<compile_context>
chip_gen: v7x
topology: tpu7x:2x2x1
jax: 0.10.0
libtpu: 0.0.40
codegen_flags: <defaults>
</compile_context>

<pallas_src>
import functools

import jax
import jax.numpy as jnp
from jax.experimental import pallas as pl
from jax.experimental.pallas import tpu as pltpu


# ------------------------------------------------------------------------------------
# Fused kernel: one grid step = one batch image; everything stays in VMEM.
# ------------------------------------------------------------------------------------
def _upconv_fused_kernel(x1_ref, x2_ref, wt_ref, bt_ref, w1_ref, b1_ref,
                         w2_ref, b2_ref, o_ref, cat_pad, mid_pad,
                         *, H, W, Cin, Cout, slope):
    # x1_ref : (1, H,  W,  Cin)        low-res input
    # x2_ref : (1, 2H, 2W, Cout)       skip connection
    # wt_ref : (Cin, 4*Cout)  bf16     fused convT weight, col = (di*2+dj)*Cout + co
    # bt_ref : (1, 4*Cout)    f32      convT bias tiled x4
    # w1_ref : (9, 2*Cout, Cout) bf16  conv1 weight, tap t = dy*3 + dx
    # w2_ref : (9, Cout,   Cout) bf16  conv2 weight
    # cat_pad: (2H+2, 2W+2, 2*Cout) f32 scratch (conv1 input, zero halo)
    # mid_pad: (2H+2, 2W+2, Cout)   f32 scratch (conv2 input, zero halo)
    f32, bf16 = jnp.float32, jnp.bfloat16
    H2, W2 = 2 * H, 2 * W
    C2 = 2 * Cout

    # ---- zero the 1-pixel halo ONCE: scratch persists across the (sequential) grid ----
    # Safe only because dimension_semantics is ("arbitrary",): one core walks the whole
    # batch and the interior is fully rewritten every step.
    @pl.when(pl.program_id(0) == 0)
    def _zero_halos():
        cat_pad[0:1, :, :] = jnp.zeros((1, W2 + 2, C2), f32)
        cat_pad[H2 + 1:H2 + 2, :, :] = jnp.zeros((1, W2 + 2, C2), f32)
        cat_pad[:, 0:1, :] = jnp.zeros((H2 + 2, 1, C2), f32)
        cat_pad[:, W2 + 1:W2 + 2, :] = jnp.zeros((H2 + 2, 1, C2), f32)
        mid_pad[0:1, :, :] = jnp.zeros((1, W2 + 2, Cout), f32)
        mid_pad[H2 + 1:H2 + 2, :, :] = jnp.zeros((1, W2 + 2, Cout), f32)
        mid_pad[:, 0:1, :] = jnp.zeros((H2 + 2, 1, Cout), f32)
        mid_pad[:, W2 + 1:W2 + 2, :] = jnp.zeros((H2 + 2, 1, Cout), f32)

    # ---------------- ConvTranspose2d(k=2, s=2): ONE fused bf16 MXU matmul ----------------
    # up[2i+di, 2j+dj, co] = sum_ci x1[i, j, ci] * Wt[ci, (di,dj,co)] + bt[co]
    x1 = x1_ref[0].reshape(H * W, Cin).astype(bf16)
    y = jnp.dot(x1, wt_ref[...], preferred_element_type=f32) + bt_ref[...]     # (H*W, 4*Cout)
    # static lane-range slices, one per output parity t = di*2 + dj
    taps = [y[:, t * Cout:(t + 1) * Cout].reshape(H, W, Cout) for t in range(4)]
    row0 = jnp.stack([taps[0], taps[1]], axis=2).reshape(H, W2, Cout)          # di = 0 rows
    row1 = jnp.stack([taps[2], taps[3]], axis=2).reshape(H, W2, Cout)          # di = 1 rows
    up = jnp.stack([row0, row1], axis=1).reshape(H2, W2, Cout)

    # ---- channel concat WITHOUT a lane concat: two disjoint channel-range stores ----
    cat_pad[1:H2 + 1, 1:W2 + 1, 0:Cout] = up
    cat_pad[1:H2 + 1, 1:W2 + 1, Cout:C2] = x2_ref[0]

    # ---- 3x3 conv = 9 accumulated per-tap matmuls (no 9x im2col patch in VMEM) ----
    def conv3x3(src_pad, w_ref, C):
        acc = None
        for t in range(9):
            dy, dx = divmod(t, 3)
            tap = src_pad[dy:dy + H2, dx:dx + W2, :].reshape(H2 * W2, C).astype(bf16)
            part = jnp.dot(tap, w_ref[t], preferred_element_type=f32)
            acc = part if acc is None else acc + part
        return acc

    h = conv3x3(cat_pad, w1_ref, C2) + b1_ref[...]
    h = jnp.where(h > 0, h, slope * h)                    # LeakyReLU(0.2), f32 VPU path
    mid_pad[1:H2 + 1, 1:W2 + 1, :] = h.reshape(H2, W2, Cout)

    out = conv3x3(mid_pad, w2_ref, Cout) + b2_ref[...]
    out = jnp.where(out > 0, out, slope * out)
    o_ref[...] = out.reshape(1, H2, W2, Cout).astype(o_ref.dtype)


# ------------------------------------------------------------------------------------
# NHWC core wrapper (no boundary transposes) + NCHW adapter matching PyTorch.
# ------------------------------------------------------------------------------------
def upconv_forward_nhwc(params, x1, x2, slope=0.2):
    N, H, W, Cin = x1.shape
    Cout = params["convT_b"].shape[0]
    H2, W2 = 2 * H, 2 * W
    C2 = 2 * Cout
    bf16 = jnp.bfloat16

    # One-time kernel-friendly weight layouts (tiny); bf16 for the MXU fast path.
    # convT (Cin, Cout, 2, 2) -> (Cin, 4*Cout), column = (di*2 + dj)*Cout + co
    wt = jnp.transpose(params["convT_w"], (0, 2, 3, 1)).reshape(Cin, 4 * Cout).astype(bf16)
    bt4 = jnp.tile(params["convT_b"], 4).reshape(1, 4 * Cout).astype(jnp.float32)
    # conv OIHW -> (9, Cin_conv, Cout), tap index t = dy*3 + dx (cross-correlation)
    w1 = jnp.transpose(params["conv1_w_oihw"], (2, 3, 1, 0)).reshape(9, C2, Cout).astype(bf16)
    b1 = params["conv1_b"].reshape(1, Cout).astype(jnp.float32)
    w2 = jnp.transpose(params["conv2_w_oihw"], (2, 3, 1, 0)).reshape(9, Cout, Cout).astype(bf16)
    b2 = params["conv2_b"].reshape(1, Cout).astype(jnp.float32)

    kern = functools.partial(_upconv_fused_kernel,
                             H=H, W=W, Cin=Cin, Cout=Cout, slope=slope)

    # Explicit scoped-VMEM budget: f32 scratch + double-buffered in/out blocks + headroom,
    # clamped to [32 MiB, 56 MiB] so it is valid on v5e/v6e/v7x.
    scratch_bytes = 4 * (H2 + 2) * (W2 + 2) * (C2 + Cout)
    block_bytes = 2 * 4 * (H * W * Cin + 2 * H2 * W2 * Cout)
    vmem_limit = int(min(max(2 * (scratch_bytes + block_bytes) + (8 << 20), 32 << 20),
                         56 << 20))

    return pl.pallas_call(
        kern,
        out_shape=jax.ShapeDtypeStruct((N, H2, W2, Cout), jnp.float32),
        grid=(N,),
        in_specs=[
            pl.BlockSpec((1, H, W, Cin), lambda n: (n, 0, 0, 0)),        # x1
            pl.BlockSpec((1, H2, W2, Cout), lambda n: (n, 0, 0, 0)),     # x2 (skip)
            pl.BlockSpec((Cin, 4 * Cout), lambda n: (0, 0)),             # fused convT weight
            pl.BlockSpec((1, 4 * Cout), lambda n: (0, 0)),               # convT bias (x4)
            pl.BlockSpec((9, C2, Cout), lambda n: (0, 0, 0)),            # conv1 weight
            pl.BlockSpec((1, Cout), lambda n: (0, 0)),                   # conv1 bias
            pl.BlockSpec((9, Cout, Cout), lambda n: (0, 0, 0)),          # conv2 weight
            pl.BlockSpec((1, Cout), lambda n: (0, 0)),                   # conv2 bias
        ],
        out_specs=pl.BlockSpec((1, H2, W2, Cout), lambda n: (n, 0, 0, 0)),
        scratch_shapes=[
            pltpu.VMEM((H2 + 2, W2 + 2, C2), jnp.float32),    # padded concat(up, skip)
            pltpu.VMEM((H2 + 2, W2 + 2, Cout), jnp.float32),  # padded conv1 output
        ],
        compiler_params=pltpu.CompilerParams(
            dimension_semantics=("arbitrary",),   # sequential -> init-once halo is valid
            vmem_limit_bytes=vmem_limit,
        ),
    )(x1, x2, wt, bt4, w1, b1, w2, b2)


def upconv_forward(params, x1_nchw, x2_nchw, slope=0.2):
    # NCHW adapter matching the PyTorch module; prefer upconv_forward_nhwc when the
    # surrounding graph can stay NHWC (saves two full HBM transpose passes).
    x1 = jnp.transpose(x1_nchw, (0, 2, 3, 1))
    x2 = jnp.transpose(x2_nchw, (0, 2, 3, 1))
    out = upconv_forward_nhwc(params, x1, x2, slope=slope)
    return jnp.transpose(out, (0, 3, 1, 2))


# ------------------------------------------------------------------------------------
# Deterministic parameter init (PyTorch layouts).
# ------------------------------------------------------------------------------------
def init_params(key, in_channels, out_channels):
    k = jax.random.split(key, 6)
    return {
        "convT_w": 0.1 * jax.random.normal(k[0], (in_channels, out_channels, 2, 2), jnp.float32),
        "convT_b": 0.1 * jax.random.normal(k[1], (out_channels,), jnp.float32),
        "conv1_w_oihw": 0.1 * jax.random.normal(k[2], (out_channels, 2 * out_channels, 3, 3), jnp.float32),
        "conv1_b": 0.1 * jax.random.normal(k[3], (out_channels,), jnp.float32),
        "conv2_w_oihw": 0.1 * jax.random.normal(k[4], (out_channels, out_channels, 3, 3), jnp.float32),
        "conv2_b": 0.1 * jax.random.normal(k[5], (out_channels,), jnp.float32),
    }


# Pure-JAX reference (NCHW, PyTorch semantics) for the sanity check.
def upconv_reference(params, x1, x2, slope=0.2):
    N, Cin, H, W = x1.shape
    Cout = params["convT_b"].shape[0]
    t = jnp.einsum("nihw,ioab->nohawb", x1, params["convT_w"])
    t = t.reshape(N, Cout, 2 * H, 2 * W) + params["convT_b"][None, :, None, None]
    x = jnp.concatenate([t, x2], axis=1)

    def conv(x, w_oihw, b):
        y = jax.lax.conv_general_dilated(
            x, w_oihw, window_strides=(1, 1), padding="SAME",
            dimension_numbers=("NCHW", "OIHW", "NCHW"))
        return y + b[None, :, None, None]

    lrelu = lambda v: jnp.where(v > 0, v, slope * v)
    x = lrelu(conv(x, params["conv1_w_oihw"], params["conv1_b"]))
    x = lrelu(conv(x, params["conv2_w_oihw"], params["conv2_b"]))
    return x


if __name__ == "__main__":
    in_channels, out_channels = 8, 4
    N, H, W = 2, 8, 8                         # x2 has 2x the spatial resolution of x1

    key = jax.random.PRNGKey(0)
    kp, kx1, kx2 = jax.random.split(key, 3)
    params = init_params(kp, in_channels, out_channels)

    x1 = jax.random.normal(kx1, (N, in_channels, H, W), jnp.float32)            # NCHW
    x2 = jax.random.normal(kx2, (N, out_channels, 2 * H, 2 * W), jnp.float32)   # NCHW

    out = jax.block_until_ready(upconv_forward(params, x1, x2))

    ref = jax.block_until_ready(upconv_reference(params, x1, x2))
    assert out.shape == (N, out_channels, 2 * H, 2 * W)
    max_err = float(jnp.max(jnp.abs(out - ref)))
    # bf16 matmul operands (f32 accumulation) -> loosened tolerance vs pure-f32 reference.
    assert jnp.allclose(out, ref, atol=5e-2, rtol=5e-2), max_err

    print("KERNEL_OK")
</pallas_src>

<mosaic_0001>
module attributes {stable_mosaic.version = 11 : i64} {
  func.func @_upconv_fused_kernel(%arg0: i32, %arg1: memref<1x8x8x8xf32, #tpu.memory_space<vmem>>, %arg2: memref<1x16x16x4xf32, #tpu.memory_space<vmem>>, %arg3: memref<8x16xbf16, #tpu.memory_space<vmem>>, %arg4: memref<1x16xf32, #tpu.memory_space<vmem>>, %arg5: memref<9x8x4xbf16, #tpu.memory_space<vmem>>, %arg6: memref<1x4xf32, #tpu.memory_space<vmem>>, %arg7: memref<9x4x4xbf16, #tpu.memory_space<vmem>>, %arg8: memref<1x4xf32, #tpu.memory_space<vmem>>, %arg9: memref<1x16x16x4xf32, #tpu.memory_space<vmem>>, %arg10: memref<18x18x8xf32, #tpu.memory_space<vmem>>, %arg11: memref<18x18x4xf32, #tpu.memory_space<vmem>>) attributes {dimension_semantics = [#tpu.dimension_semantics<arbitrary>], iteration_bounds = array<i64: 2>, scalar_prefetch = 0 : i64, scratch_operands = 2 : i64, tpu.core_type = #tpu.core_type<tc>, window_params = [{transform_indices = @transform_0, window_bounds = array<i64: 1, 8, 8, 8>}, {transform_indices = @transform_1, window_bounds = array<i64: 1, 16, 16, 4>}, {pipeline_mode = #tpu.pipeline_mode<synchronous>, transform_indices = @transform_2, window_bounds = array<i64: 8, 16>}, {pipeline_mode = #tpu.pipeline_mode<synchronous>, transform_indices = @transform_3, window_bounds = array<i64: 1, 16>}, {pipeline_mode = #tpu.pipeline_mode<synchronous>, transform_indices = @transform_4, window_bounds = array<i64: 9, 8, 4>}, {pipeline_mode = #tpu.pipeline_mode<synchronous>, transform_indices = @transform_5, window_bounds = array<i64: 1, 4>}, {pipeline_mode = #tpu.pipeline_mode<synchronous>, transform_indices = @transform_6, window_bounds = array<i64: 9, 4, 4>}, {pipeline_mode = #tpu.pipeline_mode<synchronous>, transform_indices = @transform_7, window_bounds = array<i64: 1, 4>}, {transform_indices = @transform_8, window_bounds = array<i64: 1, 16, 16, 4>}]} {
    %c0_i32 = arith.constant 0 : i32
    %0 = arith.cmpi eq, %arg0, %c0_i32 : i32
    %1 = arith.extui %0 : i1 to i32
    %c0_i32_0 = arith.constant 0 : i32
    %2 = arith.cmpi ne, %1, %c0_i32_0 : i32
    scf.if %2 {
      %cst_151 = arith.constant 0.000000e+00 : f32
      %180 = vector.broadcast %cst_151 : f32 to vector<1x18x8xf32>
      %c0_152 = arith.constant 0 : index
      %c0_153 = arith.constant 0 : index
      %c0_154 = arith.constant 0 : index
      %181 = vector.load %arg10[%c0_152, %c0_153, %c0_154] : memref<18x18x8xf32, #tpu.memory_space<vmem>>, vector<1x18x8xf32>
      tpu.vector_store %arg10[%c0_152, %c0_153, %c0_154], %180 {strides = array<i32>} : memref<18x18x8xf32, #tpu.memory_space<vmem>>, vector<1x18x8xf32>,
      %cst_155 = arith.constant 0.000000e+00 : f32
      %182 = vector.broadcast %cst_155 : f32 to vector<1x18x8xf32>
      %c17 = arith.constant 17 : index
      %c0_156 = arith.constant 0 : index
      %c0_157 = arith.constant 0 : index
      %183 = vector.load %arg10[%c17, %c0_156, %c0_157] : memref<18x18x8xf32, #tpu.memory_space<vmem>>, vector<1x18x8xf32>
      tpu.vector_store %arg10[%c17, %c0_156, %c0_157], %182 {strides = array<i32>} : memref<18x18x8xf32, #tpu.memory_space<vmem>>, vector<1x18x8xf32>,
      %cst_158 = arith.constant 0.000000e+00 : f32
      %184 = vector.broadcast %cst_158 : f32 to vector<18x1x8xf32>
      %c0_159 = arith.constant 0 : index
      %c0_160 = arith.constant 0 : index
      %c0_161 = arith.constant 0 : index
      %185 = vector.load %arg10[%c0_159, %c0_160, %c0_161] : memref<18x18x8xf32, #tpu.memory_space<vmem>>, vector<18x1x8xf32>
      tpu.vector_store %arg10[%c0_159, %c0_160, %c0_161], %184 {strides = array<i32>} : memref<18x18x8xf32, #tpu.memory_space<vmem>>, vector<18x1x8xf32>,
      %cst_162 = arith.constant 0.000000e+00 : f32
      %186 = vector.broadcast %cst_162 : f32 to vector<18x1x8xf32>
      %c0_163 = arith.constant 0 : index
      %c17_164 = arith.constant 17 : index
      %c0_165 = arith.constant 0 : index
      %187 = vector.load %arg10[%c0_163, %c17_164, %c0_165] : memref<18x18x8xf32, #tpu.memory_space<vmem>>, vector<18x1x8xf32>
      tpu.vector_store %arg10[%c0_163, %c17_164, %c0_165], %186 {strides = array<i32>} : memref<18x18x8xf32, #tpu.memory_space<vmem>>, vector<18x1x8xf32>,
      %cst_166 = arith.constant 0.000000e+00 : f32
      %188 = vector.broadcast %cst_166 : f32 to vector<1x18x4xf32>
      %c0_167 = arith.constant 0 : index
      %c0_168 = arith.constant 0 : index
      %c0_169 = arith.constant 0 : index
      %189 = vector.load %arg11[%c0_167, %c0_168, %c0_169] : memref<18x18x4xf32, #tpu.memory_space<vmem>>, vector<1x18x4xf32>
      tpu.vector_store %arg11[%c0_167, %c0_168, %c0_169], %188 {strides = array<i32>} : memref<18x18x4xf32, #tpu.memory_space<vmem>>, vector<1x18x4xf32>,
      %cst_170 = arith.constant 0.000000e+00 : f32
      %190 = vector.broadcast %cst_170 : f32 to vector<1x18x4xf32>
      %c17_171 = arith.constant 17 : index
      %c0_172 = arith.constant 0 : index
      %c0_173 = arith.constant 0 : index
      %191 = vector.load %arg11[%c17_171, %c0_172, %c0_173] : memref<18x18x4xf32, #tpu.memory_space<vmem>>, vector<1x18x4xf32>
      tpu.vector_store %arg11[%c17_171, %c0_172, %c0_173], %190 {strides = array<i32>} : memref<18x18x4xf32, #tpu.memory_space<vmem>>, vector<1x18x4xf32>,
      %cst_174 = arith.constant 0.000000e+00 : f32
      %192 = vector.broadcast %cst_174 : f32 to vector<18x1x4xf32>
      %c0_175 = arith.constant 0 : index
      %c0_176 = arith.constant 0 : index
      %c0_177 = arith.constant 0 : index
      %193 = vector.load %arg11[%c0_175, %c0_176, %c0_177] : memref<18x18x4xf32, #tpu.memory_space<vmem>>, vector<18x1x4xf32>
      tpu.vector_store %arg11[%c0_175, %c0_176, %c0_177], %192 {strides = array<i32>} : memref<18x18x4xf32, #tpu.memory_space<vmem>>, vector<18x1x4xf32>,
      %cst_178 = arith.constant 0.000000e+00 : f32
      %194 = vector.broadcast %cst_178 : f32 to vector<18x1x4xf32>
      %c0_179 = arith.constant 0 : index
      %c17_180 = arith.constant 17 : index
      %c0_181 = arith.constant 0 : index
      %195 = vector.load %arg11[%c0_179, %c17_180, %c0_181] : memref<18x18x4xf32, #tpu.memory_space<vmem>>, vector<18x1x4xf32>
      tpu.vector_store %arg11[%c0_179, %c17_180, %c0_181], %194 {strides = array<i32>} : memref<18x18x4xf32, #tpu.memory_space<vmem>>, vector<18x1x4xf32>,
    } else {
    }
    %c0 = arith.constant 0 : index
    %c0_1 = arith.constant 0 : index
    %c0_2 = arith.constant 0 : index
    %c0_3 = arith.constant 0 : index
    %3 = vector.load %arg1[%c0, %c0_1, %c0_2, %c0_3] : memref<1x8x8x8xf32, #tpu.memory_space<vmem>>, vector<1x8x8x8xf32>
    %4 = vector.shape_cast %3 : vector<1x8x8x8xf32> to vector<8x8x8xf32>
    %5 = vector.shape_cast %4 : vector<8x8x8xf32> to vector<64x8xf32>
    %6 = arith.truncf %5 : vector<64x8xf32> to vector<64x8xbf16>
    %c0_4 = arith.constant 0 : index
    %c0_5 = arith.constant 0 : index
    %7 = vector.load %arg3[%c0_4, %c0_5] : memref<8x16xbf16, #tpu.memory_space<vmem>>, vector<8x16xbf16>
    %cst = arith.constant dense<0.000000e+00> : vector<64x16xf32>
    %8 = tpu.matmul %6, %7, %cst {dimension_numbers = #tpu.dot_dimension_numbers<[1], [0], [0], [1], [0, 0, 1, 1], [], []>} : vector<64x8xbf16>, vector<8x16xbf16>, vector<64x16xf32> -> vector<64x16xf32>
    %c0_6 = arith.constant 0 : index
    %c0_7 = arith.constant 0 : index
    %9 = vector.load %arg4[%c0_6, %c0_7] : memref<1x16xf32, #tpu.memory_space<vmem>>, vector<1x16xf32>
    %10 = vector.broadcast %9 : vector<1x16xf32> to vector<64x16xf32>
    %11 = arith.addf %8, %10 : vector<64x16xf32>
    %12 = vector.extract_strided_slice %11 {offsets = [0, 0], sizes = [64, 4], strides = [1, 1]} : vector<64x16xf32> to vector<64x4xf32>
    %13 = vector.shape_cast %12 : vector<64x4xf32> to vector<8x8x4xf32>
    %14 = vector.extract_strided_slice %11 {offsets = [0, 4], sizes = [64, 4], strides = [1, 1]} : vector<64x16xf32> to vector<64x4xf32>
    %15 = vector.shape_cast %14 : vector<64x4xf32> to vector<8x8x4xf32>
    %16 = vector.extract_strided_slice %11 {offsets = [0, 8], sizes = [64, 4], strides = [1, 1]} : vector<64x16xf32> to vector<64x4xf32>
    %17 = vector.shape_cast %16 : vector<64x4xf32> to vector<8x8x4xf32>
    %18 = vector.extract_strided_slice %11 {offsets = [0, 12], sizes = [64, 4], strides = [1, 1]} : vector<64x16xf32> to vector<64x4xf32>
    %19 = vector.shape_cast %18 : vector<64x4xf32> to vector<8x8x4xf32>
    %20 = vector.shape_cast %13 : vector<8x8x4xf32> to vector<8x8x1x4xf32>
    %21 = vector.shape_cast %15 : vector<8x8x4xf32> to vector<8x8x1x4xf32>
    %22 = tpu.concatenate %20, %21 in 2 : vector<8x8x1x4xf32>, vector<8x8x1x4xf32> -> vector<8x8x2x4xf32>
    %23 = vector.shape_cast %22 : vector<8x8x2x4xf32> to vector<8x16x4xf32>
    %24 = vector.shape_cast %17 : vector<8x8x4xf32> to vector<8x8x1x4xf32>
    %25 = vector.shape_cast %19 : vector<8x8x4xf32> to vector<8x8x1x4xf32>
    %26 = tpu.concatenate %24, %25 in 2 : vector<8x8x1x4xf32>, vector<8x8x1x4xf32> -> vector<8x8x2x4xf32>
    %27 = vector.shape_cast %26 : vector<8x8x2x4xf32> to vector<8x16x4xf32>
    %28 = vector.shape_cast %23 : vector<8x16x4xf32> to vector<8x1x16x4xf32>
    %29 = vector.shape_cast %27 : vector<8x16x4xf32> to vector<8x1x16x4xf32>
    %30 = tpu.concatenate %28, %29 in 1 : vector<8x1x16x4xf32>, vector<8x1x16x4xf32> -> vector<8x2x16x4xf32>
    %31 = vector.shape_cast %30 : vector<8x2x16x4xf32> to vector<16x16x4xf32>
    %c1 = arith.constant 1 : index
    %c1_8 = arith.constant 1 : index
    %c0_9 = arith.constant 0 : index
    %32 = vector.load %arg10[%c1, %c1_8, %c0_9] : memref<18x18x8xf32, #tpu.memory_space<vmem>>, vector<16x16x4xf32>
    tpu.vector_store %arg10[%c1, %c1_8, %c0_9], %31 {strides = array<i32>} : memref<18x18x8xf32, #tpu.memory_space<vmem>>, vector<16x16x4xf32>,
    %c0_10 = arith.constant 0 : index
    %c0_11 = arith.constant 0 : index
    %c0_12 = arith.constant 0 : index
    %c0_13 = arith.constant 0 : index
    %33 = vector.load %arg2[%c0_10, %c0_11, %c0_12, %c0_13] : memref<1x16x16x4xf32, #tpu.memory_space<vmem>>, vector<1x16x16x4xf32>
    %34 = vector.shape_cast %33 : vector<1x16x16x4xf32> to vector<16x16x4xf32>
    %c1_14 = arith.constant 1 : index
    %c1_15 = arith.constant 1 : index
    %c4 = arith.constant 4 : index
    %35 = vector.load %arg10[%c1_14, %c1_15, %c4] : memref<18x18x8xf32, #tpu.memory_space<vmem>>, vector<16x16x4xf32>
    tpu.vector_store %arg10[%c1_14, %c1_15, %c4], %34 {strides = array<i32>} : memref<18x18x8xf32, #tpu.memory_space<vmem>>, vector<16x16x4xf32>,
    %c0_16 = arith.constant 0 : index
    %c0_17 = arith.constant 0 : index
    %c0_18 = arith.constant 0 : index
    %36 = vector.load %arg10[%c0_16, %c0_17, %c0_18] : memref<18x18x8xf32, #tpu.memory_space<vmem>>, vector<16x16x8xf32>
    %37 = vector.shape_cast %36 : vector<16x16x8xf32> to vector<256x8xf32>
    %38 = arith.truncf %37 : vector<256x8xf32> to vector<256x8xbf16>
    %c0_19 = arith.constant 0 : index
    %c0_20 = arith.constant 0 : index
    %c0_21 = arith.constant 0 : index
    %39 = vector.load %arg5[%c0_19, %c0_20, %c0_21] : memref<9x8x4xbf16, #tpu.memory_space<vmem>>, vector<1x8x4xbf16>
    %40 = vector.shape_cast %39 : vector<1x8x4xbf16> to vector<8x4xbf16>
    %cst_22 = arith.constant dense<0.000000e+00> : vector<256x4xf32>
    %41 = tpu.matmul %38, %40, %cst_22 {dimension_numbers = #tpu.dot_dimension_numbers<[1], [0], [0], [1], [0, 0, 1, 1], [], []>} : vector<256x8xbf16>, vector<8x4xbf16>, vector<256x4xf32> -> vector<256x4xf32>
    %c0_23 = arith.constant 0 : index
    %c1_24 = arith.constant 1 : index
    %c0_25 = arith.constant 0 : index
    %42 = vector.load %arg10[%c0_23, %c1_24, %c0_25] : memref<18x18x8xf32, #tpu.memory_space<vmem>>, vector<16x16x8xf32>
    %43 = vector.shape_cast %42 : vector<16x16x8xf32> to vector<256x8xf32>
    %44 = arith.truncf %43 : vector<256x8xf32> to vector<256x8xbf16>
    %c1_26 = arith.constant 1 : index
    %c0_27 = arith.constant 0 : index
    %c0_28 = arith.constant 0 : index
    %45 = vector.load %arg5[%c1_26, %c0_27, %c0_28] : memref<9x8x4xbf16, #tpu.memory_space<vmem>>, vector<1x8x4xbf16>
    %46 = vector.shape_cast %45 : vector<1x8x4xbf16> to vector<8x4xbf16>
    %cst_29 = arith.constant dense<0.000000e+00> : vector<256x4xf32>
    %47 = tpu.matmul %44, %46, %cst_29 {dimension_numbers = #tpu.dot_dimension_numbers<[1], [0], [0], [1], [0, 0, 1, 1], [], []>} : vector<256x8xbf16>, vector<8x4xbf16>, vector<256x4xf32> -> vector<256x4xf32>
    %48 = arith.addf %41, %47 : vector<256x4xf32>
    %c0_30 = arith.constant 0 : index
    %c2 = arith.constant 2 : index
    %c0_31 = arith.constant 0 : index
    %49 = vector.load %arg10[%c0_30, %c2, %c0_31] : memref<18x18x8xf32, #tpu.memory_space<vmem>>, vector<16x16x8xf32>
    %50 = vector.shape_cast %49 : vector<16x16x8xf32> to vector<256x8xf32>
    %51 = arith.truncf %50 : vector<256x8xf32> to vector<256x8xbf16>
    %c2_32 = arith.constant 2 : index
    %c0_33 = arith.constant 0 : index
    %c0_34 = arith.constant 0 : index
    %52 = vector.load %arg5[%c2_32, %c0_33, %c0_34] : memref<9x8x4xbf16, #tpu.memory_space<vmem>>, vector<1x8x4xbf16>
    %53 = vector.shape_cast %52 : vector<1x8x4xbf16> to vector<8x4xbf16>
    %cst_35 = arith.constant dense<0.000000e+00> : vector<256x4xf32>
    %54 = tpu.matmul %51, %53, %cst_35 {dimension_numbers = #tpu.dot_dimension_numbers<[1], [0], [0], [1], [0, 0, 1, 1], [], []>} : vector<256x8xbf16>, vector<8x4xbf16>, vector<256x4xf32> -> vector<256x4xf32>
    %55 = arith.addf %48, %54 : vector<256x4xf32>
    %c1_36 = arith.constant 1 : index
    %c0_37 = arith.constant 0 : index
    %c0_38 = arith.constant 0 : index
    %56 = vector.load %arg10[%c1_36, %c0_37, %c0_38] : memref<18x18x8xf32, #tpu.memory_space<vmem>>, vector<16x16x8xf32>
    %57 = vector.shape_cast %56 : vector<16x16x8xf32> to vector<256x8xf32>
    %58 = arith.truncf %57 : vector<256x8xf32> to vector<256x8xbf16>
    %c3 = arith.constant 3 : index
    %c0_39 = arith.constant 0 : index
    %c0_40 = arith.constant 0 : index
    %59 = vector.load %arg5[%c3, %c0_39, %c0_40] : memref<9x8x4xbf16, #tpu.memory_space<vmem>>, vector<1x8x4xbf16>
    %60 = vector.shape_cast %59 : vector<1x8x4xbf16> to vector<8x4xbf16>
    %cst_41 = arith.constant dense<0.000000e+00> : vector<256x4xf32>
    %61 = tpu.matmul %58, %60, %cst_41 {dimension_numbers = #tpu.dot_dimension_numbers<[1], [0], [0], [1], [0, 0, 1, 1], [], []>} : vector<256x8xbf16>, vector<8x4xbf16>, vector<256x4xf32> -> vector<256x4xf32>
    %62 = arith.addf %55, %61 : vector<256x4xf32>
    %c1_42 = arith.constant 1 : index
    %c1_43 = arith.constant 1 : index
    %c0_44 = arith.constant 0 : index
    %63 = vector.load %arg10[%c1_42, %c1_43, %c0_44] : memref<18x18x8xf32, #tpu.memory_space<vmem>>, vector<16x16x8xf32>
    %64 = vector.shape_cast %63 : vector<16x16x8xf32> to vector<256x8xf32>
    %65 = arith.truncf %64 : vector<256x8xf32> to vector<256x8xbf16>
    %c4_45 = arith.constant 4 : index
    %c0_46 = arith.constant 0 : index
    %c0_47 = arith.constant 0 : index
    %66 = vector.load %arg5[%c4_45, %c0_46, %c0_47] : memref<9x8x4xbf16, #tpu.memory_space<vmem>>, vector<1x8x4xbf16>
    %67 = vector.shape_cast %66 : vector<1x8x4xbf16> to vector<8x4xbf16>
    %cst_48 = arith.constant dense<0.000000e+00> : vector<256x4xf32>
    %68 = tpu.matmul %65, %67, %cst_48 {dimension_numbers = #tpu.dot_dimension_numbers<[1], [0], [0], [1], [0, 0, 1, 1], [], []>} : vector<256x8xbf16>, vector<8x4xbf16>, vector<256x4xf32> -> vector<256x4xf32>
    %69 = arith.addf %62, %68 : vector<256x4xf32>
    %c1_49 = arith.constant 1 : index
    %c2_50 = arith.constant 2 : index
    %c0_51 = arith.constant 0 : index
    %70 = vector.load %arg10[%c1_49, %c2_50, %c0_51] : memref<18x18x8xf32, #tpu.memory_space<vmem>>, vector<16x16x8xf32>
    %71 = vector.shape_cast %70 : vector<16x16x8xf32> to vector<256x8xf32>
    %72 = arith.truncf %71 : vector<256x8xf32> to vector<256x8xbf16>
    %c5 = arith.constant 5 : index
    %c0_52 = arith.constant 0 : index
    %c0_53 = arith.constant 0 : index
    %73 = vector.load %arg5[%c5, %c0_52, %c0_53] : memref<9x8x4xbf16, #tpu.memory_space<vmem>>, vector<1x8x4xbf16>
    %74 = vector.shape_cast %73 : vector<1x8x4xbf16> to vector<8x4xbf16>
    %cst_54 = arith.constant dense<0.000000e+00> : vector<256x4xf32>
    %75 = tpu.matmul %72, %74, %cst_54 {dimension_numbers = #tpu.dot_dimension_numbers<[1], [0], [0], [1], [0, 0, 1, 1], [], []>} : vector<256x8xbf16>, vector<8x4xbf16>, vector<256x4xf32> -> vector<256x4xf32>
    %76 = arith.addf %69, %75 : vector<256x4xf32>
    %c2_55 = arith.constant 2 : index
    %c0_56 = arith.constant 0 : index
    %c0_57 = arith.constant 0 : index
    %77 = vector.load %arg10[%c2_55, %c0_56, %c0_57] : memref<18x18x8xf32, #tpu.memory_space<vmem>>, vector<16x16x8xf32>
    %78 = vector.shape_cast %77 : vector<16x16x8xf32> to vector<256x8xf32>
    %79 = arith.truncf %78 : vector<256x8xf32> to vector<256x8xbf16>
    %c6 = arith.constant 6 : index
    %c0_58 = arith.constant 0 : index
    %c0_59 = arith.constant 0 : index
    %80 = vector.load %arg5[%c6, %c0_58, %c0_59] : memref<9x8x4xbf16, #tpu.memory_space<vmem>>, vector<1x8x4xbf16>
    %81 = vector.shape_cast %80 : vector<1x8x4xbf16> to vector<8x4xbf16>
    %cst_60 = arith.constant dense<0.000000e+00> : vector<256x4xf32>
    %82 = tpu.matmul %79, %81, %cst_60 {dimension_numbers = #tpu.dot_dimension_numbers<[1], [0], [0], [1], [0, 0, 1, 1], [], []>} : vector<256x8xbf16>, vector<8x4xbf16>, vector<256x4xf32> -> vector<256x4xf32>
    %83 = arith.addf %76, %82 : vector<256x4xf32>
    %c2_61 = arith.constant 2 : index
    %c1_62 = arith.constant 1 : index
    %c0_63 = arith.constant 0 : index
    %84 = vector.load %arg10[%c2_61, %c1_62, %c0_63] : memref<18x18x8xf32, #tpu.memory_space<vmem>>, vector<16x16x8xf32>
    %85 = vector.shape_cast %84 : vector<16x16x8xf32> to vector<256x8xf32>
    %86 = arith.truncf %85 : vector<256x8xf32> to vector<256x8xbf16>
    %c7 = arith.constant 7 : index
    %c0_64 = arith.constant 0 : index
    %c0_65 = arith.constant 0 : index
    %87 = vector.load %arg5[%c7, %c0_64, %c0_65] : memref<9x8x4xbf16, #tpu.memory_space<vmem>>, vector<1x8x4xbf16>
    %88 = vector.shape_cast %87 : vector<1x8x4xbf16> to vector<8x4xbf16>
    %cst_66 = arith.constant dense<0.000000e+00> : vector<256x4xf32>
    %89 = tpu.matmul %86, %88, %cst_66 {dimension_numbers = #tpu.dot_dimension_numbers<[1], [0], [0], [1], [0, 0, 1, 1], [], []>} : vector<256x8xbf16>, vector<8x4xbf16>, vector<256x4xf32> -> vector<256x4xf32>
    %90 = arith.addf %83, %89 : vector<256x4xf32>
    %c2_67 = arith.constant 2 : index
    %c2_68 = arith.constant 2 : index
    %c0_69 = arith.constant 0 : index
    %91 = vector.load %arg10[%c2_67, %c2_68, %c0_69] : memref<18x18x8xf32, #tpu.memory_space<vmem>>, vector<16x16x8xf32>
    %92 = vector.shape_cast %91 : vector<16x16x8xf32> to vector<256x8xf32>
    %93 = arith.truncf %92 : vector<256x8xf32> to vector<256x8xbf16>
    %c8 = arith.constant 8 : index
    %c0_70 = arith.constant 0 : index
    %c0_71 = arith.constant 0 : index
    %94 = vector.load %arg5[%c8, %c0_70, %c0_71] : memref<9x8x4xbf16, #tpu.memory_space<vmem>>, vector<1x8x4xbf16>
    %95 = vector.shape_cast %94 : vector<1x8x4xbf16> to vector<8x4xbf16>
    %cst_72 = arith.constant dense<0.000000e+00> : vector<256x4xf32>
    %96 = tpu.matmul %93, %95, %cst_72 {dimension_numbers = #tpu.dot_dimension_numbers<[1], [0], [0], [1], [0, 0, 1, 1], [], []>} : vector<256x8xbf16>, vector<8x4xbf16>, vector<256x4xf32> -> vector<256x4xf32>
    %97 = arith.addf %90, %96 : vector<256x4xf32>
    %c0_73 = arith.constant 0 : index
    %c0_74 = arith.constant 0 : index
    %98 = vector.load %arg6[%c0_73, %c0_74] : memref<1x4xf32, #tpu.memory_space<vmem>>, vector<1x4xf32>
    %99 = vector.broadcast %98 : vector<1x4xf32> to vector<256x4xf32>
    %100 = arith.addf %97, %99 : vector<256x4xf32>
    %cst_75 = arith.constant 0.000000e+00 : f32
    %101 = vector.broadcast %cst_75 : f32 to vector<256x4xf32>
    %102 = arith.cmpf ogt, %100, %101 : vector<256x4xf32>
    %cst_76 = arith.constant 2.000000e-01 : f32
    %103 = vector.broadcast %cst_76 : f32 to vector<256x4xf32>
    %104 = arith.mulf %103, %100 : vector<256x4xf32>
    %105 = arith.select %102, %100, %104 : vector<256x4xi1>, vector<256x4xf32>
    %106 = vector.shape_cast %105 : vector<256x4xf32> to vector<16x16x4xf32>
    %c1_77 = arith.constant 1 : index
    %c1_78 = arith.constant 1 : index
    %c0_79 = arith.constant 0 : index
    %107 = vector.load %arg11[%c1_77, %c1_78, %c0_79] : memref<18x18x4xf32, #tpu.memory_space<vmem>>, vector<16x16x4xf32>
    tpu.vector_store %arg11[%c1_77, %c1_78, %c0_79], %106 {strides = array<i32>} : memref<18x18x4xf32, #tpu.memory_space<vmem>>, vector<16x16x4xf32>,
    %c0_80 = arith.constant 0 : index
    %c0_81 = arith.constant 0 : index
    %c0_82 = arith.constant 0 : index
    %108 = vector.load %arg11[%c0_80, %c0_81, %c0_82] : memref<18x18x4xf32, #tpu.memory_space<vmem>>, vector<16x16x4xf32>
    %109 = vector.shape_cast %108 : vector<16x16x4xf32> to vector<256x4xf32>
    %110 = arith.truncf %109 : vector<256x4xf32> to vector<256x4xbf16>
    %c0_83 = arith.constant 0 : index
    %c0_84 = arith.constant 0 : index
    %c0_85 = arith.constant 0 : index
    %111 = vector.load %arg7[%c0_83, %c0_84, %c0_85] : memref<9x4x4xbf16, #tpu.memory_space<vmem>>, vector<1x4x4xbf16>
    %112 = vector.shape_cast %111 : vector<1x4x4xbf16> to vector<4x4xbf16>
    %cst_86 = arith.constant dense<0.000000e+00> : vector<256x4xf32>
    %113 = tpu.matmul %110, %112, %cst_86 {dimension_numbers = #tpu.dot_dimension_numbers<[1], [0], [0], [1], [0, 0, 1, 1], [], []>} : vector<256x4xbf16>, vector<4x4xbf16>, vector<256x4xf32> -> vector<256x4xf32>
    %c0_87 = arith.constant 0 : index
    %c1_88 = arith.constant 1 : index
    %c0_89 = arith.constant 0 : index
    %114 = vector.load %arg11[%c0_87, %c1_88, %c0_89] : memref<18x18x4xf32, #tpu.memory_space<vmem>>, vector<16x16x4xf32>
    %115 = vector.shape_cast %114 : vector<16x16x4xf32> to vector<256x4xf32>
    %116 = arith.truncf %115 : vector<256x4xf32> to vector<256x4xbf16>
    %c1_90 = arith.constant 1 : index
    %c0_91 = arith.constant 0 : index
    %c0_92 = arith.constant 0 : index
    %117 = vector.load %arg7[%c1_90, %c0_91, %c0_92] : memref<9x4x4xbf16, #tpu.memory_space<vmem>>, vector<1x4x4xbf16>
    %118 = vector.shape_cast %117 : vector<1x4x4xbf16> to vector<4x4xbf16>
    %cst_93 = arith.constant dense<0.000000e+00> : vector<256x4xf32>
    %119 = tpu.matmul %116, %118, %cst_93 {dimension_numbers = #tpu.dot_dimension_numbers<[1], [0], [0], [1], [0, 0, 1, 1], [], []>} : vector<256x4xbf16>, vector<4x4xbf16>, vector<256x4xf32> -> vector<256x4xf32>
    %120 = arith.addf %113, %119 : vector<256x4xf32>
    %c0_94 = arith.constant 0 : index
    %c2_95 = arith.constant 2 : index
    %c0_96 = arith.constant 0 : index
    %121 = vector.load %arg11[%c0_94, %c2_95, %c0_96] : memref<18x18x4xf32, #tpu.memory_space<vmem>>, vector<16x16x4xf32>
    %122 = vector.shape_cast %121 : vector<16x16x4xf32> to vector<256x4xf32>
    %123 = arith.truncf %122 : vector<256x4xf32> to vector<256x4xbf16>
    %c2_97 = arith.constant 2 : index
    %c0_98 = arith.constant 0 : index
    %c0_99 = arith.constant 0 : index
    %124 = vector.load %arg7[%c2_97, %c0_98, %c0_99] : memref<9x4x4xbf16, #tpu.memory_space<vmem>>, vector<1x4x4xbf16>
    %125 = vector.shape_cast %124 : vector<1x4x4xbf16> to vector<4x4xbf16>
    %cst_100 = arith.constant dense<0.000000e+00> : vector<256x4xf32>
    %126 = tpu.matmul %123, %125, %cst_100 {dimension_numbers = #tpu.dot_dimension_numbers<[1], [0], [0], [1], [0, 0, 1, 1], [], []>} : vector<256x4xbf16>, vector<4x4xbf16>, vector<256x4xf32> -> vector<256x4xf32>
    %127 = arith.addf %120, %126 : vector<256x4xf32>
    %c1_101 = arith.constant 1 : index
    %c0_102 = arith.constant 0 : index
    %c0_103 = arith.constant 0 : index
    %128 = vector.load %arg11[%c1_101, %c0_102, %c0_103] : memref<18x18x4xf32, #tpu.memory_space<vmem>>, vector<16x16x4xf32>
    %129 = vector.shape_cast %128 : vector<16x16x4xf32> to vector<256x4xf32>
    %130 = arith.truncf %129 : vector<256x4xf32> to vector<256x4xbf16>
    %c3_104 = arith.constant 3 : index
    %c0_105 = arith.constant 0 : index
    %c0_106 = arith.constant 0 : index
    %131 = vector.load %arg7[%c3_104, %c0_105, %c0_106] : memref<9x4x4xbf16, #tpu.memory_space<vmem>>, vector<1x4x4xbf16>
    %132 = vector.shape_cast %131 : vector<1x4x4xbf16> to vector<4x4xbf16>
    %cst_107 = arith.constant dense<0.000000e+00> : vector<256x4xf32>
    %133 = tpu.matmul %130, %132, %cst_107 {dimension_numbers = #tpu.dot_dimension_numbers<[1], [0], [0], [1], [0, 0, 1, 1], [], []>} : vector<256x4xbf16>, vector<4x4xbf16>, vector<256x4xf32> -> vector<256x4xf32>
    %134 = arith.addf %127, %133 : vector<256x4xf32>
    %c1_108 = arith.constant 1 : index
    %c1_109 = arith.constant 1 : index
    %c0_110 = arith.constant 0 : index
    %135 = vector.load %arg11[%c1_108, %c1_109, %c0_110] : memref<18x18x4xf32, #tpu.memory_space<vmem>>, vector<16x16x4xf32>
    %136 = vector.shape_cast %135 : vector<16x16x4xf32> to vector<256x4xf32>
    %137 = arith.truncf %136 : vector<256x4xf32> to vector<256x4xbf16>
    %c4_111 = arith.constant 4 : index
    %c0_112 = arith.constant 0 : index
    %c0_113 = arith.constant 0 : index
    %138 = vector.load %arg7[%c4_111, %c0_112, %c0_113] : memref<9x4x4xbf16, #tpu.memory_space<vmem>>, vector<1x4x4xbf16>
    %139 = vector.shape_cast %138 : vector<1x4x4xbf16> to vector<4x4xbf16>
    %cst_114 = arith.constant dense<0.000000e+00> : vector<256x4xf32>
    %140 = tpu.matmul %137, %139, %cst_114 {dimension_numbers = #tpu.dot_dimension_numbers<[1], [0], [0], [1], [0, 0, 1, 1], [], []>} : vector<256x4xbf16>, vector<4x4xbf16>, vector<256x4xf32> -> vector<256x4xf32>
    %141 = arith.addf %134, %140 : vector<256x4xf32>
    %c1_115 = arith.constant 1 : index
    %c2_116 = arith.constant 2 : index
    %c0_117 = arith.constant 0 : index
    %142 = vector.load %arg11[%c1_115, %c2_116, %c0_117] : memref<18x18x4xf32, #tpu.memory_space<vmem>>, vector<16x16x4xf32>
    %143 = vector.shape_cast %142 : vector<16x16x4xf32> to vector<256x4xf32>
    %144 = arith.truncf %143 : vector<256x4xf32> to vector<256x4xbf16>
    %c5_118 = arith.constant 5 : index
    %c0_119 = arith.constant 0 : index
    %c0_120 = arith.constant 0 : index
    %145 = vector.load %arg7[%c5_118, %c0_119, %c0_120] : memref<9x4x4xbf16, #tpu.memory_space<vmem>>, vector<1x4x4xbf16>
    %146 = vector.shape_cast %145 : vector<1x4x4xbf16> to vector<4x4xbf16>
    %cst_121 = arith.constant dense<0.000000e+00> : vector<256x4xf32>
    %147 = tpu.matmul %144, %146, %cst_121 {dimension_numbers = #tpu.dot_dimension_numbers<[1], [0], [0], [1], [0, 0, 1, 1], [], []>} : vector<256x4xbf16>, vector<4x4xbf16>, vector<256x4xf32> -> vector<256x4xf32>
    %148 = arith.addf %141, %147 : vector<256x4xf32>
    %c2_122 = arith.constant 2 : index
    %c0_123 = arith.constant 0 : index
    %c0_124 = arith.constant 0 : index
    %149 = vector.load %arg11[%c2_122, %c0_123, %c0_124] : memref<18x18x4xf32, #tpu.memory_space<vmem>>, vector<16x16x4xf32>
    %150 = vector.shape_cast %149 : vector<16x16x4xf32> to vector<256x4xf32>
    %151 = arith.truncf %150 : vector<256x4xf32> to vector<256x4xbf16>
    %c6_125 = arith.constant 6 : index
    %c0_126 = arith.constant 0 : index
    %c0_127 = arith.constant 0 : index
    %152 = vector.load %arg7[%c6_125, %c0_126, %c0_127] : memref<9x4x4xbf16, #tpu.memory_space<vmem>>, vector<1x4x4xbf16>
    %153 = vector.shape_cast %152 : vector<1x4x4xbf16> to vector<4x4xbf16>
    %cst_128 = arith.constant dense<0.000000e+00> : vector<256x4xf32>
    %154 = tpu.matmul %151, %153, %cst_128 {dimension_numbers = #tpu.dot_dimension_numbers<[1], [0], [0], [1], [0, 0, 1, 1], [], []>} : vector<256x4xbf16>, vector<4x4xbf16>, vector<256x4xf32> -> vector<256x4xf32>
    %155 = arith.addf %148, %154 : vector<256x4xf32>
    %c2_129 = arith.constant 2 : index
    %c1_130 = arith.constant 1 : index
    %c0_131 = arith.constant 0 : index
    %156 = vector.load %arg11[%c2_129, %c1_130, %c0_131] : memref<18x18x4xf32, #tpu.memory_space<vmem>>, vector<16x16x4xf32>
    %157 = vector.shape_cast %156 : vector<16x16x4xf32> to vector<256x4xf32>
    %158 = arith.truncf %157 : vector<256x4xf32> to vector<256x4xbf16>
    %c7_132 = arith.constant 7 : index
    %c0_133 = arith.constant 0 : index
    %c0_134 = arith.constant 0 : index
    %159 = vector.load %arg7[%c7_132, %c0_133, %c0_134] : memref<9x4x4xbf16, #tpu.memory_space<vmem>>, vector<1x4x4xbf16>
    %160 = vector.shape_cast %159 : vector<1x4x4xbf16> to vector<4x4xbf16>
    %cst_135 = arith.constant dense<0.000000e+00> : vector<256x4xf32>
    %161 = tpu.matmul %158, %160, %cst_135 {dimension_numbers = #tpu.dot_dimension_numbers<[1], [0], [0], [1], [0, 0, 1, 1], [], []>} : vector<256x4xbf16>, vector<4x4xbf16>, vector<256x4xf32> -> vector<256x4xf32>
    %162 = arith.addf %155, %161 : vector<256x4xf32>
    %c2_136 = arith.constant 2 : index
    %c2_137 = arith.constant 2 : index
    %c0_138 = arith.constant 0 : index
    %163 = vector.load %arg11[%c2_136, %c2_137, %c0_138] : memref<18x18x4xf32, #tpu.memory_space<vmem>>, vector<16x16x4xf32>
    %164 = vector.shape_cast %163 : vector<16x16x4xf32> to vector<256x4xf32>
    %165 = arith.truncf %164 : vector<256x4xf32> to vector<256x4xbf16>
    %c8_139 = arith.constant 8 : index
    %c0_140 = arith.constant 0 : index
    %c0_141 = arith.constant 0 : index
    %166 = vector.load %arg7[%c8_139, %c0_140, %c0_141] : memref<9x4x4xbf16, #tpu.memory_space<vmem>>, vector<1x4x4xbf16>
    %167 = vector.shape_cast %166 : vector<1x4x4xbf16> to vector<4x4xbf16>
    %cst_142 = arith.constant dense<0.000000e+00> : vector<256x4xf32>
    %168 = tpu.matmul %165, %167, %cst_142 {dimension_numbers = #tpu.dot_dimension_numbers<[1], [0], [0], [1], [0, 0, 1, 1], [], []>} : vector<256x4xbf16>, vector<4x4xbf16>, vector<256x4xf32> -> vector<256x4xf32>
    %169 = arith.addf %162, %168 : vector<256x4xf32>
    %c0_143 = arith.constant 0 : index
    %c0_144 = arith.constant 0 : index
    %170 = vector.load %arg8[%c0_143, %c0_144] : memref<1x4xf32, #tpu.memory_space<vmem>>, vector<1x4xf32>
    %171 = vector.broadcast %170 : vector<1x4xf32> to vector<256x4xf32>
    %172 = arith.addf %169, %171 : vector<256x4xf32>
    %cst_145 = arith.constant 0.000000e+00 : f32
    %173 = vector.broadcast %cst_145 : f32 to vector<256x4xf32>
    %174 = arith.cmpf ogt, %172, %173 : vector<256x4xf32>
    %cst_146 = arith.constant 2.000000e-01 : f32
    %175 = vector.broadcast %cst_146 : f32 to vector<256x4xf32>
    %176 = arith.mulf %175, %172 : vector<256x4xf32>
    %177 = arith.select %174, %172, %176 : vector<256x4xi1>, vector<256x4xf32>
    %178 = vector.shape_cast %177 : vector<256x4xf32> to vector<1x16x16x4xf32>
    %c0_147 = arith.constant 0 : index
    %c0_148 = arith.constant 0 : index
    %c0_149 = arith.constant 0 : index
    %c0_150 = arith.constant 0 : index
    %179 = vector.load %arg9[%c0_147, %c0_148, %c0_149, %c0_150] : memref<1x16x16x4xf32, #tpu.memory_space<vmem>>, vector<1x16x16x4xf32>
    tpu.vector_store %arg9[%c0_147, %c0_148, %c0_149, %c0_150], %178 {strides = array<i32>} : memref<1x16x16x4xf32, #tpu.memory_space<vmem>>, vector<1x16x16x4xf32>,
    return
  }
  func.func @transform_0(%arg0: i32) -> (i32, i32, i32, i32) {
    %c0_i32 = arith.constant 0 : i32
    %c0_i32_0 = arith.constant 0 : i32
    %c0_i32_1 = arith.constant 0 : i32
    %c0_i32_2 = arith.constant 0 : i32
    return %arg0, %c0_i32, %c0_i32_0, %c0_i32_1 : i32, i32, i32, i32
  }
  func.func @transform_1(%arg0: i32) -> (i32, i32, i32, i32) {
    %c0_i32 = arith.constant 0 : i32
    %c0_i32_0 = arith.constant 0 : i32
    %c0_i32_1 = arith.constant 0 : i32
    %c0_i32_2 = arith.constant 0 : i32
    return %arg0, %c0_i32, %c0_i32_0, %c0_i32_1 : i32, i32, i32, i32
  }
  func.func @transform_2(%arg0: i32) -> (i32, i32) {
    %c0_i32 = arith.constant 0 : i32
    %c0_i32_0 = arith.constant 0 : i32
    %c0_i32_1 = arith.constant 0 : i32
    return %c0_i32, %c0_i32_0 : i32, i32
  }
  func.func @transform_3(%arg0: i32) -> (i32, i32) {
    %c0_i32 = arith.constant 0 : i32
    %c0_i32_0 = arith.constant 0 : i32
    %c0_i32_1 = arith.constant 0 : i32
    return %c0_i32, %c0_i32_0 : i32, i32
  }
  func.func @transform_4(%arg0: i32) -> (i32, i32, i32) {
    %c0_i32 = arith.constant 0 : i32
    %c0_i32_0 = arith.constant 0 : i32
    %c0_i32_1 = arith.constant 0 : i32
    %c0_i32_2 = arith.constant 0 : i32
    return %c0_i32, %c0_i32_0, %c0_i32_1 : i32, i32, i32
  }
  func.func @transform_5(%arg0: i32) -> (i32, i32) {
    %c0_i32 = arith.constant 0 : i32
    %c0_i32_0 = arith.constant 0 : i32
    %c0_i32_1 = arith.constant 0 : i32
    return %c0_i32, %c0_i32_0 : i32, i32
  }
  func.func @transform_6(%arg0: i32) -> (i32, i32, i32) {
    %c0_i32 = arith.constant 0 : i32
    %c0_i32_0 = arith.constant 0 : i32
    %c0_i32_1 = arith.constant 0 : i32
    %c0_i32_2 = arith.constant 0 : i32
    return %c0_i32, %c0_i32_0, %c0_i32_1 : i32, i32, i32
  }
  func.func @transform_7(%arg0: i32) -> (i32, i32) {
    %c0_i32 = arith.constant 0 : i32
    %c0_i32_0 = arith.constant 0 : i32
    %c0_i32_1 = arith.constant 0 : i32
    return %c0_i32, %c0_i32_0 : i32, i32
  }
  func.func @transform_8(%arg0: i32) -> (i32, i32, i32, i32) {
    %c0_i32 = arith.constant 0 : i32
    %c0_i32_0 = arith.constant 0 : i32
    %c0_i32_1 = arith.constant 0 : i32
    %c0_i32_2 = arith.constant 0 : i32
    return %arg0, %c0_i32, %c0_i32_0, %c0_i32_1 : i32, i32, i32, i32
  }
}

</mosaic_0001>

<llo_original>
// kernel: tpu_custom_call.1
$region0: #{tpu_custom_call.1}
  #allocation0 [shape = 'u32[]', space=smem, size = 0x4, offset = 0x4, fixed_abs, tag = 'smem constant byte address 0x4 - core index']
  #allocation1 [shape = 'u32[144,128]{1,0:T(1,128)}', space=vmem, size = 0x12000, scoped, tag = 'internal scratch']
  #allocation2 [shape = 'f32[18,18,8]{2,1,0:T(8,128)}', space=vmem, size = 0x36000, scoped, tag = 'scratch operand']
  #allocation3 [shape = 'f32[18,18,4]{2,1,0:T(8,128)}', space=vmem, size = 0x36000, scoped, tag = 'scratch operand']
  %s0 = inlined_call_operand.vmem [shape: f32[2,8,8,8], index: 0, kind: input, shape index: {}]
  %s1 = inlined_call_operand.vmem [shape: f32[2,16,16,4], index: 1, kind: input, shape index: {}]
  %s2 = inlined_call_operand.vmem [shape: bf16[8,16], index: 2, kind: input, shape index: {}]
  %s3 = inlined_call_operand.vmem [shape: f32[1,16], index: 3, kind: input, shape index: {}]
  %s4 = inlined_call_operand.vmem [shape: bf16[9,8,4], index: 4, kind: input, shape index: {}]
  %s5 = inlined_call_operand.vmem [shape: f32[1,4], index: 5, kind: input, shape index: {}]
  %s6 = inlined_call_operand.vmem [shape: bf16[9,4,4], index: 6, kind: input, shape index: {}]
  %s7 = inlined_call_operand.vmem [shape: f32[1,4], index: 7, kind: input, shape index: {}]
  %s8 = inlined_call_operand.vmem [shape: f32[2,16,16,4], index: 8, kind: output, shape index: {}]
  %s9 = sld [smem:[#allocation0]]
  $region69: #{tpu_custom_call.1} parent=0
    _
  %s11 = ssub.s32 1, %s9
  %s12 = scalar_select 0, %s11, %s9
  loop: start=0, step=1, limit=4
  $region2: #{tpu_custom_call.1} parent=0 // loop_pre_header
    _
  $region3: #{tpu_custom_call.1} parent=0 // loop_header
    %s14 = sphi 0, %s18
    %p15 = scmp.ge.s32.totalorder %s14, 4
    %s24 = sphi 0, %s26
    %s27 = sphi 0, %s24
    %s28 = sphi 0, %s27
    %s44 = sphi 0, %s28
    %s50 = sphi 0, %s52
    %s53 = sphi 0, %s50
    %s54 = sphi 0, %s53
    %s70 = sphi 0, %s54
    %s74 = sphi 0, %s74
    %s76 = sphi 0, %s74
    %s77 = sphi 0, %s76
    %s91 = sphi 0, %s77
    %s95 = sphi 0, %s95
    %s97 = sphi 0, %s95
    %s98 = sphi 0, %s97
    %s112 = sphi 0, %s98
    %s116 = sphi 0, %s116
    %s118 = sphi 0, %s116
    %s119 = sphi 0, %s118
    %s133 = sphi 0, %s119
    %s137 = sphi 0, %s137
    %s139 = sphi 0, %s137
    %s140 = sphi 0, %s139
    %s154 = sphi 0, %s140
    %s158 = sphi 0, %s158
    %s160 = sphi 0, %s158
    %s161 = sphi 0, %s160
    %s175 = sphi 0, %s161
    %s179 = sphi 0, %s179
    %s181 = sphi 0, %s179
    %s182 = sphi 0, %s181
    %s196 = sphi 0, %s182
    %s202 = sphi 0, %s204
    %s205 = sphi 0, %s202
    %s206 = sphi 0, %s205
    %s222 = sphi 0, %s206
  $region4: #{tpu_custom_call.1} parent=0 // loop_header_branch
    %17 = sbr.rel (%p15) target = $region8
  $region5: #{tpu_custom_call.1} parent=0 // loop_body
    %s19 = ssub.s32 %s14, 1
    %s20 = ssub.s32 %s14, 2
    %s21 = sadd.s32 %s14, 1
    %s22 = ssub.s32 %s14, %s21
    %p23 = scmp.eq.s32.totalorder %s22, 0
    %s25 = sadd.s32 %s24, 1
    %s26 = scalar_select %p23, %s24, %s25
    %p29 = pneg %p23
    %p30 = scmp.eq.s32.totalorder %s14, 1
    %p31 = por %p29, %p30
    %p32 = scmp.ne.s32.totalorder %s24, %s27
    %p33 = scmp.eq.s32.totalorder %s14, 0
    %p34 = por %p32, %p33
    %p35 = scmp.ne.s32.totalorder %s24, %s27
    %p36 = scmp.eq.s32.totalorder %s19, 1
    %p37 = por %p35, %p36
    %p38 = scmp.ne.s32.totalorder %s27, %s28
    %p39 = scmp.eq.s32.totalorder %s19, 0
    %p40 = por %p38, %p39
    %p41 = scmp.ne.s32.totalorder %s27, %s28
    %p42 = scmp.eq.s32.totalorder %s20, 1
    %p43 = por %p41, %p42
    %p45 = scmp.ne.s32.totalorder %s28, %s44
    %p46 = scmp.eq.s32.totalorder %s20, 0
    %p47 = por %p45, %p46
    %s48 = ssub.s32 %s14, %s21
    %p49 = scmp.eq.s32.totalorder %s48, 0
    %s51 = sadd.s32 %s50, 1
    %s52 = scalar_select %p49, %s50, %s51
    %p55 = pneg %p49
    %p56 = scmp.eq.s32.totalorder %s14, 1
    %p57 = por %p55, %p56
    %p58 = scmp.ne.s32.totalorder %s50, %s53
    %p59 = scmp.eq.s32.totalorder %s14, 0
    %p60 = por %p58, %p59
    %p61 = scmp.ne.s32.totalorder %s50, %s53
    %p62 = scmp.eq.s32.totalorder %s19, 1
    %p63 = por %p61, %p62
    %p64 = scmp.ne.s32.totalorder %s53, %s54
    %p65 = scmp.eq.s32.totalorder %s19, 0
    %p66 = por %p64, %p65
    %p67 = scmp.ne.s32.totalorder %s53, %s54
    %p68 = scmp.eq.s32.totalorder %s20, 1
    %p69 = por %p67, %p68
    %p71 = scmp.ne.s32.totalorder %s54, %s70
    %p72 = scmp.eq.s32.totalorder %s20, 0
    %p73 = por %p71, %p72
    %s75 = sadd.s32 %s74, 1
    %p78 = scmp.eq.s32.totalorder %s14, 1
    %p79 = scmp.ne.s32.totalorder %s74, %s76
    %p80 = scmp.eq.s32.totalorder %s14, 0
    %p81 = por %p79, %p80
    %p82 = scmp.ne.s32.totalorder %s74, %s76
    %p83 = scmp.eq.s32.totalorder %s19, 1
    %p84 = por %p82, %p83
    %p85 = scmp.ne.s32.totalorder %s76, %s77
    %p86 = scmp.eq.s32.totalorder %s19, 0
    %p87 = por %p85, %p86
    %p88 = scmp.ne.s32.totalorder %s76, %s77
    %p89 = scmp.eq.s32.totalorder %s20, 1
    %p90 = por %p88, %p89
    %p92 = scmp.ne.s32.totalorder %s77, %s91
    %p93 = scmp.eq.s32.totalorder %s20, 0
    %p94 = por %p92, %p93
    %s96 = sadd.s32 %s95, 1
    %p99 = scmp.eq.s32.totalorder %s14, 1
    %p100 = scmp.ne.s32.totalorder %s95, %s97
    %p101 = scmp.eq.s32.totalorder %s14, 0
    %p102 = por %p100, %p101
    %p103 = scmp.ne.s32.totalorder %s95, %s97
    %p104 = scmp.eq.s32.totalorder %s19, 1
    %p105 = por %p103, %p104
    %p106 = scmp.ne.s32.totalorder %s97, %s98
    %p107 = scmp.eq.s32.totalorder %s19, 0
    %p108 = por %p106, %p107
    %p109 = scmp.ne.s32.totalorder %s97, %s98
    %p110 = scmp.eq.s32.totalorder %s20, 1
    %p111 = por %p109, %p110
    %p113 = scmp.ne.s32.totalorder %s98, %s112
    %p114 = scmp.eq.s32.totalorder %s20, 0
    %p115 = por %p113, %p114
    %s117 = sadd.s32 %s116, 1
    %p120 = scmp.eq.s32.totalorder %s14, 1
    %p121 = scmp.ne.s32.totalorder %s116, %s118
    %p122 = scmp.eq.s32.totalorder %s14, 0
    %p123 = por %p121, %p122
    %p124 = scmp.ne.s32.totalorder %s116, %s118
    %p125 = scmp.eq.s32.totalorder %s19, 1
    %p126 = por %p124, %p125
    %p127 = scmp.ne.s32.totalorder %s118, %s119
    %p128 = scmp.eq.s32.totalorder %s19, 0
    %p129 = por %p127, %p128
    %p130 = scmp.ne.s32.totalorder %s118, %s119
    %p131 = scmp.eq.s32.totalorder %s20, 1
    %p132 = por %p130, %p131
    %p134 = scmp.ne.s32.totalorder %s119, %s133
    %p135 = scmp.eq.s32.totalorder %s20, 0
    %p136 = por %p134, %p135
    %s138 = sadd.s32 %s137, 1
    %p141 = scmp.eq.s32.totalorder %s14, 1
    %p142 = scmp.ne.s32.totalorder %s137, %s139
    %p143 = scmp.eq.s32.totalorder %s14, 0
    %p144 = por %p142, %p143
    %p145 = scmp.ne.s32.totalorder %s137, %s139
    %p146 = scmp.eq.s32.totalorder %s19, 1
    %p147 = por %p145, %p146
    %p148 = scmp.ne.s32.totalorder %s139, %s140
    %p149 = scmp.eq.s32.totalorder %s19, 0
    %p150 = por %p148, %p149
    %p151 = scmp.ne.s32.totalorder %s139, %s140
    %p152 = scmp.eq.s32.totalorder %s20, 1
    %p153 = por %p151, %p152
    %p155 = scmp.ne.s32.totalorder %s140, %s154
    %p156 = scmp.eq.s32.totalorder %s20, 0
    %p157 = por %p155, %p156
    %s159 = sadd.s32 %s158, 1
    %p162 = scmp.eq.s32.totalorder %s14, 1
    %p163 = scmp.ne.s32.totalorder %s158, %s160
    %p164 = scmp.eq.s32.totalorder %s14, 0
    %p165 = por %p163, %p164
    %p166 = scmp.ne.s32.totalorder %s158, %s160
    %p167 = scmp.eq.s32.totalorder %s19, 1
    %p168 = por %p166, %p167
    %p169 = scmp.ne.s32.totalorder %s160, %s161
    %p170 = scmp.eq.s32.totalorder %s19, 0
    %p171 = por %p169, %p170
    %p172 = scmp.ne.s32.totalorder %s160, %s161
    %p173 = scmp.eq.s32.totalorder %s20, 1
    %p174 = por %p172, %p173
    %p176 = scmp.ne.s32.totalorder %s161, %s175
    %p177 = scmp.eq.s32.totalorder %s20, 0
    %p178 = por %p176, %p177
    %s180 = sadd.s32 %s179, 1
    %p183 = scmp.eq.s32.totalorder %s14, 1
    %p184 = scmp.ne.s32.totalorder %s179, %s181
    %p185 = scmp.eq.s32.totalorder %s14, 0
    %p186 = por %p184, %p185
    %p187 = scmp.ne.s32.totalorder %s179, %s181
    %p188 = scmp.eq.s32.totalorder %s19, 1
    %p189 = por %p187, %p188
    %p190 = scmp.ne.s32.totalorder %s181, %s182
    %p191 = scmp.eq.s32.totalorder %s19, 0
    %p192 = por %p190, %p191
    %p193 = scmp.ne.s32.totalorder %s181, %s182
    %p194 = scmp.eq.s32.totalorder %s20, 1
    %p195 = por %p193, %p194
    %p197 = scmp.ne.s32.totalorder %s182, %s196
    %p198 = scmp.eq.s32.totalorder %s20, 0
    %p199 = por %p197, %p198
    %s200 = ssub.s32 %s14, %s21
    %p201 = scmp.eq.s32.totalorder %s200, 0
    %s203 = sadd.s32 %s202, 1
    %s204 = scalar_select %p201, %s202, %s203
    %p207 = pneg %p201
    %p208 = scmp.eq.s32.totalorder %s14, 1
    %p209 = por %p207, %p208
    %p210 = scmp.ne.s32.totalorder %s202, %s205
    %p211 = scmp.eq.s32.totalorder %s14, 0
    %p212 = por %p210, %p211
    %p213 = scmp.ne.s32.totalorder %s202, %s205
    %p214 = scmp.eq.s32.totalorder %s19, 1
    %p215 = por %p213, %p214
    %p216 = scmp.ne.s32.totalorder %s205, %s206
    %p217 = scmp.eq.s32.totalorder %s19, 0
    %p218 = por %p216, %p217
    %p219 = scmp.ne.s32.totalorder %s205, %s206
    %p220 = scmp.eq.s32.totalorder %s20, 1
    %p221 = por %p219, %p220
    %p223 = scmp.ne.s32.totalorder %s206, %s222
    %p224 = scmp.eq.s32.totalorder %s20, 0
    %p225 = por %p223, %p224
    %p226 = scmp.le.s32.totalorder 1, %s14
    %p227 = scmp.lt.s32.totalorder %s14, 3
    %p228 = pnand %p226, %p227
    %p229 = pneg %p228
    // Predicated region
    $region9: #{tpu_custom_call.1} parent=5 // pred_check
      _
    $region10: #{tpu_custom_call.1} parent=5 // pred_check_branch
      %231 = sbr.rel (%p228) target = $region12
    $region11: #{tpu_custom_call.1} parent=5 // pred_region
      %s232 = ssub.s32 %s14, 1
      // Predicated region
      $region13: #{tpu_custom_call.1} parent=11 // pred_check
        %p233 = pneg %p87
      $region14: #{tpu_custom_call.1} parent=11 // pred_check_branch
        %235 = sbr.rel (%p233) target = $region16
      $region15: #{tpu_custom_call.1} parent=11 // pred_region
        _
      $region16: #{tpu_custom_call.1} parent=11 // pred_fallthru
        _
      // Predicated region
      $region17: #{tpu_custom_call.1} parent=11 // pred_check
        %p236 = pneg %p108
      $region18: #{tpu_custom_call.1} parent=11 // pred_check_branch
        %238 = sbr.rel (%p236) target = $region20
      $region19: #{tpu_custom_call.1} parent=11 // pred_region
        _
      $region20: #{tpu_custom_call.1} parent=11 // pred_fallthru
        _
      // Predicated region
      $region21: #{tpu_custom_call.1} parent=11 // pred_check
        %p239 = pneg %p129
      $region22: #{tpu_custom_call.1} parent=11 // pred_check_branch
        %241 = sbr.rel (%p239) target = $region24
      $region23: #{tpu_custom_call.1} parent=11 // pred_region
        _
      $region24: #{tpu_custom_call.1} parent=11 // pred_fallthru
        _
      // Predicated region
      $region25: #{tpu_custom_call.1} parent=11 // pred_check
        %p242 = pneg %p150
      $region26: #{tpu_custom_call.1} parent=11 // pred_check_branch
        %244 = sbr.rel (%p242) target = $region28
      $region27: #{tpu_custom_call.1} parent=11 // pred_region
        _
      $region28: #{tpu_custom_call.1} parent=11 // pred_fallthru
        _
      // Predicated region
      $region29: #{tpu_custom_call.1} parent=11 // pred_check
        %p245 = pneg %p171
      $region30: #{tpu_custom_call.1} parent=11 // pred_check_branch
        %247 = sbr.rel (%p245) target = $region32
      $region31: #{tpu_custom_call.1} parent=11 // pred_region
        _
      $region32: #{tpu_custom_call.1} parent=11 // pred_fallthru
        _
      // Predicated region
      $region33: #{tpu_custom_call.1} parent=11 // pred_check
        %p248 = pneg %p192
      $region34: #{tpu_custom_call.1} parent=11 // pred_check_branch
        %250 = sbr.rel (%p248) target = $region36
      $region35: #{tpu_custom_call.1} parent=11 // pred_region
        _
      $region36: #{tpu_custom_call.1} parent=11 // pred_fallthru
        _
    $region12: #{tpu_custom_call.1} parent=5 // pred_fallthru
      _
    %p251 = scmp.lt.s32.totalorder %s14, 2
    // Predicated region
    $region37: #{tpu_custom_call.1} parent=5 // pred_check
      %p252 = pneg %p251
    $region38: #{tpu_custom_call.1} parent=5 // pred_check_branch
      %254 = sbr.rel (%p252) target = $region40
    $region39: #{tpu_custom_call.1} parent=5 // pred_region
      // Predicated region
      $region41: #{tpu_custom_call.1} parent=39 // pred_check
        %p255 = pneg %p34
      $region42: #{tpu_custom_call.1} parent=39 // pred_check_branch
        %257 = sbr.rel (%p255) target = $region44
      $region43: #{tpu_custom_call.1} parent=39 // pred_region
        %p258 = scmp.lt.s32.totalorder %s14, 1
        %s259 = scalar_select %p258, %s14, 1
        %s260 = smul.addr %s259, 8
        %s261 = smul.addr %s260, 8
        %s262 = scalar_lea.vmem %s0, %s261
      $region44: #{tpu_custom_call.1} parent=39 // pred_fallthru
        _
      // Predicated region
      $region45: #{tpu_custom_call.1} parent=39 // pred_check
        %p263 = pneg %p60
      $region46: #{tpu_custom_call.1} parent=39 // pred_check_branch
        %265 = sbr.rel (%p263) target = $region48
      $region47: #{tpu_custom_call.1} parent=39 // pred_region
        %p266 = scmp.lt.s32.totalorder %s14, 1
        %s267 = scalar_select %p266, %s14, 1
        %s268 = smul.addr %s267, 32
        %s269 = smul.addr %s268, 8
        %s270 = scalar_lea.vmem %s1, %s269
      $region48: #{tpu_custom_call.1} parent=39 // pred_fallthru
        _
    $region40: #{tpu_custom_call.1} parent=5 // pred_fallthru
      _
    %p271 = scmp.le.s32.totalorder 1, %s14
    %p272 = scmp.lt.s32.totalorder %s14, 3
    %p273 = pnand %p271, %p272
    %p274 = pneg %p273
    // Predicated region
    $region49: #{tpu_custom_call.1} parent=5 // pred_check
      _
    $region50: #{tpu_custom_call.1} parent=5 // pred_check_branch
      %276 = sbr.rel (%p273) target = $region52
    $region51: #{tpu_custom_call.1} parent=5 // pred_region
      %s277 = ssub.s32 %s14, 1
      %p278 = scmp.lt.s32.totalorder %s19, 1
      %s279 = scalar_select %p278, %s19, 1
      %s280 = smul.addr %s279, 8
      %s281 = smul.addr %s280, 8
      %s282 = scalar_lea.vmem %s0, %s281
      %p283 = pneg %p40
      %p284 = pneg %p37
      %p285 = scmp.lt.s32.totalorder %s19, 1
      %s286 = scalar_select %p285, %s19, 1
      %s287 = smul.addr %s286, 32
      %s288 = smul.addr %s287, 8
      %s289 = scalar_lea.vmem %s1, %s288
      %p290 = pneg %p66
      %p291 = pneg %p63
      %p292 = pneg %p87
      %p293 = pneg %p84
      %p294 = pneg %p108
      %p295 = pneg %p105
      %p296 = pneg %p129
      %p297 = pneg %p126
      %p298 = pneg %p150
      %p299 = pneg %p147
      %p300 = pneg %p171
      %p301 = pneg %p168
      %p302 = pneg %p192
      %p303 = pneg %p189
      %p304 = pneg %p218
      %p305 = pneg %p215
      %p306 = scmp.lt.s32.totalorder %s19, 1
      %s307 = scalar_select %p306, %s19, 1
      %s308 = smul.addr %s307, 32
      %s309 = smul.addr %s308, 8
      %s310 = scalar_lea.vmem %s8, %s309
      %p311 = scmp.lt.s32.totalorder %s19, 1
      %s312 = scalar_select %p311, %s19, 1
      %s313 = smul.addr %s312, 8
      %s314 = smul.addr %s313, 8
      %s315 = scalar_lea.vmem %s0, %s314
      %p316 = scmp.lt.s32.totalorder %s19, 1
      %s317 = scalar_select %p316, %s19, 1
      %s318 = smul.addr %s317, 32
      %s319 = smul.addr %s318, 8
      %s320 = scalar_lea.vmem %s1, %s319
      %p321 = scmp.lt.s32.totalorder %s19, 1
      %s322 = scalar_select %p321, %s19, 1
      %s323 = smul.addr %s322, 32
      %s324 = smul.addr %s323, 8
      %s325 = scalar_lea.vmem %s8, %s324
      %p327 = scmp.eq.s32.totalorder %s19, 0
      // Predicated region
      $region53: #{tpu_custom_call.1} parent=51 // pred_check
        %p328 = pneg %p327
      $region54: #{tpu_custom_call.1} parent=51 // pred_check_branch
        %330 = sbr.rel (%p328) target = $region56
      $region55: #{tpu_custom_call.1} parent=51 // pred_region
        %vm331 = vcmask 64512
        %332 = vst.msk [vmem:[#allocation2] sm:$0xff] %vm331, 0.0
        %333 = vst.msk [vmem:[#allocation2 + $0x8] sm:$0xff] %vm331, 0.0
        %vm334 = vcmask 58368
        %335 = vst.msk [vmem:[#allocation2 + $0x10] sm:$0x3] %vm334, 0.0
        %s336 = scalar_lea.vmem [#allocation2], 408
        %337 = vst.msk [vmem:[%s336] sm:$0xff] %vm331, 0.0
        %338 = vst.msk [vmem:[%s336 + $0x8] sm:$0xff] %vm331, 0.0
        %339 = vst.msk [vmem:[%s336 + $0x10] sm:$0x3] %vm334, 0.0
        %vm340 = vcmask 57344
        %341 = vst.msk [vmem:[#allocation2] sm:$0x1] %vm340, 0.0
        %342 = vst.msk [vmem:[#allocation2 + $0x18] sm:$0x1] %vm340, 0.0
        %343 = vst.msk [vmem:[#allocation2 + $0x30] sm:$0x1] %vm340, 0.0
        %344 = vst.msk [vmem:[#allocation2 + $0x48] sm:$0x1] %vm340, 0.0
        %345 = vst.msk [vmem:[#allocation2 + $0x60] sm:$0x1] %vm340, 0.0
        %346 = vst.msk [vmem:[#allocation2 + $0x78] sm:$0x1] %vm340, 0.0
        %347 = vst.msk [vmem:[#allocation2 + $0x90] sm:$0x1] %vm340, 0.0
        %348 = vst.msk [vmem:[#allocation2 + $0xa8] sm:$0x1] %vm340, 0.0
        %349 = vst.msk [vmem:[#allocation2 + $0xc0] sm:$0x1] %vm340, 0.0
        %350 = vst.msk [vmem:[#allocation2 + $0xd8] sm:$0x1] %vm340, 0.0
        %351 = vst.msk [vmem:[#allocation2 + $0xf0] sm:$0x1] %vm340, 0.0
        %352 = vst.msk [vmem:[#allocation2 + $0x108] sm:$0x1] %vm340, 0.0
        %353 = vst.msk [vmem:[#allocation2 + $0x120] sm:$0x1] %vm340, 0.0
        %354 = vst.msk [vmem:[#allocation2 + $0x138] sm:$0x1] %vm340, 0.0
        %355 = vst.msk [vmem:[#allocation2 + $0x150] sm:$0x1] %vm340, 0.0
        %356 = vst.msk [vmem:[#allocation2 + $0x168] sm:$0x1] %vm340, 0.0
        %357 = vst.msk [vmem:[#allocation2 + $0x180] sm:$0x1] %vm340, 0.0
        %358 = vst.msk [vmem:[#allocation2 + $0x198] sm:$0x1] %vm340, 0.0
        %359 = vst.msk [vmem:[#allocation2 + $0x11] sm:$0x1] %vm340, 0.0
        %360 = vst.msk [vmem:[#allocation2 + $0x29] sm:$0x1] %vm340, 0.0
        %361 = vst.msk [vmem:[#allocation2 + $0x41] sm:$0x1] %vm340, 0.0
        %362 = vst.msk [vmem:[#allocation2 + $0x59] sm:$0x1] %vm340, 0.0
        %363 = vst.msk [vmem:[#allocation2 + $0x71] sm:$0x1] %vm340, 0.0
        %364 = vst.msk [vmem:[#allocation2 + $0x89] sm:$0x1] %vm340, 0.0
        %365 = vst.msk [vmem:[#allocation2 + $0xa1] sm:$0x1] %vm340, 0.0
        %366 = vst.msk [vmem:[#allocation2 + $0xb9] sm:$0x1] %vm340, 0.0
        %367 = vst.msk [vmem:[#allocation2 + $0xd1] sm:$0x1] %vm340, 0.0
        %368 = vst.msk [vmem:[#allocation2 + $0xe9] sm:$0x1] %vm340, 0.0
        %369 = vst.msk [vmem:[#allocation2 + $0x101] sm:$0x1] %vm340, 0.0
        %370 = vst.msk [vmem:[#allocation2 + $0x119] sm:$0x1] %vm340, 0.0
        %371 = vst.msk [vmem:[#allocation2 + $0x131] sm:$0x1] %vm340, 0.0
        %372 = vst.msk [vmem:[#allocation2 + $0x149] sm:$0x1] %vm340, 0.0
        %373 = vst.msk [vmem:[#allocation2 + $0x161] sm:$0x1] %vm340, 0.0
        %374 = vst.msk [vmem:[#allocation2 + $0x179] sm:$0x1] %vm340, 0.0
        %375 = vst.msk [vmem:[#allocation2 + $0x191] sm:$0x1] %vm340, 0.0
        %376 = vst.msk [vmem:[#allocation2 + $0x1a9] sm:$0x1] %vm340, 0.0
        %vm377 = vcmask 31744
        %378 = vst.msk [vmem:[#allocation3] sm:$0xff] %vm377, 0.0
        %379 = vst.msk [vmem:[#allocation3 + $0x8] sm:$0xff] %vm377, 0.0
        %vm380 = vcmask 25600
        %381 = vst.msk [vmem:[#allocation3 + $0x10] sm:$0x3] %vm380, 0.0
        %s382 = scalar_lea.vmem [#allocation3], 408
        %383 = vst.msk [vmem:[%s382] sm:$0xff] %vm377, 0.0
        %384 = vst.msk [vmem:[%s382 + $0x8] sm:$0xff] %vm377, 0.0
        %385 = vst.msk [vmem:[%s382 + $0x10] sm:$0x3] %vm380, 0.0
        %vm386 = vcmask 24576
        %387 = vst.msk [vmem:[#allocation3] sm:$0x1] %vm386, 0.0
        %388 = vst.msk [vmem:[#allocation3 + $0x18] sm:$0x1] %vm386, 0.0
        %389 = vst.msk [vmem:[#allocation3 + $0x30] sm:$0x1] %vm386, 0.0
        %390 = vst.msk [vmem:[#allocation3 + $0x48] sm:$0x1] %vm386, 0.0
        %391 = vst.msk [vmem:[#allocation3 + $0x60] sm:$0x1] %vm386, 0.0
        %392 = vst.msk [vmem:[#allocation3 + $0x78] sm:$0x1] %vm386, 0.0
        %393 = vst.msk [vmem:[#allocation3 + $0x90] sm:$0x1] %vm386, 0.0
        %394 = vst.msk [vmem:[#allocation3 + $0xa8] sm:$0x1] %vm386, 0.0
        %395 = vst.msk [vmem:[#allocation3 + $0xc0] sm:$0x1] %vm386, 0.0
        %396 = vst.msk [vmem:[#allocation3 + $0xd8] sm:$0x1] %vm386, 0.0
        %397 = vst.msk [vmem:[#allocation3 + $0xf0] sm:$0x1] %vm386, 0.0
        %398 = vst.msk [vmem:[#allocation3 + $0x108] sm:$0x1] %vm386, 0.0
        %399 = vst.msk [vmem:[#allocation3 + $0x120] sm:$0x1] %vm386, 0.0
        %400 = vst.msk [vmem:[#allocation3 + $0x138] sm:$0x1] %vm386, 0.0
        %401 = vst.msk [vmem:[#allocation3 + $0x150] sm:$0x1] %vm386, 0.0
        %402 = vst.msk [vmem:[#allocation3 + $0x168] sm:$0x1] %vm386, 0.0
        %403 = vst.msk [vmem:[#allocation3 + $0x180] sm:$0x1] %vm386, 0.0
        %404 = vst.msk [vmem:[#allocation3 + $0x198] sm:$0x1] %vm386, 0.0
        %405 = vst.msk [vmem:[#allocation3 + $0x11] sm:$0x1] %vm386, 0.0
        %406 = vst.msk [vmem:[#allocation3 + $0x29] sm:$0x1] %vm386, 0.0
        %407 = vst.msk [vmem:[#allocation3 + $0x41] sm:$0x1] %vm386, 0.0
        %408 = vst.msk [vmem:[#allocation3 + $0x59] sm:$0x1] %vm386, 0.0
        %409 = vst.msk [vmem:[#allocation3 + $0x71] sm:$0x1] %vm386, 0.0
        %410 = vst.msk [vmem:[#allocation3 + $0x89] sm:$0x1] %vm386, 0.0
        %411 = vst.msk [vmem:[#allocation3 + $0xa1] sm:$0x1] %vm386, 0.0
        %412 = vst.msk [vmem:[#allocation3 + $0xb9] sm:$0x1] %vm386, 0.0
        %413 = vst.msk [vmem:[#allocation3 + $0xd1] sm:$0x1] %vm386, 0.0
        %414 = vst.msk [vmem:[#allocation3 + $0xe9] sm:$0x1] %vm386, 0.0
        %415 = vst.msk [vmem:[#allocation3 + $0x101] sm:$0x1] %vm386, 0.0
        %416 = vst.msk [vmem:[#allocation3 + $0x119] sm:$0x1] %vm386, 0.0
        %417 = vst.msk [vmem:[#allocation3 + $0x131] sm:$0x1] %vm386, 0.0
        %418 = vst.msk [vmem:[#allocation3 + $0x149] sm:$0x1] %vm386, 0.0
        %419 = vst.msk [vmem:[#allocation3 + $0x161] sm:$0x1] %vm386, 0.0
        %420 = vst.msk [vmem:[#allocation3 + $0x179] sm:$0x1] %vm386, 0.0
        %421 = vst.msk [vmem:[#allocation3 + $0x191] sm:$0x1] %vm386, 0.0
        %422 = vst.msk [vmem:[#allocation3 + $0x1a9] sm:$0x1] %vm386, 0.0
      $region56: #{tpu_custom_call.1} parent=51 // pred_fallthru
        _
      %v423 = vld [vmem:[%s315] sm:$0xff]
      %v424 = vld [vmem:[%s315 + $0x8] sm:$0xff]
      %v425 = vld [vmem:[%s315 + $0x10] sm:$0xff]
      %v426 = vld [vmem:[%s315 + $0x18] sm:$0xff]
      %v427 = vld [vmem:[%s315 + $0x20] sm:$0xff]
      %v428 = vld [vmem:[%s315 + $0x28] sm:$0xff]
      %v429 = vld [vmem:[%s315 + $0x30] sm:$0xff]
      %v430 = vld [vmem:[%s315 + $0x38] sm:$0xff]
      %v431 = vpack.c.bf16 %v424, %v423
      %v432 = vpack.c.bf16 %v426, %v425
      %v433 = vpack.c.bf16 %v428, %v427
      %v434 = vpack.c.bf16 %v430, %v429
      %v435 = vld [vmem:[%s2] sm:$0xf]
      %v436 = vld [vmem:[%s3] sm:$0x1]
      %v438 = vlaneseq
      %v439 = vshrl.u32 %v438, 7
      %v440 = vsub.s32 0, %v439
      %v441 = vrot.slane %v436, %v440
      %vm443 = vcmask 64512
      %v445 = vsel %vm443, %v431, 0
      %v448 = vsel %vm443, %v432, 0
      %v451 = vsel %vm443, %v433, 0
      %v454 = vsel %vm443, %v434, 0
      %vm456 = vcmask 1043456
      %v458 = vsel %vm456, %v435, 0
      %460 = vmatprep.subr.bf16.mxu0 0
      %461 = vmatpush1.bf16.msra.mxu0 %v458
      %462 = vmatprep.subr.bf16.mxu0 0
      %463 = vmatpush1.bf16.msra.mxu0 0
      %464 = vmatprep.subr.bf16.mxu0 0
      %465 = vmatpush1.bf16.msra.mxu0 0
      %466 = vmatprep.subr.bf16.mxu0 0
      %467 = vmatpush1.bf16.msra.mxu0 0
      %468 = vmatprep.subr.bf16.mxu0 0
      %469 = vmatpush1.bf16.msra.mxu0 0
      %470 = vmatprep.subr.bf16.mxu0 0
      %471 = vmatpush1.bf16.msra.mxu0 0
      %472 = vmatprep.subr.bf16.mxu0 0
      %473 = vmatpush1.bf16.msra.mxu0 0
      %474 = vmatprep.subr.bf16.mxu0 0
      %475 = vmatpush1.bf16.msra.mxu0 0
      %476 = vmatprep.subr.bf16.mxu0 0
      %477 = vmatpush1.bf16.msra.mxu0 0
      %478 = vmatprep.subr.bf16.mxu0 0
      %479 = vmatpush1.bf16.msra.mxu0 0
      %480 = vmatprep.subr.bf16.mxu0 0
      %481 = vmatpush1.bf16.msra.mxu0 0
      %482 = vmatprep.subr.bf16.mxu0 0
      %483 = vmatpush1.bf16.msra.mxu0 0
      %484 = vmatprep.subr.bf16.mxu0 0
      %485 = vmatpush1.bf16.msra.mxu0 0
      %486 = vmatprep.subr.bf16.mxu0 0
      %487 = vmatpush1.bf16.msra.mxu0 0
      %488 = vmatprep.subr.bf16.mxu0 0
      %489 = vmatpush1.bf16.msra.mxu0 0
      %490 = vmatprep.subr.bf16.mxu0 0
      %491 = vmatpush1.bf16.msra.mxu0 0
      %492 = vmatprep.mubr.bf16.mxu0 0
      %493 = vmatmul.mubr.bf16.gmra.mrb[0].mxu0 %v445
      %v494 = vpop.f32.mrb[0].mxu0
      %v495 = vadd.f32 %v441, %v494
      %v496 = vpop.f32.mrb[0].mxu0
      %v497 = vpop.f32.mrb[0].mxu0
      %v498 = vadd.f32 %v441, %v497
      %v499 = vpop.f32.mrb[0].mxu0
      %500 = vmatprep.mubr.bf16.mxu0 0
      %501 = vmatmul.mubr.bf16.gmra.mrb[0].mxu0 %v448
      %v502 = vpop.f32.mrb[0].mxu0
      %v503 = vadd.f32 %v441, %v502
      %v504 = vpop.f32.mrb[0].mxu0
      %v505 = vpop.f32.mrb[0].mxu0
      %v506 = vadd.f32 %v441, %v505
      %v507 = vpop.f32.mrb[0].mxu0
      %508 = vmatprep.mubr.bf16.mxu0 0
      %509 = vmatmul.mubr.bf16.gmra.mrb[0].mxu0 %v451
      %v510 = vpop.f32.mrb[0].mxu0
      %v511 = vadd.f32 %v441, %v510
      %v512 = vpop.f32.mrb[0].mxu0
      %v513 = vpop.f32.mrb[0].mxu0
      %v514 = vadd.f32 %v441, %v513
      %v515 = vpop.f32.mrb[0].mxu0
      %516 = vmatprep.mubr.bf16.mxu0 0
      %517 = vmatmul.mubr.bf16.gmra.mrb[0].mxu0 %v454
      %v518 = vpop.f32.mrb[0].mxu0
      %v519 = vadd.f32 %v441, %v518
      %v520 = vpop.f32.mrb[0].mxu0
      %v521 = vpop.f32.mrb[0].mxu0
      %v522 = vadd.f32 %v441, %v521
      %v523 = vpop.f32.mrb[0].mxu0
      %524 = vdwg.mxu0
      %v533 = vcombine.high %v495, %v495
      %v535 = vunpack.c.l.s4 1966171168
      %v536 = vunpack.c.0.s8 %v535
      %v537 = vlaneseq
      %v538 = vshrl.u32 %v537, 7
      %v539 = vsub.s32 %v536, %v538
      %v540 = vrot.slane %v495, %v539
      %v542 = vunpack.c.l.s4 1966171168
      %v543 = vunpack.c.0.s8 %v542
      %v544 = vlaneseq
      %v545 = vshrl.u32 %v544, 7
      %v546 = vsub.s32 %v543, %v545
      %v547 = vrot.slane %v533, %v546
      %v548 = vcombine.high %v540, %v540
      %v549 = vcombine.high %v547, %v547
      %v551 = vunpack.c.l.s4 1966171168
      %v552 = vunpack.c.0.s8 %v551
      %v553 = vlaneseq
      %v554 = vshrl.u32 %v553, 7
      %v555 = vsub.s32 %v552, %v554
      %v556 = vrot.slane %v540, %v555
      %v558 = vunpack.c.l.s4 1966171168
      %v559 = vunpack.c.0.s8 %v558
      %v560 = vlaneseq
      %v561 = vshrl.u32 %v560, 7
      %v562 = vsub.s32 %v559, %v561
      %v563 = vrot.slane %v547, %v562
      %v565 = vunpack.c.l.s4 1966171168
      %v566 = vunpack.c.0.s8 %v565
      %v567 = vlaneseq
      %v568 = vshrl.u32 %v567, 7
      %v569 = vsub.s32 %v566, %v568
      %v570 = vrot.slane %v548, %v569
      %v572 = vunpack.c.l.s4 1966171168
      %v573 = vunpack.c.0.s8 %v572
      %v574 = vlaneseq
      %v575 = vshrl.u32 %v574, 7
      %v576 = vsub.s32 %v573, %v575
      %v577 = vrot.slane %v549, %v576
      %v578 = vcombine.high %v556, %v556
      %v579 = vcombine.high %v563, %v563
      %v580 = vcombine.high %v570, %v570
      %v581 = vcombine.high %v577, %v577
      %v582 = vcombine.high %v498, %v498
      %v584 = vunpack.c.l.s4 1966171168
      %v585 = vunpack.c.0.s8 %v584
      %v586 = vlaneseq
      %v587 = vshrl.u32 %v586, 7
      %v588 = vsub.s32 %v585, %v587
      %v589 = vrot.slane %v498, %v588
      %v591 = vunpack.c.l.s4 1966171168
      %v592 = vunpack.c.0.s8 %v591
      %v593 = vlaneseq
      %v594 = vshrl.u32 %v593, 7
      %v595 = vsub.s32 %v592, %v594
      %v596 = vrot.slane %v582, %v595
      %v597 = vcombine.high %v589, %v589
      %v598 = vcombine.high %v596, %v596
      %v600 = vunpack.c.l.s4 1966171168
      %v601 = vunpack.c.0.s8 %v600
      %v602 = vlaneseq
      %v603 = vshrl.u32 %v602, 7
      %v604 = vsub.s32 %v601, %v603
      %v605 = vrot.slane %v589, %v604
      %v607 = vunpack.c.l.s4 1966171168
      %v608 = vunpack.c.0.s8 %v607
      %v609 = vlaneseq
      %v610 = vshrl.u32 %v609, 7
      %v611 = vsub.s32 %v608, %v610
      %v612 = vrot.slane %v596, %v611
      %v614 = vunpack.c.l.s4 1966171168
      %v615 = vunpack.c.0.s8 %v614
      %v616 = vlaneseq
      %v617 = vshrl.u32 %v616, 7
      %v618 = vsub.s32 %v615, %v617
      %v619 = vrot.slane %v597, %v618
      %v621 = vunpack.c.l.s4 1966171168
      %v622 = vunpack.c.0.s8 %v621
      %v623 = vlaneseq
      %v624 = vshrl.u32 %v623, 7
      %v625 = vsub.s32 %v622, %v624
      %v626 = vrot.slane %v598, %v625
      %v627 = vcombine.high %v605, %v605
      %v628 = vcombine.high %v612, %v612
      %v629 = vcombine.high %v619, %v619
      %v630 = vcombine.high %v626, %v626
      %v631 = vcombine.high %v503, %v503
      %v633 = vunpack.c.l.s4 1966171168
      %v634 = vunpack.c.0.s8 %v633
      %v635 = vlaneseq
      %v636 = vshrl.u32 %v635, 7
      %v637 = vsub.s32 %v634, %v636
      %v638 = vrot.slane %v503, %v637
      %v640 = vunpack.c.l.s4 1966171168
      %v641 = vunpack.c.0.s8 %v640
      %v642 = vlaneseq
      %v643 = vshrl.u32 %v642, 7
      %v644 = vsub.s32 %v641, %v643
      %v645 = vrot.slane %v631, %v644
      %v646 = vcombine.high %v638, %v638
      %v647 = vcombine.high %v645, %v645
      %v649 = vunpack.c.l.s4 1966171168
      %v650 = vunpack.c.0.s8 %v649
      %v651 = vlaneseq
      %v652 = vshrl.u32 %v651, 7
      %v653 = vsub.s32 %v650, %v652
      %v654 = vrot.slane %v638, %v653
      %v656 = vunpack.c.l.s4 1966171168
      %v657 = vunpack.c.0.s8 %v656
      %v658 = vlaneseq
      %v659 = vshrl.u32 %v658, 7
      %v660 = vsub.s32 %v657, %v659
      %v661 = vrot.slane %v645, %v660
      %v663 = vunpack.c.l.s4 1966171168
      %v664 = vunpack.c.0.s8 %v663
      %v665 = vlaneseq
      %v666 = vshrl.u32 %v665, 7
      %v667 = vsub.s32 %v664, %v666
      %v668 = vrot.slane %v646, %v667
      %v670 = vunpack.c.l.s4 1966171168
      %v671 = vunpack.c.0.s8 %v670
      %v672 = vlaneseq
      %v673 = vshrl.u32 %v672, 7
      %v674 = vsub.s32 %v671, %v673
      %v675 = vrot.slane %v647, %v674
      %v676 = vcombine.high %v654, %v654
      %v677 = vcombine.high %v661, %v661
      %v678 = vcombine.high %v668, %v668
      %v679 = vcombine.high %v675, %v675
      %v680 = vcombine.high %v506, %v506
      %v682 = vunpack.c.l.s4 1966171168
      %v683 = vunpack.c.0.s8 %v682
      %v684 = vlaneseq
      %v685 = vshrl.u32 %v684, 7
      %v686 = vsub.s32 %v683, %v685
      %v687 = vrot.slane %v506, %v686
      %v689 = vunpack.c.l.s4 1966171168
      %v690 = vunpack.c.0.s8 %v689
      %v691 = vlaneseq
      %v692 = vshrl.u32 %v691, 7
      %v693 = vsub.s32 %v690, %v692
      %v694 = vrot.slane %v680, %v693
      %v695 = vcombine.high %v687, %v687
      %v696 = vcombine.high %v694, %v694
      %v698 = vunpack.c.l.s4 1966171168
      %v699 = vunpack.c.0.s8 %v698
      %v700 = vlaneseq
      %v701 = vshrl.u32 %v700, 7
      %v702 = vsub.s32 %v699, %v701
      %v703 = vrot.slane %v687, %v702
      %v705 = vunpack.c.l.s4 1966171168
      %v706 = vunpack.c.0.s8 %v705
      %v707 = vlaneseq
      %v708 = vshrl.u32 %v707, 7
      %v709 = vsub.s32 %v706, %v708
      %v710 = vrot.slane %v694, %v709
      %v712 = vunpack.c.l.s4 1966171168
      %v713 = vunpack.c.0.s8 %v712
      %v714 = vlaneseq
      %v715 = vshrl.u32 %v714, 7
      %v716 = vsub.s32 %v713, %v715
      %v717 = vrot.slane %v695, %v716
      %v719 = vunpack.c.l.s4 1966171168
      %v720 = vunpack.c.0.s8 %v719
      %v721 = vlaneseq
      %v722 = vshrl.u32 %v721, 7
      %v723 = vsub.s32 %v720, %v722
      %v724 = vrot.slane %v696, %v723
      %v725 = vcombine.high %v703, %v703
      %v726 = vcombine.high %v710, %v710
      %v727 = vcombine.high %v717, %v717
      %v728 = vcombine.high %v724, %v724
      %v729 = vcombine.high %v511, %v511
      %v731 = vunpack.c.l.s4 1966171168
      %v732 = vunpack.c.0.s8 %v731
      %v733 = vlaneseq
      %v734 = vshrl.u32 %v733, 7
      %v735 = vsub.s32 %v732, %v734
      %v736 = vrot.slane %v511, %v735
      %v738 = vunpack.c.l.s4 1966171168
      %v739 = vunpack.c.0.s8 %v738
      %v740 = vlaneseq
      %v741 = vshrl.u32 %v740, 7
      %v742 = vsub.s32 %v739, %v741
      %v743 = vrot.slane %v729, %v742
      %v744 = vcombine.high %v736, %v736
      %v745 = vcombine.high %v743, %v743
      %v747 = vunpack.c.l.s4 1966171168
      %v748 = vunpack.c.0.s8 %v747
      %v749 = vlaneseq
      %v750 = vshrl.u32 %v749, 7
      %v751 = vsub.s32 %v748, %v750
      %v752 = vrot.slane %v736, %v751
      %v754 = vunpack.c.l.s4 1966171168
      %v755 = vunpack.c.0.s8 %v754
      %v756 = vlaneseq
      %v757 = vshrl.u32 %v756, 7
      %v758 = vsub.s32 %v755, %v757
      %v759 = vrot.slane %v743, %v758
      %v761 = vunpack.c.l.s4 1966171168
      %v762 = vunpack.c.0.s8 %v761
      %v763 = vlaneseq
      %v764 = vshrl.u32 %v763, 7
      %v765 = vsub.s32 %v762, %v764
      %v766 = vrot.slane %v744, %v765
      %v768 = vunpack.c.l.s4 1966171168
      %v769 = vunpack.c.0.s8 %v768
      %v770 = vlaneseq
      %v771 = vshrl.u32 %v770, 7
      %v772 = vsub.s32 %v769, %v771
      %v773 = vrot.slane %v745, %v772
      %v774 = vcombine.high %v752, %v752
      %v775 = vcombine.high %v759, %v759
      %v776 = vcombine.high %v766, %v766
      %v777 = vcombine.high %v773, %v773
      %v778 = vcombine.high %v514, %v514
      %v780 = vunpack.c.l.s4 1966171168
      %v781 = vunpack.c.0.s8 %v780
      %v782 = vlaneseq
      %v783 = vshrl.u32 %v782, 7
      %v784 = vsub.s32 %v781, %v783
      %v785 = vrot.slane %v514, %v784
      %v787 = vunpack.c.l.s4 1966171168
      %v788 = vunpack.c.0.s8 %v787
      %v789 = vlaneseq
      %v790 = vshrl.u32 %v789, 7
      %v791 = vsub.s32 %v788, %v790
      %v792 = vrot.slane %v778, %v791
      %v793 = vcombine.high %v785, %v785
      %v794 = vcombine.high %v792, %v792
      %v796 = vunpack.c.l.s4 1966171168
      %v797 = vunpack.c.0.s8 %v796
      %v798 = vlaneseq
      %v799 = vshrl.u32 %v798, 7
      %v800 = vsub.s32 %v797, %v799
      %v801 = vrot.slane %v785, %v800
      %v803 = vunpack.c.l.s4 1966171168
      %v804 = vunpack.c.0.s8 %v803
      %v805 = vlaneseq
      %v806 = vshrl.u32 %v805, 7
      %v807 = vsub.s32 %v804, %v806
      %v808 = vrot.slane %v792, %v807
      %v810 = vunpack.c.l.s4 1966171168
      %v811 = vunpack.c.0.s8 %v810
      %v812 = vlaneseq
      %v813 = vshrl.u32 %v812, 7
      %v814 = vsub.s32 %v811, %v813
      %v815 = vrot.slane %v793, %v814
      %v817 = vunpack.c.l.s4 1966171168
      %v818 = vunpack.c.0.s8 %v817
      %v819 = vlaneseq
      %v820 = vshrl.u32 %v819, 7
      %v821 = vsub.s32 %v818, %v820
      %v822 = vrot.slane %v794, %v821
      %v823 = vcombine.high %v801, %v801
      %v824 = vcombine.high %v808, %v808
      %v825 = vcombine.high %v815, %v815
      %v826 = vcombine.high %v822, %v822
      %v827 = vcombine.high %v519, %v519
      %v829 = vunpack.c.l.s4 1966171168
      %v830 = vunpack.c.0.s8 %v829
      %v831 = vlaneseq
      %v832 = vshrl.u32 %v831, 7
      %v833 = vsub.s32 %v830, %v832
      %v834 = vrot.slane %v519, %v833
      %v836 = vunpack.c.l.s4 1966171168
      %v837 = vunpack.c.0.s8 %v836
      %v838 = vlaneseq
      %v839 = vshrl.u32 %v838, 7
      %v840 = vsub.s32 %v837, %v839
      %v841 = vrot.slane %v827, %v840
      %v842 = vcombine.high %v834, %v834
      %v843 = vcombine.high %v841, %v841
      %v845 = vunpack.c.l.s4 1966171168
      %v846 = vunpack.c.0.s8 %v845
      %v847 = vlaneseq
      %v848 = vshrl.u32 %v847, 7
      %v849 = vsub.s32 %v846, %v848
      %v850 = vrot.slane %v834, %v849
      %v852 = vunpack.c.l.s4 1966171168
      %v853 = vunpack.c.0.s8 %v852
      %v854 = vlaneseq
      %v855 = vshrl.u32 %v854, 7
      %v856 = vsub.s32 %v853, %v855
      %v857 = vrot.slane %v841, %v856
      %v859 = vunpack.c.l.s4 1966171168
      %v860 = vunpack.c.0.s8 %v859
      %v861 = vlaneseq
      %v862 = vshrl.u32 %v861, 7
      %v863 = vsub.s32 %v860, %v862
      %v864 = vrot.slane %v842, %v863
      %v866 = vunpack.c.l.s4 1966171168
      %v867 = vunpack.c.0.s8 %v866
      %v868 = vlaneseq
      %v869 = vshrl.u32 %v868, 7
      %v870 = vsub.s32 %v867, %v869
      %v871 = vrot.slane %v843, %v870
      %v872 = vcombine.high %v850, %v850
      %v873 = vcombine.high %v857, %v857
      %v874 = vcombine.high %v864, %v864
      %v875 = vcombine.high %v871, %v871
      %v876 = vcombine.high %v522, %v522
      %v878 = vunpack.c.l.s4 1966171168
      %v879 = vunpack.c.0.s8 %v878
      %v880 = vlaneseq
      %v881 = vshrl.u32 %v880, 7
      %v882 = vsub.s32 %v879, %v881
      %v883 = vrot.slane %v522, %v882
      %v885 = vunpack.c.l.s4 1966171168
      %v886 = vunpack.c.0.s8 %v885
      %v887 = vlaneseq
      %v888 = vshrl.u32 %v887, 7
      %v889 = vsub.s32 %v886, %v888
      %v890 = vrot.slane %v876, %v889
      %v891 = vcombine.high %v883, %v883
      %v892 = vcombine.high %v890, %v890
      %v894 = vunpack.c.l.s4 1966171168
      %v895 = vunpack.c.0.s8 %v894
      %v896 = vlaneseq
      %v897 = vshrl.u32 %v896, 7
      %v898 = vsub.s32 %v895, %v897
      %v899 = vrot.slane %v883, %v898
      %v901 = vunpack.c.l.s4 1966171168
      %v902 = vunpack.c.0.s8 %v901
      %v903 = vlaneseq
      %v904 = vshrl.u32 %v903, 7
      %v905 = vsub.s32 %v902, %v904
      %v906 = vrot.slane %v890, %v905
      %v908 = vunpack.c.l.s4 1966171168
      %v909 = vunpack.c.0.s8 %v908
      %v910 = vlaneseq
      %v911 = vshrl.u32 %v910, 7
      %v912 = vsub.s32 %v909, %v911
      %v913 = vrot.slane %v891, %v912
      %v915 = vunpack.c.l.s4 1966171168
      %v916 = vunpack.c.0.s8 %v915
      %v917 = vlaneseq
      %v918 = vshrl.u32 %v917, 7
      %v919 = vsub.s32 %v916, %v918
      %v920 = vrot.slane %v892, %v919
      %v921 = vcombine.high %v899, %v899
      %v922 = vcombine.high %v906, %v906
      %v923 = vcombine.high %v913, %v913
      %v924 = vcombine.high %v920, %v920
      %v989 = vlaneseq
      %v990 = vshrl.u32 %v989, 7
      %v991 = vsub.s32 0, %v990
      %v992 = vrot.slane %v556, %v991
      %v993 = vlaneseq
      %v994 = vshrl.u32 %v993, 7
      %v995 = vsub.s32 0, %v994
      %v996 = vrot.slane %v570, %v995
      %v997 = vlaneseq
      %v998 = vshrl.u32 %v997, 7
      %v999 = vsub.s32 0, %v998
      %v1000 = vrot.slane %v578, %v999
      %v1001 = vlaneseq
      %v1002 = vshrl.u32 %v1001, 7
      %v1003 = vsub.s32 0, %v1002
      %v1004 = vrot.slane %v580, %v1003
      %v1005 = vlaneseq
      %v1006 = vshrl.u32 %v1005, 7
      %v1007 = vsub.s32 0, %v1006
      %v1008 = vrot.slane %v563, %v1007
      %v1009 = vlaneseq
      %v1010 = vshrl.u32 %v1009, 7
      %v1011 = vsub.s32 0, %v1010
      %v1012 = vrot.slane %v577, %v1011
      %v1013 = vlaneseq
      %v1014 = vshrl.u32 %v1013, 7
      %v1015 = vsub.s32 0, %v1014
      %v1016 = vrot.slane %v579, %v1015
      %v1017 = vlaneseq
      %v1018 = vshrl.u32 %v1017, 7
      %v1019 = vsub.s32 0, %v1018
      %v1020 = vrot.slane %v581, %v1019
      %v1021 = vlaneseq
      %v1022 = vshrl.u32 %v1021, 7
      %v1023 = vsub.s32 0, %v1022
      %v1024 = vrot.slane %v605, %v1023
      %v1025 = vlaneseq
      %v1026 = vshrl.u32 %v1025, 7
      %v1027 = vsub.s32 0, %v1026
      %v1028 = vrot.slane %v619, %v1027
      %v1029 = vlaneseq
      %v1030 = vshrl.u32 %v1029, 7
      %v1031 = vsub.s32 0, %v1030
      %v1032 = vrot.slane %v627, %v1031
      %v1033 = vlaneseq
      %v1034 = vshrl.u32 %v1033, 7
      %v1035 = vsub.s32 0, %v1034
      %v1036 = vrot.slane %v629, %v1035
      %v1037 = vlaneseq
      %v1038 = vshrl.u32 %v1037, 7
      %v1039 = vsub.s32 0, %v1038
      %v1040 = vrot.slane %v612, %v1039
      %v1041 = vlaneseq
      %v1042 = vshrl.u32 %v1041, 7
      %v1043 = vsub.s32 0, %v1042
      %v1044 = vrot.slane %v626, %v1043
      %v1045 = vlaneseq
      %v1046 = vshrl.u32 %v1045, 7
      %v1047 = vsub.s32 0, %v1046
      %v1048 = vrot.slane %v628, %v1047
      %v1049 = vlaneseq
      %v1050 = vshrl.u32 %v1049, 7
      %v1051 = vsub.s32 0, %v1050
      %v1052 = vrot.slane %v630, %v1051
      %v1053 = vlaneseq
      %v1054 = vshrl.u32 %v1053, 7
      %v1055 = vsub.s32 0, %v1054
      %v1056 = vrot.slane %v654, %v1055
      %v1057 = vlaneseq
      %v1058 = vshrl.u32 %v1057, 7
      %v1059 = vsub.s32 0, %v1058
      %v1060 = vrot.slane %v668, %v1059
      %v1061 = vlaneseq
      %v1062 = vshrl.u32 %v1061, 7
      %v1063 = vsub.s32 0, %v1062
      %v1064 = vrot.slane %v676, %v1063
      %v1065 = vlaneseq
      %v1066 = vshrl.u32 %v1065, 7
      %v1067 = vsub.s32 0, %v1066
      %v1068 = vrot.slane %v678, %v1067
      %v1069 = vlaneseq
      %v1070 = vshrl.u32 %v1069, 7
      %v1071 = vsub.s32 0, %v1070
      %v1072 = vrot.slane %v661, %v1071
      %v1073 = vlaneseq
      %v1074 = vshrl.u32 %v1073, 7
      %v1075 = vsub.s32 0, %v1074
      %v1076 = vrot.slane %v675, %v1075
      %v1077 = vlaneseq
      %v1078 = vshrl.u32 %v1077, 7
      %v1079 = vsub.s32 0, %v1078
      %v1080 = vrot.slane %v677, %v1079
      %v1081 = vlaneseq
      %v1082 = vshrl.u32 %v1081, 7
      %v1083 = vsub.s32 0, %v1082
      %v1084 = vrot.slane %v679, %v1083
      %v1085 = vlaneseq
      %v1086 = vshrl.u32 %v1085, 7
      %v1087 = vsub.s32 0, %v1086
      %v1088 = vrot.slane %v703, %v1087
      %v1089 = vlaneseq
      %v1090 = vshrl.u32 %v1089, 7
      %v1091 = vsub.s32 0, %v1090
      %v1092 = vrot.slane %v717, %v1091
      %v1093 = vlaneseq
      %v1094 = vshrl.u32 %v1093, 7
      %v1095 = vsub.s32 0, %v1094
      %v1096 = vrot.slane %v725, %v1095
      %v1097 = vlaneseq
      %v1098 = vshrl.u32 %v1097, 7
      %v1099 = vsub.s32 0, %v1098
      %v1100 = vrot.slane %v727, %v1099
      %v1101 = vlaneseq
      %v1102 = vshrl.u32 %v1101, 7
      %v1103 = vsub.s32 0, %v1102
      %v1104 = vrot.slane %v710, %v1103
      %v1105 = vlaneseq
      %v1106 = vshrl.u32 %v1105, 7
      %v1107 = vsub.s32 0, %v1106
      %v1108 = vrot.slane %v724, %v1107
      %v1109 = vlaneseq
      %v1110 = vshrl.u32 %v1109, 7
      %v1111 = vsub.s32 0, %v1110
      %v1112 = vrot.slane %v726, %v1111
      %v1113 = vlaneseq
      %v1114 = vshrl.u32 %v1113, 7
      %v1115 = vsub.s32 0, %v1114
      %v1116 = vrot.slane %v728, %v1115
      %v1117 = vlaneseq
      %v1118 = vshrl.u32 %v1117, 7
      %v1119 = vsub.s32 0, %v1118
      %v1120 = vrot.slane %v752, %v1119
      %v1121 = vlaneseq
      %v1122 = vshrl.u32 %v1121, 7
      %v1123 = vsub.s32 0, %v1122
      %v1124 = vrot.slane %v766, %v1123
      %v1125 = vlaneseq
      %v1126 = vshrl.u32 %v1125, 7
      %v1127 = vsub.s32 0, %v1126
      %v1128 = vrot.slane %v774, %v1127
      %v1129 = vlaneseq
      %v1130 = vshrl.u32 %v1129, 7
      %v1131 = vsub.s32 0, %v1130
      %v1132 = vrot.slane %v776, %v1131
      %v1133 = vlaneseq
      %v1134 = vshrl.u32 %v1133, 7
      %v1135 = vsub.s32 0, %v1134
      %v1136 = vrot.slane %v759, %v1135
      %v1137 = vlaneseq
      %v1138 = vshrl.u32 %v1137, 7
      %v1139 = vsub.s32 0, %v1138
      %v1140 = vrot.slane %v773, %v1139
      %v1141 = vlaneseq
      %v1142 = vshrl.u32 %v1141, 7
      %v1143 = vsub.s32 0, %v1142
      %v1144 = vrot.slane %v775, %v1143
      %v1145 = vlaneseq
      %v1146 = vshrl.u32 %v1145, 7
      %v1147 = vsub.s32 0, %v1146
      %v1148 = vrot.slane %v777, %v1147
      %v1149 = vlaneseq
      %v1150 = vshrl.u32 %v1149, 7
      %v1151 = vsub.s32 0, %v1150
      %v1152 = vrot.slane %v801, %v1151
      %v1153 = vlaneseq
      %v1154 = vshrl.u32 %v1153, 7
      %v1155 = vsub.s32 0, %v1154
      %v1156 = vrot.slane %v815, %v1155
      %v1157 = vlaneseq
      %v1158 = vshrl.u32 %v1157, 7
      %v1159 = vsub.s32 0, %v1158
      %v1160 = vrot.slane %v823, %v1159
      %v1161 = vlaneseq
      %v1162 = vshrl.u32 %v1161, 7
      %v1163 = vsub.s32 0, %v1162
      %v1164 = vrot.slane %v825, %v1163
      %v1165 = vlaneseq
      %v1166 = vshrl.u32 %v1165, 7
      %v1167 = vsub.s32 0, %v1166
      %v1168 = vrot.slane %v808, %v1167
      %v1169 = vlaneseq
      %v1170 = vshrl.u32 %v1169, 7
      %v1171 = vsub.s32 0, %v1170
      %v1172 = vrot.slane %v822, %v1171
      %v1173 = vlaneseq
      %v1174 = vshrl.u32 %v1173, 7
      %v1175 = vsub.s32 0, %v1174
      %v1176 = vrot.slane %v824, %v1175
      %v1177 = vlaneseq
      %v1178 = vshrl.u32 %v1177, 7
      %v1179 = vsub.s32 0, %v1178
      %v1180 = vrot.slane %v826, %v1179
      %v1181 = vlaneseq
      %v1182 = vshrl.u32 %v1181, 7
      %v1183 = vsub.s32 0, %v1182
      %v1184 = vrot.slane %v850, %v1183
      %v1185 = vlaneseq
      %v1186 = vshrl.u32 %v1185, 7
      %v1187 = vsub.s32 0, %v1186
      %v1188 = vrot.slane %v864, %v1187
      %v1189 = vlaneseq
      %v1190 = vshrl.u32 %v1189, 7
      %v1191 = vsub.s32 0, %v1190
      %v1192 = vrot.slane %v872, %v1191
      %v1193 = vlaneseq
      %v1194 = vshrl.u32 %v1193, 7
      %v1195 = vsub.s32 0, %v1194
      %v1196 = vrot.slane %v874, %v1195
      %v1197 = vlaneseq
      %v1198 = vshrl.u32 %v1197, 7
      %v1199 = vsub.s32 0, %v1198
      %v1200 = vrot.slane %v857, %v1199
      %v1201 = vlaneseq
      %v1202 = vshrl.u32 %v1201, 7
      %v1203 = vsub.s32 0, %v1202
      %v1204 = vrot.slane %v871, %v1203
      %v1205 = vlaneseq
      %v1206 = vshrl.u32 %v1205, 7
      %v1207 = vsub.s32 0, %v1206
      %v1208 = vrot.slane %v873, %v1207
      %v1209 = vlaneseq
      %v1210 = vshrl.u32 %v1209, 7
      %v1211 = vsub.s32 0, %v1210
      %v1212 = vrot.slane %v875, %v1211
      %v1213 = vlaneseq
      %v1214 = vshrl.u32 %v1213, 7
      %v1215 = vsub.s32 0, %v1214
      %v1216 = vrot.slane %v899, %v1215
      %v1217 = vlaneseq
      %v1218 = vshrl.u32 %v1217, 7
      %v1219 = vsub.s32 0, %v1218
      %v1220 = vrot.slane %v913, %v1219
      %v1221 = vlaneseq
      %v1222 = vshrl.u32 %v1221, 7
      %v1223 = vsub.s32 0, %v1222
      %v1224 = vrot.slane %v921, %v1223
      %v1225 = vlaneseq
      %v1226 = vshrl.u32 %v1225, 7
      %v1227 = vsub.s32 0, %v1226
      %v1228 = vrot.slane %v923, %v1227
      %v1229 = vlaneseq
      %v1230 = vshrl.u32 %v1229, 7
      %v1231 = vsub.s32 0, %v1230
      %v1232 = vrot.slane %v906, %v1231
      %v1233 = vlaneseq
      %v1234 = vshrl.u32 %v1233, 7
      %v1235 = vsub.s32 0, %v1234
      %v1236 = vrot.slane %v920, %v1235
      %v1237 = vlaneseq
      %v1238 = vshrl.u32 %v1237, 7
      %v1239 = vsub.s32 0, %v1238
      %v1240 = vrot.slane %v922, %v1239
      %v1241 = vlaneseq
      %v1242 = vshrl.u32 %v1241, 7
      %v1243 = vsub.s32 0, %v1242
      %v1244 = vrot.slane %v924, %v1243
      %1245 = vrot.lane.b32.xlu0 %v992, 124
      %v1246 = vpop.permute.xlu0 %1245
      %1247 = vrot.lane.b32.xlu0 %v996, 124
      %v1248 = vpop.permute.xlu0 %1247
      %1249 = vrot.lane.b32.xlu0 %v1000, 124
      %v1250 = vpop.permute.xlu0 %1249
      %1251 = vrot.lane.b32.xlu0 %v1004, 124
      %v1252 = vpop.permute.xlu0 %1251
      %1253 = vrot.lane.b32.xlu0 %v1008, 124
      %v1254 = vpop.permute.xlu0 %1253
      %1255 = vrot.lane.b32.xlu0 %v1012, 124
      %v1256 = vpop.permute.xlu0 %1255
      %1257 = vrot.lane.b32.xlu0 %v1016, 124
      %v1258 = vpop.permute.xlu0 %1257
      %1259 = vrot.lane.b32.xlu0 %v1020, 124
      %v1260 = vpop.permute.xlu0 %1259
      %1261 = vrot.lane.b32.xlu0 %v1024, 124
      %v1262 = vpop.permute.xlu0 %1261
      %1263 = vrot.lane.b32.xlu0 %v1028, 124
      %v1264 = vpop.permute.xlu0 %1263
      %1265 = vrot.lane.b32.xlu0 %v1032, 124
      %v1266 = vpop.permute.xlu0 %1265
      %1267 = vrot.lane.b32.xlu0 %v1036, 124
      %v1268 = vpop.permute.xlu0 %1267
      %1269 = vrot.lane.b32.xlu0 %v1040, 124
      %v1270 = vpop.permute.xlu0 %1269
      %1271 = vrot.lane.b32.xlu0 %v1044, 124
      %v1272 = vpop.permute.xlu0 %1271
      %1273 = vrot.lane.b32.xlu0 %v1048, 124
      %v1274 = vpop.permute.xlu0 %1273
      %1275 = vrot.lane.b32.xlu0 %v1052, 124
      %v1276 = vpop.permute.xlu0 %1275
      %1277 = vrot.lane.b32.xlu0 %v1056, 124
      %v1278 = vpop.permute.xlu0 %1277
      %1279 = vrot.lane.b32.xlu0 %v1060, 124
      %v1280 = vpop.permute.xlu0 %1279
      %1281 = vrot.lane.b32.xlu0 %v1064, 124
      %v1282 = vpop.permute.xlu0 %1281
      %1283 = vrot.lane.b32.xlu0 %v1068, 124
      %v1284 = vpop.permute.xlu0 %1283
      %1285 = vrot.lane.b32.xlu0 %v1072, 124
      %v1286 = vpop.permute.xlu0 %1285
      %1287 = vrot.lane.b32.xlu0 %v1076, 124
      %v1288 = vpop.permute.xlu0 %1287
      %1289 = vrot.lane.b32.xlu0 %v1080, 124
      %v1290 = vpop.permute.xlu0 %1289
      %1291 = vrot.lane.b32.xlu0 %v1084, 124
      %v1292 = vpop.permute.xlu0 %1291
      %1293 = vrot.lane.b32.xlu0 %v1088, 124
      %v1294 = vpop.permute.xlu0 %1293
      %1295 = vrot.lane.b32.xlu0 %v1092, 124
      %v1296 = vpop.permute.xlu0 %1295
      %1297 = vrot.lane.b32.xlu0 %v1096, 124
      %v1298 = vpop.permute.xlu0 %1297
      %1299 = vrot.lane.b32.xlu0 %v1100, 124
      %v1300 = vpop.permute.xlu0 %1299
      %1301 = vrot.lane.b32.xlu0 %v1104, 124
      %v1302 = vpop.permute.xlu0 %1301
      %1303 = vrot.lane.b32.xlu0 %v1108, 124
      %v1304 = vpop.permute.xlu0 %1303
      %1305 = vrot.lane.b32.xlu0 %v1112, 124
      %v1306 = vpop.permute.xlu0 %1305
      %1307 = vrot.lane.b32.xlu0 %v1116, 124
      %v1308 = vpop.permute.xlu0 %1307
      %1309 = vrot.lane.b32.xlu0 %v1120, 124
      %v1310 = vpop.permute.xlu0 %1309
      %1311 = vrot.lane.b32.xlu0 %v1124, 124
      %v1312 = vpop.permute.xlu0 %1311
      %1313 = vrot.lane.b32.xlu0 %v1128, 124
      %v1314 = vpop.permute.xlu0 %1313
      %1315 = vrot.lane.b32.xlu0 %v1132, 124
      %v1316 = vpop.permute.xlu0 %1315
      %1317 = vrot.lane.b32.xlu0 %v1136, 124
      %v1318 = vpop.permute.xlu0 %1317
      %1319 = vrot.lane.b32.xlu0 %v1140, 124
      %v1320 = vpop.permute.xlu0 %1319
      %1321 = vrot.lane.b32.xlu0 %v1144, 124
      %v1322 = vpop.permute.xlu0 %1321
      %1323 = vrot.lane.b32.xlu0 %v1148, 124
      %v1324 = vpop.permute.xlu0 %1323
      %1325 = vrot.lane.b32.xlu0 %v1152, 124
      %v1326 = vpop.permute.xlu0 %1325
      %1327 = vrot.lane.b32.xlu0 %v1156, 124
      %v1328 = vpop.permute.xlu0 %1327
      %1329 = vrot.lane.b32.xlu0 %v1160, 124
      %v1330 = vpop.permute.xlu0 %1329
      %1331 = vrot.lane.b32.xlu0 %v1164, 124
      %v1332 = vpop.permute.xlu0 %1331
      %1333 = vrot.lane.b32.xlu0 %v1168, 124
      %v1334 = vpop.permute.xlu0 %1333
      %1335 = vrot.lane.b32.xlu0 %v1172, 124
      %v1336 = vpop.permute.xlu0 %1335
      %1337 = vrot.lane.b32.xlu0 %v1176, 124
      %v1338 = vpop.permute.xlu0 %1337
      %1339 = vrot.lane.b32.xlu0 %v1180, 124
      %v1340 = vpop.permute.xlu0 %1339
      %1341 = vrot.lane.b32.xlu0 %v1184, 124
      %v1342 = vpop.permute.xlu0 %1341
      %1343 = vrot.lane.b32.xlu0 %v1188, 124
      %v1344 = vpop.permute.xlu0 %1343
      %1345 = vrot.lane.b32.xlu0 %v1192, 124
      %v1346 = vpop.permute.xlu0 %1345
      %1347 = vrot.lane.b32.xlu0 %v1196, 124
      %v1348 = vpop.permute.xlu0 %1347
      %1349 = vrot.lane.b32.xlu0 %v1200, 124
      %v1350 = vpop.permute.xlu0 %1349
      %1351 = vrot.lane.b32.xlu0 %v1204, 124
      %v1352 = vpop.permute.xlu0 %1351
      %1353 = vrot.lane.b32.xlu0 %v1208, 124
      %v1354 = vpop.permute.xlu0 %1353
      %1355 = vrot.lane.b32.xlu0 %v1212, 124
      %v1356 = vpop.permute.xlu0 %1355
      %1357 = vrot.lane.b32.xlu0 %v1216, 124
      %v1358 = vpop.permute.xlu0 %1357
      %1359 = vrot.lane.b32.xlu0 %v1220, 124
      %v1360 = vpop.permute.xlu0 %1359
      %1361 = vrot.lane.b32.xlu0 %v1224, 124
      %v1362 = vpop.permute.xlu0 %1361
      %1363 = vrot.lane.b32.xlu0 %v1228, 124
      %v1364 = vpop.permute.xlu0 %1363
      %1365 = vrot.lane.b32.xlu0 %v1232, 124
      %v1366 = vpop.permute.xlu0 %1365
      %1367 = vrot.lane.b32.xlu0 %v1236, 124
      %v1368 = vpop.permute.xlu0 %1367
      %1369 = vrot.lane.b32.xlu0 %v1240, 124
      %v1370 = vpop.permute.xlu0 %1369
      %1371 = vrot.lane.b32.xlu0 %v1244, 124
      %v1372 = vpop.permute.xlu0 %1371
      %vm1437 = vcmask 1040384
      %v1438 = vsel %vm1437, %v556, %v1246
      %v1439 = vsel %vm1437, %v570, %v1248
      %v1440 = vsel %vm1437, %v578, %v1250
      %v1441 = vsel %vm1437, %v580, %v1252
      %v1442 = vsel %vm1437, %v563, %v1254
      %v1443 = vsel %vm1437, %v577, %v1256
      %v1444 = vsel %vm1437, %v579, %v1258
      %v1445 = vsel %vm1437, %v581, %v1260
      %v1446 = vsel %vm1437, %v605, %v1262
      %v1447 = vsel %vm1437, %v619, %v1264
      %v1448 = vsel %vm1437, %v627, %v1266
      %v1449 = vsel %vm1437, %v629, %v1268
      %v1450 = vsel %vm1437, %v612, %v1270
      %v1451 = vsel %vm1437, %v626, %v1272
      %v1452 = vsel %vm1437, %v628, %v1274
      %v1453 = vsel %vm1437, %v630, %v1276
      %v1454 = vsel %vm1437, %v654, %v1278
      %v1455 = vsel %vm1437, %v668, %v1280
      %v1456 = vsel %vm1437, %v676, %v1282
      %v1457 = vsel %vm1437, %v678, %v1284
      %v1458 = vsel %vm1437, %v661, %v1286
      %v1459 = vsel %vm1437, %v675, %v1288
      %v1460 = vsel %vm1437, %v677, %v1290
      %v1461 = vsel %vm1437, %v679, %v1292
      %v1462 = vsel %vm1437, %v703, %v1294
      %v1463 = vsel %vm1437, %v717, %v1296
      %v1464 = vsel %vm1437, %v725, %v1298
      %v1465 = vsel %vm1437, %v727, %v1300
      %v1466 = vsel %vm1437, %v710, %v1302
      %v1467 = vsel %vm1437, %v724, %v1304
      %v1468 = vsel %vm1437, %v726, %v1306
      %v1469 = vsel %vm1437, %v728, %v1308
      %v1470 = vsel %vm1437, %v752, %v1310
      %v1471 = vsel %vm1437, %v766, %v1312
      %v1472 = vsel %vm1437, %v774, %v1314
      %v1473 = vsel %vm1437, %v776, %v1316
      %v1474 = vsel %vm1437, %v759, %v1318
      %v1475 = vsel %vm1437, %v773, %v1320
      %v1476 = vsel %vm1437, %v775, %v1322
      %v1477 = vsel %vm1437, %v777, %v1324
      %v1478 = vsel %vm1437, %v801, %v1326
      %v1479 = vsel %vm1437, %v815, %v1328
      %v1480 = vsel %vm1437, %v823, %v1330
      %v1481 = vsel %vm1437, %v825, %v1332
      %v1482 = vsel %vm1437, %v808, %v1334
      %v1483 = vsel %vm1437, %v822, %v1336
      %v1484 = vsel %vm1437, %v824, %v1338
      %v1485 = vsel %vm1437, %v826, %v1340
      %v1486 = vsel %vm1437, %v850, %v1342
      %v1487 = vsel %vm1437, %v864, %v1344
      %v1488 = vsel %vm1437, %v872, %v1346
      %v1489 = vsel %vm1437, %v874, %v1348
      %v1490 = vsel %vm1437, %v857, %v1350
      %v1491 = vsel %vm1437, %v871, %v1352
      %v1492 = vsel %vm1437, %v873, %v1354
      %v1493 = vsel %vm1437, %v875, %v1356
      %v1494 = vsel %vm1437, %v899, %v1358
      %v1495 = vsel %vm1437, %v913, %v1360
      %v1496 = vsel %vm1437, %v921, %v1362
      %v1497 = vsel %vm1437, %v923, %v1364
      %v1498 = vsel %vm1437, %v906, %v1366
      %v1499 = vsel %vm1437, %v920, %v1368
      %v1500 = vsel %vm1437, %v922, %v1370
      %v1501 = vsel %vm1437, %v924, %v1372
      %1566 = vrot.lane.b32.xlu0 %v1438, 120
      %v1567 = vpop.permute.xlu0 %1566
      %1568 = vrot.lane.b32.xlu0 %v1439, 120
      %v1569 = vpop.permute.xlu0 %1568
      %1570 = vrot.lane.b32.xlu0 %v1440, 120
      %v1571 = vpop.permute.xlu0 %1570
      %1572 = vrot.lane.b32.xlu0 %v1441, 120
      %v1573 = vpop.permute.xlu0 %1572
      %1574 = vrot.lane.b32.xlu0 %v1442, 120
      %v1575 = vpop.permute.xlu0 %1574
      %1576 = vrot.lane.b32.xlu0 %v1443, 120
      %v1577 = vpop.permute.xlu0 %1576
      %1578 = vrot.lane.b32.xlu0 %v1444, 120
      %v1579 = vpop.permute.xlu0 %1578
      %1580 = vrot.lane.b32.xlu0 %v1445, 120
      %v1581 = vpop.permute.xlu0 %1580
      %1582 = vrot.lane.b32.xlu0 %v1446, 120
      %v1583 = vpop.permute.xlu0 %1582
      %1584 = vrot.lane.b32.xlu0 %v1447, 120
      %v1585 = vpop.permute.xlu0 %1584
      %1586 = vrot.lane.b32.xlu0 %v1448, 120
      %v1587 = vpop.permute.xlu0 %1586
      %1588 = vrot.lane.b32.xlu0 %v1449, 120
      %v1589 = vpop.permute.xlu0 %1588
      %1590 = vrot.lane.b32.xlu0 %v1450, 120
      %v1591 = vpop.permute.xlu0 %1590
      %1592 = vrot.lane.b32.xlu0 %v1451, 120
      %v1593 = vpop.permute.xlu0 %1592
      %1594 = vrot.lane.b32.xlu0 %v1452, 120
      %v1595 = vpop.permute.xlu0 %1594
      %1596 = vrot.lane.b32.xlu0 %v1453, 120
      %v1597 = vpop.permute.xlu0 %1596
      %1598 = vrot.lane.b32.xlu0 %v1454, 120
      %v1599 = vpop.permute.xlu0 %1598
      %1600 = vrot.lane.b32.xlu0 %v1455, 120
      %v1601 = vpop.permute.xlu0 %1600
      %1602 = vrot.lane.b32.xlu0 %v1456, 120
      %v1603 = vpop.permute.xlu0 %1602
      %1604 = vrot.lane.b32.xlu0 %v1457, 120
      %v1605 = vpop.permute.xlu0 %1604
      %1606 = vrot.lane.b32.xlu0 %v1458, 120
      %v1607 = vpop.permute.xlu0 %1606
      %1608 = vrot.lane.b32.xlu0 %v1459, 120
      %v1609 = vpop.permute.xlu0 %1608
      %1610 = vrot.lane.b32.xlu0 %v1460, 120
      %v1611 = vpop.permute.xlu0 %1610
      %1612 = vrot.lane.b32.xlu0 %v1461, 120
      %v1613 = vpop.permute.xlu0 %1612
      %1614 = vrot.lane.b32.xlu0 %v1462, 120
      %v1615 = vpop.permute.xlu0 %1614
      %1616 = vrot.lane.b32.xlu0 %v1463, 120
      %v1617 = vpop.permute.xlu0 %1616
      %1618 = vrot.lane.b32.xlu0 %v1464, 120
      %v1619 = vpop.permute.xlu0 %1618
      %1620 = vrot.lane.b32.xlu0 %v1465, 120
      %v1621 = vpop.permute.xlu0 %1620
      %1622 = vrot.lane.b32.xlu0 %v1466, 120
      %v1623 = vpop.permute.xlu0 %1622
      %1624 = vrot.lane.b32.xlu0 %v1467, 120
      %v1625 = vpop.permute.xlu0 %1624
      %1626 = vrot.lane.b32.xlu0 %v1468, 120
      %v1627 = vpop.permute.xlu0 %1626
      %1628 = vrot.lane.b32.xlu0 %v1469, 120
      %v1629 = vpop.permute.xlu0 %1628
      %1630 = vrot.lane.b32.xlu0 %v1470, 120
      %v1631 = vpop.permute.xlu0 %1630
      %1632 = vrot.lane.b32.xlu0 %v1471, 120
      %v1633 = vpop.permute.xlu0 %1632
      %1634 = vrot.lane.b32.xlu0 %v1472, 120
      %v1635 = vpop.permute.xlu0 %1634
      %1636 = vrot.lane.b32.xlu0 %v1473, 120
      %v1637 = vpop.permute.xlu0 %1636
      %1638 = vrot.lane.b32.xlu0 %v1474, 120
      %v1639 = vpop.permute.xlu0 %1638
      %1640 = vrot.lane.b32.xlu0 %v1475, 120
      %v1641 = vpop.permute.xlu0 %1640
      %1642 = vrot.lane.b32.xlu0 %v1476, 120
      %v1643 = vpop.permute.xlu0 %1642
      %1644 = vrot.lane.b32.xlu0 %v1477, 120
      %v1645 = vpop.permute.xlu0 %1644
      %1646 = vrot.lane.b32.xlu0 %v1478, 120
      %v1647 = vpop.permute.xlu0 %1646
      %1648 = vrot.lane.b32.xlu0 %v1479, 120
      %v1649 = vpop.permute.xlu0 %1648
      %1650 = vrot.lane.b32.xlu0 %v1480, 120
      %v1651 = vpop.permute.xlu0 %1650
      %1652 = vrot.lane.b32.xlu0 %v1481, 120
      %v1653 = vpop.permute.xlu0 %1652
      %1654 = vrot.lane.b32.xlu0 %v1482, 120
      %v1655 = vpop.permute.xlu0 %1654
      %1656 = vrot.lane.b32.xlu0 %v1483, 120
      %v1657 = vpop.permute.xlu0 %1656
      %1658 = vrot.lane.b32.xlu0 %v1484, 120
      %v1659 = vpop.permute.xlu0 %1658
      %1660 = vrot.lane.b32.xlu0 %v1485, 120
      %v1661 = vpop.permute.xlu0 %1660
      %1662 = vrot.lane.b32.xlu0 %v1486, 120
      %v1663 = vpop.permute.xlu0 %1662
      %1664 = vrot.lane.b32.xlu0 %v1487, 120
      %v1665 = vpop.permute.xlu0 %1664
      %1666 = vrot.lane.b32.xlu0 %v1488, 120
      %v1667 = vpop.permute.xlu0 %1666
      %1668 = vrot.lane.b32.xlu0 %v1489, 120
      %v1669 = vpop.permute.xlu0 %1668
      %1670 = vrot.lane.b32.xlu0 %v1490, 120
      %v1671 = vpop.permute.xlu0 %1670
      %1672 = vrot.lane.b32.xlu0 %v1491, 120
      %v1673 = vpop.permute.xlu0 %1672
      %1674 = vrot.lane.b32.xlu0 %v1492, 120
      %v1675 = vpop.permute.xlu0 %1674
      %1676 = vrot.lane.b32.xlu0 %v1493, 120
      %v1677 = vpop.permute.xlu0 %1676
      %1678 = vrot.lane.b32.xlu0 %v1494, 120
      %v1679 = vpop.permute.xlu0 %1678
      %1680 = vrot.lane.b32.xlu0 %v1495, 120
      %v1681 = vpop.permute.xlu0 %1680
      %1682 = vrot.lane.b32.xlu0 %v1496, 120
      %v1683 = vpop.permute.xlu0 %1682
      %1684 = vrot.lane.b32.xlu0 %v1497, 120
      %v1685 = vpop.permute.xlu0 %1684
      %1686 = vrot.lane.b32.xlu0 %v1498, 120
      %v1687 = vpop.permute.xlu0 %1686
      %1688 = vrot.lane.b32.xlu0 %v1499, 120
      %v1689 = vpop.permute.xlu0 %1688
      %1690 = vrot.lane.b32.xlu0 %v1500, 120
      %v1691 = vpop.permute.xlu0 %1690
      %1692 = vrot.lane.b32.xlu0 %v1501, 120
      %v1693 = vpop.permute.xlu0 %1692
      %v1694 = vcombine.low %v1438, %v1439
      %v1695 = vcombine.low %v1440, %v1441
      %v1697 = vunpack.c.l.s4 1983009808
      %v1698 = vunpack.c.0.s8 %v1697
      %v1699 = vlaneseq
      %v1700 = vshrl.u32 %v1699, 7
      %v1701 = vsub.s32 %v1698, %v1700
      %v1702 = vrot.slane %v1694, %v1701
      %v1704 = vunpack.c.l.s4 1983009808
      %v1705 = vunpack.c.0.s8 %v1704
      %v1706 = vlaneseq
      %v1707 = vshrl.u32 %v1706, 7
      %v1708 = vsub.s32 %v1705, %v1707
      %v1709 = vrot.slane %v1695, %v1708
      %v1710 = vcombine.low %v1702, %v1709
      %v1711 = vcombine.low %v1442, %v1443
      %v1712 = vcombine.low %v1444, %v1445
      %v1714 = vunpack.c.l.s4 1983009808
      %v1715 = vunpack.c.0.s8 %v1714
      %v1716 = vlaneseq
      %v1717 = vshrl.u32 %v1716, 7
      %v1718 = vsub.s32 %v1715, %v1717
      %v1719 = vrot.slane %v1711, %v1718
      %v1721 = vunpack.c.l.s4 1983009808
      %v1722 = vunpack.c.0.s8 %v1721
      %v1723 = vlaneseq
      %v1724 = vshrl.u32 %v1723, 7
      %v1725 = vsub.s32 %v1722, %v1724
      %v1726 = vrot.slane %v1712, %v1725
      %v1727 = vcombine.low %v1719, %v1726
      %v1728 = vcombine.low %v1567, %v1569
      %v1729 = vcombine.low %v1571, %v1573
      %v1731 = vunpack.c.l.s4 1983009808
      %v1732 = vunpack.c.0.s8 %v1731
      %v1733 = vlaneseq
      %v1734 = vshrl.u32 %v1733, 7
      %v1735 = vsub.s32 %v1732, %v1734
      %v1736 = vrot.slane %v1728, %v1735
      %v1738 = vunpack.c.l.s4 1983009808
      %v1739 = vunpack.c.0.s8 %v1738
      %v1740 = vlaneseq
      %v1741 = vshrl.u32 %v1740, 7
      %v1742 = vsub.s32 %v1739, %v1741
      %v1743 = vrot.slane %v1729, %v1742
      %v1744 = vcombine.low %v1736, %v1743
      %v1745 = vcombine.low %v1575, %v1577
      %v1746 = vcombine.low %v1579, %v1581
      %v1748 = vunpack.c.l.s4 1983009808
      %v1749 = vunpack.c.0.s8 %v1748
      %v1750 = vlaneseq
      %v1751 = vshrl.u32 %v1750, 7
      %v1752 = vsub.s32 %v1749, %v1751
      %v1753 = vrot.slane %v1745, %v1752
      %v1755 = vunpack.c.l.s4 1983009808
      %v1756 = vunpack.c.0.s8 %v1755
      %v1757 = vlaneseq
      %v1758 = vshrl.u32 %v1757, 7
      %v1759 = vsub.s32 %v1756, %v1758
      %v1760 = vrot.slane %v1746, %v1759
      %v1761 = vcombine.low %v1753, %v1760
      %v1762 = vcombine.low %v1446, %v1447
      %v1763 = vcombine.low %v1448, %v1449
      %v1765 = vunpack.c.l.s4 1983009808
      %v1766 = vunpack.c.0.s8 %v1765
      %v1767 = vlaneseq
      %v1768 = vshrl.u32 %v1767, 7
      %v1769 = vsub.s32 %v1766, %v1768
      %v1770 = vrot.slane %v1762, %v1769
      %v1772 = vunpack.c.l.s4 1983009808
      %v1773 = vunpack.c.0.s8 %v1772
      %v1774 = vlaneseq
      %v1775 = vshrl.u32 %v1774, 7
      %v1776 = vsub.s32 %v1773, %v1775
      %v1777 = vrot.slane %v1763, %v1776
      %v1778 = vcombine.low %v1770, %v1777
      %v1779 = vcombine.low %v1450, %v1451
      %v1780 = vcombine.low %v1452, %v1453
      %v1782 = vunpack.c.l.s4 1983009808
      %v1783 = vunpack.c.0.s8 %v1782
      %v1784 = vlaneseq
      %v1785 = vshrl.u32 %v1784, 7
      %v1786 = vsub.s32 %v1783, %v1785
      %v1787 = vrot.slane %v1779, %v1786
      %v1789 = vunpack.c.l.s4 1983009808
      %v1790 = vunpack.c.0.s8 %v1789
      %v1791 = vlaneseq
      %v1792 = vshrl.u32 %v1791, 7
      %v1793 = vsub.s32 %v1790, %v1792
      %v1794 = vrot.slane %v1780, %v1793
      %v1795 = vcombine.low %v1787, %v1794
      %v1796 = vcombine.low %v1583, %v1585
      %v1797 = vcombine.low %v1587, %v1589
      %v1799 = vunpack.c.l.s4 1983009808
      %v1800 = vunpack.c.0.s8 %v1799
      %v1801 = vlaneseq
      %v1802 = vshrl.u32 %v1801, 7
      %v1803 = vsub.s32 %v1800, %v1802
      %v1804 = vrot.slane %v1796, %v1803
      %v1806 = vunpack.c.l.s4 1983009808
      %v1807 = vunpack.c.0.s8 %v1806
      %v1808 = vlaneseq
      %v1809 = vshrl.u32 %v1808, 7
      %v1810 = vsub.s32 %v1807, %v1809
      %v1811 = vrot.slane %v1797, %v1810
      %v1812 = vcombine.low %v1804, %v1811
      %v1813 = vcombine.low %v1591, %v1593
      %v1814 = vcombine.low %v1595, %v1597
      %v1816 = vunpack.c.l.s4 1983009808
      %v1817 = vunpack.c.0.s8 %v1816
      %v1818 = vlaneseq
      %v1819 = vshrl.u32 %v1818, 7
      %v1820 = vsub.s32 %v1817, %v1819
      %v1821 = vrot.slane %v1813, %v1820
      %v1823 = vunpack.c.l.s4 1983009808
      %v1824 = vunpack.c.0.s8 %v1823
      %v1825 = vlaneseq
      %v1826 = vshrl.u32 %v1825, 7
      %v1827 = vsub.s32 %v1824, %v1826
      %v1828 = vrot.slane %v1814, %v1827
      %v1829 = vcombine.low %v1821, %v1828
      %v1830 = vcombine.low %v1454, %v1455
      %v1831 = vcombine.low %v1456, %v1457
      %v1833 = vunpack.c.l.s4 1983009808
      %v1834 = vunpack.c.0.s8 %v1833
      %v1835 = vlaneseq
      %v1836 = vshrl.u32 %v1835, 7
      %v1837 = vsub.s32 %v1834, %v1836
      %v1838 = vrot.slane %v1830, %v1837
      %v1840 = vunpack.c.l.s4 1983009808
      %v1841 = vunpack.c.0.s8 %v1840
      %v1842 = vlaneseq
      %v1843 = vshrl.u32 %v1842, 7
      %v1844 = vsub.s32 %v1841, %v1843
      %v1845 = vrot.slane %v1831, %v1844
      %v1846 = vcombine.low %v1838, %v1845
      %v1847 = vcombine.low %v1458, %v1459
      %v1848 = vcombine.low %v1460, %v1461
      %v1850 = vunpack.c.l.s4 1983009808
      %v1851 = vunpack.c.0.s8 %v1850
      %v1852 = vlaneseq
      %v1853 = vshrl.u32 %v1852, 7
      %v1854 = vsub.s32 %v1851, %v1853
      %v1855 = vrot.slane %v1847, %v1854
      %v1857 = vunpack.c.l.s4 1983009808
      %v1858 = vunpack.c.0.s8 %v1857
      %v1859 = vlaneseq
      %v1860 = vshrl.u32 %v1859, 7
      %v1861 = vsub.s32 %v1858, %v1860
      %v1862 = vrot.slane %v1848, %v1861
      %v1863 = vcombine.low %v1855, %v1862
      %v1864 = vcombine.low %v1599, %v1601
      %v1865 = vcombine.low %v1603, %v1605
      %v1867 = vunpack.c.l.s4 1983009808
      %v1868 = vunpack.c.0.s8 %v1867
      %v1869 = vlaneseq
      %v1870 = vshrl.u32 %v1869, 7
      %v1871 = vsub.s32 %v1868, %v1870
      %v1872 = vrot.slane %v1864, %v1871
      %v1874 = vunpack.c.l.s4 1983009808
      %v1875 = vunpack.c.0.s8 %v1874
      %v1876 = vlaneseq
      %v1877 = vshrl.u32 %v1876, 7
      %v1878 = vsub.s32 %v1875, %v1877
      %v1879 = vrot.slane %v1865, %v1878
      %v1880 = vcombine.low %v1872, %v1879
      %v1881 = vcombine.low %v1607, %v1609
      %v1882 = vcombine.low %v1611, %v1613
      %v1884 = vunpack.c.l.s4 1983009808
      %v1885 = vunpack.c.0.s8 %v1884
      %v1886 = vlaneseq
      %v1887 = vshrl.u32 %v1886, 7
      %v1888 = vsub.s32 %v1885, %v1887
      %v1889 = vrot.slane %v1881, %v1888
      %v1891 = vunpack.c.l.s4 1983009808
      %v1892 = vunpack.c.0.s8 %v1891
      %v1893 = vlaneseq
      %v1894 = vshrl.u32 %v1893, 7
      %v1895 = vsub.s32 %v1892, %v1894
      %v1896 = vrot.slane %v1882, %v1895
      %v1897 = vcombine.low %v1889, %v1896
      %v1898 = vcombine.low %v1462, %v1463
      %v1899 = vcombine.low %v1464, %v1465
      %v1901 = vunpack.c.l.s4 1983009808
      %v1902 = vunpack.c.0.s8 %v1901
      %v1903 = vlaneseq
      %v1904 = vshrl.u32 %v1903, 7
      %v1905 = vsub.s32 %v1902, %v1904
      %v1906 = vrot.slane %v1898, %v1905
      %v1908 = vunpack.c.l.s4 1983009808
      %v1909 = vunpack.c.0.s8 %v1908
      %v1910 = vlaneseq
      %v1911 = vshrl.u32 %v1910, 7
      %v1912 = vsub.s32 %v1909, %v1911
      %v1913 = vrot.slane %v1899, %v1912
      %v1914 = vcombine.low %v1906, %v1913
      %v1915 = vcombine.low %v1466, %v1467
      %v1916 = vcombine.low %v1468, %v1469
      %v1918 = vunpack.c.l.s4 1983009808
      %v1919 = vunpack.c.0.s8 %v1918
      %v1920 = vlaneseq
      %v1921 = vshrl.u32 %v1920, 7
      %v1922 = vsub.s32 %v1919, %v1921
      %v1923 = vrot.slane %v1915, %v1922
      %v1925 = vunpack.c.l.s4 1983009808
      %v1926 = vunpack.c.0.s8 %v1925
      %v1927 = vlaneseq
      %v1928 = vshrl.u32 %v1927, 7
      %v1929 = vsub.s32 %v1926, %v1928
      %v1930 = vrot.slane %v1916, %v1929
      %v1931 = vcombine.low %v1923, %v1930
      %v1932 = vcombine.low %v1615, %v1617
      %v1933 = vcombine.low %v1619, %v1621
      %v1935 = vunpack.c.l.s4 1983009808
      %v1936 = vunpack.c.0.s8 %v1935
      %v1937 = vlaneseq
      %v1938 = vshrl.u32 %v1937, 7
      %v1939 = vsub.s32 %v1936, %v1938
      %v1940 = vrot.slane %v1932, %v1939
      %v1942 = vunpack.c.l.s4 1983009808
      %v1943 = vunpack.c.0.s8 %v1942
      %v1944 = vlaneseq
      %v1945 = vshrl.u32 %v1944, 7
      %v1946 = vsub.s32 %v1943, %v1945
      %v1947 = vrot.slane %v1933, %v1946
      %v1948 = vcombine.low %v1940, %v1947
      %v1949 = vcombine.low %v1623, %v1625
      %v1950 = vcombine.low %v1627, %v1629
      %v1952 = vunpack.c.l.s4 1983009808
      %v1953 = vunpack.c.0.s8 %v1952
      %v1954 = vlaneseq
      %v1955 = vshrl.u32 %v1954, 7
      %v1956 = vsub.s32 %v1953, %v1955
      %v1957 = vrot.slane %v1949, %v1956
      %v1959 = vunpack.c.l.s4 1983009808
      %v1960 = vunpack.c.0.s8 %v1959
      %v1961 = vlaneseq
      %v1962 = vshrl.u32 %v1961, 7
      %v1963 = vsub.s32 %v1960, %v1962
      %v1964 = vrot.slane %v1950, %v1963
      %v1965 = vcombine.low %v1957, %v1964
      %v1966 = vcombine.low %v1470, %v1471
      %v1967 = vcombine.low %v1472, %v1473
      %v1969 = vunpack.c.l.s4 1983009808
      %v1970 = vunpack.c.0.s8 %v1969
      %v1971 = vlaneseq
      %v1972 = vshrl.u32 %v1971, 7
      %v1973 = vsub.s32 %v1970, %v1972
      %v1974 = vrot.slane %v1966, %v1973
      %v1976 = vunpack.c.l.s4 1983009808
      %v1977 = vunpack.c.0.s8 %v1976
      %v1978 = vlaneseq
      %v1979 = vshrl.u32 %v1978, 7
      %v1980 = vsub.s32 %v1977, %v1979
      %v1981 = vrot.slane %v1967, %v1980
      %v1982 = vcombine.low %v1974, %v1981
      %v1983 = vcombine.low %v1474, %v1475
      %v1984 = vcombine.low %v1476, %v1477
      %v1986 = vunpack.c.l.s4 1983009808
      %v1987 = vunpack.c.0.s8 %v1986
      %v1988 = vlaneseq
      %v1989 = vshrl.u32 %v1988, 7
      %v1990 = vsub.s32 %v1987, %v1989
      %v1991 = vrot.slane %v1983, %v1990
      %v1993 = vunpack.c.l.s4 1983009808
      %v1994 = vunpack.c.0.s8 %v1993
      %v1995 = vlaneseq
      %v1996 = vshrl.u32 %v1995, 7
      %v1997 = vsub.s32 %v1994, %v1996
      %v1998 = vrot.slane %v1984, %v1997
      %v1999 = vcombine.low %v1991, %v1998
      %v2000 = vcombine.low %v1631, %v1633
      %v2001 = vcombine.low %v1635, %v1637
      %v2003 = vunpack.c.l.s4 1983009808
      %v2004 = vunpack.c.0.s8 %v2003
      %v2005 = vlaneseq
      %v2006 = vshrl.u32 %v2005, 7
      %v2007 = vsub.s32 %v2004, %v2006
      %v2008 = vrot.slane %v2000, %v2007
      %v2010 = vunpack.c.l.s4 1983009808
      %v2011 = vunpack.c.0.s8 %v2010
      %v2012 = vlaneseq
      %v2013 = vshrl.u32 %v2012, 7
      %v2014 = vsub.s32 %v2011, %v2013
      %v2015 = vrot.slane %v2001, %v2014
      %v2016 = vcombine.low %v2008, %v2015
      %v2017 = vcombine.low %v1639, %v1641
      %v2018 = vcombine.low %v1643, %v1645
      %v2020 = vunpack.c.l.s4 1983009808
      %v2021 = vunpack.c.0.s8 %v2020
      %v2022 = vlaneseq
      %v2023 = vshrl.u32 %v2022, 7
      %v2024 = vsub.s32 %v2021, %v2023
      %v2025 = vrot.slane %v2017, %v2024
      %v2027 = vunpack.c.l.s4 1983009808
      %v2028 = vunpack.c.0.s8 %v2027
      %v2029 = vlaneseq
      %v2030 = vshrl.u32 %v2029, 7
      %v2031 = vsub.s32 %v2028, %v2030
      %v2032 = vrot.slane %v2018, %v2031
      %v2033 = vcombine.low %v2025, %v2032
      %v2034 = vcombine.low %v1478, %v1479
      %v2035 = vcombine.low %v1480, %v1481
      %v2037 = vunpack.c.l.s4 1983009808
      %v2038 = vunpack.c.0.s8 %v2037
      %v2039 = vlaneseq
      %v2040 = vshrl.u32 %v2039, 7
      %v2041 = vsub.s32 %v2038, %v2040
      %v2042 = vrot.slane %v2034, %v2041
      %v2044 = vunpack.c.l.s4 1983009808
      %v2045 = vunpack.c.0.s8 %v2044
      %v2046 = vlaneseq
      %v2047 = vshrl.u32 %v2046, 7
      %v2048 = vsub.s32 %v2045, %v2047
      %v2049 = vrot.slane %v2035, %v2048
      %v2050 = vcombine.low %v2042, %v2049
      %v2051 = vcombine.low %v1482, %v1483
      %v2052 = vcombine.low %v1484, %v1485
      %v2054 = vunpack.c.l.s4 1983009808
      %v2055 = vunpack.c.0.s8 %v2054
      %v2056 = vlaneseq
      %v2057 = vshrl.u32 %v2056, 7
      %v2058 = vsub.s32 %v2055, %v2057
      %v2059 = vrot.slane %v2051, %v2058
      %v2061 = vunpack.c.l.s4 1983009808
      %v2062 = vunpack.c.0.s8 %v2061
      %v2063 = vlaneseq
      %v2064 = vshrl.u32 %v2063, 7
      %v2065 = vsub.s32 %v2062, %v2064
      %v2066 = vrot.slane %v2052, %v2065
      %v2067 = vcombine.low %v2059, %v2066
      %v2068 = vcombine.low %v1647, %v1649
      %v2069 = vcombine.low %v1651, %v1653
      %v2071 = vunpack.c.l.s4 1983009808
      %v2072 = vunpack.c.0.s8 %v2071
      %v2073 = vlaneseq
      %v2074 = vshrl.u32 %v2073, 7
      %v2075 = vsub.s32 %v2072, %v2074
      %v2076 = vrot.slane %v2068, %v2075
      %v2078 = vunpack.c.l.s4 1983009808
      %v2079 = vunpack.c.0.s8 %v2078
      %v2080 = vlaneseq
      %v2081 = vshrl.u32 %v2080, 7
      %v2082 = vsub.s32 %v2079, %v2081
      %v2083 = vrot.slane %v2069, %v2082
      %v2084 = vcombine.low %v2076, %v2083
      %v2085 = vcombine.low %v1655, %v1657
      %v2086 = vcombine.low %v1659, %v1661
      %v2088 = vunpack.c.l.s4 1983009808
      %v2089 = vunpack.c.0.s8 %v2088
      %v2090 = vlaneseq
      %v2091 = vshrl.u32 %v2090, 7
      %v2092 = vsub.s32 %v2089, %v2091
      %v2093 = vrot.slane %v2085, %v2092
      %v2095 = vunpack.c.l.s4 1983009808
      %v2096 = vunpack.c.0.s8 %v2095
      %v2097 = vlaneseq
      %v2098 = vshrl.u32 %v2097, 7
      %v2099 = vsub.s32 %v2096, %v2098
      %v2100 = vrot.slane %v2086, %v2099
      %v2101 = vcombine.low %v2093, %v2100
      %v2102 = vcombine.low %v1486, %v1487
      %v2103 = vcombine.low %v1488, %v1489
      %v2105 = vunpack.c.l.s4 1983009808
      %v2106 = vunpack.c.0.s8 %v2105
      %v2107 = vlaneseq
      %v2108 = vshrl.u32 %v2107, 7
      %v2109 = vsub.s32 %v2106, %v2108
      %v2110 = vrot.slane %v2102, %v2109
      %v2112 = vunpack.c.l.s4 1983009808
      %v2113 = vunpack.c.0.s8 %v2112
      %v2114 = vlaneseq
      %v2115 = vshrl.u32 %v2114, 7
      %v2116 = vsub.s32 %v2113, %v2115
      %v2117 = vrot.slane %v2103, %v2116
      %v2118 = vcombine.low %v2110, %v2117
      %v2119 = vcombine.low %v1490, %v1491
      %v2120 = vcombine.low %v1492, %v1493
      %v2122 = vunpack.c.l.s4 1983009808
      %v2123 = vunpack.c.0.s8 %v2122
      %v2124 = vlaneseq
      %v2125 = vshrl.u32 %v2124, 7
      %v2126 = vsub.s32 %v2123, %v2125
      %v2127 = vrot.slane %v2119, %v2126
      %v2129 = vunpack.c.l.s4 1983009808
      %v2130 = vunpack.c.0.s8 %v2129
      %v2131 = vlaneseq
      %v2132 = vshrl.u32 %v2131, 7
      %v2133 = vsub.s32 %v2130, %v2132
      %v2134 = vrot.slane %v2120, %v2133
      %v2135 = vcombine.low %v2127, %v2134
      %v2136 = vcombine.low %v1663, %v1665
      %v2137 = vcombine.low %v1667, %v1669
      %v2139 = vunpack.c.l.s4 1983009808
      %v2140 = vunpack.c.0.s8 %v2139
      %v2141 = vlaneseq
      %v2142 = vshrl.u32 %v2141, 7
      %v2143 = vsub.s32 %v2140, %v2142
      %v2144 = vrot.slane %v2136, %v2143
      %v2146 = vunpack.c.l.s4 1983009808
      %v2147 = vunpack.c.0.s8 %v2146
      %v2148 = vlaneseq
      %v2149 = vshrl.u32 %v2148, 7
      %v2150 = vsub.s32 %v2147, %v2149
      %v2151 = vrot.slane %v2137, %v2150
      %v2152 = vcombine.low %v2144, %v2151
      %v2153 = vcombine.low %v1671, %v1673
      %v2154 = vcombine.low %v1675, %v1677
      %v2156 = vunpack.c.l.s4 1983009808
      %v2157 = vunpack.c.0.s8 %v2156
      %v2158 = vlaneseq
      %v2159 = vshrl.u32 %v2158, 7
      %v2160 = vsub.s32 %v2157, %v2159
      %v2161 = vrot.slane %v2153, %v2160
      %v2163 = vunpack.c.l.s4 1983009808
      %v2164 = vunpack.c.0.s8 %v2163
      %v2165 = vlaneseq
      %v2166 = vshrl.u32 %v2165, 7
      %v2167 = vsub.s32 %v2164, %v2166
      %v2168 = vrot.slane %v2154, %v2167
      %v2169 = vcombine.low %v2161, %v2168
      %v2170 = vcombine.low %v1494, %v1495
      %v2171 = vcombine.low %v1496, %v1497
      %v2173 = vunpack.c.l.s4 1983009808
      %v2174 = vunpack.c.0.s8 %v2173
      %v2175 = vlaneseq
      %v2176 = vshrl.u32 %v2175, 7
      %v2177 = vsub.s32 %v2174, %v2176
      %v2178 = vrot.slane %v2170, %v2177
      %v2180 = vunpack.c.l.s4 1983009808
      %v2181 = vunpack.c.0.s8 %v2180
      %v2182 = vlaneseq
      %v2183 = vshrl.u32 %v2182, 7
      %v2184 = vsub.s32 %v2181, %v2183
      %v2185 = vrot.slane %v2171, %v2184
      %v2186 = vcombine.low %v2178, %v2185
      %v2187 = vcombine.low %v1498, %v1499
      %v2188 = vcombine.low %v1500, %v1501
      %v2190 = vunpack.c.l.s4 1983009808
      %v2191 = vunpack.c.0.s8 %v2190
      %v2192 = vlaneseq
      %v2193 = vshrl.u32 %v2192, 7
      %v2194 = vsub.s32 %v2191, %v2193
      %v2195 = vrot.slane %v2187, %v2194
      %v2197 = vunpack.c.l.s4 1983009808
      %v2198 = vunpack.c.0.s8 %v2197
      %v2199 = vlaneseq
      %v2200 = vshrl.u32 %v2199, 7
      %v2201 = vsub.s32 %v2198, %v2200
      %v2202 = vrot.slane %v2188, %v2201
      %v2203 = vcombine.low %v2195, %v2202
      %v2204 = vcombine.low %v1679, %v1681
      %v2205 = vcombine.low %v1683, %v1685
      %v2207 = vunpack.c.l.s4 1983009808
      %v2208 = vunpack.c.0.s8 %v2207
      %v2209 = vlaneseq
      %v2210 = vshrl.u32 %v2209, 7
      %v2211 = vsub.s32 %v2208, %v2210
      %v2212 = vrot.slane %v2204, %v2211
      %v2214 = vunpack.c.l.s4 1983009808
      %v2215 = vunpack.c.0.s8 %v2214
      %v2216 = vlaneseq
      %v2217 = vshrl.u32 %v2216, 7
      %v2218 = vsub.s32 %v2215, %v2217
      %v2219 = vrot.slane %v2205, %v2218
      %v2220 = vcombine.low %v2212, %v2219
      %v2221 = vcombine.low %v1687, %v1689
      %v2222 = vcombine.low %v1691, %v1693
      %v2224 = vunpack.c.l.s4 1983009808
      %v2225 = vunpack.c.0.s8 %v2224
      %v2226 = vlaneseq
      %v2227 = vshrl.u32 %v2226, 7
      %v2228 = vsub.s32 %v2225, %v2227
      %v2229 = vrot.slane %v2221, %v2228
      %v2231 = vunpack.c.l.s4 1983009808
      %v2232 = vunpack.c.0.s8 %v2231
      %v2233 = vlaneseq
      %v2234 = vshrl.u32 %v2233, 7
      %v2235 = vsub.s32 %v2232, %v2234
      %v2236 = vrot.slane %v2222, %v2235
      %v2237 = vcombine.low %v2229, %v2236
      %s2270 = scalar_lea.vmem [#allocation2], 24
      %vm2271 = vcmask 31744
      %2272 = vst.msk [vmem:[%s2270 + $0x1] sm:$0xff] %vm2271, %v1710
      %2273 = vst.msk [vmem:[%s2270 + $0x9] sm:$0xff] %vm2271, %v1727
      %2274 = vst.msk [vmem:[%s2270 + $0x19] sm:$0xff] %vm2271, %v1744
      %2275 = vst.msk [vmem:[%s2270 + $0x21] sm:$0xff] %vm2271, %v1761
      %2276 = vst.msk [vmem:[%s2270 + $0x31] sm:$0xff] %vm2271, %v1778
      %2277 = vst.msk [vmem:[%s2270 + $0x39] sm:$0xff] %vm2271, %v1795
      %2278 = vst.msk [vmem:[%s2270 + $0x49] sm:$0xff] %vm2271, %v1812
      %2279 = vst.msk [vmem:[%s2270 + $0x51] sm:$0xff] %vm2271, %v1829
      %2280 = vst.msk [vmem:[%s2270 + $0x61] sm:$0xff] %vm2271, %v1846
      %2281 = vst.msk [vmem:[%s2270 + $0x69] sm:$0xff] %vm2271, %v1863
      %2282 = vst.msk [vmem:[%s2270 + $0x79] sm:$0xff] %vm2271, %v1880
      %2283 = vst.msk [vmem:[%s2270 + $0x81] sm:$0xff] %vm2271, %v1897
      %2284 = vst.msk [vmem:[%s2270 + $0x91] sm:$0xff] %vm2271, %v1914
      %2285 = vst.msk [vmem:[%s2270 + $0x99] sm:$0xff] %vm2271, %v1931
      %2286 = vst.msk [vmem:[%s2270 + $0xa9] sm:$0xff] %vm2271, %v1948
      %2287 = vst.msk [vmem:[%s2270 + $0xb1] sm:$0xff] %vm2271, %v1965
      %2288 = vst.msk [vmem:[%s2270 + $0xc1] sm:$0xff] %vm2271, %v1982
      %2289 = vst.msk [vmem:[%s2270 + $0xc9] sm:$0xff] %vm2271, %v1999
      %2290 = vst.msk [vmem:[%s2270 + $0xd9] sm:$0xff] %vm2271, %v2016
      %2291 = vst.msk [vmem:[%s2270 + $0xe1] sm:$0xff] %vm2271, %v2033
      %2292 = vst.msk [vmem:[%s2270 + $0xf1] sm:$0xff] %vm2271, %v2050
      %2293 = vst.msk [vmem:[%s2270 + $0xf9] sm:$0xff] %vm2271, %v2067
      %2294 = vst.msk [vmem:[%s2270 + $0x109] sm:$0xff] %vm2271, %v2084
      %2295 = vst.msk [vmem:[%s2270 + $0x111] sm:$0xff] %vm2271, %v2101
      %2296 = vst.msk [vmem:[%s2270 + $0x121] sm:$0xff] %vm2271, %v2118
      %2297 = vst.msk [vmem:[%s2270 + $0x129] sm:$0xff] %vm2271, %v2135
      %2298 = vst.msk [vmem:[%s2270 + $0x139] sm:$0xff] %vm2271, %v2152
      %2299 = vst.msk [vmem:[%s2270 + $0x141] sm:$0xff] %vm2271, %v2169
      %2300 = vst.msk [vmem:[%s2270 + $0x151] sm:$0xff] %vm2271, %v2186
      %2301 = vst.msk [vmem:[%s2270 + $0x159] sm:$0xff] %vm2271, %v2203
      %2302 = vst.msk [vmem:[%s2270 + $0x169] sm:$0xff] %vm2271, %v2220
      %2303 = vst.msk [vmem:[%s2270 + $0x171] sm:$0xff] %vm2271, %v2237
      %v2304 = vld [vmem:[%s320] sm:$0xff]
      %v2305 = vld [vmem:[%s320 + $0x8] sm:$0xff]
      %v2306 = vld [vmem:[%s320 + $0x10] sm:$0xff]
      %v2307 = vld [vmem:[%s320 + $0x18] sm:$0xff]
      %v2308 = vld [vmem:[%s320 + $0x20] sm:$0xff]
      %v2309 = vld [vmem:[%s320 + $0x28] sm:$0xff]
      %v2310 = vld [vmem:[%s320 + $0x30] sm:$0xff]
      %v2311 = vld [vmem:[%s320 + $0x38] sm:$0xff]
      %v2312 = vld [vmem:[%s320 + $0x40] sm:$0xff]
      %v2313 = vld [vmem:[%s320 + $0x48] sm:$0xff]
      %v2314 = vld [vmem:[%s320 + $0x50] sm:$0xff]
      %v2315 = vld [vmem:[%s320 + $0x58] sm:$0xff]
      %v2316 = vld [vmem:[%s320 + $0x60] sm:$0xff]
      %v2317 = vld [vmem:[%s320 + $0x68] sm:$0xff]
      %v2318 = vld [vmem:[%s320 + $0x70] sm:$0xff]
      %v2319 = vld [vmem:[%s320 + $0x78] sm:$0xff]
      %v2320 = vld [vmem:[%s320 + $0x80] sm:$0xff]
      %v2321 = vld [vmem:[%s320 + $0x88] sm:$0xff]
      %v2322 = vld [vmem:[%s320 + $0x90] sm:$0xff]
      %v2323 = vld [vmem:[%s320 + $0x98] sm:$0xff]
      %v2324 = vld [vmem:[%s320 + $0xa0] sm:$0xff]
      %v2325 = vld [vmem:[%s320 + $0xa8] sm:$0xff]
      %v2326 = vld [vmem:[%s320 + $0xb0] sm:$0xff]
      %v2327 = vld [vmem:[%s320 + $0xb8] sm:$0xff]
      %v2328 = vld [vmem:[%s320 + $0xc0] sm:$0xff]
      %v2329 = vld [vmem:[%s320 + $0xc8] sm:$0xff]
      %v2330 = vld [vmem:[%s320 + $0xd0] sm:$0xff]
      %v2331 = vld [vmem:[%s320 + $0xd8] sm:$0xff]
      %v2332 = vld [vmem:[%s320 + $0xe0] sm:$0xff]
      %v2333 = vld [vmem:[%s320 + $0xe8] sm:$0xff]
      %v2334 = vld [vmem:[%s320 + $0xf0] sm:$0xff]
      %v2335 = vld [vmem:[%s320 + $0xf8] sm:$0xff]
      %2368 = vrot.lane.b32.xlu0 %v2304, 4
      %v2369 = vpop.permute.xlu0 %2368
      %2370 = vrot.lane.b32.xlu0 %v2305, 4
      %v2371 = vpop.permute.xlu0 %2370
      %2372 = vrot.lane.b32.xlu0 %v2306, 4
      %v2373 = vpop.permute.xlu0 %2372
      %2374 = vrot.lane.b32.xlu0 %v2307, 4
      %v2375 = vpop.permute.xlu0 %2374
      %2376 = vrot.lane.b32.xlu0 %v2308, 4
      %v2377 = vpop.permute.xlu0 %2376
      %2378 = vrot.lane.b32.xlu0 %v2309, 4
      %v2379 = vpop.permute.xlu0 %2378
      %2380 = vrot.lane.b32.xlu0 %v2310, 4
      %v2381 = vpop.permute.xlu0 %2380
      %2382 = vrot.lane.b32.xlu0 %v2311, 4
      %v2383 = vpop.permute.xlu0 %2382
      %2384 = vrot.lane.b32.xlu0 %v2312, 4
      %v2385 = vpop.permute.xlu0 %2384
      %2386 = vrot.lane.b32.xlu0 %v2313, 4
      %v2387 = vpop.permute.xlu0 %2386
      %2388 = vrot.lane.b32.xlu0 %v2314, 4
      %v2389 = vpop.permute.xlu0 %2388
      %2390 = vrot.lane.b32.xlu0 %v2315, 4
      %v2391 = vpop.permute.xlu0 %2390
      %2392 = vrot.lane.b32.xlu0 %v2316, 4
      %v2393 = vpop.permute.xlu0 %2392
      %2394 = vrot.lane.b32.xlu0 %v2317, 4
      %v2395 = vpop.permute.xlu0 %2394
      %2396 = vrot.lane.b32.xlu0 %v2318, 4
      %v2397 = vpop.permute.xlu0 %2396
      %2398 = vrot.lane.b32.xlu0 %v2319, 4
      %v2399 = vpop.permute.xlu0 %2398
      %2400 = vrot.lane.b32.xlu0 %v2320, 4
      %v2401 = vpop.permute.xlu0 %2400
      %2402 = vrot.lane.b32.xlu0 %v2321, 4
      %v2403 = vpop.permute.xlu0 %2402
      %2404 = vrot.lane.b32.xlu0 %v2322, 4
      %v2405 = vpop.permute.xlu0 %2404
      %2406 = vrot.lane.b32.xlu0 %v2323, 4
      %v2407 = vpop.permute.xlu0 %2406
      %2408 = vrot.lane.b32.xlu0 %v2324, 4
      %v2409 = vpop.permute.xlu0 %2408
      %2410 = vrot.lane.b32.xlu0 %v2325, 4
      %v2411 = vpop.permute.xlu0 %2410
      %2412 = vrot.lane.b32.xlu0 %v2326, 4
      %v2413 = vpop.permute.xlu0 %2412
      %2414 = vrot.lane.b32.xlu0 %v2327, 4
      %v2415 = vpop.permute.xlu0 %2414
      %2416 = vrot.lane.b32.xlu0 %v2328, 4
      %v2417 = vpop.permute.xlu0 %2416
      %2418 = vrot.lane.b32.xlu0 %v2329, 4
      %v2419 = vpop.permute.xlu0 %2418
      %2420 = vrot.lane.b32.xlu0 %v2330, 4
      %v2421 = vpop.permute.xlu0 %2420
      %2422 = vrot.lane.b32.xlu0 %v2331, 4
      %v2423 = vpop.permute.xlu0 %2422
      %2424 = vrot.lane.b32.xlu0 %v2332, 4
      %v2425 = vpop.permute.xlu0 %2424
      %2426 = vrot.lane.b32.xlu0 %v2333, 4
      %v2427 = vpop.permute.xlu0 %2426
      %2428 = vrot.lane.b32.xlu0 %v2334, 4
      %v2429 = vpop.permute.xlu0 %2428
      %2430 = vrot.lane.b32.xlu0 %v2335, 4
      %v2431 = vpop.permute.xlu0 %2430
      %vm2464 = vcmask 64544
      %2465 = vst.msk [vmem:[%s2270 + $0x1] sm:$0xff] %vm2464, %v2369
      %2466 = vst.msk [vmem:[%s2270 + $0x9] sm:$0xff] %vm2464, %v2371
      %2467 = vst.msk [vmem:[%s2270 + $0x19] sm:$0xff] %vm2464, %v2373
      %2468 = vst.msk [vmem:[%s2270 + $0x21] sm:$0xff] %vm2464, %v2375
      %2469 = vst.msk [vmem:[%s2270 + $0x31] sm:$0xff] %vm2464, %v2377
      %2470 = vst.msk [vmem:[%s2270 + $0x39] sm:$0xff] %vm2464, %v2379
      %2471 = vst.msk [vmem:[%s2270 + $0x49] sm:$0xff] %vm2464, %v2381
      %2472 = vst.msk [vmem:[%s2270 + $0x51] sm:$0xff] %vm2464, %v2383
      %2473 = vst.msk [vmem:[%s2270 + $0x61] sm:$0xff] %vm2464, %v2385
      %2474 = vst.msk [vmem:[%s2270 + $0x69] sm:$0xff] %vm2464, %v2387
      %2475 = vst.msk [vmem:[%s2270 + $0x79] sm:$0xff] %vm2464, %v2389
      %2476 = vst.msk [vmem:[%s2270 + $0x81] sm:$0xff] %vm2464, %v2391
      %2477 = vst.msk [vmem:[%s2270 + $0x91] sm:$0xff] %vm2464, %v2393
      %2478 = vst.msk [vmem:[%s2270 + $0x99] sm:$0xff] %vm2464, %v2395
      %2479 = vst.msk [vmem:[%s2270 + $0xa9] sm:$0xff] %vm2464, %v2397
      %2480 = vst.msk [vmem:[%s2270 + $0xb1] sm:$0xff] %vm2464, %v2399
      %2481 = vst.msk [vmem:[%s2270 + $0xc1] sm:$0xff] %vm2464, %v2401
      %2482 = vst.msk [vmem:[%s2270 + $0xc9] sm:$0xff] %vm2464, %v2403
      %2483 = vst.msk [vmem:[%s2270 + $0xd9] sm:$0xff] %vm2464, %v2405
      %2484 = vst.msk [vmem:[%s2270 + $0xe1] sm:$0xff] %vm2464, %v2407
      %2485 = vst.msk [vmem:[%s2270 + $0xf1] sm:$0xff] %vm2464, %v2409
      %2486 = vst.msk [vmem:[%s2270 + $0xf9] sm:$0xff] %vm2464, %v2411
      %2487 = vst.msk [vmem:[%s2270 + $0x109] sm:$0xff] %vm2464, %v2413
      %2488 = vst.msk [vmem:[%s2270 + $0x111] sm:$0xff] %vm2464, %v2415
      %2489 = vst.msk [vmem:[%s2270 + $0x121] sm:$0xff] %vm2464, %v2417
      %2490 = vst.msk [vmem:[%s2270 + $0x129] sm:$0xff] %vm2464, %v2419
      %2491 = vst.msk [vmem:[%s2270 + $0x139] sm:$0xff] %vm2464, %v2421
      %2492 = vst.msk [vmem:[%s2270 + $0x141] sm:$0xff] %vm2464, %v2423
      %2493 = vst.msk [vmem:[%s2270 + $0x151] sm:$0xff] %vm2464, %v2425
      %2494 = vst.msk [vmem:[%s2270 + $0x159] sm:$0xff] %vm2464, %v2427
      %2495 = vst.msk [vmem:[%s2270 + $0x169] sm:$0xff] %vm2464, %v2429
      %2496 = vst.msk [vmem:[%s2270 + $0x171] sm:$0xff] %vm2464, %v2431
      %v2497 = vld [vmem:[#allocation2] sm:$0xff]
      %v2498 = vld [vmem:[#allocation2 + $0x8] sm:$0xff]
      %v2499 = vld [vmem:[#allocation2 + $0x18] sm:$0xff]
      %v2500 = vld [vmem:[#allocation2 + $0x20] sm:$0xff]
      %v2501 = vld [vmem:[#allocation2 + $0x30] sm:$0xff]
      %v2502 = vld [vmem:[#allocation2 + $0x38] sm:$0xff]
      %v2503 = vld [vmem:[#allocation2 + $0x48] sm:$0xff]
      %v2504 = vld [vmem:[#allocation2 + $0x50] sm:$0xff]
      %v2505 = vld [vmem:[#allocation2 + $0x60] sm:$0xff]
      %v2506 = vld [vmem:[#allocation2 + $0x68] sm:$0xff]
      %v2507 = vld [vmem:[#allocation2 + $0x78] sm:$0xff]
      %v2508 = vld [vmem:[#allocation2 + $0x80] sm:$0xff]
      %v2509 = vld [vmem:[#allocation2 + $0x90] sm:$0xff]
      %v2510 = vld [vmem:[#allocation2 + $0x98] sm:$0xff]
      %v2511 = vld [vmem:[#allocation2 + $0xa8] sm:$0xff]
      %v2512 = vld [vmem:[#allocation2 + $0xb0] sm:$0xff]
      %v2513 = vld [vmem:[#allocation2 + $0xc0] sm:$0xff]
      %v2514 = vld [vmem:[#allocation2 + $0xc8] sm:$0xff]
      %v2515 = vld [vmem:[#allocation2 + $0xd8] sm:$0xff]
      %v2516 = vld [vmem:[#allocation2 + $0xe0] sm:$0xff]
      %v2517 = vld [vmem:[#allocation2 + $0xf0] sm:$0xff]
      %v2518 = vld [vmem:[#allocation2 + $0xf8] sm:$0xff]
      %v2519 = vld [vmem:[#allocation2 + $0x108] sm:$0xff]
      %v2520 = vld [vmem:[#allocation2 + $0x110] sm:$0xff]
      %v2521 = vld [vmem:[#allocation2 + $0x120] sm:$0xff]
      %v2522 = vld [vmem:[#allocation2 + $0x128] sm:$0xff]
      %v2523 = vld [vmem:[#allocation2 + $0x138] sm:$0xff]
      %v2524 = vld [vmem:[#allocation2 + $0x140] sm:$0xff]
      %v2525 = vld [vmem:[#allocation2 + $0x150] sm:$0xff]
      %v2526 = vld [vmem:[#allocation2 + $0x158] sm:$0xff]
      %v2527 = vld [vmem:[#allocation2 + $0x168] sm:$0xff]
      %v2528 = vld [vmem:[#allocation2 + $0x170] sm:$0xff]
      %v2529 = vpack.c.bf16 %v2498, %v2497
      %v2530 = vpack.c.bf16 %v2500, %v2499
      %v2531 = vpack.c.bf16 %v2502, %v2501
      %v2532 = vpack.c.bf16 %v2504, %v2503
      %v2533 = vpack.c.bf16 %v2506, %v2505
      %v2534 = vpack.c.bf16 %v2508, %v2507
      %v2535 = vpack.c.bf16 %v2510, %v2509
      %v2536 = vpack.c.bf16 %v2512, %v2511
      %v2537 = vpack.c.bf16 %v2514, %v2513
      %v2538 = vpack.c.bf16 %v2516, %v2515
      %v2539 = vpack.c.bf16 %v2518, %v2517
      %v2540 = vpack.c.bf16 %v2520, %v2519
      %v2541 = vpack.c.bf16 %v2522, %v2521
      %v2542 = vpack.c.bf16 %v2524, %v2523
      %v2543 = vpack.c.bf16 %v2526, %v2525
      %v2544 = vpack.c.bf16 %v2528, %v2527
      %v2545 = vld [vmem:[%s4] sm:$0xf]
      %v2546 = vld [vmem:[#allocation2 + $0x1] sm:$0xff]
      %v2547 = vld [vmem:[#allocation2 + $0x9] sm:$0xff]
      %v2548 = vld [vmem:[#allocation2 + $0x19] sm:$0xff]
      %v2549 = vld [vmem:[#allocation2 + $0x21] sm:$0xff]
      %v2550 = vld [vmem:[#allocation2 + $0x31] sm:$0xff]
      %v2551 = vld [vmem:[#allocation2 + $0x39] sm:$0xff]
      %v2552 = vld [vmem:[#allocation2 + $0x49] sm:$0xff]
      %v2553 = vld [vmem:[#allocation2 + $0x51] sm:$0xff]
      %v2554 = vld [vmem:[#allocation2 + $0x61] sm:$0xff]
      %v2555 = vld [vmem:[#allocation2 + $0x69] sm:$0xff]
      %v2556 = vld [vmem:[#allocation2 + $0x79] sm:$0xff]
      %v2557 = vld [vmem:[#allocation2 + $0x81] sm:$0xff]
      %v2558 = vld [vmem:[#allocation2 + $0x91] sm:$0xff]
      %v2559 = vld [vmem:[#allocation2 + $0x99] sm:$0xff]
      %v2560 = vld [vmem:[#allocation2 + $0xa9] sm:$0xff]
      %v2561 = vld [vmem:[#allocation2 + $0xb1] sm:$0xff]
      %v2562 = vld [vmem:[#allocation2 + $0xc1] sm:$0xff]
      %v2563 = vld [vmem:[#allocation2 + $0xc9] sm:$0xff]
      %v2564 = vld [vmem:[#allocation2 + $0xd9] sm:$0xff]
      %v2565 = vld [vmem:[#allocation2 + $0xe1] sm:$0xff]
      %v2566 = vld [vmem:[#allocation2 + $0xf1] sm:$0xff]
      %v2567 = vld [vmem:[#allocation2 + $0xf9] sm:$0xff]
      %v2568 = vld [vmem:[#allocation2 + $0x109] sm:$0xff]
      %v2569 = vld [vmem:[#allocation2 + $0x111] sm:$0xff]
      %v2570 = vld [vmem:[#allocation2 + $0x121] sm:$0xff]
      %v2571 = vld [vmem:[#allocation2 + $0x129] sm:$0xff]
      %v2572 = vld [vmem:[#allocation2 + $0x139] sm:$0xff]
      %v2573 = vld [vmem:[#allocation2 + $0x141] sm:$0xff]
      %v2574 = vld [vmem:[#allocation2 + $0x151] sm:$0xff]
      %v2575 = vld [vmem:[#allocation2 + $0x159] sm:$0xff]
      %v2576 = vld [vmem:[#allocation2 + $0x169] sm:$0xff]
      %v2577 = vld [vmem:[#allocation2 + $0x171] sm:$0xff]
      %v2578 = vpack.c.bf16 %v2547, %v2546
      %v2579 = vpack.c.bf16 %v2549, %v2548
      %v2580 = vpack.c.bf16 %v2551, %v2550
      %v2581 = vpack.c.bf16 %v2553, %v2552
      %v2582 = vpack.c.bf16 %v2555, %v2554
      %v2583 = vpack.c.bf16 %v2557, %v2556
      %v2584 = vpack.c.bf16 %v2559, %v2558
      %v2585 = vpack.c.bf16 %v2561, %v2560
      %v2586 = vpack.c.bf16 %v2563, %v2562
      %v2587 = vpack.c.bf16 %v2565, %v2564
      %v2588 = vpack.c.bf16 %v2567, %v2566
      %v2589 = vpack.c.bf16 %v2569, %v2568
      %v2590 = vpack.c.bf16 %v2571, %v2570
      %v2591 = vpack.c.bf16 %v2573, %v2572
      %v2592 = vpack.c.bf16 %v2575, %v2574
      %v2593 = vpack.c.bf16 %v2577, %v2576
      %s2594 = scalar_lea.vmem %s4, 4
      %v2595 = vld [vmem:[%s2594] sm:$0xf]
      %v2597 = vsel %vm443, %v2578, 0
      %v2600 = vsel %vm443, %v2579, 0
      %v2603 = vsel %vm443, %v2580, 0
      %v2606 = vsel %vm443, %v2581, 0
      %v2609 = vsel %vm443, %v2582, 0
      %v2612 = vsel %vm443, %v2583, 0
      %v2615 = vsel %vm443, %v2584, 0
      %v2618 = vsel %vm443, %v2585, 0
      %v2621 = vsel %vm443, %v2586, 0
      %v2624 = vsel %vm443, %v2587, 0
      %v2627 = vsel %vm443, %v2588, 0
      %v2630 = vsel %vm443, %v2589, 0
      %v2633 = vsel %vm443, %v2590, 0
      %v2636 = vsel %vm443, %v2591, 0
      %v2639 = vsel %vm443, %v2592, 0
      %v2642 = vsel %vm443, %v2593, 0
      %v2645 = vsel %vm456, %v2595, 0
      %2647 = vmatprep.subr.bf16.mxu0 0
      %2648 = vmatpush1.bf16.msra.mxu0 %v2645
      %2649 = vmatprep.subr.bf16.mxu0 0
      %2650 = vmatpush1.bf16.msra.mxu0 0
      %2651 = vmatprep.subr.bf16.mxu0 0
      %2652 = vmatpush1.bf16.msra.mxu0 0
      %2653 = vmatprep.subr.bf16.mxu0 0
      %2654 = vmatpush1.bf16.msra.mxu0 0
      %2655 = vmatprep.subr.bf16.mxu0 0
      %2656 = vmatpush1.bf16.msra.mxu0 0
      %2657 = vmatprep.subr.bf16.mxu0 0
      %2658 = vmatpush1.bf16.msra.mxu0 0
      %2659 = vmatprep.subr.bf16.mxu0 0
      %2660 = vmatpush1.bf16.msra.mxu0 0
      %2661 = vmatprep.subr.bf16.mxu0 0
      %2662 = vmatpush1.bf16.msra.mxu0 0
      %2663 = vmatprep.subr.bf16.mxu0 0
      %2664 = vmatpush1.bf16.msra.mxu0 0
      %2665 = vmatprep.subr.bf16.mxu0 0
      %2666 = vmatpush1.bf16.msra.mxu0 0
      %2667 = vmatprep.subr.bf16.mxu0 0
      %2668 = vmatpush1.bf16.msra.mxu0 0
      %2669 = vmatprep.subr.bf16.mxu0 0
      %2670 = vmatpush1.bf16.msra.mxu0 0
      %2671 = vmatprep.subr.bf16.mxu0 0
      %2672 = vmatpush1.bf16.msra.mxu0 0
      %2673 = vmatprep.subr.bf16.mxu0 0
      %2674 = vmatpush1.bf16.msra.mxu0 0
      %2675 = vmatprep.subr.bf16.mxu0 0
      %2676 = vmatpush1.bf16.msra.mxu0 0
      %2677 = vmatprep.subr.bf16.mxu0 0
      %2678 = vmatpush1.bf16.msra.mxu0 0
      %2679 = vmatprep.mubr.bf16.mxu0 0
      %2680 = vmatmul.mubr.bf16.gmra.mrb[0].mxu0 %v2597
      %v2681 = vpop.f32.mrb[0].mxu0
      %v2682 = vadd.f32 0.0, %v2681
      %v2683 = vpop.f32.mrb[0].mxu0
      %v2684 = vpop.f32.mrb[0].mxu0
      %v2685 = vadd.f32 0.0, %v2684
      %v2686 = vpop.f32.mrb[0].mxu0
      %2687 = vmatprep.mubr.bf16.mxu0 0
      %2688 = vmatmul.mubr.bf16.gmra.mrb[0].mxu0 %v2600
      %v2689 = vpop.f32.mrb[0].mxu0
      %v2690 = vadd.f32 0.0, %v2689
      %v2691 = vpop.f32.mrb[0].mxu0
      %v2692 = vpop.f32.mrb[0].mxu0
      %v2693 = vadd.f32 0.0, %v2692
      %v2694 = vpop.f32.mrb[0].mxu0
      %2695 = vmatprep.mubr.bf16.mxu0 0
      %2696 = vmatmul.mubr.bf16.gmra.mrb[0].mxu0 %v2603
      %v2697 = vpop.f32.mrb[0].mxu0
      %v2698 = vadd.f32 0.0, %v2697
      %v2699 = vpop.f32.mrb[0].mxu0
      %v2700 = vpop.f32.mrb[0].mxu0
      %v2701 = vadd.f32 0.0, %v2700
      %v2702 = vpop.f32.mrb[0].mxu0
      %2703 = vmatprep.mubr.bf16.mxu0 0
      %2704 = vmatmul.mubr.bf16.gmra.mrb[0].mxu0 %v2606
      %v2705 = vpop.f32.mrb[0].mxu0
      %v2706 = vadd.f32 0.0, %v2705
      %v2707 = vpop.f32.mrb[0].mxu0
      %v2708 = vpop.f32.mrb[0].mxu0
      %v2709 = vadd.f32 0.0, %v2708
      %v2710 = vpop.f32.mrb[0].mxu0
      %2711 = vmatprep.mubr.bf16.mxu0 0
      %2712 = vmatmul.mubr.bf16.gmra.mrb[0].mxu0 %v2609
      %v2713 = vpop.f32.mrb[0].mxu0
      %v2714 = vadd.f32 0.0, %v2713
      %v2715 = vpop.f32.mrb[0].mxu0
      %v2716 = vpop.f32.mrb[0].mxu0
      %v2717 = vadd.f32 0.0, %v2716
      %v2718 = vpop.f32.mrb[0].mxu0
      %2719 = vmatprep.mubr.bf16.mxu0 0
      %2720 = vmatmul.mubr.bf16.gmra.mrb[0].mxu0 %v2612
      %v2721 = vpop.f32.mrb[0].mxu0
      %v2722 = vadd.f32 0.0, %v2721
      %v2723 = vpop.f32.mrb[0].mxu0
      %v2724 = vpop.f32.mrb[0].mxu0
      %v2725 = vadd.f32 0.0, %v2724
      %v2726 = vpop.f32.mrb[0].mxu0
      %2727 = vmatprep.mubr.bf16.mxu0 0
      %2728 = vmatmul.mubr.bf16.gmra.mrb[0].mxu0 %v2615
      %v2729 = vpop.f32.mrb[0].mxu0
      %v2730 = vadd.f32 0.0, %v2729
      %v2731 = vpop.f32.mrb[0].mxu0
      %v2732 = vpop.f32.mrb[0].mxu0
      %v2733 = vadd.f32 0.0, %v2732
      %v2734 = vpop.f32.mrb[0].mxu0
      %2735 = vmatprep.mubr.bf16.mxu0 0
      %2736 = vmatmul.mubr.bf16.gmra.mrb[0].mxu0 %v2618
      %v2737 = vpop.f32.mrb[0].mxu0
      %v2738 = vadd.f32 0.0, %v2737
      %v2739 = vpop.f32.mrb[0].mxu0
      %v2740 = vpop.f32.mrb[0].mxu0
      %v2741 = vadd.f32 0.0, %v2740
      %v2742 = vpop.f32.mrb[0].mxu0
      %2743 = vmatprep.mubr.bf16.mxu0 0
      %2744 = vmatmul.mubr.bf16.gmra.mrb[0].mxu0 %v2621
      %v2745 = vpop.f32.mrb[0].mxu0
      %v2746 = vadd.f32 0.0, %v2745
      %v2747 = vpop.f32.mrb[0].mxu0
      %v2748 = vpop.f32.mrb[0].mxu0
      %v2749 = vadd.f32 0.0, %v2748
      %v2750 = vpop.f32.mrb[0].mxu0
      %2751 = vmatprep.mubr.bf16.mxu0 0
      %2752 = vmatmul.mubr.bf16.gmra.mrb[0].mxu0 %v2624
      %v2753 = vpop.f32.mrb[0].mxu0
      %v2754 = vadd.f32 0.0, %v2753
      %v2755 = vpop.f32.mrb[0].mxu0
      %v2756 = vpop.f32.mrb[0].mxu0
      %v2757 = vadd.f32 0.0, %v2756
      %v2758 = vpop.f32.mrb[0].mxu0
      %2759 = vmatprep.mubr.bf16.mxu0 0
      %2760 = vmatmul.mubr.bf16.gmra.mrb[0].mxu0 %v2627
      %v2761 = vpop.f32.mrb[0].mxu0
      %v2762 = vadd.f32 0.0, %v2761
      %v2763 = vpop.f32.mrb[0].mxu0
      %v2764 = vpop.f32.mrb[0].mxu0
      %v2765 = vadd.f32 0.0, %v2764
      %v2766 = vpop.f32.mrb[0].mxu0
      %2767 = vmatprep.mubr.bf16.mxu0 0
      %2768 = vmatmul.mubr.bf16.gmra.mrb[0].mxu0 %v2630
      %v2769 = vpop.f32.mrb[0].mxu0
      %v2770 = vadd.f32 0.0, %v2769
      %v2771 = vpop.f32.mrb[0].mxu0
      %v2772 = vpop.f32.mrb[0].mxu0
      %v2773 = vadd.f32 0.0, %v2772
      %v2774 = vpop.f32.mrb[0].mxu0
      %2775 = vmatprep.mubr.bf16.mxu0 0
      %2776 = vmatmul.mubr.bf16.gmra.mrb[0].mxu0 %v2633
      %v2777 = vpop.f32.mrb[0].mxu0
      %v2778 = vadd.f32 0.0, %v2777
      %v2779 = vpop.f32.mrb[0].mxu0
      %v2780 = vpop.f32.mrb[0].mxu0
      %v2781 = vadd.f32 0.0, %v2780
      %v2782 = vpop.f32.mrb[0].mxu0
      %2783 = vmatprep.mubr.bf16.mxu0 0
      %2784 = vmatmul.mubr.bf16.gmra.mrb[0].mxu0 %v2636
      %v2785 = vpop.f32.mrb[0].mxu0
      %v2786 = vadd.f32 0.0, %v2785
      %v2787 = vpop.f32.mrb[0].mxu0
      %v2788 = vpop.f32.mrb[0].mxu0
      %v2789 = vadd.f32 0.0, %v2788
      %v2790 = vpop.f32.mrb[0].mxu0
      %2791 = vmatprep.mubr.bf16.mxu0 0
      %2792 = vmatmul.mubr.bf16.gmra.mrb[0].mxu0 %v2639
      %v2793 = vpop.f32.mrb[0].mxu0
      %v2794 = vadd.f32 0.0, %v2793
      %v2795 = vpop.f32.mrb[0].mxu0
      %v2796 = vpop.f32.mrb[0].mxu0
      %v2797 = vadd.f32 0.0, %v2796
      %v2798 = vpop.f32.mrb[0].mxu0
      %2799 = vmatprep.mubr.bf16.mxu0 0
      %2800 = vmatmul.mubr.bf16.gmra.mrb[0].mxu0 %v2642
      %v2801 = vpop.f32.mrb[0].mxu0
      %v2802 = vadd.f32 0.0, %v2801
      %v2803 = vpop.f32.mrb[0].mxu0
      %v2804 = vpop.f32.mrb[0].mxu0
      %v2805 = vadd.f32 0.0, %v2804
      %v2806 = vpop.f32.mrb[0].mxu0
      %2807 = vdwg.mxu0
      %v2809 = vsel %vm443, %v2529, 0
      %v2812 = vsel %vm443, %v2530, 0
      %v2815 = vsel %vm443, %v2531, 0
      %v2818 = vsel %vm443, %v2532, 0
      %v2821 = vsel %vm443, %v2533, 0
      %v2824 = vsel %vm443, %v2534, 0
      %v2827 = vsel %vm443, %v2535, 0
      %v2830 = vsel %vm443, %v2536, 0
      %v2833 = vsel %vm443, %v2537, 0
      %v2836 = vsel %vm443, %v2538, 0
      %v2839 = vsel %vm443, %v2539, 0
      %v2842 = vsel %vm443, %v2540, 0
      %v2845 = vsel %vm443, %v2541, 0
      %v2848 = vsel %vm443, %v2542, 0
      %v2851 = vsel %vm443, %v2543, 0
      %v2854 = vsel %vm443, %v2544, 0
      %v2857 = vsel %vm456, %v2545, 0
      %2859 = vmatprep.subr.bf16.mxu0 0
      %2860 = vmatpush1.bf16.msra.mxu0 %v2857
      %2861 = vmatprep.subr.bf16.mxu0 0
      %2862 = vmatpush1.bf16.msra.mxu0 0
      %2863 = vmatprep.subr.bf16.mxu0 0
      %2864 = vmatpush1.bf16.msra.mxu0 0
      %2865 = vmatprep.subr.bf16.mxu0 0
      %2866 = vmatpush1.bf16.msra.mxu0 0
      %2867 = vmatprep.subr.bf16.mxu0 0
      %2868 = vmatpush1.bf16.msra.mxu0 0
      %2869 = vmatprep.subr.bf16.mxu0 0
      %2870 = vmatpush1.bf16.msra.mxu0 0
      %2871 = vmatprep.subr.bf16.mxu0 0
      %2872 = vmatpush1.bf16.msra.mxu0 0
      %2873 = vmatprep.subr.bf16.mxu0 0
      %2874 = vmatpush1.bf16.msra.mxu0 0
      %2875 = vmatprep.subr.bf16.mxu0 0
      %2876 = vmatpush1.bf16.msra.mxu0 0
      %2877 = vmatprep.subr.bf16.mxu0 0
      %2878 = vmatpush1.bf16.msra.mxu0 0
      %2879 = vmatprep.subr.bf16.mxu0 0
      %2880 = vmatpush1.bf16.msra.mxu0 0
      %2881 = vmatprep.subr.bf16.mxu0 0
      %2882 = vmatpush1.bf16.msra.mxu0 0
      %2883 = vmatprep.subr.bf16.mxu0 0
      %2884 = vmatpush1.bf16.msra.mxu0 0
      %2885 = vmatprep.subr.bf16.mxu0 0
      %2886 = vmatpush1.bf16.msra.mxu0 0
      %2887 = vmatprep.subr.bf16.mxu0 0
      %2888 = vmatpush1.bf16.msra.mxu0 0
      %2889 = vmatprep.subr.bf16.mxu0 0
      %2890 = vmatpush1.bf16.msra.mxu0 0
      %2891 = vmatprep.mubr.bf16.mxu0 0
      %2892 = vmatmul.mubr.bf16.gmra.mrb[0].mxu0 %v2809
      %v2893 = vpop.f32.mrb[0].mxu0
      %v2894 = vadd.f32 %v2682, %v2893
      %v2895 = vpop.f32.mrb[0].mxu0
      %v2896 = vpop.f32.mrb[0].mxu0
      %v2897 = vadd.f32 %v2685, %v2896
      %v2898 = vpop.f32.mrb[0].mxu0
      %2899 = vmatprep.mubr.bf16.mxu0 0
      %2900 = vmatmul.mubr.bf16.gmra.mrb[0].mxu0 %v2812
      %v2901 = vpop.f32.mrb[0].mxu0
      %v2902 = vadd.f32 %v2690, %v2901
      %v2903 = vpop.f32.mrb[0].mxu0
      %v2904 = vpop.f32.mrb[0].mxu0
      %v2905 = vadd.f32 %v2693, %v2904
      %v2906 = vpop.f32.mrb[0].mxu0
      %2907 = vmatprep.mubr.bf16.mxu0 0
      %2908 = vmatmul.mubr.bf16.gmra.mrb[0].mxu0 %v2815
      %v2909 = vpop.f32.mrb[0].mxu0
      %v2910 = vadd.f32 %v2698, %v2909
      %v2911 = vpop.f32.mrb[0].mxu0
      %v2912 = vpop.f32.mrb[0].mxu0
      %v2913 = vadd.f32 %v2701, %v2912
      %v2914 = vpop.f32.mrb[0].mxu0
      %2915 = vmatprep.mubr.bf16.mxu0 0
      %2916 = vmatmul.mubr.bf16.gmra.mrb[0].mxu0 %v2818
      %v2917 = vpop.f32.mrb[0].mxu0
      %v2918 = vadd.f32 %v2706, %v2917
      %v2919 = vpop.f32.mrb[0].mxu0
      %v2920 = vpop.f32.mrb[0].mxu0
      %v2921 = vadd.f32 %v2709, %v2920
      %v2922 = vpop.f32.mrb[0].mxu0
      %2923 = vmatprep.mubr.bf16.mxu0 0
      %2924 = vmatmul.mubr.bf16.gmra.mrb[0].mxu0 %v2821
      %v2925 = vpop.f32.mrb[0].mxu0
      %v2926 = vadd.f32 %v2714, %v2925
      %v2927 = vpop.f32.mrb[0].mxu0
      %v2928 = vpop.f32.mrb[0].mxu0
      %v2929 = vadd.f32 %v2717, %v2928
      %v2930 = vpop.f32.mrb[0].mxu0
      %2931 = vmatprep.mubr.bf16.mxu0 0
      %2932 = vmatmul.mubr.bf16.gmra.mrb[0].mxu0 %v2824
      %v2933 = vpop.f32.mrb[0].mxu0
      %v2934 = vadd.f32 %v2722, %v2933
      %v2935 = vpop.f32.mrb[0].mxu0
      %v2936 = vpop.f32.mrb[0].mxu0
      %v2937 = vadd.f32 %v2725, %v2936
      %v2938 = vpop.f32.mrb[0].mxu0
      %2939 = vmatprep.mubr.bf16.mxu0 0
      %2940 = vmatmul.mubr.bf16.gmra.mrb[0].mxu0 %v2827
      %v2941 = vpop.f32.mrb[0].mxu0
      %v2942 = vadd.f32 %v2730, %v2941
      %v2943 = vpop.f32.mrb[0].mxu0
      %v2944 = vpop.f32.mrb[0].mxu0
      %v2945 = vadd.f32 %v2733, %v2944
      %v2946 = vpop.f32.mrb[0].mxu0
      %2947 = vmatprep.mubr.bf16.mxu0 0
      %2948 = vmatmul.mubr.bf16.gmra.mrb[0].mxu0 %v2830
      %v2949 = vpop.f32.mrb[0].mxu0
      %v2950 = vadd.f32 %v2738, %v2949
      %v2951 = vpop.f32.mrb[0].mxu0
      %v2952 = vpop.f32.mrb[0].mxu0
      %v2953 = vadd.f32 %v2741, %v2952
      %v2954 = vpop.f32.mrb[0].mxu0
      %2955 = vmatprep.mubr.bf16.mxu0 0
      %2956 = vmatmul.mubr.bf16.gmra.mrb[0].mxu0 %v2833
      %v2957 = vpop.f32.mrb[0].mxu0
      %v2958 = vadd.f32 %v2746, %v2957
      %v2959 = vpop.f32.mrb[0].mxu0
      %v2960 = vpop.f32.mrb[0].mxu0
      %v2961 = vadd.f32 %v2749, %v2960
      %v2962 = vpop.f32.mrb[0].mxu0
      %2963 = vmatprep.mubr.bf16.mxu0 0
      %2964 = vmatmul.mubr.bf16.gmra.mrb[0].mxu0 %v2836
      %v2965 = vpop.f32.mrb[0].mxu0
      %v2966 = vadd.f32 %v2754, %v2965
      %v2967 = vpop.f32.mrb[0].mxu0
      %v2968 = vpop.f32.mrb[0].mxu0
      %v2969 = vadd.f32 %v2757, %v2968
      %v2970 = vpop.f32.mrb[0].mxu0
      %2971 = vmatprep.mubr.bf16.mxu0 0
      %2972 = vmatmul.mubr.bf16.gmra.mrb[0].mxu0 %v2839
      %v2973 = vpop.f32.mrb[0].mxu0
      %v2974 = vadd.f32 %v2762, %v2973
      %v2975 = vpop.f32.mrb[0].mxu0
      %v2976 = vpop.f32.mrb[0].mxu0
      %v2977 = vadd.f32 %v2765, %v2976
      %v2978 = vpop.f32.mrb[0].mxu0
      %2979 = vmatprep.mubr.bf16.mxu0 0
      %2980 = vmatmul.mubr.bf16.gmra.mrb[0].mxu0 %v2842
      %v2981 = vpop.f32.mrb[0].mxu0
      %v2982 = vadd.f32 %v2770, %v2981
      %v2983 = vpop.f32.mrb[0].mxu0
      %v2984 = vpop.f32.mrb[0].mxu0
      %v2985 = vadd.f32 %v2773, %v2984
      %v2986 = vpop.f32.mrb[0].mxu0
      %2987 = vmatprep.mubr.bf16.mxu0 0
      %2988 = vmatmul.mubr.bf16.gmra.mrb[0].mxu0 %v2845
      %v2989 = vpop.f32.mrb[0].mxu0
      %v2990 = vadd.f32 %v2778, %v2989
      %v2991 = vpop.f32.mrb[0].mxu0
      %v2992 = vpop.f32.mrb[0].mxu0
      %v2993 = vadd.f32 %v2781, %v2992
      %v2994 = vpop.f32.mrb[0].mxu0
      %2995 = vmatprep.mubr.bf16.mxu0 0
      %2996 = vmatmul.mubr.bf16.gmra.mrb[0].mxu0 %v2848
      %v2997 = vpop.f32.mrb[0].mxu0
      %v2998 = vadd.f32 %v2786, %v2997
      %v2999 = vpop.f32.mrb[0].mxu0
      %v3000 = vpop.f32.mrb[0].mxu0
      %v3001 = vadd.f32 %v2789, %v3000
      %v3002 = vpop.f32.mrb[0].mxu0
      %3003 = vmatprep.mubr.bf16.mxu0 0
      %3004 = vmatmul.mubr.bf16.gmra.mrb[0].mxu0 %v2851
      %v3005 = vpop.f32.mrb[0].mxu0
      %v3006 = vadd.f32 %v2794, %v3005
      %v3007 = vpop.f32.mrb[0].mxu0
      %v3008 = vpop.f32.mrb[0].mxu0
      %v3009 = vadd.f32 %v2797, %v3008
      %v3010 = vpop.f32.mrb[0].mxu0
      %3011 = vmatprep.mubr.bf16.mxu0 0
      %3012 = vmatmul.mubr.bf16.gmra.mrb[0].mxu0 %v2854
      %v3013 = vpop.f32.mrb[0].mxu0
      %v3014 = vadd.f32 %v2802, %v3013
      %v3015 = vpop.f32.mrb[0].mxu0
      %v3016 = vpop.f32.mrb[0].mxu0
      %v3017 = vadd.f32 %v2805, %v3016
      %v3018 = vpop.f32.mrb[0].mxu0
      %3019 = vdwg.mxu0
      %v3020 = vld [vmem:[#allocation2 + $0x2] sm:$0xff]
      %v3021 = vld [vmem:[#allocation2 + $0xa] sm:$0xff]
      %v3022 = vld [vmem:[#allocation2 + $0x1a] sm:$0xff]
      %v3023 = vld [vmem:[#allocation2 + $0x22] sm:$0xff]
      %v3024 = vld [vmem:[#allocation2 + $0x32] sm:$0xff]
      %v3025 = vld [vmem:[#allocation2 + $0x3a] sm:$0xff]
      %v3026 = vld [vmem:[#allocation2 + $0x4a] sm:$0xff]
      %v3027 = vld [vmem:[#allocation2 + $0x52] sm:$0xff]
      %v3028 = vld [vmem:[#allocation2 + $0x62] sm:$0xff]
      %v3029 = vld [vmem:[#allocation2 + $0x6a] sm:$0xff]
      %v3030 = vld [vmem:[#allocation2 + $0x7a] sm:$0xff]
      %v3031 = vld [vmem:[#allocation2 + $0x82] sm:$0xff]
      %v3032 = vld [vmem:[#allocation2 + $0x92] sm:$0xff]
      %v3033 = vld [vmem:[#allocation2 + $0x9a] sm:$0xff]
      %v3034 = vld [vmem:[#allocation2 + $0xaa] sm:$0xff]
      %v3035 = vld [vmem:[#allocation2 + $0xb2] sm:$0xff]
      %v3036 = vld [vmem:[#allocation2 + $0xc2] sm:$0xff]
      %v3037 = vld [vmem:[#allocation2 + $0xca] sm:$0xff]
      %v3038 = vld [vmem:[#allocation2 + $0xda] sm:$0xff]
      %v3039 = vld [vmem:[#allocation2 + $0xe2] sm:$0xff]
      %v3040 = vld [vmem:[#allocation2 + $0xf2] sm:$0xff]
      %v3041 = vld [vmem:[#allocation2 + $0xfa] sm:$0xff]
      %v3042 = vld [vmem:[#allocation2 + $0x10a] sm:$0xff]
      %v3043 = vld [vmem:[#allocation2 + $0x112] sm:$0xff]
      %v3044 = vld [vmem:[#allocation2 + $0x122] sm:$0xff]
      %v3045 = vld [vmem:[#allocation2 + $0x12a] sm:$0xff]
      %v3046 = vld [vmem:[#allocation2 + $0x13a] sm:$0xff]
      %v3047 = vld [vmem:[#allocation2 + $0x142] sm:$0xff]
      %v3048 = vld [vmem:[#allocation2 + $0x152] sm:$0xff]
      %v3049 = vld [vmem:[#allocation2 + $0x15a] sm:$0xff]
      %v3050 = vld [vmem:[#allocation2 + $0x16a] sm:$0xff]
      %v3051 = vld [vmem:[#allocation2 + $0x172] sm:$0xff]
      %v3052 = vpack.c.bf16 %v3021, %v3020
      %v3053 = vpack.c.bf16 %v3023, %v3022
      %v3054 = vpack.c.bf16 %v3025, %v3024
      %v3055 = vpack.c.bf16 %v3027, %v3026
      %v3056 = vpack.c.bf16 %v3029, %v3028
      %v3057 = vpack.c.bf16 %v3031, %v3030
      %v3058 = vpack.c.bf16 %v3033, %v3032
      %v3059 = vpack.c.bf16 %v3035, %v3034
      %v3060 = vpack.c.bf16 %v3037, %v3036
      %v3061 = vpack.c.bf16 %v3039, %v3038
      %v3062 = vpack.c.bf16 %v3041, %v3040
      %v3063 = vpack.c.bf16 %v3043, %v3042
      %v3064 = vpack.c.bf16 %v3045, %v3044
      %v3065 = vpack.c.bf16 %v3047, %v3046
      %v3066 = vpack.c.bf16 %v3049, %v3048
      %v3067 = vpack.c.bf16 %v3051, %v3050
      %s3068 = scalar_lea.vmem %s4, 8
      %v3069 = vld [vmem:[%s3068] sm:$0xf]
      %v3071 = vsel %vm443, %v3052, 0
      %v3074 = vsel %vm443, %v3053, 0
      %v3077 = vsel %vm443, %v3054, 0
      %v3080 = vsel %vm443, %v3055, 0
      %v3083 = vsel %vm443, %v3056, 0
      %v3086 = vsel %vm443, %v3057, 0
      %v3089 = vsel %vm443, %v3058, 0
      %v3092 = vsel %vm443, %v3059, 0
      %v3095 = vsel %vm443, %v3060, 0
      %v3098 = vsel %vm443, %v3061, 0
      %v3101 = vsel %vm443, %v3062, 0
      %v3104 = vsel %vm443, %v3063, 0
      %v3107 = vsel %vm443, %v3064, 0
      %v3110 = vsel %vm443, %v3065, 0
      %v3113 = vsel %vm443, %v3066, 0
      %v3116 = vsel %vm443, %v3067, 0
      %v3119 = vsel %vm456, %v3069, 0
      %3121 = vmatprep.subr.bf16.mxu0 0
      %3122 = vmatpush1.bf16.msra.mxu0 %v3119
      %3123 = vmatprep.subr.bf16.mxu0 0
      %3124 = vmatpush1.bf16.msra.mxu0 0
      %3125 = vmatprep.subr.bf16.mxu0 0
      %3126 = vmatpush1.bf16.msra.mxu0 0
      %3127 = vmatprep.subr.bf16.mxu0 0
      %3128 = vmatpush1.bf16.msra.mxu0 0
      %3129 = vmatprep.subr.bf16.mxu0 0
      %3130 = vmatpush1.bf16.msra.mxu0 0
      %3131 = vmatprep.subr.bf16.mxu0 0
      %3132 = vmatpush1.bf16.msra.mxu0 0
      %3133 = vmatprep.subr.bf16.mxu0 0
      %3134 = vmatpush1.bf16.msra.mxu0 0
      %3135 = vmatprep.subr.bf16.mxu0 0
      %3136 = vmatpush1.bf16.msra.mxu0 0
      %3137 = vmatprep.subr.bf16.mxu0 0
      %3138 = vmatpush1.bf16.msra.mxu0 0
      %3139 = vmatprep.subr.bf16.mxu0 0
      %3140 = vmatpush1.bf16.msra.mxu0 0
      %3141 = vmatprep.subr.bf16.mxu0 0
      %3142 = vmatpush1.bf16.msra.mxu0 0
      %3143 = vmatprep.subr.bf16.mxu0 0
      %3144 = vmatpush1.bf16.msra.mxu0 0
      %3145 = vmatprep.subr.bf16.mxu0 0
      %3146 = vmatpush1.bf16.msra.mxu0 0
      %3147 = vmatprep.subr.bf16.mxu0 0
      %3148 = vmatpush1.bf16.msra.mxu0 0
      %3149 = vmatprep.subr.bf16.mxu0 0
      %3150 = vmatpush1.bf16.msra.mxu0 0
      %3151 = vmatprep.subr.bf16.mxu0 0
      %3152 = vmatpush1.bf16.msra.mxu0 0
      %3153 = vmatprep.mubr.bf16.mxu0 0
      %3154 = vmatmul.mubr.bf16.gmra.mrb[0].mxu0 %v3071
      %v3155 = vpop.f32.mrb[0].mxu0
      %v3156 = vadd.f32 0.0, %v3155
      %v3157 = vpop.f32.mrb[0].mxu0
      %v3158 = vpop.f32.mrb[0].mxu0
      %v3159 = vadd.f32 0.0, %v3158
      %v3160 = vpop.f32.mrb[0].mxu0
      %3161 = vmatprep.mubr.bf16.mxu0 0
      %3162 = vmatmul.mubr.bf16.gmra.mrb[0].mxu0 %v3074
      %v3163 = vpop.f32.mrb[0].mxu0
      %v3164 = vadd.f32 0.0, %v3163
      %v3165 = vpop.f32.mrb[0].mxu0
      %v3166 = vpop.f32.mrb[0].mxu0
      %v3167 = vadd.f32 0.0, %v3166
      %v3168 = vpop.f32.mrb[0].mxu0
      %3169 = vmatprep.mubr.bf16.mxu0 0
      %3170 = vmatmul.mubr.bf16.gmra.mrb[0].mxu0 %v3077
      %v3171 = vpop.f32.mrb[0].mxu0
      %v3172 = vadd.f32 0.0, %v3171
      %v3173 = vpop.f32.mrb[0].mxu0
      %v3174 = vpop.f32.mrb[0].mxu0
      %v3175 = vadd.f32 0.0, %v3174
      %v3176 = vpop.f32.mrb[0].mxu0
      %3177 = vmatprep.mubr.bf16.mxu0 0
      %3178 = vmatmul.mubr.bf16.gmra.mrb[0].mxu0 %v3080
      %v3179 = vpop.f32.mrb[0].mxu0
      %v3180 = vadd.f32 0.0, %v3179
      %v3181 = vpop.f32.mrb[0].mxu0
      %v3182 = vpop.f32.mrb[0].mxu0
      %v3183 = vadd.f32 0.0, %v3182
      %v3184 = vpop.f32.mrb[0].mxu0
      %3185 = vmatprep.mubr.bf16.mxu0 0
      %3186 = vmatmul.mubr.bf16.gmra.mrb[0].mxu0 %v3083
      %v3187 = vpop.f32.mrb[0].mxu0
      %v3188 = vadd.f32 0.0, %v3187
      %v3189 = vpop.f32.mrb[0].mxu0
      %v3190 = vpop.f32.mrb[0].mxu0
      %v3191 = vadd.f32 0.0, %v3190
      %v3192 = vpop.f32.mrb[0].mxu0
      %3193 = vmatprep.mubr.bf16.mxu0 0
      %3194 = vmatmul.mubr.bf16.gmra.mrb[0].mxu0 %v3086
      %v3195 = vpop.f32.mrb[0].mxu0
      %v3196 = vadd.f32 0.0, %v3195
      %v3197 = vpop.f32.mrb[0].mxu0
      %v3198 = vpop.f32.mrb[0].mxu0
      %v3199 = vadd.f32 0.0, %v3198
      %v3200 = vpop.f32.mrb[0].mxu0
      %3201 = vmatprep.mubr.bf16.mxu0 0
      %3202 = vmatmul.mubr.bf16.gmra.mrb[0].mxu0 %v3089
      %v3203 = vpop.f32.mrb[0].mxu0
      %v3204 = vadd.f32 0.0, %v3203
      %v3205 = vpop.f32.mrb[0].mxu0
      %v3206 = vpop.f32.mrb[0].mxu0
      %v3207 = vadd.f32 0.0, %v3206
      %v3208 = vpop.f32.mrb[0].mxu0
      %3209 = vmatprep.mubr.bf16.mxu0 0
      %3210 = vmatmul.mubr.bf16.gmra.mrb[0].mxu0 %v3092
      %v3211 = vpop.f32.mrb[0].mxu0
      %v3212 = vadd.f32 0.0, %v3211
      %v3213 = vpop.f32.mrb[0].mxu0
      %v3214 = vpop.f32.mrb[0].mxu0
      %v3215 = vadd.f32 0.0, %v3214
      %v3216 = vpop.f32.mrb[0].mxu0
      %3217 = vmatprep.mubr.bf16.mxu0 0
      %3218 = vmatmul.mubr.bf16.gmra.mrb[0].mxu0 %v3095
      %v3219 = vpop.f32.mrb[0].mxu0
      %v3220 = vadd.f32 0.0, %v3219
      %v3221 = vpop.f32.mrb[0].mxu0
      %v3222 = vpop.f32.mrb[0].mxu0
      %v3223 = vadd.f32 0.0, %v3222
      %v3224 = vpop.f32.mrb[0].mxu0
      %3225 = vmatprep.mubr.bf16.mxu0 0
      %3226 = vmatmul.mubr.bf16.gmra.mrb[0].mxu0 %v3098
      %v3227 = vpop.f32.mrb[0].mxu0
      %v3228 = vadd.f32 0.0, %v3227
      %v3229 = vpop.f32.mrb[0].mxu0
      %v3230 = vpop.f32.mrb[0].mxu0
      %v3231 = vadd.f32 0.0, %v3230
      %v3232 = vpop.f32.mrb[0].mxu0
      %3233 = vmatprep.mubr.bf16.mxu0 0
      %3234 = vmatmul.mubr.bf16.gmra.mrb[0].mxu0 %v3101
      %v3235 = vpop.f32.mrb[0].mxu0
      %v3236 = vadd.f32 0.0, %v3235
      %v3237 = vpop.f32.mrb[0].mxu0
      %v3238 = vpop.f32.mrb[0].mxu0
      %v3239 = vadd.f32 0.0, %v3238
      %v3240 = vpop.f32.mrb[0].mxu0
      %3241 = vmatprep.mubr.bf16.mxu0 0
      %3242 = vmatmul.mubr.bf16.gmra.mrb[0].mxu0 %v3104
      %v3243 = vpop.f32.mrb[0].mxu0
      %v3244 = vadd.f32 0.0, %v3243
      %v3245 = vpop.f32.mrb[0].mxu0
      %v3246 = vpop.f32.mrb[0].mxu0
      %v3247 = vadd.f32 0.0, %v3246
      %v3248 = vpop.f32.mrb[0].mxu0
      %3249 = vmatprep.mubr.bf16.mxu0 0
      %3250 = vmatmul.mubr.bf16.gmra.mrb[0].mxu0 %v3107
      %v3251 = vpop.f32.mrb[0].mxu0
      %v3252 = vadd.f32 0.0, %v3251
      %v3253 = vpop.f32.mrb[0].mxu0
      %v3254 = vpop.f32.mrb[0].mxu0
      %v3255 = vadd.f32 0.0, %v3254
      %v3256 = vpop.f32.mrb[0].mxu0
      %3257 = vmatprep.mubr.bf16.mxu0 0
      %3258 = vmatmul.mubr.bf16.gmra.mrb[0].mxu0 %v3110
      %v3259 = vpop.f32.mrb[0].mxu0
      %v3260 = vadd.f32 0.0, %v3259
      %v3261 = vpop.f32.mrb[0].mxu0
      %v3262 = vpop.f32.mrb[0].mxu0
      %v3263 = vadd.f32 0.0, %v3262
      %v3264 = vpop.f32.mrb[0].mxu0
      %3265 = vmatprep.mubr.bf16.mxu0 0
      %3266 = vmatmul.mubr.bf16.gmra.mrb[0].mxu0 %v3113
      %v3267 = vpop.f32.mrb[0].mxu0
      %v3268 = vadd.f32 0.0, %v3267
      %v3269 = vpop.f32.mrb[0].mxu0
      %v3270 = vpop.f32.mrb[0].mxu0
      %v3271 = vadd.f32 0.0, %v3270
      %v3272 = vpop.f32.mrb[0].mxu0
      %3273 = vmatprep.mubr.bf16.mxu0 0
      %3274 = vmatmul.mubr.bf16.gmra.mrb[0].mxu0 %v3116
      %v3275 = vpop.f32.mrb[0].mxu0
      %v3276 = vadd.f32 0.0, %v3275
      %v3277 = vpop.f32.mrb[0].mxu0
      %v3278 = vpop.f32.mrb[0].mxu0
      %v3279 = vadd.f32 0.0, %v3278
      %v3280 = vpop.f32.mrb[0].mxu0
      %3281 = vdwg.mxu0
      %v3282 = vadd.f32 %v2894, %v3156
      %v3283 = vadd.f32 %v2897, %v3159
      %v3284 = vadd.f32 %v2902, %v3164
      %v3285 = vadd.f32 %v2905, %v3167
      %v3286 = vadd.f32 %v2910, %v3172
      %v3287 = vadd.f32 %v2913, %v3175
      %v3288 = vadd.f32 %v2918, %v3180
      %v3289 = vadd.f32 %v2921, %v3183
      %v3290 = vadd.f32 %v2926, %v3188
      %v3291 = vadd.f32 %v2929, %v3191
      %v3292 = vadd.f32 %v2934, %v3196
      %v3293 = vadd.f32 %v2937, %v3199
      %v3294 = vadd.f32 %v2942, %v3204
      %v3295 = vadd.f32 %v2945, %v3207
      %v3296 = vadd.f32 %v2950, %v3212
      %v3297 = vadd.f32 %v2953, %v3215
      %v3298 = vadd.f32 %v2958, %v3220
      %v3299 = vadd.f32 %v2961, %v3223
      %v3300 = vadd.f32 %v2966, %v3228
      %v3301 = vadd.f32 %v2969, %v3231
      %v3302 = vadd.f32 %v2974, %v3236
      %v3303 = vadd.f32 %v2977, %v3239
      %v3304 = vadd.f32 %v2982, %v3244
      %v3305 = vadd.f32 %v2985, %v3247
      %v3306 = vadd.f32 %v2990, %v3252
      %v3307 = vadd.f32 %v2993, %v3255
      %v3308 = vadd.f32 %v2998, %v3260
      %v3309 = vadd.f32 %v3001, %v3263
      %v3310 = vadd.f32 %v3006, %v3268
      %v3311 = vadd.f32 %v3009, %v3271
      %v3312 = vadd.f32 %v3014, %v3276
      %v3313 = vadd.f32 %v3017, %v3279
      %v3314 = vld [vmem:[%s2270] sm:$0xff]
      %v3315 = vld [vmem:[%s2270 + $0x8] sm:$0xff]
      %v3316 = vld [vmem:[%s2270 + $0x18] sm:$0xff]
      %v3317 = vld [vmem:[%s2270 + $0x20] sm:$0xff]
      %v3318 = vld [vmem:[%s2270 + $0x30] sm:$0xff]
      %v3319 = vld [vmem:[%s2270 + $0x38] sm:$0xff]
      %v3320 = vld [vmem:[%s2270 + $0x48] sm:$0xff]
      %v3321 = vld [vmem:[%s2270 + $0x50] sm:$0xff]
      %v3322 = vld [vmem:[%s2270 + $0x60] sm:$0xff]
      %v3323 = vld [vmem:[%s2270 + $0x68] sm:$0xff]
      %v3324 = vld [vmem:[%s2270 + $0x78] sm:$0xff]
      %v3325 = vld [vmem:[%s2270 + $0x80] sm:$0xff]
      %v3326 = vld [vmem:[%s2270 + $0x90] sm:$0xff]
      %v3327 = vld [vmem:[%s2270 + $0x98] sm:$0xff]
      %v3328 = vld [vmem:[%s2270 + $0xa8] sm:$0xff]
      %v3329 = vld [vmem:[%s2270 + $0xb0] sm:$0xff]
      %v3330 = vld [vmem:[%s2270 + $0xc0] sm:$0xff]
      %v3331 = vld [vmem:[%s2270 + $0xc8] sm:$0xff]
      %v3332 = vld [vmem:[%s2270 + $0xd8] sm:$0xff]
      %v3333 = vld [vmem:[%s2270 + $0xe0] sm:$0xff]
      %v3334 = vld [vmem:[%s2270 + $0xf0] sm:$0xff]
      %v3335 = vld [vmem:[%s2270 + $0xf8] sm:$0xff]
      %v3336 = vld [vmem:[%s2270 + $0x108] sm:$0xff]
      %v3337 = vld [vmem:[%s2270 + $0x110] sm:$0xff]
      %v3338 = vld [vmem:[%s2270 + $0x120] sm:$0xff]
      %v3339 = vld [vmem:[%s2270 + $0x128] sm:$0xff]
      %v3340 = vld [vmem:[%s2270 + $0x138] sm:$0xff]
      %v3341 = vld [vmem:[%s2270 + $0x140] sm:$0xff]
      %v3342 = vld [vmem:[%s2270 + $0x150] sm:$0xff]
      %v3343 = vld [vmem:[%s2270 + $0x158] sm:$0xff]
      %v3344 = vld [vmem:[%s2270 + $0x168] sm:$0xff]
      %v3345 = vld [vmem:[%s2270 + $0x170] sm:$0xff]
      %v3346 = vpack.c.bf16 %v3315, %v3314
      %v3347 = vpack.c.bf16 %v3317, %v3316
      %v3348 = vpack.c.bf16 %v3319, %v3318
      %v3349 = vpack.c.bf16 %v3321, %v3320
      %v3350 = vpack.c.bf16 %v3323, %v3322
      %v3351 = vpack.c.bf16 %v3325, %v3324
      %v3352 = vpack.c.bf16 %v3327, %v3326
      %v3353 = vpack.c.bf16 %v3329, %v3328
      %v3354 = vpack.c.bf16 %v3331, %v3330
      %v3355 = vpack.c.bf16 %v3333, %v3332
      %v3356 = vpack.c.bf16 %v3335, %v3334
      %v3357 = vpack.c.bf16 %v3337, %v3336
      %v3358 = vpack.c.bf16 %v3339, %v3338
      %v3359 = vpack.c.bf16 %v3341, %v3340
      %v3360 = vpack.c.bf16 %v3343, %v3342
      %v3361 = vpack.c.bf16 %v3345, %v3344
      %s3362 = scalar_lea.vmem %s4, 12
      %v3363 = vld [vmem:[%s3362] sm:$0xf]
      %v3365 = vsel %vm443, %v3346, 0
      %v3368 = vsel %vm443, %v3347, 0
      %v3371 = vsel %vm443, %v3348, 0
      %v3374 = vsel %vm443, %v3349, 0
      %v3377 = vsel %vm443, %v3350, 0
      %v3380 = vsel %vm443, %v3351, 0
      %v3383 = vsel %vm443, %v3352, 0
      %v3386 = vsel %vm443, %v3353, 0
      %v3389 = vsel %vm443, %v3354, 0
      %v3392 = vsel %vm443, %v3355, 0
      %v3395 = vsel %vm443, %v3356, 0
      %v3398 = vsel %vm443, %v3357, 0
      %v3401 = vsel %vm443, %v3358, 0
      %v3404 = vsel %vm443, %v3359, 0
      %v3407 = vsel %vm443, %v3360, 0
      %v3410 = vsel %vm443, %v3361, 0
      %v3413 = vsel %vm456, %v3363, 0
      %3415 = vmatprep.subr.bf16.mxu0 0
      %3416 = vmatpush1.bf16.msra.mxu0 %v3413
      %3417 = vmatprep.subr.bf16.mxu0 0
      %3418 = vmatpush1.bf16.msra.mxu0 0
      %3419 = vmatprep.subr.bf16.mxu0 0
      %3420 = vmatpush1.bf16.msra.mxu0 0
      %3421 = vmatprep.subr.bf16.mxu0 0
      %3422 = vmatpush1.bf16.msra.mxu0 0
      %3423 = vmatprep.subr.bf16.mxu0 0
      %3424 = vmatpush1.bf16.msra.mxu0 0
      %3425 = vmatprep.subr.bf16.mxu0 0
      %3426 = vmatpush1.bf16.msra.mxu0 0
      %3427 = vmatprep.subr.bf16.mxu0 0
      %3428 = vmatpush1.bf16.msra.mxu0 0
      %3429 = vmatprep.subr.bf16.mxu0 0
      %3430 = vmatpush1.bf16.msra.mxu0 0
      %3431 = vmatprep.subr.bf16.mxu0 0
      %3432 = vmatpush1.bf16.msra.mxu0 0
      %3433 = vmatprep.subr.bf16.mxu0 0
      %3434 = vmatpush1.bf16.msra.mxu0 0
      %3435 = vmatprep.subr.bf16.mxu0 0
      %3436 = vmatpush1.bf16.msra.mxu0 0
      %3437 = vmatprep.subr.bf16.mxu0 0
      %3438 = vmatpush1.bf16.msra.mxu0 0
      %3439 = vmatprep.subr.bf16.mxu0 0
      %3440 = vmatpush1.bf16.msra.mxu0 0
      %3441 = vmatprep.subr.bf16.mxu0 0
      %3442 = vmatpush1.bf16.msra.mxu0 0
      %3443 = vmatprep.subr.bf16.mxu0 0
      %3444 = vmatpush1.bf16.msra.mxu0 0
      %3445 = vmatprep.subr.bf16.mxu0 0
      %3446 = vmatpush1.bf16.msra.mxu0 0
      %3447 = vmatprep.mubr.bf16.mxu0 0
      %3448 = vmatmul.mubr.bf16.gmra.mrb[0].mxu0 %v3365
      %v3449 = vpop.f32.mrb[0].mxu0
      %v3450 = vadd.f32 0.0, %v3449
      %v3451 = vpop.f32.mrb[0].mxu0
      %v3452 = vpop.f32.mrb[0].mxu0
      %v3453 = vadd.f32 0.0, %v3452
      %v3454 = vpop.f32.mrb[0].mxu0
      %3455 = vmatprep.mubr.bf16.mxu0 0
      %3456 = vmatmul.mubr.bf16.gmra.mrb[0].mxu0 %v3368
      %v3457 = vpop.f32.mrb[0].mxu0
      %v3458 = vadd.f32 0.0, %v3457
      %v3459 = vpop.f32.mrb[0].mxu0
      %v3460 = vpop.f32.mrb[0].mxu0
      %v3461 = vadd.f32 0.0, %v3460
      %v3462 = vpop.f32.mrb[0].mxu0
      %3463 = vmatprep.mubr.bf16.mxu0 0
      %3464 = vmatmul.mubr.bf16.gmra.mrb[0].mxu0 %v3371
      %v3465 = vpop.f32.mrb[0].mxu0
      %v3466 = vadd.f32 0.0, %v3465
      %v3467 = vpop.f32.mrb[0].mxu0
      %v3468 = vpop.f32.mrb[0].mxu0
      %v3469 = vadd.f32 0.0, %v3468
      %v3470 = vpop.f32.mrb[0].mxu0
      %3471 = vmatprep.mubr.bf16.mxu0 0
      %3472 = vmatmul.mubr.bf16.gmra.mrb[0].mxu0 %v3374
      %v3473 = vpop.f32.mrb[0].mxu0
      %v3474 = vadd.f32 0.0, %v3473
      %v3475 = vpop.f32.mrb[0].mxu0
      %v3476 = vpop.f32.mrb[0].mxu0
      %v3477 = vadd.f32 0.0, %v3476
      %v3478 = vpop.f32.mrb[0].mxu0
      %3479 = vmatprep.mubr.bf16.mxu0 0
      %3480 = vmatmul.mubr.bf16.gmra.mrb[0].mxu0 %v3377
      %v3481 = vpop.f32.mrb[0].mxu0
      %v3482 = vadd.f32 0.0, %v3481
      %v3483 = vpop.f32.mrb[0].mxu0
      %v3484 = vpop.f32.mrb[0].mxu0
      %v3485 = vadd.f32 0.0, %v3484
      %v3486 = vpop.f32.mrb[0].mxu0
      %3487 = vmatprep.mubr.bf16.mxu0 0
      %3488 = vmatmul.mubr.bf16.gmra.mrb[0].mxu0 %v3380
      %v3489 = vpop.f32.mrb[0].mxu0
      %v3490 = vadd.f32 0.0, %v3489
      %v3491 = vpop.f32.mrb[0].mxu0
      %v3492 = vpop.f32.mrb[0].mxu0
      %v3493 = vadd.f32 0.0, %v3492
      %v3494 = vpop.f32.mrb[0].mxu0
      %3495 = vmatprep.mubr.bf16.mxu0 0
      %3496 = vmatmul.mubr.bf16.gmra.mrb[0].mxu0 %v3383
      %v3497 = vpop.f32.mrb[0].mxu0
      %v3498 = vadd.f32 0.0, %v3497
      %v3499 = vpop.f32.mrb[0].mxu0
      %v3500 = vpop.f32.mrb[0].mxu0
      %v3501 = vadd.f32 0.0, %v3500
      %v3502 = vpop.f32.mrb[0].mxu0
      %3503 = vmatprep.mubr.bf16.mxu0 0
      %3504 = vmatmul.mubr.bf16.gmra.mrb[0].mxu0 %v3386
      %v3505 = vpop.f32.mrb[0].mxu0
      %v3506 = vadd.f32 0.0, %v3505
      %v3507 = vpop.f32.mrb[0].mxu0
      %v3508 = vpop.f32.mrb[0].mxu0
      %v3509 = vadd.f32 0.0, %v3508
      %v3510 = vpop.f32.mrb[0].mxu0
      %3511 = vmatprep.mubr.bf16.mxu0 0
      %3512 = vmatmul.mubr.bf16.gmra.mrb[0].mxu0 %v3389
      %v3513 = vpop.f32.mrb[0].mxu0
      %v3514 = vadd.f32 0.0, %v3513
      %v3515 = vpop.f32.mrb[0].mxu0
      %v3516 = vpop.f32.mrb[0].mxu0
      %v3517 = vadd.f32 0.0, %v3516
      %v3518 = vpop.f32.mrb[0].mxu0
      %3519 = vmatprep.mubr.bf16.mxu0 0
      %3520 = vmatmul.mubr.bf16.gmra.mrb[0].mxu0 %v3392
      %v3521 = vpop.f32.mrb[0].mxu0
      %v3522 = vadd.f32 0.0, %v3521
      %v3523 = vpop.f32.mrb[0].mxu0
      %v3524 = vpop.f32.mrb[0].mxu0
      %v3525 = vadd.f32 0.0, %v3524
      %v3526 = vpop.f32.mrb[0].mxu0
      %3527 = vmatprep.mubr.bf16.mxu0 0
      %3528 = vmatmul.mubr.bf16.gmra.mrb[0].mxu0 %v3395
      %v3529 = vpop.f32.mrb[0].mxu0
      %v3530 = vadd.f32 0.0, %v3529
      %v3531 = vpop.f32.mrb[0].mxu0
      %v3532 = vpop.f32.mrb[0].mxu0
      %v3533 = vadd.f32 0.0, %v3532
      %v3534 = vpop.f32.mrb[0].mxu0
      %3535 = vmatprep.mubr.bf16.mxu0 0
      %3536 = vmatmul.mubr.bf16.gmra.mrb[0].mxu0 %v3398
      %v3537 = vpop.f32.mrb[0].mxu0
      %v3538 = vadd.f32 0.0, %v3537
      %v3539 = vpop.f32.mrb[0].mxu0
      %v3540 = vpop.f32.mrb[0].mxu0
      %v3541 = vadd.f32 0.0, %v3540
      %v3542 = vpop.f32.mrb[0].mxu0
      %3543 = vmatprep.mubr.bf16.mxu0 0
      %3544 = vmatmul.mubr.bf16.gmra.mrb[0].mxu0 %v3401
      %v3545 = vpop.f32.mrb[0].mxu0
      %v3546 = vadd.f32 0.0, %v3545
      %v3547 = vpop.f32.mrb[0].mxu0
      %v3548 = vpop.f32.mrb[0].mxu0
      %v3549 = vadd.f32 0.0, %v3548
      %v3550 = vpop.f32.mrb[0].mxu0
      %3551 = vmatprep.mubr.bf16.mxu0 0
      %3552 = vmatmul.mubr.bf16.gmra.mrb[0].mxu0 %v3404
      %v3553 = vpop.f32.mrb[0].mxu0
      %v3554 = vadd.f32 0.0, %v3553
      %v3555 = vpop.f32.mrb[0].mxu0
      %v3556 = vpop.f32.mrb[0].mxu0
      %v3557 = vadd.f32 0.0, %v3556
      %v3558 = vpop.f32.mrb[0].mxu0
      %3559 = vmatprep.mubr.bf16.mxu0 0
      %3560 = vmatmul.mubr.bf16.gmra.mrb[0].mxu0 %v3407
      %v3561 = vpop.f32.mrb[0].mxu0
      %v3562 = vadd.f32 0.0, %v3561
      %v3563 = vpop.f32.mrb[0].mxu0
      %v3564 = vpop.f32.mrb[0].mxu0
      %v3565 = vadd.f32 0.0, %v3564
      %v3566 = vpop.f32.mrb[0].mxu0
      %3567 = vmatprep.mubr.bf16.mxu0 0
      %3568 = vmatmul.mubr.bf16.gmra.mrb[0].mxu0 %v3410
      %v3569 = vpop.f32.mrb[0].mxu0
      %v3570 = vadd.f32 0.0, %v3569
      %v3571 = vpop.f32.mrb[0].mxu0
      %v3572 = vpop.f32.mrb[0].mxu0
      %v3573 = vadd.f32 0.0, %v3572
      %v3574 = vpop.f32.mrb[0].mxu0
      %3575 = vdwg.mxu0
      %v3576 = vadd.f32 %v3282, %v3450
      %v3577 = vadd.f32 %v3283, %v3453
      %v3578 = vadd.f32 %v3284, %v3458
      %v3579 = vadd.f32 %v3285, %v3461
      %v3580 = vadd.f32 %v3286, %v3466
      %v3581 = vadd.f32 %v3287, %v3469
      %v3582 = vadd.f32 %v3288, %v3474
      %v3583 = vadd.f32 %v3289, %v3477
      %v3584 = vadd.f32 %v3290, %v3482
      %v3585 = vadd.f32 %v3291, %v3485
      %v3586 = vadd.f32 %v3292, %v3490
      %v3587 = vadd.f32 %v3293, %v3493
      %v3588 = vadd.f32 %v3294, %v3498
      %v3589 = vadd.f32 %v3295, %v3501
      %v3590 = vadd.f32 %v3296, %v3506
      %v3591 = vadd.f32 %v3297, %v3509
      %v3592 = vadd.f32 %v3298, %v3514
      %v3593 = vadd.f32 %v3299, %v3517
      %v3594 = vadd.f32 %v3300, %v3522
      %v3595 = vadd.f32 %v3301, %v3525
      %v3596 = vadd.f32 %v3302, %v3530
      %v3597 = vadd.f32 %v3303, %v3533
      %v3598 = vadd.f32 %v3304, %v3538
      %v3599 = vadd.f32 %v3305, %v3541
      %v3600 = vadd.f32 %v3306, %v3546
      %v3601 = vadd.f32 %v3307, %v3549
      %v3602 = vadd.f32 %v3308, %v3554
      %v3603 = vadd.f32 %v3309, %v3557
      %v3604 = vadd.f32 %v3310, %v3562
      %v3605 = vadd.f32 %v3311, %v3565
      %v3606 = vadd.f32 %v3312, %v3570
      %v3607 = vadd.f32 %v3313, %v3573
      %v3608 = vld [vmem:[%s2270 + $0x1] sm:$0xff]
      %v3609 = vld [vmem:[%s2270 + $0x9] sm:$0xff]
      %v3610 = vld [vmem:[%s2270 + $0x19] sm:$0xff]
      %v3611 = vld [vmem:[%s2270 + $0x21] sm:$0xff]
      %v3612 = vld [vmem:[%s2270 + $0x31] sm:$0xff]
      %v3613 = vld [vmem:[%s2270 + $0x39] sm:$0xff]
      %v3614 = vld [vmem:[%s2270 + $0x49] sm:$0xff]
      %v3615 = vld [vmem:[%s2270 + $0x51] sm:$0xff]
      %v3616 = vld [vmem:[%s2270 + $0x61] sm:$0xff]
      %v3617 = vld [vmem:[%s2270 + $0x69] sm:$0xff]
      %v3618 = vld [vmem:[%s2270 + $0x79] sm:$0xff]
      %v3619 = vld [vmem:[%s2270 + $0x81] sm:$0xff]
      %v3620 = vld [vmem:[%s2270 + $0x91] sm:$0xff]
      %v3621 = vld [vmem:[%s2270 + $0x99] sm:$0xff]
      %v3622 = vld [vmem:[%s2270 + $0xa9] sm:$0xff]
      %v3623 = vld [vmem:[%s2270 + $0xb1] sm:$0xff]
      %v3624 = vld [vmem:[%s2270 + $0xc1] sm:$0xff]
      %v3625 = vld [vmem:[%s2270 + $0xc9] sm:$0xff]
      %v3626 = vld [vmem:[%s2270 + $0xd9] sm:$0xff]
      %v3627 = vld [vmem:[%s2270 + $0xe1] sm:$0xff]
      %v3628 = vld [vmem:[%s2270 + $0xf1] sm:$0xff]
      %v3629 = vld [vmem:[%s2270 + $0xf9] sm:$0xff]
      %v3630 = vld [vmem:[%s2270 + $0x109] sm:$0xff]
      %v3631 = vld [vmem:[%s2270 + $0x111] sm:$0xff]
      %v3632 = vld [vmem:[%s2270 + $0x121] sm:$0xff]
      %v3633 = vld [vmem:[%s2270 + $0x129] sm:$0xff]
      %v3634 = vld [vmem:[%s2270 + $0x139] sm:$0xff]
      %v3635 = vld [vmem:[%s2270 + $0x141] sm:$0xff]
      %v3636 = vld [vmem:[%s2270 + $0x151] sm:$0xff]
      %v3637 = vld [vmem:[%s2270 + $0x159] sm:$0xff]
      %v3638 = vld [vmem:[%s2270 + $0x169] sm:$0xff]
      %v3639 = vld [vmem:[%s2270 + $0x171] sm:$0xff]
      %v3640 = vpack.c.bf16 %v3609, %v3608
      %v3641 = vpack.c.bf16 %v3611, %v3610
      %v3642 = vpack.c.bf16 %v3613, %v3612
      %v3643 = vpack.c.bf16 %v3615, %v3614
      %v3644 = vpack.c.bf16 %v3617, %v3616
      %v3645 = vpack.c.bf16 %v3619, %v3618
      %v3646 = vpack.c.bf16 %v3621, %v3620
      %v3647 = vpack.c.bf16 %v3623, %v3622
      %v3648 = vpack.c.bf16 %v3625, %v3624
      %v3649 = vpack.c.bf16 %v3627, %v3626
      %v3650 = vpack.c.bf16 %v3629, %v3628
      %v3651 = vpack.c.bf16 %v3631, %v3630
      %v3652 = vpack.c.bf16 %v3633, %v3632
      %v3653 = vpack.c.bf16 %v3635, %v3634
      %v3654 = vpack.c.bf16 %v3637, %v3636
      %v3655 = vpack.c.bf16 %v3639, %v3638
      %s3656 = scalar_lea.vmem %s4, 16
      %v3657 = vld [vmem:[%s3656] sm:$0xf]
      %v3659 = vsel %vm443, %v3640, 0
      %v3662 = vsel %vm443, %v3641, 0
      %v3665 = vsel %vm443, %v3642, 0
      %v3668 = vsel %vm443, %v3643, 0
      %v3671 = vsel %vm443, %v3644, 0
      %v3674 = vsel %vm443, %v3645, 0
      %v3677 = vsel %vm443, %v3646, 0
      %v3680 = vsel %vm443, %v3647, 0
      %v3683 = vsel %vm443, %v3648, 0
      %v3686 = vsel %vm443, %v3649, 0
      %v3689 = vsel %vm443, %v3650, 0
      %v3692 = vsel %vm443, %v3651, 0
      %v3695 = vsel %vm443, %v3652, 0
      %v3698 = vsel %vm443, %v3653, 0
      %v3701 = vsel %vm443, %v3654, 0
      %v3704 = vsel %vm443, %v3655, 0
      %v3707 = vsel %vm456, %v3657, 0
      %3709 = vmatprep.subr.bf16.mxu0 0
      %3710 = vmatpush1.bf16.msra.mxu0 %v3707
      %3711 = vmatprep.subr.bf16.mxu0 0
      %3712 = vmatpush1.bf16.msra.mxu0 0
      %3713 = vmatprep.subr.bf16.mxu0 0
      %3714 = vmatpush1.bf16.msra.mxu0 0
      %3715 = vmatprep.subr.bf16.mxu0 0
      %3716 = vmatpush1.bf16.msra.mxu0 0
      %3717 = vmatprep.subr.bf16.mxu0 0
      %3718 = vmatpush1.bf16.msra.mxu0 0
      %3719 = vmatprep.subr.bf16.mxu0 0
      %3720 = vmatpush1.bf16.msra.mxu0 0
      %3721 = vmatprep.subr.bf16.mxu0 0
      %3722 = vmatpush1.bf16.msra.mxu0 0
      %3723 = vmatprep.subr.bf16.mxu0 0
      %3724 = vmatpush1.bf16.msra.mxu0 0
      %3725 = vmatprep.subr.bf16.mxu0 0
      %3726 = vmatpush1.bf16.msra.mxu0 0
      %3727 = vmatprep.subr.bf16.mxu0 0
      %3728 = vmatpush1.bf16.msra.mxu0 0
      %3729 = vmatprep.subr.bf16.mxu0 0
      %3730 = vmatpush1.bf16.msra.mxu0 0
      %3731 = vmatprep.subr.bf16.mxu0 0
      %3732 = vmatpush1.bf16.msra.mxu0 0
      %3733 = vmatprep.subr.bf16.mxu0 0
      %3734 = vmatpush1.bf16.msra.mxu0 0
      %3735 = vmatprep.subr.bf16.mxu0 0
      %3736 = vmatpush1.bf16.msra.mxu0 0
      %3737 = vmatprep.subr.bf16.mxu0 0
      %3738 = vmatpush1.bf16.msra.mxu0 0
      %3739 = vmatprep.subr.bf16.mxu0 0
      %3740 = vmatpush1.bf16.msra.mxu0 0
      %3741 = vmatprep.mubr.bf16.mxu0 0
      %3742 = vmatmul.mubr.bf16.gmra.mrb[0].mxu0 %v3659
      %v3743 = vpop.f32.mrb[0].mxu0
      %v3744 = vadd.f32 0.0, %v3743
      %v3745 = vpop.f32.mrb[0].mxu0
      %v3746 = vpop.f32.mrb[0].mxu0
      %v3747 = vadd.f32 0.0, %v3746
      %v3748 = vpop.f32.mrb[0].mxu0
      %3749 = vmatprep.mubr.bf16.mxu0 0
      %3750 = vmatmul.mubr.bf16.gmra.mrb[0].mxu0 %v3662
      %v3751 = vpop.f32.mrb[0].mxu0
      %v3752 = vadd.f32 0.0, %v3751
      %v3753 = vpop.f32.mrb[0].mxu0
      %v3754 = vpop.f32.mrb[0].mxu0
      %v3755 = vadd.f32 0.0, %v3754
      %v3756 = vpop.f32.mrb[0].mxu0
      %3757 = vmatprep.mubr.bf16.mxu0 0
      %3758 = vmatmul.mubr.bf16.gmra.mrb[0].mxu0 %v3665
      %v3759 = vpop.f32.mrb[0].mxu0
      %v3760 = vadd.f32 0.0, %v3759
      %v3761 = vpop.f32.mrb[0].mxu0
      %v3762 = vpop.f32.mrb[0].mxu0
      %v3763 = vadd.f32 0.0, %v3762
      %v3764 = vpop.f32.mrb[0].mxu0
      %3765 = vmatprep.mubr.bf16.mxu0 0
      %3766 = vmatmul.mubr.bf16.gmra.mrb[0].mxu0 %v3668
      %v3767 = vpop.f32.mrb[0].mxu0
      %v3768 = vadd.f32 0.0, %v3767
      %v3769 = vpop.f32.mrb[0].mxu0
      %v3770 = vpop.f32.mrb[0].mxu0
      %v3771 = vadd.f32 0.0, %v3770
      %v3772 = vpop.f32.mrb[0].mxu0
      %3773 = vmatprep.mubr.bf16.mxu0 0
      %3774 = vmatmul.mubr.bf16.gmra.mrb[0].mxu0 %v3671
      %v3775 = vpop.f32.mrb[0].mxu0
      %v3776 = vadd.f32 0.0, %v3775
      %v3777 = vpop.f32.mrb[0].mxu0
      %v3778 = vpop.f32.mrb[0].mxu0
      %v3779 = vadd.f32 0.0, %v3778
      %v3780 = vpop.f32.mrb[0].mxu0
      %3781 = vmatprep.mubr.bf16.mxu0 0
      %3782 = vmatmul.mubr.bf16.gmra.mrb[0].mxu0 %v3674
      %v3783 = vpop.f32.mrb[0].mxu0
      %v3784 = vadd.f32 0.0, %v3783
      %v3785 = vpop.f32.mrb[0].mxu0
      %v3786 = vpop.f32.mrb[0].mxu0
      %v3787 = vadd.f32 0.0, %v3786
      %v3788 = vpop.f32.mrb[0].mxu0
      %3789 = vmatprep.mubr.bf16.mxu0 0
      %3790 = vmatmul.mubr.bf16.gmra.mrb[0].mxu0 %v3677
      %v3791 = vpop.f32.mrb[0].mxu0
      %v3792 = vadd.f32 0.0, %v3791
      %v3793 = vpop.f32.mrb[0].mxu0
      %v3794 = vpop.f32.mrb[0].mxu0
      %v3795 = vadd.f32 0.0, %v3794
      %v3796 = vpop.f32.mrb[0].mxu0
      %3797 = vmatprep.mubr.bf16.mxu0 0
      %3798 = vmatmul.mubr.bf16.gmra.mrb[0].mxu0 %v3680
      %v3799 = vpop.f32.mrb[0].mxu0
      %v3800 = vadd.f32 0.0, %v3799
      %v3801 = vpop.f32.mrb[0].mxu0
      %v3802 = vpop.f32.mrb[0].mxu0
      %v3803 = vadd.f32 0.0, %v3802
      %v3804 = vpop.f32.mrb[0].mxu0
      %3805 = vmatprep.mubr.bf16.mxu0 0
      %3806 = vmatmul.mubr.bf16.gmra.mrb[0].mxu0 %v3683
      %v3807 = vpop.f32.mrb[0].mxu0
      %v3808 = vadd.f32 0.0, %v3807
      %v3809 = vpop.f32.mrb[0].mxu0
      %v3810 = vpop.f32.mrb[0].mxu0
      %v3811 = vadd.f32 0.0, %v3810
      %v3812 = vpop.f32.mrb[0].mxu0
      %3813 = vmatprep.mubr.bf16.mxu0 0
      %3814 = vmatmul.mubr.bf16.gmra.mrb[0].mxu0 %v3686
      %v3815 = vpop.f32.mrb[0].mxu0
      %v3816 = vadd.f32 0.0, %v3815
      %v3817 = vpop.f32.mrb[0].mxu0
      %v3818 = vpop.f32.mrb[0].mxu0
      %v3819 = vadd.f32 0.0, %v3818
      %v3820 = vpop.f32.mrb[0].mxu0
      %3821 = vmatprep.mubr.bf16.mxu0 0
      %3822 = vmatmul.mubr.bf16.gmra.mrb[0].mxu0 %v3689
      %v3823 = vpop.f32.mrb[0].mxu0
      %v3824 = vadd.f32 0.0, %v3823
      %v3825 = vpop.f32.mrb[0].mxu0
      %v3826 = vpop.f32.mrb[0].mxu0
      %v3827 = vadd.f32 0.0, %v3826
      %v3828 = vpop.f32.mrb[0].mxu0
      %3829 = vmatprep.mubr.bf16.mxu0 0
      %3830 = vmatmul.mubr.bf16.gmra.mrb[0].mxu0 %v3692
      %v3831 = vpop.f32.mrb[0].mxu0
      %v3832 = vadd.f32 0.0, %v3831
      %v3833 = vpop.f32.mrb[0].mxu0
      %v3834 = vpop.f32.mrb[0].mxu0
      %v3835 = vadd.f32 0.0, %v3834
      %v3836 = vpop.f32.mrb[0].mxu0
      %3837 = vmatprep.mubr.bf16.mxu0 0
      %3838 = vmatmul.mubr.bf16.gmra.mrb[0].mxu0 %v3695
      %v3839 = vpop.f32.mrb[0].mxu0
      %v3840 = vadd.f32 0.0, %v3839
      %v3841 = vpop.f32.mrb[0].mxu0
      %v3842 = vpop.f32.mrb[0].mxu0
      %v3843 = vadd.f32 0.0, %v3842
      %v3844 = vpop.f32.mrb[0].mxu0
      %3845 = vmatprep.mubr.bf16.mxu0 0
      %3846 = vmatmul.mubr.bf16.gmra.mrb[0].mxu0 %v3698
      %v3847 = vpop.f32.mrb[0].mxu0
      %v3848 = vadd.f32 0.0, %v3847
      %v3849 = vpop.f32.mrb[0].mxu0
      %v3850 = vpop.f32.mrb[0].mxu0
      %v3851 = vadd.f32 0.0, %v3850
      %v3852 = vpop.f32.mrb[0].mxu0
      %3853 = vmatprep.mubr.bf16.mxu0 0
      %3854 = vmatmul.mubr.bf16.gmra.mrb[0].mxu0 %v3701
      %v3855 = vpop.f32.mrb[0].mxu0
      %v3856 = vadd.f32 0.0, %v3855
      %v3857 = vpop.f32.mrb[0].mxu0
      %v3858 = vpop.f32.mrb[0].mxu0
      %v3859 = vadd.f32 0.0, %v3858
      %v3860 = vpop.f32.mrb[0].mxu0
      %3861 = vmatprep.mubr.bf16.mxu0 0
      %3862 = vmatmul.mubr.bf16.gmra.mrb[0].mxu0 %v3704
      %v3863 = vpop.f32.mrb[0].mxu0
      %v3864 = vadd.f32 0.0, %v3863
      %v3865 = vpop.f32.mrb[0].mxu0
      %v3866 = vpop.f32.mrb[0].mxu0
      %v3867 = vadd.f32 0.0, %v3866
      %v3868 = vpop.f32.mrb[0].mxu0
      %3869 = vdwg.mxu0
      %v3870 = vadd.f32 %v3576, %v3744
      %v3871 = vadd.f32 %v3577, %v3747
      %v3872 = vadd.f32 %v3578, %v3752
      %v3873 = vadd.f32 %v3579, %v3755
      %v3874 = vadd.f32 %v3580, %v3760
      %v3875 = vadd.f32 %v3581, %v3763
      %v3876 = vadd.f32 %v3582, %v3768
      %v3877 = vadd.f32 %v3583, %v3771
      %v3878 = vadd.f32 %v3584, %v3776
      %v3879 = vadd.f32 %v3585, %v3779
      %v3880 = vadd.f32 %v3586, %v3784
      %v3881 = vadd.f32 %v3587, %v3787
      %v3882 = vadd.f32 %v3588, %v3792
      %v3883 = vadd.f32 %v3589, %v3795
      %v3884 = vadd.f32 %v3590, %v3800
      %v3885 = vadd.f32 %v3591, %v3803
      %v3886 = vadd.f32 %v3592, %v3808
      %v3887 = vadd.f32 %v3593, %v3811
      %v3888 = vadd.f32 %v3594, %v3816
      %v3889 = vadd.f32 %v3595, %v3819
      %v3890 = vadd.f32 %v3596, %v3824
      %v3891 = vadd.f32 %v3597, %v3827
      %v3892 = vadd.f32 %v3598, %v3832
      %v3893 = vadd.f32 %v3599, %v3835
      %v3894 = vadd.f32 %v3600, %v3840
      %v3895 = vadd.f32 %v3601, %v3843
      %v3896 = vadd.f32 %v3602, %v3848
      %v3897 = vadd.f32 %v3603, %v3851
      %v3898 = vadd.f32 %v3604, %v3856
      %v3899 = vadd.f32 %v3605, %v3859
      %v3900 = vadd.f32 %v3606, %v3864
      %v3901 = vadd.f32 %v3607, %v3867
      %v3902 = vld [vmem:[%s2270 + $0x2] sm:$0xff]
      %v3903 = vld [vmem:[%s2270 + $0xa] sm:$0xff]
      %v3904 = vld [vmem:[%s2270 + $0x1a] sm:$0xff]
      %v3905 = vld [vmem:[%s2270 + $0x22] sm:$0xff]
      %v3906 = vld [vmem:[%s2270 + $0x32] sm:$0xff]
      %v3907 = vld [vmem:[%s2270 + $0x3a] sm:$0xff]
      %v3908 = vld [vmem:[%s2270 + $0x4a] sm:$0xff]
      %v3909 = vld [vmem:[%s2270 + $0x52] sm:$0xff]
      %v3910 = vld [vmem:[%s2270 + $0x62] sm:$0xff]
      %v3911 = vld [vmem:[%s2270 + $0x6a] sm:$0xff]
      %v3912 = vld [vmem:[%s2270 + $0x7a] sm:$0xff]
      %v3913 = vld [vmem:[%s2270 + $0x82] sm:$0xff]
      %v3914 = vld [vmem:[%s2270 + $0x92] sm:$0xff]
      %v3915 = vld [vmem:[%s2270 + $0x9a] sm:$0xff]
      %v3916 = vld [vmem:[%s2270 + $0xaa] sm:$0xff]
      %v3917 = vld [vmem:[%s2270 + $0xb2] sm:$0xff]
      %v3918 = vld [vmem:[%s2270 + $0xc2] sm:$0xff]
      %v3919 = vld [vmem:[%s2270 + $0xca] sm:$0xff]
      %v3920 = vld [vmem:[%s2270 + $0xda] sm:$0xff]
      %v3921 = vld [vmem:[%s2270 + $0xe2] sm:$0xff]
      %v3922 = vld [vmem:[%s2270 + $0xf2] sm:$0xff]
      %v3923 = vld [vmem:[%s2270 + $0xfa] sm:$0xff]
      %v3924 = vld [vmem:[%s2270 + $0x10a] sm:$0xff]
      %v3925 = vld [vmem:[%s2270 + $0x112] sm:$0xff]
      %v3926 = vld [vmem:[%s2270 + $0x122] sm:$0xff]
      %v3927 = vld [vmem:[%s2270 + $0x12a] sm:$0xff]
      %v3928 = vld [vmem:[%s2270 + $0x13a] sm:$0xff]
      %v3929 = vld [vmem:[%s2270 + $0x142] sm:$0xff]
      %v3930 = vld [vmem:[%s2270 + $0x152] sm:$0xff]
      %v3931 = vld [vmem:[%s2270 + $0x15a] sm:$0xff]
      %v3932 = vld [vmem:[%s2270 + $0x16a] sm:$0xff]
      %v3933 = vld [vmem:[%s2270 + $0x172] sm:$0xff]
      %v3934 = vpack.c.bf16 %v3903, %v3902
      %v3935 = vpack.c.bf16 %v3905, %v3904
      %v3936 = vpack.c.bf16 %v3907, %v3906
      %v3937 = vpack.c.bf16 %v3909, %v3908
      %v3938 = vpack.c.bf16 %v3911, %v3910
      %v3939 = vpack.c.bf16 %v3913, %v3912
      %v3940 = vpack.c.bf16 %v3915, %v3914
      %v3941 = vpack.c.bf16 %v3917, %v3916
      %v3942 = vpack.c.bf16 %v3919, %v3918
      %v3943 = vpack.c.bf16 %v3921, %v3920
      %v3944 = vpack.c.bf16 %v3923, %v3922
      %v3945 = vpack.c.bf16 %v3925, %v3924
      %v3946 = vpack.c.bf16 %v3927, %v3926
      %v3947 = vpack.c.bf16 %v3929, %v3928
      %v3948 = vpack.c.bf16 %v3931, %v3930
      %v3949 = vpack.c.bf16 %v3933, %v3932
      %s3950 = scalar_lea.vmem %s4, 20
      %v3951 = vld [vmem:[%s3950] sm:$0xf]
      %v3953 = vsel %vm443, %v3934, 0
      %v3956 = vsel %vm443, %v3935, 0
      %v3959 = vsel %vm443, %v3936, 0
      %v3962 = vsel %vm443, %v3937, 0
      %v3965 = vsel %vm443, %v3938, 0
      %v3968 = vsel %vm443, %v3939, 0
      %v3971 = vsel %vm443, %v3940, 0
      %v3974 = vsel %vm443, %v3941, 0
      %v3977 = vsel %vm443, %v3942, 0
      %v3980 = vsel %vm443, %v3943, 0
      %v3983 = vsel %vm443, %v3944, 0
      %v3986 = vsel %vm443, %v3945, 0
      %v3989 = vsel %vm443, %v3946, 0
      %v3992 = vsel %vm443, %v3947, 0
      %v3995 = vsel %vm443, %v3948, 0
      %v3998 = vsel %vm443, %v3949, 0
      %v4001 = vsel %vm456, %v3951, 0
      %4003 = vmatprep.subr.bf16.mxu0 0
      %4004 = vmatpush1.bf16.msra.mxu0 %v4001
      %4005 = vmatprep.subr.bf16.mxu0 0
      %4006 = vmatpush1.bf16.msra.mxu0 0
      %4007 = vmatprep.subr.bf16.mxu0 0
      %4008 = vmatpush1.bf16.msra.mxu0 0
      %4009 = vmatprep.subr.bf16.mxu0 0
      %4010 = vmatpush1.bf16.msra.mxu0 0
      %4011 = vmatprep.subr.bf16.mxu0 0
      %4012 = vmatpush1.bf16.msra.mxu0 0
      %4013 = vmatprep.subr.bf16.mxu0 0
      %4014 = vmatpush1.bf16.msra.mxu0 0
      %4015 = vmatprep.subr.bf16.mxu0 0
      %4016 = vmatpush1.bf16.msra.mxu0 0
      %4017 = vmatprep.subr.bf16.mxu0 0
      %4018 = vmatpush1.bf16.msra.mxu0 0
      %4019 = vmatprep.subr.bf16.mxu0 0
      %4020 = vmatpush1.bf16.msra.mxu0 0
      %4021 = vmatprep.subr.bf16.mxu0 0
      %4022 = vmatpush1.bf16.msra.mxu0 0
      %4023 = vmatprep.subr.bf16.mxu0 0
      %4024 = vmatpush1.bf16.msra.mxu0 0
      %4025 = vmatprep.subr.bf16.mxu0 0
      %4026 = vmatpush1.bf16.msra.mxu0 0
      %4027 = vmatprep.subr.bf16.mxu0 0
      %4028 = vmatpush1.bf16.msra.mxu0 0
      %4029 = vmatprep.subr.bf16.mxu0 0
      %4030 = vmatpush1.bf16.msra.mxu0 0
      %4031 = vmatprep.subr.bf16.mxu0 0
      %4032 = vmatpush1.bf16.msra.mxu0 0
      %4033 = vmatprep.subr.bf16.mxu0 0
      %4034 = vmatpush1.bf16.msra.mxu0 0
      %4035 = vmatprep.mubr.bf16.mxu0 0
      %4036 = vmatmul.mubr.bf16.gmra.mrb[0].mxu0 %v3953
      %v4037 = vpop.f32.mrb[0].mxu0
      %v4038 = vadd.f32 0.0, %v4037
      %v4039 = vpop.f32.mrb[0].mxu0
      %v4040 = vpop.f32.mrb[0].mxu0
      %v4041 = vadd.f32 0.0, %v4040
      %v4042 = vpop.f32.mrb[0].mxu0
      %4043 = vmatprep.mubr.bf16.mxu0 0
      %4044 = vmatmul.mubr.bf16.gmra.mrb[0].mxu0 %v3956
      %v4045 = vpop.f32.mrb[0].mxu0
      %v4046 = vadd.f32 0.0, %v4045
      %v4047 = vpop.f32.mrb[0].mxu0
      %v4048 = vpop.f32.mrb[0].mxu0
      %v4049 = vadd.f32 0.0, %v4048
      %v4050 = vpop.f32.mrb[0].mxu0
      %4051 = vmatprep.mubr.bf16.mxu0 0
      %4052 = vmatmul.mubr.bf16.gmra.mrb[0].mxu0 %v3959
      %v4053 = vpop.f32.mrb[0].mxu0
      %v4054 = vadd.f32 0.0, %v4053
      %v4055 = vpop.f32.mrb[0].mxu0
      %v4056 = vpop.f32.mrb[0].mxu0
      %v4057 = vadd.f32 0.0, %v4056
      %v4058 = vpop.f32.mrb[0].mxu0
      %4059 = vmatprep.mubr.bf16.mxu0 0
      %4060 = vmatmul.mubr.bf16.gmra.mrb[0].mxu0 %v3962
      %v4061 = vpop.f32.mrb[0].mxu0
      %v4062 = vadd.f32 0.0, %v4061
      %v4063 = vpop.f32.mrb[0].mxu0
      %v4064 = vpop.f32.mrb[0].mxu0
      %v4065 = vadd.f32 0.0, %v4064
      %v4066 = vpop.f32.mrb[0].mxu0
      %4067 = vmatprep.mubr.bf16.mxu0 0
      %4068 = vmatmul.mubr.bf16.gmra.mrb[0].mxu0 %v3965
      %v4069 = vpop.f32.mrb[0].mxu0
      %v4070 = vadd.f32 0.0, %v4069
      %v4071 = vpop.f32.mrb[0].mxu0
      %v4072 = vpop.f32.mrb[0].mxu0
      %v4073 = vadd.f32 0.0, %v4072
      %v4074 = vpop.f32.mrb[0].mxu0
      %4075 = vmatprep.mubr.bf16.mxu0 0
      %4076 = vmatmul.mubr.bf16.gmra.mrb[0].mxu0 %v3968
      %v4077 = vpop.f32.mrb[0].mxu0
      %v4078 = vadd.f32 0.0, %v4077
      %v4079 = vpop.f32.mrb[0].mxu0
      %v4080 = vpop.f32.mrb[0].mxu0
      %v4081 = vadd.f32 0.0, %v4080
      %v4082 = vpop.f32.mrb[0].mxu0
      %4083 = vmatprep.mubr.bf16.mxu0 0
      %4084 = vmatmul.mubr.bf16.gmra.mrb[0].mxu0 %v3971
      %v4085 = vpop.f32.mrb[0].mxu0
      %v4086 = vadd.f32 0.0, %v4085
      %v4087 = vpop.f32.mrb[0].mxu0
      %v4088 = vpop.f32.mrb[0].mxu0
      %v4089 = vadd.f32 0.0, %v4088
      %v4090 = vpop.f32.mrb[0].mxu0
      %4091 = vmatprep.mubr.bf16.mxu0 0
      %4092 = vmatmul.mubr.bf16.gmra.mrb[0].mxu0 %v3974
      %v4093 = vpop.f32.mrb[0].mxu0
      %v4094 = vadd.f32 0.0, %v4093
      %v4095 = vpop.f32.mrb[0].mxu0
      %v4096 = vpop.f32.mrb[0].mxu0
      %v4097 = vadd.f32 0.0, %v4096
      %v4098 = vpop.f32.mrb[0].mxu0
      %4099 = vmatprep.mubr.bf16.mxu0 0
      %4100 = vmatmul.mubr.bf16.gmra.mrb[0].mxu0 %v3977
      %v4101 = vpop.f32.mrb[0].mxu0
      %v4102 = vadd.f32 0.0, %v4101
      %v4103 = vpop.f32.mrb[0].mxu0
      %v4104 = vpop.f32.mrb[0].mxu0
      %v4105 = vadd.f32 0.0, %v4104
      %v4106 = vpop.f32.mrb[0].mxu0
      %4107 = vmatprep.mubr.bf16.mxu0 0
      %4108 = vmatmul.mubr.bf16.gmra.mrb[0].mxu0 %v3980
      %v4109 = vpop.f32.mrb[0].mxu0
      %v4110 = vadd.f32 0.0, %v4109
      %v4111 = vpop.f32.mrb[0].mxu0
      %v4112 = vpop.f32.mrb[0].mxu0
      %v4113 = vadd.f32 0.0, %v4112
      %v4114 = vpop.f32.mrb[0].mxu0
      %4115 = vmatprep.mubr.bf16.mxu0 0
      %4116 = vmatmul.mubr.bf16.gmra.mrb[0].mxu0 %v3983
      %v4117 = vpop.f32.mrb[0].mxu0
      %v4118 = vadd.f32 0.0, %v4117
      %v4119 = vpop.f32.mrb[0].mxu0
      %v4120 = vpop.f32.mrb[0].mxu0
      %v4121 = vadd.f32 0.0, %v4120
      %v4122 = vpop.f32.mrb[0].mxu0
      %4123 = vmatprep.mubr.bf16.mxu0 0
      %4124 = vmatmul.mubr.bf16.gmra.mrb[0].mxu0 %v3986
      %v4125 = vpop.f32.mrb[0].mxu0
      %v4126 = vadd.f32 0.0, %v4125
      %v4127 = vpop.f32.mrb[0].mxu0
      %v4128 = vpop.f32.mrb[0].mxu0
      %v4129 = vadd.f32 0.0, %v4128
      %v4130 = vpop.f32.mrb[0].mxu0
      %4131 = vmatprep.mubr.bf16.mxu0 0
      %4132 = vmatmul.mubr.bf16.gmra.mrb[0].mxu0 %v3989
      %v4133 = vpop.f32.mrb[0].mxu0
      %v4134 = vadd.f32 0.0, %v4133
      %v4135 = vpop.f32.mrb[0].mxu0
      %v4136 = vpop.f32.mrb[0].mxu0
      %v4137 = vadd.f32 0.0, %v4136
      %v4138 = vpop.f32.mrb[0].mxu0
      %4139 = vmatprep.mubr.bf16.mxu0 0
      %4140 = vmatmul.mubr.bf16.gmra.mrb[0].mxu0 %v3992
      %v4141 = vpop.f32.mrb[0].mxu0
      %v4142 = vadd.f32 0.0, %v4141
      %v4143 = vpop.f32.mrb[0].mxu0
      %v4144 = vpop.f32.mrb[0].mxu0
      %v4145 = vadd.f32 0.0, %v4144
      %v4146 = vpop.f32.mrb[0].mxu0
      %4147 = vmatprep.mubr.bf16.mxu0 0
      %4148 = vmatmul.mubr.bf16.gmra.mrb[0].mxu0 %v3995
      %v4149 = vpop.f32.mrb[0].mxu0
      %v4150 = vadd.f32 0.0, %v4149
      %v4151 = vpop.f32.mrb[0].mxu0
      %v4152 = vpop.f32.mrb[0].mxu0
      %v4153 = vadd.f32 0.0, %v4152
      %v4154 = vpop.f32.mrb[0].mxu0
      %4155 = vmatprep.mubr.bf16.mxu0 0
      %4156 = vmatmul.mubr.bf16.gmra.mrb[0].mxu0 %v3998
      %v4157 = vpop.f32.mrb[0].mxu0
      %v4158 = vadd.f32 0.0, %v4157
      %v4159 = vpop.f32.mrb[0].mxu0
      %v4160 = vpop.f32.mrb[0].mxu0
      %v4161 = vadd.f32 0.0, %v4160
      %v4162 = vpop.f32.mrb[0].mxu0
      %4163 = vdwg.mxu0
      %v4164 = vadd.f32 %v3870, %v4038
      %v4165 = vadd.f32 %v3871, %v4041
      %v4166 = vadd.f32 %v3872, %v4046
      %v4167 = vadd.f32 %v3873, %v4049
      %v4168 = vadd.f32 %v3874, %v4054
      %v4169 = vadd.f32 %v3875, %v4057
      %v4170 = vadd.f32 %v3876, %v4062
      %v4171 = vadd.f32 %v3877, %v4065
      %v4172 = vadd.f32 %v3878, %v4070
      %v4173 = vadd.f32 %v3879, %v4073
      %v4174 = vadd.f32 %v3880, %v4078
      %v4175 = vadd.f32 %v3881, %v4081
      %v4176 = vadd.f32 %v3882, %v4086
      %v4177 = vadd.f32 %v3883, %v4089
      %v4178 = vadd.f32 %v3884, %v4094
      %v4179 = vadd.f32 %v3885, %v4097
      %v4180 = vadd.f32 %v3886, %v4102
      %v4181 = vadd.f32 %v3887, %v4105
      %v4182 = vadd.f32 %v3888, %v4110
      %v4183 = vadd.f32 %v3889, %v4113
      %v4184 = vadd.f32 %v3890, %v4118
      %v4185 = vadd.f32 %v3891, %v4121
      %v4186 = vadd.f32 %v3892, %v4126
      %v4187 = vadd.f32 %v3893, %v4129
      %v4188 = vadd.f32 %v3894, %v4134
      %v4189 = vadd.f32 %v3895, %v4137
      %v4190 = vadd.f32 %v3896, %v4142
      %v4191 = vadd.f32 %v3897, %v4145
      %v4192 = vadd.f32 %v3898, %v4150
      %v4193 = vadd.f32 %v3899, %v4153
      %v4194 = vadd.f32 %v3900, %v4158
      %v4195 = vadd.f32 %v3901, %v4161
      %s4196 = scalar_lea.vmem [#allocation2], 48
      %v4197 = vld [vmem:[%s4196] sm:$0xff]
      %v4198 = vld [vmem:[%s4196 + $0x8] sm:$0xff]
      %v4199 = vld [vmem:[%s4196 + $0x18] sm:$0xff]
      %v4200 = vld [vmem:[%s4196 + $0x20] sm:$0xff]
      %v4201 = vld [vmem:[%s4196 + $0x30] sm:$0xff]
      %v4202 = vld [vmem:[%s4196 + $0x38] sm:$0xff]
      %v4203 = vld [vmem:[%s4196 + $0x48] sm:$0xff]
      %v4204 = vld [vmem:[%s4196 + $0x50] sm:$0xff]
      %v4205 = vld [vmem:[%s4196 + $0x60] sm:$0xff]
      %v4206 = vld [vmem:[%s4196 + $0x68] sm:$0xff]
      %v4207 = vld [vmem:[%s4196 + $0x78] sm:$0xff]
      %v4208 = vld [vmem:[%s4196 + $0x80] sm:$0xff]
      %v4209 = vld [vmem:[%s4196 + $0x90] sm:$0xff]
      %v4210 = vld [vmem:[%s4196 + $0x98] sm:$0xff]
      %v4211 = vld [vmem:[%s4196 + $0xa8] sm:$0xff]
      %v4212 = vld [vmem:[%s4196 + $0xb0] sm:$0xff]
      %v4213 = vld [vmem:[%s4196 + $0xc0] sm:$0xff]
      %v4214 = vld [vmem:[%s4196 + $0xc8] sm:$0xff]
      %v4215 = vld [vmem:[%s4196 + $0xd8] sm:$0xff]
      %v4216 = vld [vmem:[%s4196 + $0xe0] sm:$0xff]
      %v4217 = vld [vmem:[%s4196 + $0xf0] sm:$0xff]
      %v4218 = vld [vmem:[%s4196 + $0xf8] sm:$0xff]
      %v4219 = vld [vmem:[%s4196 + $0x108] sm:$0xff]
      %v4220 = vld [vmem:[%s4196 + $0x110] sm:$0xff]
      %v4221 = vld [vmem:[%s4196 + $0x120] sm:$0xff]
      %v4222 = vld [vmem:[%s4196 + $0x128] sm:$0xff]
      %v4223 = vld [vmem:[%s4196 + $0x138] sm:$0xff]
      %v4224 = vld [vmem:[%s4196 + $0x140] sm:$0xff]
      %v4225 = vld [vmem:[%s4196 + $0x150] sm:$0xff]
      %v4226 = vld [vmem:[%s4196 + $0x158] sm:$0xff]
      %v4227 = vld [vmem:[%s4196 + $0x168] sm:$0xff]
      %v4228 = vld [vmem:[%s4196 + $0x170] sm:$0xff]
      %v4229 = vpack.c.bf16 %v4198, %v4197
      %v4230 = vpack.c.bf16 %v4200, %v4199
      %v4231 = vpack.c.bf16 %v4202, %v4201
      %v4232 = vpack.c.bf16 %v4204, %v4203
      %v4233 = vpack.c.bf16 %v4206, %v4205
      %v4234 = vpack.c.bf16 %v4208, %v4207
      %v4235 = vpack.c.bf16 %v4210, %v4209
      %v4236 = vpack.c.bf16 %v4212, %v4211
      %v4237 = vpack.c.bf16 %v4214, %v4213
      %v4238 = vpack.c.bf16 %v4216, %v4215
      %v4239 = vpack.c.bf16 %v4218, %v4217
      %v4240 = vpack.c.bf16 %v4220, %v4219
      %v4241 = vpack.c.bf16 %v4222, %v4221
      %v4242 = vpack.c.bf16 %v4224, %v4223
      %v4243 = vpack.c.bf16 %v4226, %v4225
      %v4244 = vpack.c.bf16 %v4228, %v4227
      %s4245 = scalar_lea.vmem %s4, 24
      %v4246 = vld [vmem:[%s4245] sm:$0xf]
      %v4248 = vsel %vm443, %v4229, 0
      %v4251 = vsel %vm443, %v4230, 0
      %v4254 = vsel %vm443, %v4231, 0
      %v4257 = vsel %vm443, %v4232, 0
      %v4260 = vsel %vm443, %v4233, 0
      %v4263 = vsel %vm443, %v4234, 0
      %v4266 = vsel %vm443, %v4235, 0
      %v4269 = vsel %vm443, %v4236, 0
      %v4272 = vsel %vm443, %v4237, 0
      %v4275 = vsel %vm443, %v4238, 0
      %v4278 = vsel %vm443, %v4239, 0
      %v4281 = vsel %vm443, %v4240, 0
      %v4284 = vsel %vm443, %v4241, 0
      %v4287 = vsel %vm443, %v4242, 0
      %v4290 = vsel %vm443, %v4243, 0
      %v4293 = vsel %vm443, %v4244, 0
      %v4296 = vsel %vm456, %v4246, 0
      %4298 = vmatprep.subr.bf16.mxu0 0
      %4299 = vmatpush1.bf16.msra.mxu0 %v4296
      %4300 = vmatprep.subr.bf16.mxu0 0
      %4301 = vmatpush1.bf16.msra.mxu0 0
      %4302 = vmatprep.subr.bf16.mxu0 0
      %4303 = vmatpush1.bf16.msra.mxu0 0
      %4304 = vmatprep.subr.bf16.mxu0 0
      %4305 = vmatpush1.bf16.msra.mxu0 0
      %4306 = vmatprep.subr.bf16.mxu0 0
      %4307 = vmatpush1.bf16.msra.mxu0 0
      %4308 = vmatprep.subr.bf16.mxu0 0
      %4309 = vmatpush1.bf16.msra.mxu0 0
      %4310 = vmatprep.subr.bf16.mxu0 0
      %4311 = vmatpush1.bf16.msra.mxu0 0
      %4312 = vmatprep.subr.bf16.mxu0 0
      %4313 = vmatpush1.bf16.msra.mxu0 0
      %4314 = vmatprep.subr.bf16.mxu0 0
      %4315 = vmatpush1.bf16.msra.mxu0 0
      %4316 = vmatprep.subr.bf16.mxu0 0
      %4317 = vmatpush1.bf16.msra.mxu0 0
      %4318 = vmatprep.subr.bf16.mxu0 0
      %4319 = vmatpush1.bf16.msra.mxu0 0
      %4320 = vmatprep.subr.bf16.mxu0 0
      %4321 = vmatpush1.bf16.msra.mxu0 0
      %4322 = vmatprep.subr.bf16.mxu0 0
      %4323 = vmatpush1.bf16.msra.mxu0 0
      %4324 = vmatprep.subr.bf16.mxu0 0
      %4325 = vmatpush1.bf16.msra.mxu0 0
      %4326 = vmatprep.subr.bf16.mxu0 0
      %4327 = vmatpush1.bf16.msra.mxu0 0
      %4328 = vmatprep.subr.bf16.mxu0 0
      %4329 = vmatpush1.bf16.msra.mxu0 0
      %4330 = vmatprep.mubr.bf16.mxu0 0
      %4331 = vmatmul.mubr.bf16.gmra.mrb[0].mxu0 %v4248
      %v4332 = vpop.f32.mrb[0].mxu0
      %v4333 = vadd.f32 0.0, %v4332
      %v4334 = vpop.f32.mrb[0].mxu0
      %v4335 = vpop.f32.mrb[0].mxu0
      %v4336 = vadd.f32 0.0, %v4335
      %v4337 = vpop.f32.mrb[0].mxu0
      %4338 = vmatprep.mubr.bf16.mxu0 0
      %4339 = vmatmul.mubr.bf16.gmra.mrb[0].mxu0 %v4251
      %v4340 = vpop.f32.mrb[0].mxu0
      %v4341 = vadd.f32 0.0, %v4340
      %v4342 = vpop.f32.mrb[0].mxu0
      %v4343 = vpop.f32.mrb[0].mxu0
      %v4344 = vadd.f32 0.0, %v4343
      %v4345 = vpop.f32.mrb[0].mxu0
      %4346 = vmatprep.mubr.bf16.mxu0 0
      %4347 = vmatmul.mubr.bf16.gmra.mrb[0].mxu0 %v4254
      %v4348 = vpop.f32.mrb[0].mxu0
      %v4349 = vadd.f32 0.0, %v4348
      %v4350 = vpop.f32.mrb[0].mxu0
      %v4351 = vpop.f32.mrb[0].mxu0
      %v4352 = vadd.f32 0.0, %v4351
      %v4353 = vpop.f32.mrb[0].mxu0
      %4354 = vmatprep.mubr.bf16.mxu0 0
      %4355 = vmatmul.mubr.bf16.gmra.mrb[0].mxu0 %v4257
      %v4356 = vpop.f32.mrb[0].mxu0
      %v4357 = vadd.f32 0.0, %v4356
      %v4358 = vpop.f32.mrb[0].mxu0
      %v4359 = vpop.f32.mrb[0].mxu0
      %v4360 = vadd.f32 0.0, %v4359
      %v4361 = vpop.f32.mrb[0].mxu0
      %4362 = vmatprep.mubr.bf16.mxu0 0
      %4363 = vmatmul.mubr.bf16.gmra.mrb[0].mxu0 %v4260
      %v4364 = vpop.f32.mrb[0].mxu0
      %v4365 = vadd.f32 0.0, %v4364
      %v4366 = vpop.f32.mrb[0].mxu0
      %v4367 = vpop.f32.mrb[0].mxu0
      %v4368 = vadd.f32 0.0, %v4367
      %v4369 = vpop.f32.mrb[0].mxu0
      %4370 = vmatprep.mubr.bf16.mxu0 0
      %4371 = vmatmul.mubr.bf16.gmra.mrb[0].mxu0 %v4263
      %v4372 = vpop.f32.mrb[0].mxu0
      %v4373 = vadd.f32 0.0, %v4372
      %v4374 = vpop.f32.mrb[0].mxu0
      %v4375 = vpop.f32.mrb[0].mxu0
      %v4376 = vadd.f32 0.0, %v4375
      %v4377 = vpop.f32.mrb[0].mxu0
      %4378 = vmatprep.mubr.bf16.mxu0 0
      %4379 = vmatmul.mubr.bf16.gmra.mrb[0].mxu0 %v4266
      %v4380 = vpop.f32.mrb[0].mxu0
      %v4381 = vadd.f32 0.0, %v4380
      %v4382 = vpop.f32.mrb[0].mxu0
      %v4383 = vpop.f32.mrb[0].mxu0
      %v4384 = vadd.f32 0.0, %v4383
      %v4385 = vpop.f32.mrb[0].mxu0
      %4386 = vmatprep.mubr.bf16.mxu0 0
      %4387 = vmatmul.mubr.bf16.gmra.mrb[0].mxu0 %v4269
      %v4388 = vpop.f32.mrb[0].mxu0
      %v4389 = vadd.f32 0.0, %v4388
      %v4390 = vpop.f32.mrb[0].mxu0
      %v4391 = vpop.f32.mrb[0].mxu0
      %v4392 = vadd.f32 0.0, %v4391
      %v4393 = vpop.f32.mrb[0].mxu0
      %4394 = vmatprep.mubr.bf16.mxu0 0
      %4395 = vmatmul.mubr.bf16.gmra.mrb[0].mxu0 %v4272
      %v4396 = vpop.f32.mrb[0].mxu0
      %v4397 = vadd.f32 0.0, %v4396
      %v4398 = vpop.f32.mrb[0].mxu0
      %v4399 = vpop.f32.mrb[0].mxu0
      %v4400 = vadd.f32 0.0, %v4399
      %v4401 = vpop.f32.mrb[0].mxu0
      %4402 = vmatprep.mubr.bf16.mxu0 0
      %4403 = vmatmul.mubr.bf16.gmra.mrb[0].mxu0 %v4275
      %v4404 = vpop.f32.mrb[0].mxu0
      %v4405 = vadd.f32 0.0, %v4404
      %v4406 = vpop.f32.mrb[0].mxu0
      %v4407 = vpop.f32.mrb[0].mxu0
      %v4408 = vadd.f32 0.0, %v4407
      %v4409 = vpop.f32.mrb[0].mxu0
      %4410 = vmatprep.mubr.bf16.mxu0 0
      %4411 = vmatmul.mubr.bf16.gmra.mrb[0].mxu0 %v4278
      %v4412 = vpop.f32.mrb[0].mxu0
      %v4413 = vadd.f32 0.0, %v4412
      %v4414 = vpop.f32.mrb[0].mxu0
      %v4415 = vpop.f32.mrb[0].mxu0
      %v4416 = vadd.f32 0.0, %v4415
      %v4417 = vpop.f32.mrb[0].mxu0
      %4418 = vmatprep.mubr.bf16.mxu0 0
      %4419 = vmatmul.mubr.bf16.gmra.mrb[0].mxu0 %v4281
      %v4420 = vpop.f32.mrb[0].mxu0
      %v4421 = vadd.f32 0.0, %v4420
      %v4422 = vpop.f32.mrb[0].mxu0
      %v4423 = vpop.f32.mrb[0].mxu0
      %v4424 = vadd.f32 0.0, %v4423
      %v4425 = vpop.f32.mrb[0].mxu0
      %4426 = vmatprep.mubr.bf16.mxu0 0
      %4427 = vmatmul.mubr.bf16.gmra.mrb[0].mxu0 %v4284
      %v4428 = vpop.f32.mrb[0].mxu0
      %v4429 = vadd.f32 0.0, %v4428
      %v4430 = vpop.f32.mrb[0].mxu0
      %v4431 = vpop.f32.mrb[0].mxu0
      %v4432 = vadd.f32 0.0, %v4431
      %v4433 = vpop.f32.mrb[0].mxu0
      %4434 = vmatprep.mubr.bf16.mxu0 0
      %4435 = vmatmul.mubr.bf16.gmra.mrb[0].mxu0 %v4287
      %v4436 = vpop.f32.mrb[0].mxu0
      %v4437 = vadd.f32 0.0, %v4436
      %v4438 = vpop.f32.mrb[0].mxu0
      %v4439 = vpop.f32.mrb[0].mxu0
      %v4440 = vadd.f32 0.0, %v4439
      %v4441 = vpop.f32.mrb[0].mxu0
      %4442 = vmatprep.mubr.bf16.mxu0 0
      %4443 = vmatmul.mubr.bf16.gmra.mrb[0].mxu0 %v4290
      %v4444 = vpop.f32.mrb[0].mxu0
      %v4445 = vadd.f32 0.0, %v4444
      %v4446 = vpop.f32.mrb[0].mxu0
      %v4447 = vpop.f32.mrb[0].mxu0
      %v4448 = vadd.f32 0.0, %v4447
      %v4449 = vpop.f32.mrb[0].mxu0
      %4450 = vmatprep.mubr.bf16.mxu0 0
      %4451 = vmatmul.mubr.bf16.gmra.mrb[0].mxu0 %v4293
      %v4452 = vpop.f32.mrb[0].mxu0
      %v4453 = vadd.f32 0.0, %v4452
      %v4454 = vpop.f32.mrb[0].mxu0
      %v4455 = vpop.f32.mrb[0].mxu0
      %v4456 = vadd.f32 0.0, %v4455
      %v4457 = vpop.f32.mrb[0].mxu0
      %4458 = vdwg.mxu0
      %v4459 = vadd.f32 %v4164, %v4333
      %v4460 = vadd.f32 %v4165, %v4336
      %v4461 = vadd.f32 %v4166, %v4341
      %v4462 = vadd.f32 %v4167, %v4344
      %v4463 = vadd.f32 %v4168, %v4349
      %v4464 = vadd.f32 %v4169, %v4352
      %v4465 = vadd.f32 %v4170, %v4357
      %v4466 = vadd.f32 %v4171, %v4360
      %v4467 = vadd.f32 %v4172, %v4365
      %v4468 = vadd.f32 %v4173, %v4368
      %v4469 = vadd.f32 %v4174, %v4373
      %v4470 = vadd.f32 %v4175, %v4376
      %v4471 = vadd.f32 %v4176, %v4381
      %v4472 = vadd.f32 %v4177, %v4384
      %v4473 = vadd.f32 %v4178, %v4389
      %v4474 = vadd.f32 %v4179, %v4392
      %v4475 = vadd.f32 %v4180, %v4397
      %v4476 = vadd.f32 %v4181, %v4400
      %v4477 = vadd.f32 %v4182, %v4405
      %v4478 = vadd.f32 %v4183, %v4408
      %v4479 = vadd.f32 %v4184, %v4413
      %v4480 = vadd.f32 %v4185, %v4416
      %v4481 = vadd.f32 %v4186, %v4421
      %v4482 = vadd.f32 %v4187, %v4424
      %v4483 = vadd.f32 %v4188, %v4429
      %v4484 = vadd.f32 %v4189, %v4432
      %v4485 = vadd.f32 %v4190, %v4437
      %v4486 = vadd.f32 %v4191, %v4440
      %v4487 = vadd.f32 %v4192, %v4445
      %v4488 = vadd.f32 %v4193, %v4448
      %v4489 = vadd.f32 %v4194, %v4453
      %v4490 = vadd.f32 %v4195, %v4456
      %v4491 = vld [vmem:[%s4196 + $0x1] sm:$0xff]
      %v4492 = vld [vmem:[%s4196 + $0x9] sm:$0xff]
      %v4493 = vld [vmem:[%s4196 + $0x19] sm:$0xff]
      %v4494 = vld [vmem:[%s4196 + $0x21] sm:$0xff]
      %v4495 = vld [vmem:[%s4196 + $0x31] sm:$0xff]
      %v4496 = vld [vmem:[%s4196 + $0x39] sm:$0xff]
      %v4497 = vld [vmem:[%s4196 + $0x49] sm:$0xff]
      %v4498 = vld [vmem:[%s4196 + $0x51] sm:$0xff]
      %v4499 = vld [vmem:[%s4196 + $0x61] sm:$0xff]
      %v4500 = vld [vmem:[%s4196 + $0x69] sm:$0xff]
      %v4501 = vld [vmem:[%s4196 + $0x79] sm:$0xff]
      %v4502 = vld [vmem:[%s4196 + $0x81] sm:$0xff]
      %v4503 = vld [vmem:[%s4196 + $0x91] sm:$0xff]
      %v4504 = vld [vmem:[%s4196 + $0x99] sm:$0xff]
      %v4505 = vld [vmem:[%s4196 + $0xa9] sm:$0xff]
      %v4506 = vld [vmem:[%s4196 + $0xb1] sm:$0xff]
      %v4507 = vld [vmem:[%s4196 + $0xc1] sm:$0xff]
      %v4508 = vld [vmem:[%s4196 + $0xc9] sm:$0xff]
      %v4509 = vld [vmem:[%s4196 + $0xd9] sm:$0xff]
      %v4510 = vld [vmem:[%s4196 + $0xe1] sm:$0xff]
      %v4511 = vld [vmem:[%s4196 + $0xf1] sm:$0xff]
      %v4512 = vld [vmem:[%s4196 + $0xf9] sm:$0xff]
      %v4513 = vld [vmem:[%s4196 + $0x109] sm:$0xff]
      %v4514 = vld [vmem:[%s4196 + $0x111] sm:$0xff]
      %v4515 = vld [vmem:[%s4196 + $0x121] sm:$0xff]
      %v4516 = vld [vmem:[%s4196 + $0x129] sm:$0xff]
      %v4517 = vld [vmem:[%s4196 + $0x139] sm:$0xff]
      %v4518 = vld [vmem:[%s4196 + $0x141] sm:$0xff]
      %v4519 = vld [vmem:[%s4196 + $0x151] sm:$0xff]
      %v4520 = vld [vmem:[%s4196 + $0x159] sm:$0xff]
      %v4521 = vld [vmem:[%s4196 + $0x169] sm:$0xff]
      %v4522 = vld [vmem:[%s4196 + $0x171] sm:$0xff]
      %v4523 = vpack.c.bf16 %v4492, %v4491
      %v4524 = vpack.c.bf16 %v4494, %v4493
      %v4525 = vpack.c.bf16 %v4496, %v4495
      %v4526 = vpack.c.bf16 %v4498, %v4497
      %v4527 = vpack.c.bf16 %v4500, %v4499
      %v4528 = vpack.c.bf16 %v4502, %v4501
      %v4529 = vpack.c.bf16 %v4504, %v4503
      %v4530 = vpack.c.bf16 %v4506, %v4505
      %v4531 = vpack.c.bf16 %v4508, %v4507
      %v4532 = vpack.c.bf16 %v4510, %v4509
      %v4533 = vpack.c.bf16 %v4512, %v4511
      %v4534 = vpack.c.bf16 %v4514, %v4513
      %v4535 = vpack.c.bf16 %v4516, %v4515
      %v4536 = vpack.c.bf16 %v4518, %v4517
      %v4537 = vpack.c.bf16 %v4520, %v4519
      %v4538 = vpack.c.bf16 %v4522, %v4521
      %s4539 = scalar_lea.vmem %s4, 28
      %v4540 = vld [vmem:[%s4539] sm:$0xf]
      %v4542 = vsel %vm443, %v4523, 0
      %v4545 = vsel %vm443, %v4524, 0
      %v4548 = vsel %vm443, %v4525, 0
      %v4551 = vsel %vm443, %v4526, 0
      %v4554 = vsel %vm443, %v4527, 0
      %v4557 = vsel %vm443, %v4528, 0
      %v4560 = vsel %vm443, %v4529, 0
      %v4563 = vsel %vm443, %v4530, 0
      %v4566 = vsel %vm443, %v4531, 0
      %v4569 = vsel %vm443, %v4532, 0
      %v4572 = vsel %vm443, %v4533, 0
      %v4575 = vsel %vm443, %v4534, 0
      %v4578 = vsel %vm443, %v4535, 0
      %v4581 = vsel %vm443, %v4536, 0
      %v4584 = vsel %vm443, %v4537, 0
      %v4587 = vsel %vm443, %v4538, 0
      %v4590 = vsel %vm456, %v4540, 0
      %4592 = vmatprep.subr.bf16.mxu0 0
      %4593 = vmatpush1.bf16.msra.mxu0 %v4590
      %4594 = vmatprep.subr.bf16.mxu0 0
      %4595 = vmatpush1.bf16.msra.mxu0 0
      %4596 = vmatprep.subr.bf16.mxu0 0
      %4597 = vmatpush1.bf16.msra.mxu0 0
      %4598 = vmatprep.subr.bf16.mxu0 0
      %4599 = vmatpush1.bf16.msra.mxu0 0
      %4600 = vmatprep.subr.bf16.mxu0 0
      %4601 = vmatpush1.bf16.msra.mxu0 0
      %4602 = vmatprep.subr.bf16.mxu0 0
      %4603 = vmatpush1.bf16.msra.mxu0 0
      %4604 = vmatprep.subr.bf16.mxu0 0
      %4605 = vmatpush1.bf16.msra.mxu0 0
      %4606 = vmatprep.subr.bf16.mxu0 0
      %4607 = vmatpush1.bf16.msra.mxu0 0
      %4608 = vmatprep.subr.bf16.mxu0 0
      %4609 = vmatpush1.bf16.msra.mxu0 0
      %4610 = vmatprep.subr.bf16.mxu0 0
      %4611 = vmatpush1.bf16.msra.mxu0 0
      %4612 = vmatprep.subr.bf16.mxu0 0
      %4613 = vmatpush1.bf16.msra.mxu0 0
      %4614 = vmatprep.subr.bf16.mxu0 0
      %4615 = vmatpush1.bf16.msra.mxu0 0
      %4616 = vmatprep.subr.bf16.mxu0 0
      %4617 = vmatpush1.bf16.msra.mxu0 0
      %4618 = vmatprep.subr.bf16.mxu0 0
      %4619 = vmatpush1.bf16.msra.mxu0 0
      %4620 = vmatprep.subr.bf16.mxu0 0
      %4621 = vmatpush1.bf16.msra.mxu0 0
      %4622 = vmatprep.subr.bf16.mxu0 0
      %4623 = vmatpush1.bf16.msra.mxu0 0
      %4624 = vmatprep.mubr.bf16.mxu0 0
      %4625 = vmatmul.mubr.bf16.gmra.mrb[0].mxu0 %v4542
      %v4626 = vpop.f32.mrb[0].mxu0
      %v4627 = vadd.f32 0.0, %v4626
      %v4628 = vpop.f32.mrb[0].mxu0
      %v4629 = vpop.f32.mrb[0].mxu0
      %v4630 = vadd.f32 0.0, %v4629
      %v4631 = vpop.f32.mrb[0].mxu0
      %4632 = vmatprep.mubr.bf16.mxu0 0
      %4633 = vmatmul.mubr.bf16.gmra.mrb[0].mxu0 %v4545
      %v4634 = vpop.f32.mrb[0].mxu0
      %v4635 = vadd.f32 0.0, %v4634
      %v4636 = vpop.f32.mrb[0].mxu0
      %v4637 = vpop.f32.mrb[0].mxu0
      %v4638 = vadd.f32 0.0, %v4637
      %v4639 = vpop.f32.mrb[0].mxu0
      %4640 = vmatprep.mubr.bf16.mxu0 0
      %4641 = vmatmul.mubr.bf16.gmra.mrb[0].mxu0 %v4548
      %v4642 = vpop.f32.mrb[0].mxu0
      %v4643 = vadd.f32 0.0, %v4642
      %v4644 = vpop.f32.mrb[0].mxu0
      %v4645 = vpop.f32.mrb[0].mxu0
      %v4646 = vadd.f32 0.0, %v4645
      %v4647 = vpop.f32.mrb[0].mxu0
      %4648 = vmatprep.mubr.bf16.mxu0 0
      %4649 = vmatmul.mubr.bf16.gmra.mrb[0].mxu0 %v4551
      %v4650 = vpop.f32.mrb[0].mxu0
      %v4651 = vadd.f32 0.0, %v4650
      %v4652 = vpop.f32.mrb[0].mxu0
      %v4653 = vpop.f32.mrb[0].mxu0
      %v4654 = vadd.f32 0.0, %v4653
      %v4655 = vpop.f32.mrb[0].mxu0
      %4656 = vmatprep.mubr.bf16.mxu0 0
      %4657 = vmatmul.mubr.bf16.gmra.mrb[0].mxu0 %v4554
      %v4658 = vpop.f32.mrb[0].mxu0
      %v4659 = vadd.f32 0.0, %v4658
      %v4660 = vpop.f32.mrb[0].mxu0
      %v4661 = vpop.f32.mrb[0].mxu0
      %v4662 = vadd.f32 0.0, %v4661
      %v4663 = vpop.f32.mrb[0].mxu0
      %4664 = vmatprep.mubr.bf16.mxu0 0
      %4665 = vmatmul.mubr.bf16.gmra.mrb[0].mxu0 %v4557
      %v4666 = vpop.f32.mrb[0].mxu0
      %v4667 = vadd.f32 0.0, %v4666
      %v4668 = vpop.f32.mrb[0].mxu0
      %v4669 = vpop.f32.mrb[0].mxu0
      %v4670 = vadd.f32 0.0, %v4669
      %v4671 = vpop.f32.mrb[0].mxu0
      %4672 = vmatprep.mubr.bf16.mxu0 0
      %4673 = vmatmul.mubr.bf16.gmra.mrb[0].mxu0 %v4560
      %v4674 = vpop.f32.mrb[0].mxu0
      %v4675 = vadd.f32 0.0, %v4674
      %v4676 = vpop.f32.mrb[0].mxu0
      %v4677 = vpop.f32.mrb[0].mxu0
      %v4678 = vadd.f32 0.0, %v4677
      %v4679 = vpop.f32.mrb[0].mxu0
      %4680 = vmatprep.mubr.bf16.mxu0 0
      %4681 = vmatmul.mubr.bf16.gmra.mrb[0].mxu0 %v4563
      %v4682 = vpop.f32.mrb[0].mxu0
      %v4683 = vadd.f32 0.0, %v4682
      %v4684 = vpop.f32.mrb[0].mxu0
      %v4685 = vpop.f32.mrb[0].mxu0
      %v4686 = vadd.f32 0.0, %v4685
      %v4687 = vpop.f32.mrb[0].mxu0
      %4688 = vmatprep.mubr.bf16.mxu0 0
      %4689 = vmatmul.mubr.bf16.gmra.mrb[0].mxu0 %v4566
      %v4690 = vpop.f32.mrb[0].mxu0
      %v4691 = vadd.f32 0.0, %v4690
      %v4692 = vpop.f32.mrb[0].mxu0
      %v4693 = vpop.f32.mrb[0].mxu0
      %v4694 = vadd.f32 0.0, %v4693
      %v4695 = vpop.f32.mrb[0].mxu0
      %4696 = vmatprep.mubr.bf16.mxu0 0
      %4697 = vmatmul.mubr.bf16.gmra.mrb[0].mxu0 %v4569
      %v4698 = vpop.f32.mrb[0].mxu0
      %v4699 = vadd.f32 0.0, %v4698
      %v4700 = vpop.f32.mrb[0].mxu0
      %v4701 = vpop.f32.mrb[0].mxu0
      %v4702 = vadd.f32 0.0, %v4701
      %v4703 = vpop.f32.mrb[0].mxu0
      %4704 = vmatprep.mubr.bf16.mxu0 0
      %4705 = vmatmul.mubr.bf16.gmra.mrb[0].mxu0 %v4572
      %v4706 = vpop.f32.mrb[0].mxu0
      %v4707 = vadd.f32 0.0, %v4706
      %v4708 = vpop.f32.mrb[0].mxu0
      %v4709 = vpop.f32.mrb[0].mxu0
      %v4710 = vadd.f32 0.0, %v4709
      %v4711 = vpop.f32.mrb[0].mxu0
      %4712 = vmatprep.mubr.bf16.mxu0 0
      %4713 = vmatmul.mubr.bf16.gmra.mrb[0].mxu0 %v4575
      %v4714 = vpop.f32.mrb[0].mxu0
      %v4715 = vadd.f32 0.0, %v4714
      %v4716 = vpop.f32.mrb[0].mxu0
      %v4717 = vpop.f32.mrb[0].mxu0
      %v4718 = vadd.f32 0.0, %v4717
      %v4719 = vpop.f32.mrb[0].mxu0
      %4720 = vmatprep.mubr.bf16.mxu0 0
      %4721 = vmatmul.mubr.bf16.gmra.mrb[0].mxu0 %v4578
      %v4722 = vpop.f32.mrb[0].mxu0
      %v4723 = vadd.f32 0.0, %v4722
      %v4724 = vpop.f32.mrb[0].mxu0
      %v4725 = vpop.f32.mrb[0].mxu0
      %v4726 = vadd.f32 0.0, %v4725
      %v4727 = vpop.f32.mrb[0].mxu0
      %4728 = vmatprep.mubr.bf16.mxu0 0
      %4729 = vmatmul.mubr.bf16.gmra.mrb[0].mxu0 %v4581
      %v4730 = vpop.f32.mrb[0].mxu0
      %v4731 = vadd.f32 0.0, %v4730
      %v4732 = vpop.f32.mrb[0].mxu0
      %v4733 = vpop.f32.mrb[0].mxu0
      %v4734 = vadd.f32 0.0, %v4733
      %v4735 = vpop.f32.mrb[0].mxu0
      %4736 = vmatprep.mubr.bf16.mxu0 0
      %4737 = vmatmul.mubr.bf16.gmra.mrb[0].mxu0 %v4584
      %v4738 = vpop.f32.mrb[0].mxu0
      %v4739 = vadd.f32 0.0, %v4738
      %v4740 = vpop.f32.mrb[0].mxu0
      %v4741 = vpop.f32.mrb[0].mxu0
      %v4742 = vadd.f32 0.0, %v4741
      %v4743 = vpop.f32.mrb[0].mxu0
      %4744 = vmatprep.mubr.bf16.mxu0 0
      %4745 = vmatmul.mubr.bf16.gmra.mrb[0].mxu0 %v4587
      %v4746 = vpop.f32.mrb[0].mxu0
      %v4747 = vadd.f32 0.0, %v4746
      %v4748 = vpop.f32.mrb[0].mxu0
      %v4749 = vpop.f32.mrb[0].mxu0
      %v4750 = vadd.f32 0.0, %v4749
      %v4751 = vpop.f32.mrb[0].mxu0
      %4752 = vdwg.mxu0
      %v4753 = vadd.f32 %v4459, %v4627
      %v4754 = vadd.f32 %v4460, %v4630
      %v4755 = vadd.f32 %v4461, %v4635
      %v4756 = vadd.f32 %v4462, %v4638
      %v4757 = vadd.f32 %v4463, %v4643
      %v4758 = vadd.f32 %v4464, %v4646
      %v4759 = vadd.f32 %v4465, %v4651
      %v4760 = vadd.f32 %v4466, %v4654
      %v4761 = vadd.f32 %v4467, %v4659
      %v4762 = vadd.f32 %v4468, %v4662
      %v4763 = vadd.f32 %v4469, %v4667
      %v4764 = vadd.f32 %v4470, %v4670
      %v4765 = vadd.f32 %v4471, %v4675
      %v4766 = vadd.f32 %v4472, %v4678
      %v4767 = vadd.f32 %v4473, %v4683
      %v4768 = vadd.f32 %v4474, %v4686
      %v4769 = vadd.f32 %v4475, %v4691
      %v4770 = vadd.f32 %v4476, %v4694
      %v4771 = vadd.f32 %v4477, %v4699
      %v4772 = vadd.f32 %v4478, %v4702
      %v4773 = vadd.f32 %v4479, %v4707
      %v4774 = vadd.f32 %v4480, %v4710
      %v4775 = vadd.f32 %v4481, %v4715
      %v4776 = vadd.f32 %v4482, %v4718
      %v4777 = vadd.f32 %v4483, %v4723
      %v4778 = vadd.f32 %v4484, %v4726
      %v4779 = vadd.f32 %v4485, %v4731
      %v4780 = vadd.f32 %v4486, %v4734
      %v4781 = vadd.f32 %v4487, %v4739
      %v4782 = vadd.f32 %v4488, %v4742
      %v4783 = vadd.f32 %v4489, %v4747
      %v4784 = vadd.f32 %v4490, %v4750
      %v4785 = vld [vmem:[%s4196 + $0x2] sm:$0xff]
      %v4786 = vld [vmem:[%s4196 + $0xa] sm:$0xff]
      %v4787 = vld [vmem:[%s4196 + $0x1a] sm:$0xff]
      %v4788 = vld [vmem:[%s4196 + $0x22] sm:$0xff]
      %v4789 = vld [vmem:[%s4196 + $0x32] sm:$0xff]
      %v4790 = vld [vmem:[%s4196 + $0x3a] sm:$0xff]
      %v4791 = vld [vmem:[%s4196 + $0x4a] sm:$0xff]
      %v4792 = vld [vmem:[%s4196 + $0x52] sm:$0xff]
      %v4793 = vld [vmem:[%s4196 + $0x62] sm:$0xff]
      %v4794 = vld [vmem:[%s4196 + $0x6a] sm:$0xff]
      %v4795 = vld [vmem:[%s4196 + $0x7a] sm:$0xff]
      %v4796 = vld [vmem:[%s4196 + $0x82] sm:$0xff]
      %v4797 = vld [vmem:[%s4196 + $0x92] sm:$0xff]
      %v4798 = vld [vmem:[%s4196 + $0x9a] sm:$0xff]
      %v4799 = vld [vmem:[%s4196 + $0xaa] sm:$0xff]
      %v4800 = vld [vmem:[%s4196 + $0xb2] sm:$0xff]
      %v4801 = vld [vmem:[%s4196 + $0xc2] sm:$0xff]
      %v4802 = vld [vmem:[%s4196 + $0xca] sm:$0xff]
      %v4803 = vld [vmem:[%s4196 + $0xda] sm:$0xff]
      %v4804 = vld [vmem:[%s4196 + $0xe2] sm:$0xff]
      %v4805 = vld [vmem:[%s4196 + $0xf2] sm:$0xff]
      %v4806 = vld [vmem:[%s4196 + $0xfa] sm:$0xff]
      %v4807 = vld [vmem:[%s4196 + $0x10a] sm:$0xff]
      %v4808 = vld [vmem:[%s4196 + $0x112] sm:$0xff]
      %v4809 = vld [vmem:[%s4196 + $0x122] sm:$0xff]
      %v4810 = vld [vmem:[%s4196 + $0x12a] sm:$0xff]
      %v4811 = vld [vmem:[%s4196 + $0x13a] sm:$0xff]
      %v4812 = vld [vmem:[%s4196 + $0x142] sm:$0xff]
      %v4813 = vld [vmem:[%s4196 + $0x152] sm:$0xff]
      %v4814 = vld [vmem:[%s4196 + $0x15a] sm:$0xff]
      %v4815 = vld [vmem:[%s4196 + $0x16a] sm:$0xff]
      %v4816 = vld [vmem:[%s4196 + $0x172] sm:$0xff]
      %v4817 = vpack.c.bf16 %v4786, %v4785
      %v4818 = vpack.c.bf16 %v4788, %v4787
      %v4819 = vpack.c.bf16 %v4790, %v4789
      %v4820 = vpack.c.bf16 %v4792, %v4791
      %v4821 = vpack.c.bf16 %v4794, %v4793
      %v4822 = vpack.c.bf16 %v4796, %v4795
      %v4823 = vpack.c.bf16 %v4798, %v4797
      %v4824 = vpack.c.bf16 %v4800, %v4799
      %v4825 = vpack.c.bf16 %v4802, %v4801
      %v4826 = vpack.c.bf16 %v4804, %v4803
      %v4827 = vpack.c.bf16 %v4806, %v4805
      %v4828 = vpack.c.bf16 %v4808, %v4807
      %v4829 = vpack.c.bf16 %v4810, %v4809
      %v4830 = vpack.c.bf16 %v4812, %v4811
      %v4831 = vpack.c.bf16 %v4814, %v4813
      %v4832 = vpack.c.bf16 %v4816, %v4815
      %s4833 = scalar_lea.vmem %s4, 32
      %v4834 = vld [vmem:[%s4833] sm:$0xf]
      %v4836 = vsel %vm443, %v4817, 0
      %v4839 = vsel %vm443, %v4818, 0
      %v4842 = vsel %vm443, %v4819, 0
      %v4845 = vsel %vm443, %v4820, 0
      %v4848 = vsel %vm443, %v4821, 0
      %v4851 = vsel %vm443, %v4822, 0
      %v4854 = vsel %vm443, %v4823, 0
      %v4857 = vsel %vm443, %v4824, 0
      %v4860 = vsel %vm443, %v4825, 0
      %v4863 = vsel %vm443, %v4826, 0
      %v4866 = vsel %vm443, %v4827, 0
      %v4869 = vsel %vm443, %v4828, 0
      %v4872 = vsel %vm443, %v4829, 0
      %v4875 = vsel %vm443, %v4830, 0
      %v4878 = vsel %vm443, %v4831, 0
      %v4881 = vsel %vm443, %v4832, 0
      %v4884 = vsel %vm456, %v4834, 0
      %4886 = vmatprep.subr.bf16.mxu0 0
      %4887 = vmatpush1.bf16.msra.mxu0 %v4884
      %4888 = vmatprep.subr.bf16.mxu0 0
      %4889 = vmatpush1.bf16.msra.mxu0 0
      %4890 = vmatprep.subr.bf16.mxu0 0
      %4891 = vmatpush1.bf16.msra.mxu0 0
      %4892 = vmatprep.subr.bf16.mxu0 0
      %4893 = vmatpush1.bf16.msra.mxu0 0
      %4894 = vmatprep.subr.bf16.mxu0 0
      %4895 = vmatpush1.bf16.msra.mxu0 0
      %4896 = vmatprep.subr.bf16.mxu0 0
      %4897 = vmatpush1.bf16.msra.mxu0 0
      %4898 = vmatprep.subr.bf16.mxu0 0
      %4899 = vmatpush1.bf16.msra.mxu0 0
      %4900 = vmatprep.subr.bf16.mxu0 0
      %4901 = vmatpush1.bf16.msra.mxu0 0
      %4902 = vmatprep.subr.bf16.mxu0 0
      %4903 = vmatpush1.bf16.msra.mxu0 0
      %4904 = vmatprep.subr.bf16.mxu0 0
      %4905 = vmatpush1.bf16.msra.mxu0 0
      %4906 = vmatprep.subr.bf16.mxu0 0
      %4907 = vmatpush1.bf16.msra.mxu0 0
      %4908 = vmatprep.subr.bf16.mxu0 0
      %4909 = vmatpush1.bf16.msra.mxu0 0
      %4910 = vmatprep.subr.bf16.mxu0 0
      %4911 = vmatpush1.bf16.msra.mxu0 0
      %4912 = vmatprep.subr.bf16.mxu0 0
      %4913 = vmatpush1.bf16.msra.mxu0 0
      %4914 = vmatprep.subr.bf16.mxu0 0
      %4915 = vmatpush1.bf16.msra.mxu0 0
      %4916 = vmatprep.subr.bf16.mxu0 0
      %4917 = vmatpush1.bf16.msra.mxu0 0
      %4918 = vmatprep.mubr.bf16.mxu0 0
      %4919 = vmatmul.mubr.bf16.gmra.mrb[0].mxu0 %v4836
      %v4920 = vpop.f32.mrb[0].mxu0
      %v4921 = vadd.f32 0.0, %v4920
      %v4922 = vpop.f32.mrb[0].mxu0
      %v4923 = vpop.f32.mrb[0].mxu0
      %v4924 = vadd.f32 0.0, %v4923
      %v4925 = vpop.f32.mrb[0].mxu0
      %4926 = vmatprep.mubr.bf16.mxu0 0
      %4927 = vmatmul.mubr.bf16.gmra.mrb[0].mxu0 %v4839
      %v4928 = vpop.f32.mrb[0].mxu0
      %v4929 = vadd.f32 0.0, %v4928
      %v4930 = vpop.f32.mrb[0].mxu0
      %v4931 = vpop.f32.mrb[0].mxu0
      %v4932 = vadd.f32 0.0, %v4931
      %v4933 = vpop.f32.mrb[0].mxu0
      %4934 = vmatprep.mubr.bf16.mxu0 0
      %4935 = vmatmul.mubr.bf16.gmra.mrb[0].mxu0 %v4842
      %v4936 = vpop.f32.mrb[0].mxu0
      %v4937 = vadd.f32 0.0, %v4936
      %v4938 = vpop.f32.mrb[0].mxu0
      %v4939 = vpop.f32.mrb[0].mxu0
      %v4940 = vadd.f32 0.0, %v4939
      %v4941 = vpop.f32.mrb[0].mxu0
      %4942 = vmatprep.mubr.bf16.mxu0 0
      %4943 = vmatmul.mubr.bf16.gmra.mrb[0].mxu0 %v4845
      %v4944 = vpop.f32.mrb[0].mxu0
      %v4945 = vadd.f32 0.0, %v4944
      %v4946 = vpop.f32.mrb[0].mxu0
      %v4947 = vpop.f32.mrb[0].mxu0
      %v4948 = vadd.f32 0.0, %v4947
      %v4949 = vpop.f32.mrb[0].mxu0
      %4950 = vmatprep.mubr.bf16.mxu0 0
      %4951 = vmatmul.mubr.bf16.gmra.mrb[0].mxu0 %v4848
      %v4952 = vpop.f32.mrb[0].mxu0
      %v4953 = vadd.f32 0.0, %v4952
      %v4954 = vpop.f32.mrb[0].mxu0
      %v4955 = vpop.f32.mrb[0].mxu0
      %v4956 = vadd.f32 0.0, %v4955
      %v4957 = vpop.f32.mrb[0].mxu0
      %4958 = vmatprep.mubr.bf16.mxu0 0
      %4959 = vmatmul.mubr.bf16.gmra.mrb[0].mxu0 %v4851
      %v4960 = vpop.f32.mrb[0].mxu0
      %v4961 = vadd.f32 0.0, %v4960
      %v4962 = vpop.f32.mrb[0].mxu0
      %v4963 = vpop.f32.mrb[0].mxu0
      %v4964 = vadd.f32 0.0, %v4963
      %v4965 = vpop.f32.mrb[0].mxu0
      %4966 = vmatprep.mubr.bf16.mxu0 0
      %4967 = vmatmul.mubr.bf16.gmra.mrb[0].mxu0 %v4854
      %v4968 = vpop.f32.mrb[0].mxu0
      %v4969 = vadd.f32 0.0, %v4968
      %v4970 = vpop.f32.mrb[0].mxu0
      %v4971 = vpop.f32.mrb[0].mxu0
      %v4972 = vadd.f32 0.0, %v4971
      %v4973 = vpop.f32.mrb[0].mxu0
      %4974 = vmatprep.mubr.bf16.mxu0 0
      %4975 = vmatmul.mubr.bf16.gmra.mrb[0].mxu0 %v4857
      %v4976 = vpop.f32.mrb[0].mxu0
      %v4977 = vadd.f32 0.0, %v4976
      %v4978 = vpop.f32.mrb[0].mxu0
      %v4979 = vpop.f32.mrb[0].mxu0
      %v4980 = vadd.f32 0.0, %v4979
      %v4981 = vpop.f32.mrb[0].mxu0
      %4982 = vmatprep.mubr.bf16.mxu0 0
      %4983 = vmatmul.mubr.bf16.gmra.mrb[0].mxu0 %v4860
      %v4984 = vpop.f32.mrb[0].mxu0
      %v4985 = vadd.f32 0.0, %v4984
      %v4986 = vpop.f32.mrb[0].mxu0
      %v4987 = vpop.f32.mrb[0].mxu0
      %v4988 = vadd.f32 0.0, %v4987
      %v4989 = vpop.f32.mrb[0].mxu0
      %4990 = vmatprep.mubr.bf16.mxu0 0
      %4991 = vmatmul.mubr.bf16.gmra.mrb[0].mxu0 %v4863
      %v4992 = vpop.f32.mrb[0].mxu0
      %v4993 = vadd.f32 0.0, %v4992
      %v4994 = vpop.f32.mrb[0].mxu0
      %v4995 = vpop.f32.mrb[0].mxu0
      %v4996 = vadd.f32 0.0, %v4995
      %v4997 = vpop.f32.mrb[0].mxu0
      %4998 = vmatprep.mubr.bf16.mxu0 0
      %4999 = vmatmul.mubr.bf16.gmra.mrb[0].mxu0 %v4866
      %v5000 = vpop.f32.mrb[0].mxu0
      %v5001 = vadd.f32 0.0, %v5000
      %v5002 = vpop.f32.mrb[0].mxu0
      %v5003 = vpop.f32.mrb[0].mxu0
      %v5004 = vadd.f32 0.0, %v5003
      %v5005 = vpop.f32.mrb[0].mxu0
      %5006 = vmatprep.mubr.bf16.mxu0 0
      %5007 = vmatmul.mubr.bf16.gmra.mrb[0].mxu0 %v4869
      %v5008 = vpop.f32.mrb[0].mxu0
      %v5009 = vadd.f32 0.0, %v5008
      %v5010 = vpop.f32.mrb[0].mxu0
      %v5011 = vpop.f32.mrb[0].mxu0
      %v5012 = vadd.f32 0.0, %v5011
      %v5013 = vpop.f32.mrb[0].mxu0
      %5014 = vmatprep.mubr.bf16.mxu0 0
      %5015 = vmatmul.mubr.bf16.gmra.mrb[0].mxu0 %v4872
      %v5016 = vpop.f32.mrb[0].mxu0
      %v5017 = vadd.f32 0.0, %v5016
      %v5018 = vpop.f32.mrb[0].mxu0
      %v5019 = vpop.f32.mrb[0].mxu0
      %v5020 = vadd.f32 0.0, %v5019
      %v5021 = vpop.f32.mrb[0].mxu0
      %5022 = vmatprep.mubr.bf16.mxu0 0
      %5023 = vmatmul.mubr.bf16.gmra.mrb[0].mxu0 %v4875
      %v5024 = vpop.f32.mrb[0].mxu0
      %v5025 = vadd.f32 0.0, %v5024
      %v5026 = vpop.f32.mrb[0].mxu0
      %v5027 = vpop.f32.mrb[0].mxu0
      %v5028 = vadd.f32 0.0, %v5027
      %v5029 = vpop.f32.mrb[0].mxu0
      %5030 = vmatprep.mubr.bf16.mxu0 0
      %5031 = vmatmul.mubr.bf16.gmra.mrb[0].mxu0 %v4878
      %v5032 = vpop.f32.mrb[0].mxu0
      %v5033 = vadd.f32 0.0, %v5032
      %v5034 = vpop.f32.mrb[0].mxu0
      %v5035 = vpop.f32.mrb[0].mxu0
      %v5036 = vadd.f32 0.0, %v5035
      %v5037 = vpop.f32.mrb[0].mxu0
      %5038 = vmatprep.mubr.bf16.mxu0 0
      %5039 = vmatmul.mubr.bf16.gmra.mrb[0].mxu0 %v4881
      %v5040 = vpop.f32.mrb[0].mxu0
      %v5041 = vadd.f32 0.0, %v5040
      %v5042 = vpop.f32.mrb[0].mxu0
      %v5043 = vpop.f32.mrb[0].mxu0
      %v5044 = vadd.f32 0.0, %v5043
      %v5045 = vpop.f32.mrb[0].mxu0
      %5046 = vdwg.mxu0
      %v5047 = vadd.f32 %v4753, %v4921
      %v5048 = vadd.f32 %v4754, %v4924
      %v5049 = vadd.f32 %v4755, %v4929
      %v5050 = vadd.f32 %v4756, %v4932
      %v5051 = vadd.f32 %v4757, %v4937
      %v5052 = vadd.f32 %v4758, %v4940
      %v5053 = vadd.f32 %v4759, %v4945
      %v5054 = vadd.f32 %v4760, %v4948
      %v5055 = vadd.f32 %v4761, %v4953
      %v5056 = vadd.f32 %v4762, %v4956
      %v5057 = vadd.f32 %v4763, %v4961
      %v5058 = vadd.f32 %v4764, %v4964
      %v5059 = vadd.f32 %v4765, %v4969
      %v5060 = vadd.f32 %v4766, %v4972
      %v5061 = vadd.f32 %v4767, %v4977
      %v5062 = vadd.f32 %v4768, %v4980
      %v5063 = vadd.f32 %v4769, %v4985
      %v5064 = vadd.f32 %v4770, %v4988
      %v5065 = vadd.f32 %v4771, %v4993
      %v5066 = vadd.f32 %v4772, %v4996
      %v5067 = vadd.f32 %v4773, %v5001
      %v5068 = vadd.f32 %v4774, %v5004
      %v5069 = vadd.f32 %v4775, %v5009
      %v5070 = vadd.f32 %v4776, %v5012
      %v5071 = vadd.f32 %v4777, %v5017
      %v5072 = vadd.f32 %v4778, %v5020
      %v5073 = vadd.f32 %v4779, %v5025
      %v5074 = vadd.f32 %v4780, %v5028
      %v5075 = vadd.f32 %v4781, %v5033
      %v5076 = vadd.f32 %v4782, %v5036
      %v5077 = vadd.f32 %v4783, %v5041
      %v5078 = vadd.f32 %v4784, %v5044
      %v5079 = vld [vmem:[%s5] sm:$0x1]
      %v5081 = vlaneseq
      %v5082 = vshrl.u32 %v5081, 7
      %v5083 = vsub.s32 0, %v5082
      %v5084 = vrot.slane %v5079, %v5083
      %v5086 = vadd.f32 %v5047, %v5084
      %v5087 = vadd.f32 %v5048, %v5084
      %v5088 = vadd.f32 %v5049, %v5084
      %v5089 = vadd.f32 %v5050, %v5084
      %v5090 = vadd.f32 %v5051, %v5084
      %v5091 = vadd.f32 %v5052, %v5084
      %v5092 = vadd.f32 %v5053, %v5084
      %v5093 = vadd.f32 %v5054, %v5084
      %v5094 = vadd.f32 %v5055, %v5084
      %v5095 = vadd.f32 %v5056, %v5084
      %v5096 = vadd.f32 %v5057, %v5084
      %v5097 = vadd.f32 %v5058, %v5084
      %v5098 = vadd.f32 %v5059, %v5084
      %v5099 = vadd.f32 %v5060, %v5084
      %v5100 = vadd.f32 %v5061, %v5084
      %v5101 = vadd.f32 %v5062, %v5084
      %v5102 = vadd.f32 %v5063, %v5084
      %v5103 = vadd.f32 %v5064, %v5084
      %v5104 = vadd.f32 %v5065, %v5084
      %v5105 = vadd.f32 %v5066, %v5084
      %v5106 = vadd.f32 %v5067, %v5084
      %v5107 = vadd.f32 %v5068, %v5084
      %v5108 = vadd.f32 %v5069, %v5084
      %v5109 = vadd.f32 %v5070, %v5084
      %v5110 = vadd.f32 %v5071, %v5084
      %v5111 = vadd.f32 %v5072, %v5084
      %v5112 = vadd.f32 %v5073, %v5084
      %v5113 = vadd.f32 %v5074, %v5084
      %v5114 = vadd.f32 %v5075, %v5084
      %v5115 = vadd.f32 %v5076, %v5084
      %v5116 = vadd.f32 %v5077, %v5084
      %v5117 = vadd.f32 %v5078, %v5084
      %vm5118 = vcmp.gt.f32.partialorder %v5086, 0.0
      %vm5119 = vcmp.gt.f32.partialorder %v5087, 0.0
      %vm5120 = vcmp.gt.f32.partialorder %v5088, 0.0
      %vm5121 = vcmp.gt.f32.partialorder %v5089, 0.0
      %vm5122 = vcmp.gt.f32.partialorder %v5090, 0.0
      %vm5123 = vcmp.gt.f32.partialorder %v5091, 0.0
      %vm5124 = vcmp.gt.f32.partialorder %v5092, 0.0
      %vm5125 = vcmp.gt.f32.partialorder %v5093, 0.0
      %vm5126 = vcmp.gt.f32.partialorder %v5094, 0.0
      %vm5127 = vcmp.gt.f32.partialorder %v5095, 0.0
      %vm5128 = vcmp.gt.f32.partialorder %v5096, 0.0
      %vm5129 = vcmp.gt.f32.partialorder %v5097, 0.0
      %vm5130 = vcmp.gt.f32.partialorder %v5098, 0.0
      %vm5131 = vcmp.gt.f32.partialorder %v5099, 0.0
      %vm5132 = vcmp.gt.f32.partialorder %v5100, 0.0
      %vm5133 = vcmp.gt.f32.partialorder %v5101, 0.0
      %vm5134 = vcmp.gt.f32.partialorder %v5102, 0.0
      %vm5135 = vcmp.gt.f32.partialorder %v5103, 0.0
      %vm5136 = vcmp.gt.f32.partialorder %v5104, 0.0
      %vm5137 = vcmp.gt.f32.partialorder %v5105, 0.0
      %vm5138 = vcmp.gt.f32.partialorder %v5106, 0.0
      %vm5139 = vcmp.gt.f32.partialorder %v5107, 0.0
      %vm5140 = vcmp.gt.f32.partialorder %v5108, 0.0
      %vm5141 = vcmp.gt.f32.partialorder %v5109, 0.0
      %vm5142 = vcmp.gt.f32.partialorder %v5110, 0.0
      %vm5143 = vcmp.gt.f32.partialorder %v5111, 0.0
      %vm5144 = vcmp.gt.f32.partialorder %v5112, 0.0
      %vm5145 = vcmp.gt.f32.partialorder %v5113, 0.0
      %vm5146 = vcmp.gt.f32.partialorder %v5114, 0.0
      %vm5147 = vcmp.gt.f32.partialorder %v5115, 0.0
      %vm5148 = vcmp.gt.f32.partialorder %v5116, 0.0
      %vm5149 = vcmp.gt.f32.partialorder %v5117, 0.0
      %v5150 = vmul.f32 %v5086, 0.2
      %v5151 = vmul.f32 %v5087, 0.2
      %v5152 = vmul.f32 %v5088, 0.2
      %v5153 = vmul.f32 %v5089, 0.2
      %v5154 = vmul.f32 %v5090, 0.2
      %v5155 = vmul.f32 %v5091, 0.2
      %v5156 = vmul.f32 %v5092, 0.2
      %v5157 = vmul.f32 %v5093, 0.2
      %v5158 = vmul.f32 %v5094, 0.2
      %v5159 = vmul.f32 %v5095, 0.2
      %v5160 = vmul.f32 %v5096, 0.2
      %v5161 = vmul.f32 %v5097, 0.2
      %v5162 = vmul.f32 %v5098, 0.2
      %v5163 = vmul.f32 %v5099, 0.2
      %v5164 = vmul.f32 %v5100, 0.2
      %v5165 = vmul.f32 %v5101, 0.2
      %v5166 = vmul.f32 %v5102, 0.2
      %v5167 = vmul.f32 %v5103, 0.2
      %v5168 = vmul.f32 %v5104, 0.2
      %v5169 = vmul.f32 %v5105, 0.2
      %v5170 = vmul.f32 %v5106, 0.2
      %v5171 = vmul.f32 %v5107, 0.2
      %v5172 = vmul.f32 %v5108, 0.2
      %v5173 = vmul.f32 %v5109, 0.2
      %v5174 = vmul.f32 %v5110, 0.2
      %v5175 = vmul.f32 %v5111, 0.2
      %v5176 = vmul.f32 %v5112, 0.2
      %v5177 = vmul.f32 %v5113, 0.2
      %v5178 = vmul.f32 %v5114, 0.2
      %v5179 = vmul.f32 %v5115, 0.2
      %v5180 = vmul.f32 %v5116, 0.2
      %v5181 = vmul.f32 %v5117, 0.2
      %v5182 = vsel %vm5118, %v5086, %v5150
      %v5183 = vsel %vm5119, %v5087, %v5151
      %v5184 = vsel %vm5120, %v5088, %v5152
      %v5185 = vsel %vm5121, %v5089, %v5153
      %v5186 = vsel %vm5122, %v5090, %v5154
      %v5187 = vsel %vm5123, %v5091, %v5155
      %v5188 = vsel %vm5124, %v5092, %v5156
      %v5189 = vsel %vm5125, %v5093, %v5157
      %v5190 = vsel %vm5126, %v5094, %v5158
      %v5191 = vsel %vm5127, %v5095, %v5159
      %v5192 = vsel %vm5128, %v5096, %v5160
      %v5193 = vsel %vm5129, %v5097, %v5161
      %v5194 = vsel %vm5130, %v5098, %v5162
      %v5195 = vsel %vm5131, %v5099, %v5163
      %v5196 = vsel %vm5132, %v5100, %v5164
      %v5197 = vsel %vm5133, %v5101, %v5165
      %v5198 = vsel %vm5134, %v5102, %v5166
      %v5199 = vsel %vm5135, %v5103, %v5167
      %v5200 = vsel %vm5136, %v5104, %v5168
      %v5201 = vsel %vm5137, %v5105, %v5169
      %v5202 = vsel %vm5138, %v5106, %v5170
      %v5203 = vsel %vm5139, %v5107, %v5171
      %v5204 = vsel %vm5140, %v5108, %v5172
      %v5205 = vsel %vm5141, %v5109, %v5173
      %v5206 = vsel %vm5142, %v5110, %v5174
      %v5207 = vsel %vm5143, %v5111, %v5175
      %v5208 = vsel %vm5144, %v5112, %v5176
      %v5209 = vsel %vm5145, %v5113, %v5177
      %v5210 = vsel %vm5146, %v5114, %v5178
      %v5211 = vsel %vm5147, %v5115, %v5179
      %v5212 = vsel %vm5148, %v5116, %v5180
      %v5213 = vsel %vm5149, %v5117, %v5181
      %s5214 = scalar_lea.vmem [#allocation3], 24
      %5215 = vst.msk [vmem:[%s5214 + $0x1] sm:$0xff] %vm2271, %v5182
      %5216 = vst.msk [vmem:[%s5214 + $0x9] sm:$0xff] %vm2271, %v5183
      %5217 = vst.msk [vmem:[%s5214 + $0x19] sm:$0xff] %vm2271, %v5184
      %5218 = vst.msk [vmem:[%s5214 + $0x21] sm:$0xff] %vm2271, %v5185
      %5219 = vst.msk [vmem:[%s5214 + $0x31] sm:$0xff] %vm2271, %v5186
      %5220 = vst.msk [vmem:[%s5214 + $0x39] sm:$0xff] %vm2271, %v5187
      %5221 = vst.msk [vmem:[%s5214 + $0x49] sm:$0xff] %vm2271, %v5188
      %5222 = vst.msk [vmem:[%s5214 + $0x51] sm:$0xff] %vm2271, %v5189
      %5223 = vst.msk [vmem:[%s5214 + $0x61] sm:$0xff] %vm2271, %v5190
      %5224 = vst.msk [vmem:[%s5214 + $0x69] sm:$0xff] %vm2271, %v5191
      %5225 = vst.msk [vmem:[%s5214 + $0x79] sm:$0xff] %vm2271, %v5192
      %5226 = vst.msk [vmem:[%s5214 + $0x81] sm:$0xff] %vm2271, %v5193
      %5227 = vst.msk [vmem:[%s5214 + $0x91] sm:$0xff] %vm2271, %v5194
      %5228 = vst.msk [vmem:[%s5214 + $0x99] sm:$0xff] %vm2271, %v5195
      %5229 = vst.msk [vmem:[%s5214 + $0xa9] sm:$0xff] %vm2271, %v5196
      %5230 = vst.msk [vmem:[%s5214 + $0xb1] sm:$0xff] %vm2271, %v5197
      %5231 = vst.msk [vmem:[%s5214 + $0xc1] sm:$0xff] %vm2271, %v5198
      %5232 = vst.msk [vmem:[%s5214 + $0xc9] sm:$0xff] %vm2271, %v5199
      %5233 = vst.msk [vmem:[%s5214 + $0xd9] sm:$0xff] %vm2271, %v5200
      %5234 = vst.msk [vmem:[%s5214 + $0xe1] sm:$0xff] %vm2271, %v5201
      %5235 = vst.msk [vmem:[%s5214 + $0xf1] sm:$0xff] %vm2271, %v5202
      %5236 = vst.msk [vmem:[%s5214 + $0xf9] sm:$0xff] %vm2271, %v5203
      %5237 = vst.msk [vmem:[%s5214 + $0x109] sm:$0xff] %vm2271, %v5204
      %5238 = vst.msk [vmem:[%s5214 + $0x111] sm:$0xff] %vm2271, %v5205
      %5239 = vst.msk [vmem:[%s5214 + $0x121] sm:$0xff] %vm2271, %v5206
      %5240 = vst.msk [vmem:[%s5214 + $0x129] sm:$0xff] %vm2271, %v5207
      %5241 = vst.msk [vmem:[%s5214 + $0x139] sm:$0xff] %vm2271, %v5208
      %5242 = vst.msk [vmem:[%s5214 + $0x141] sm:$0xff] %vm2271, %v5209
      %5243 = vst.msk [vmem:[%s5214 + $0x151] sm:$0xff] %vm2271, %v5210
      %5244 = vst.msk [vmem:[%s5214 + $0x159] sm:$0xff] %vm2271, %v5211
      %5245 = vst.msk [vmem:[%s5214 + $0x169] sm:$0xff] %vm2271, %v5212
      %5246 = vst.msk [vmem:[%s5214 + $0x171] sm:$0xff] %vm2271, %v5213
      %v5247 = vld [vmem:[#allocation3] sm:$0xff]
      %v5248 = vld [vmem:[#allocation3 + $0x8] sm:$0xff]
      %v5249 = vld [vmem:[#allocation3 + $0x18] sm:$0xff]
      %v5250 = vld [vmem:[#allocation3 + $0x20] sm:$0xff]
      %v5251 = vld [vmem:[#allocation3 + $0x30] sm:$0xff]
      %v5252 = vld [vmem:[#allocation3 + $0x38] sm:$0xff]
      %v5253 = vld [vmem:[#allocation3 + $0x48] sm:$0xff]
      %v5254 = vld [vmem:[#allocation3 + $0x50] sm:$0xff]
      %v5255 = vld [vmem:[#allocation3 + $0x60] sm:$0xff]
      %v5256 = vld [vmem:[#allocation3 + $0x68] sm:$0xff]
      %v5257 = vld [vmem:[#allocation3 + $0x78] sm:$0xff]
      %v5258 = vld [vmem:[#allocation3 + $0x80] sm:$0xff]
      %v5259 = vld [vmem:[#allocation3 + $0x90] sm:$0xff]
      %v5260 = vld [vmem:[#allocation3 + $0x98] sm:$0xff]
      %v5261 = vld [vmem:[#allocation3 + $0xa8] sm:$0xff]
      %v5262 = vld [vmem:[#allocation3 + $0xb0] sm:$0xff]
      %v5263 = vld [vmem:[#allocation3 + $0xc0] sm:$0xff]
      %v5264 = vld [vmem:[#allocation3 + $0xc8] sm:$0xff]
      %v5265 = vld [vmem:[#allocation3 + $0xd8] sm:$0xff]
      %v5266 = vld [vmem:[#allocation3 + $0xe0] sm:$0xff]
      %v5267 = vld [vmem:[#allocation3 + $0xf0] sm:$0xff]
      %v5268 = vld [vmem:[#allocation3 + $0xf8] sm:$0xff]
      %v5269 = vld [vmem:[#allocation3 + $0x108] sm:$0xff]
      %v5270 = vld [vmem:[#allocation3 + $0x110] sm:$0xff]
      %v5271 = vld [vmem:[#allocation3 + $0x120] sm:$0xff]
      %v5272 = vld [vmem:[#allocation3 + $0x128] sm:$0xff]
      %v5273 = vld [vmem:[#allocation3 + $0x138] sm:$0xff]
      %v5274 = vld [vmem:[#allocation3 + $0x140] sm:$0xff]
      %v5275 = vld [vmem:[#allocation3 + $0x150] sm:$0xff]
      %v5276 = vld [vmem:[#allocation3 + $0x158] sm:$0xff]
      %v5277 = vld [vmem:[#allocation3 + $0x168] sm:$0xff]
      %v5278 = vld [vmem:[#allocation3 + $0x170] sm:$0xff]
      %v5279 = vpack.c.bf16 %v5248, %v5247
      %v5280 = vpack.c.bf16 %v5250, %v5249
      %v5281 = vpack.c.bf16 %v5252, %v5251
      %v5282 = vpack.c.bf16 %v5254, %v5253
      %v5283 = vpack.c.bf16 %v5256, %v5255
      %v5284 = vpack.c.bf16 %v5258, %v5257
      %v5285 = vpack.c.bf16 %v5260, %v5259
      %v5286 = vpack.c.bf16 %v5262, %v5261
      %v5287 = vpack.c.bf16 %v5264, %v5263
      %v5288 = vpack.c.bf16 %v5266, %v5265
      %v5289 = vpack.c.bf16 %v5268, %v5267
      %v5290 = vpack.c.bf16 %v5270, %v5269
      %v5291 = vpack.c.bf16 %v5272, %v5271
      %v5292 = vpack.c.bf16 %v5274, %v5273
      %v5293 = vpack.c.bf16 %v5276, %v5275
      %v5294 = vpack.c.bf16 %v5278, %v5277
      %v5295 = vld [vmem:[%s6] sm:$0x3]
      %v5296 = vld [vmem:[#allocation3 + $0x1] sm:$0xff]
      %v5297 = vld [vmem:[#allocation3 + $0x9] sm:$0xff]
      %v5298 = vld [vmem:[#allocation3 + $0x19] sm:$0xff]
      %v5299 = vld [vmem:[#allocation3 + $0x21] sm:$0xff]
      %v5300 = vld [vmem:[#allocation3 + $0x31] sm:$0xff]
      %v5301 = vld [vmem:[#allocation3 + $0x39] sm:$0xff]
      %v5302 = vld [vmem:[#allocation3 + $0x49] sm:$0xff]
      %v5303 = vld [vmem:[#allocation3 + $0x51] sm:$0xff]
      %v5304 = vld [vmem:[#allocation3 + $0x61] sm:$0xff]
      %v5305 = vld [vmem:[#allocation3 + $0x69] sm:$0xff]
      %v5306 = vld [vmem:[#allocation3 + $0x79] sm:$0xff]
      %v5307 = vld [vmem:[#allocation3 + $0x81] sm:$0xff]
      %v5308 = vld [vmem:[#allocation3 + $0x91] sm:$0xff]
      %v5309 = vld [vmem:[#allocation3 + $0x99] sm:$0xff]
      %v5310 = vld [vmem:[#allocation3 + $0xa9] sm:$0xff]
      %v5311 = vld [vmem:[#allocation3 + $0xb1] sm:$0xff]
      %v5312 = vld [vmem:[#allocation3 + $0xc1] sm:$0xff]
      %v5313 = vld [vmem:[#allocation3 + $0xc9] sm:$0xff]
      %v5314 = vld [vmem:[#allocation3 + $0xd9] sm:$0xff]
      %v5315 = vld [vmem:[#allocation3 + $0xe1] sm:$0xff]
      %v5316 = vld [vmem:[#allocation3 + $0xf1] sm:$0xff]
      %v5317 = vld [vmem:[#allocation3 + $0xf9] sm:$0xff]
      %v5318 = vld [vmem:[#allocation3 + $0x109] sm:$0xff]
      %v5319 = vld [vmem:[#allocation3 + $0x111] sm:$0xff]
      %v5320 = vld [vmem:[#allocation3 + $0x121] sm:$0xff]
      %v5321 = vld [vmem:[#allocation3 + $0x129] sm:$0xff]
      %v5322 = vld [vmem:[#allocation3 + $0x139] sm:$0xff]
      %v5323 = vld [vmem:[#allocation3 + $0x141] sm:$0xff]
      %v5324 = vld [vmem:[#allocation3 + $0x151] sm:$0xff]
      %v5325 = vld [vmem:[#allocation3 + $0x159] sm:$0xff]
      %v5326 = vld [vmem:[#allocation3 + $0x169] sm:$0xff]
      %v5327 = vld [vmem:[#allocation3 + $0x171] sm:$0xff]
      %v5328 = vpack.c.bf16 %v5297, %v5296
      %v5329 = vpack.c.bf16 %v5299, %v5298
      %v5330 = vpack.c.bf16 %v5301, %v5300
      %v5331 = vpack.c.bf16 %v5303, %v5302
      %v5332 = vpack.c.bf16 %v5305, %v5304
      %v5333 = vpack.c.bf16 %v5307, %v5306
      %v5334 = vpack.c.bf16 %v5309, %v5308
      %v5335 = vpack.c.bf16 %v5311, %v5310
      %v5336 = vpack.c.bf16 %v5313, %v5312
      %v5337 = vpack.c.bf16 %v5315, %v5314
      %v5338 = vpack.c.bf16 %v5317, %v5316
      %v5339 = vpack.c.bf16 %v5319, %v5318
      %v5340 = vpack.c.bf16 %v5321, %v5320
      %v5341 = vpack.c.bf16 %v5323, %v5322
      %v5342 = vpack.c.bf16 %v5325, %v5324
      %v5343 = vpack.c.bf16 %v5327, %v5326
      %s5344 = scalar_lea.vmem %s6, 2
      %v5345 = vld [vmem:[%s5344] sm:$0x3]
      %v5347 = vsel %vm2271, %v5328, 0
      %v5350 = vsel %vm2271, %v5329, 0
      %v5353 = vsel %vm2271, %v5330, 0
      %v5356 = vsel %vm2271, %v5331, 0
      %v5359 = vsel %vm2271, %v5332, 0
      %v5362 = vsel %vm2271, %v5333, 0
      %v5365 = vsel %vm2271, %v5334, 0
      %v5368 = vsel %vm2271, %v5335, 0
      %v5371 = vsel %vm2271, %v5336, 0
      %v5374 = vsel %vm2271, %v5337, 0
      %v5377 = vsel %vm2271, %v5338, 0
      %v5380 = vsel %vm2271, %v5339, 0
      %v5383 = vsel %vm2271, %v5340, 0
      %v5386 = vsel %vm2271, %v5341, 0
      %v5389 = vsel %vm2271, %v5342, 0
      %v5392 = vsel %vm2271, %v5343, 0
      %vm5394 = vcmask 1041408
      %v5396 = vsel %vm5394, %v5345, 0
      %5398 = vmatprep.subr.bf16.mxu0 0
      %5399 = vmatpush1.bf16.msra.mxu0 %v5396
      %5400 = vmatprep.subr.bf16.mxu0 0
      %5401 = vmatpush1.bf16.msra.mxu0 0
      %5402 = vmatprep.subr.bf16.mxu0 0
      %5403 = vmatpush1.bf16.msra.mxu0 0
      %5404 = vmatprep.subr.bf16.mxu0 0
      %5405 = vmatpush1.bf16.msra.mxu0 0
      %5406 = vmatprep.subr.bf16.mxu0 0
      %5407 = vmatpush1.bf16.msra.mxu0 0
      %5408 = vmatprep.subr.bf16.mxu0 0
      %5409 = vmatpush1.bf16.msra.mxu0 0
      %5410 = vmatprep.subr.bf16.mxu0 0
      %5411 = vmatpush1.bf16.msra.mxu0 0
      %5412 = vmatprep.subr.bf16.mxu0 0
      %5413 = vmatpush1.bf16.msra.mxu0 0
      %5414 = vmatprep.subr.bf16.mxu0 0
      %5415 = vmatpush1.bf16.msra.mxu0 0
      %5416 = vmatprep.subr.bf16.mxu0 0
      %5417 = vmatpush1.bf16.msra.mxu0 0
      %5418 = vmatprep.subr.bf16.mxu0 0
      %5419 = vmatpush1.bf16.msra.mxu0 0
      %5420 = vmatprep.subr.bf16.mxu0 0
      %5421 = vmatpush1.bf16.msra.mxu0 0
      %5422 = vmatprep.subr.bf16.mxu0 0
      %5423 = vmatpush1.bf16.msra.mxu0 0
      %5424 = vmatprep.subr.bf16.mxu0 0
      %5425 = vmatpush1.bf16.msra.mxu0 0
      %5426 = vmatprep.subr.bf16.mxu0 0
      %5427 = vmatpush1.bf16.msra.mxu0 0
      %5428 = vmatprep.subr.bf16.mxu0 0
      %5429 = vmatpush1.bf16.msra.mxu0 0
      %5430 = vmatprep.mubr.bf16.mxu0 0
      %5431 = vmatmul.mubr.bf16.gmra.mrb[0].mxu0 %v5347
      %v5432 = vpop.f32.mrb[0].mxu0
      %v5433 = vadd.f32 0.0, %v5432
      %v5434 = vpop.f32.mrb[0].mxu0
      %v5435 = vpop.f32.mrb[0].mxu0
      %v5436 = vadd.f32 0.0, %v5435
      %v5437 = vpop.f32.mrb[0].mxu0
      %5438 = vmatprep.mubr.bf16.mxu0 0
      %5439 = vmatmul.mubr.bf16.gmra.mrb[0].mxu0 %v5350
      %v5440 = vpop.f32.mrb[0].mxu0
      %v5441 = vadd.f32 0.0, %v5440
      %v5442 = vpop.f32.mrb[0].mxu0
      %v5443 = vpop.f32.mrb[0].mxu0
      %v5444 = vadd.f32 0.0, %v5443
      %v5445 = vpop.f32.mrb[0].mxu0
      %5446 = vmatprep.mubr.bf16.mxu0 0
      %5447 = vmatmul.mubr.bf16.gmra.mrb[0].mxu0 %v5353
      %v5448 = vpop.f32.mrb[0].mxu0
      %v5449 = vadd.f32 0.0, %v5448
      %v5450 = vpop.f32.mrb[0].mxu0
      %v5451 = vpop.f32.mrb[0].mxu0
      %v5452 = vadd.f32 0.0, %v5451
      %v5453 = vpop.f32.mrb[0].mxu0
      %5454 = vmatprep.mubr.bf16.mxu0 0
      %5455 = vmatmul.mubr.bf16.gmra.mrb[0].mxu0 %v5356
      %v5456 = vpop.f32.mrb[0].mxu0
      %v5457 = vadd.f32 0.0, %v5456
      %v5458 = vpop.f32.mrb[0].mxu0
      %v5459 = vpop.f32.mrb[0].mxu0
      %v5460 = vadd.f32 0.0, %v5459
      %v5461 = vpop.f32.mrb[0].mxu0
      %5462 = vmatprep.mubr.bf16.mxu0 0
      %5463 = vmatmul.mubr.bf16.gmra.mrb[0].mxu0 %v5359
      %v5464 = vpop.f32.mrb[0].mxu0
      %v5465 = vadd.f32 0.0, %v5464
      %v5466 = vpop.f32.mrb[0].mxu0
      %v5467 = vpop.f32.mrb[0].mxu0
      %v5468 = vadd.f32 0.0, %v5467
      %v5469 = vpop.f32.mrb[0].mxu0
      %5470 = vmatprep.mubr.bf16.mxu0 0
      %5471 = vmatmul.mubr.bf16.gmra.mrb[0].mxu0 %v5362
      %v5472 = vpop.f32.mrb[0].mxu0
      %v5473 = vadd.f32 0.0, %v5472
      %v5474 = vpop.f32.mrb[0].mxu0
      %v5475 = vpop.f32.mrb[0].mxu0
      %v5476 = vadd.f32 0.0, %v5475
      %v5477 = vpop.f32.mrb[0].mxu0
      %5478 = vmatprep.mubr.bf16.mxu0 0
      %5479 = vmatmul.mubr.bf16.gmra.mrb[0].mxu0 %v5365
      %v5480 = vpop.f32.mrb[0].mxu0
      %v5481 = vadd.f32 0.0, %v5480
      %v5482 = vpop.f32.mrb[0].mxu0
      %v5483 = vpop.f32.mrb[0].mxu0
      %v5484 = vadd.f32 0.0, %v5483
      %v5485 = vpop.f32.mrb[0].mxu0
      %5486 = vmatprep.mubr.bf16.mxu0 0
      %5487 = vmatmul.mubr.bf16.gmra.mrb[0].mxu0 %v5368
      %v5488 = vpop.f32.mrb[0].mxu0
      %v5489 = vadd.f32 0.0, %v5488
      %v5490 = vpop.f32.mrb[0].mxu0
      %v5491 = vpop.f32.mrb[0].mxu0
      %v5492 = vadd.f32 0.0, %v5491
      %v5493 = vpop.f32.mrb[0].mxu0
      %5494 = vmatprep.mubr.bf16.mxu0 0
      %5495 = vmatmul.mubr.bf16.gmra.mrb[0].mxu0 %v5371
      %v5496 = vpop.f32.mrb[0].mxu0
      %v5497 = vadd.f32 0.0, %v5496
      %v5498 = vpop.f32.mrb[0].mxu0
      %v5499 = vpop.f32.mrb[0].mxu0
      %v5500 = vadd.f32 0.0, %v5499
      %v5501 = vpop.f32.mrb[0].mxu0
      %5502 = vmatprep.mubr.bf16.mxu0 0
      %5503 = vmatmul.mubr.bf16.gmra.mrb[0].mxu0 %v5374
      %v5504 = vpop.f32.mrb[0].mxu0
      %v5505 = vadd.f32 0.0, %v5504
      %v5506 = vpop.f32.mrb[0].mxu0
      %v5507 = vpop.f32.mrb[0].mxu0
      %v5508 = vadd.f32 0.0, %v5507
      %v5509 = vpop.f32.mrb[0].mxu0
      %5510 = vmatprep.mubr.bf16.mxu0 0
      %5511 = vmatmul.mubr.bf16.gmra.mrb[0].mxu0 %v5377
      %v5512 = vpop.f32.mrb[0].mxu0
      %v5513 = vadd.f32 0.0, %v5512
      %v5514 = vpop.f32.mrb[0].mxu0
      %v5515 = vpop.f32.mrb[0].mxu0
      %v5516 = vadd.f32 0.0, %v5515
      %v5517 = vpop.f32.mrb[0].mxu0
      %5518 = vmatprep.mubr.bf16.mxu0 0
      %5519 = vmatmul.mubr.bf16.gmra.mrb[0].mxu0 %v5380
      %v5520 = vpop.f32.mrb[0].mxu0
      %v5521 = vadd.f32 0.0, %v5520
      %v5522 = vpop.f32.mrb[0].mxu0
      %v5523 = vpop.f32.mrb[0].mxu0
      %v5524 = vadd.f32 0.0, %v5523
      %v5525 = vpop.f32.mrb[0].mxu0
      %5526 = vmatprep.mubr.bf16.mxu0 0
      %5527 = vmatmul.mubr.bf16.gmra.mrb[0].mxu0 %v5383
      %v5528 = vpop.f32.mrb[0].mxu0
      %v5529 = vadd.f32 0.0, %v5528
      %v5530 = vpop.f32.mrb[0].mxu0
      %v5531 = vpop.f32.mrb[0].mxu0
      %v5532 = vadd.f32 0.0, %v5531
      %v5533 = vpop.f32.mrb[0].mxu0
      %5534 = vmatprep.mubr.bf16.mxu0 0
      %5535 = vmatmul.mubr.bf16.gmra.mrb[0].mxu0 %v5386
      %v5536 = vpop.f32.mrb[0].mxu0
      %v5537 = vadd.f32 0.0, %v5536
      %v5538 = vpop.f32.mrb[0].mxu0
      %v5539 = vpop.f32.mrb[0].mxu0
      %v5540 = vadd.f32 0.0, %v5539
      %v5541 = vpop.f32.mrb[0].mxu0
      %5542 = vmatprep.mubr.bf16.mxu0 0
      %5543 = vmatmul.mubr.bf16.gmra.mrb[0].mxu0 %v5389
      %v5544 = vpop.f32.mrb[0].mxu0
      %v5545 = vadd.f32 0.0, %v5544
      %v5546 = vpop.f32.mrb[0].mxu0
      %v5547 = vpop.f32.mrb[0].mxu0
      %v5548 = vadd.f32 0.0, %v5547
      %v5549 = vpop.f32.mrb[0].mxu0
      %5550 = vmatprep.mubr.bf16.mxu0 0
      %5551 = vmatmul.mubr.bf16.gmra.mrb[0].mxu0 %v5392
      %v5552 = vpop.f32.mrb[0].mxu0
      %v5553 = vadd.f32 0.0, %v5552
      %v5554 = vpop.f32.mrb[0].mxu0
      %v5555 = vpop.f32.mrb[0].mxu0
      %v5556 = vadd.f32 0.0, %v5555
      %v5557 = vpop.f32.mrb[0].mxu0
      %5558 = vdwg.mxu0
      %v5560 = vsel %vm2271, %v5279, 0
      %v5563 = vsel %vm2271, %v5280, 0
      %v5566 = vsel %vm2271, %v5281, 0
      %v5569 = vsel %vm2271, %v5282, 0
      %v5572 = vsel %vm2271, %v5283, 0
      %v5575 = vsel %vm2271, %v5284, 0
      %v5578 = vsel %vm2271, %v5285, 0
      %v5581 = vsel %vm2271, %v5286, 0
      %v5584 = vsel %vm2271, %v5287, 0
      %v5587 = vsel %vm2271, %v5288, 0
      %v5590 = vsel %vm2271, %v5289, 0
      %v5593 = vsel %vm2271, %v5290, 0
      %v5596 = vsel %vm2271, %v5291, 0
      %v5599 = vsel %vm2271, %v5292, 0
      %v5602 = vsel %vm2271, %v5293, 0
      %v5605 = vsel %vm2271, %v5294, 0
      %v5608 = vsel %vm5394, %v5295, 0
      %5610 = vmatprep.subr.bf16.mxu0 0
      %5611 = vmatpush1.bf16.msra.mxu0 %v5608
      %5612 = vmatprep.subr.bf16.mxu0 0
      %5613 = vmatpush1.bf16.msra.mxu0 0
      %5614 = vmatprep.subr.bf16.mxu0 0
      %5615 = vmatpush1.bf16.msra.mxu0 0
      %5616 = vmatprep.subr.bf16.mxu0 0
      %5617 = vmatpush1.bf16.msra.mxu0 0
      %5618 = vmatprep.subr.bf16.mxu0 0
      %5619 = vmatpush1.bf16.msra.mxu0 0
      %5620 = vmatprep.subr.bf16.mxu0 0
      %5621 = vmatpush1.bf16.msra.mxu0 0
      %5622 = vmatprep.subr.bf16.mxu0 0
      %5623 = vmatpush1.bf16.msra.mxu0 0
      %5624 = vmatprep.subr.bf16.mxu0 0
      %5625 = vmatpush1.bf16.msra.mxu0 0
      %5626 = vmatprep.subr.bf16.mxu0 0
      %5627 = vmatpush1.bf16.msra.mxu0 0
      %5628 = vmatprep.subr.bf16.mxu0 0
      %5629 = vmatpush1.bf16.msra.mxu0 0
      %5630 = vmatprep.subr.bf16.mxu0 0
      %5631 = vmatpush1.bf16.msra.mxu0 0
      %5632 = vmatprep.subr.bf16.mxu0 0
      %5633 = vmatpush1.bf16.msra.mxu0 0
      %5634 = vmatprep.subr.bf16.mxu0 0
      %5635 = vmatpush1.bf16.msra.mxu0 0
      %5636 = vmatprep.subr.bf16.mxu0 0
      %5637 = vmatpush1.bf16.msra.mxu0 0
      %5638 = vmatprep.subr.bf16.mxu0 0
      %5639 = vmatpush1.bf16.msra.mxu0 0
      %5640 = vmatprep.subr.bf16.mxu0 0
      %5641 = vmatpush1.bf16.msra.mxu0 0
      %5642 = vmatprep.mubr.bf16.mxu0 0
      %5643 = vmatmul.mubr.bf16.gmra.mrb[0].mxu0 %v5560
      %v5644 = vpop.f32.mrb[0].mxu0
      %v5645 = vadd.f32 %v5433, %v5644
      %v5646 = vpop.f32.mrb[0].mxu0
      %v5647 = vpop.f32.mrb[0].mxu0
      %v5648 = vadd.f32 %v5436, %v5647
      %v5649 = vpop.f32.mrb[0].mxu0
      %5650 = vmatprep.mubr.bf16.mxu0 0
      %5651 = vmatmul.mubr.bf16.gmra.mrb[0].mxu0 %v5563
      %v5652 = vpop.f32.mrb[0].mxu0
      %v5653 = vadd.f32 %v5441, %v5652
      %v5654 = vpop.f32.mrb[0].mxu0
      %v5655 = vpop.f32.mrb[0].mxu0
      %v5656 = vadd.f32 %v5444, %v5655
      %v5657 = vpop.f32.mrb[0].mxu0
      %5658 = vmatprep.mubr.bf16.mxu0 0
      %5659 = vmatmul.mubr.bf16.gmra.mrb[0].mxu0 %v5566
      %v5660 = vpop.f32.mrb[0].mxu0
      %v5661 = vadd.f32 %v5449, %v5660
      %v5662 = vpop.f32.mrb[0].mxu0
      %v5663 = vpop.f32.mrb[0].mxu0
      %v5664 = vadd.f32 %v5452, %v5663
      %v5665 = vpop.f32.mrb[0].mxu0
      %5666 = vmatprep.mubr.bf16.mxu0 0
      %5667 = vmatmul.mubr.bf16.gmra.mrb[0].mxu0 %v5569
      %v5668 = vpop.f32.mrb[0].mxu0
      %v5669 = vadd.f32 %v5457, %v5668
      %v5670 = vpop.f32.mrb[0].mxu0
      %v5671 = vpop.f32.mrb[0].mxu0
      %v5672 = vadd.f32 %v5460, %v5671
      %v5673 = vpop.f32.mrb[0].mxu0
      %5674 = vmatprep.mubr.bf16.mxu0 0
      %5675 = vmatmul.mubr.bf16.gmra.mrb[0].mxu0 %v5572
      %v5676 = vpop.f32.mrb[0].mxu0
      %v5677 = vadd.f32 %v5465, %v5676
      %v5678 = vpop.f32.mrb[0].mxu0
      %v5679 = vpop.f32.mrb[0].mxu0
      %v5680 = vadd.f32 %v5468, %v5679
      %v5681 = vpop.f32.mrb[0].mxu0
      %5682 = vmatprep.mubr.bf16.mxu0 0
      %5683 = vmatmul.mubr.bf16.gmra.mrb[0].mxu0 %v5575
      %v5684 = vpop.f32.mrb[0].mxu0
      %v5685 = vadd.f32 %v5473, %v5684
      %v5686 = vpop.f32.mrb[0].mxu0
      %v5687 = vpop.f32.mrb[0].mxu0
      %v5688 = vadd.f32 %v5476, %v5687
      %v5689 = vpop.f32.mrb[0].mxu0
      %5690 = vmatprep.mubr.bf16.mxu0 0
      %5691 = vmatmul.mubr.bf16.gmra.mrb[0].mxu0 %v5578
      %v5692 = vpop.f32.mrb[0].mxu0
      %v5693 = vadd.f32 %v5481, %v5692
      %v5694 = vpop.f32.mrb[0].mxu0
      %v5695 = vpop.f32.mrb[0].mxu0
      %v5696 = vadd.f32 %v5484, %v5695
      %v5697 = vpop.f32.mrb[0].mxu0
      %5698 = vmatprep.mubr.bf16.mxu0 0
      %5699 = vmatmul.mubr.bf16.gmra.mrb[0].mxu0 %v5581
      %v5700 = vpop.f32.mrb[0].mxu0
      %v5701 = vadd.f32 %v5489, %v5700
      %v5702 = vpop.f32.mrb[0].mxu0
      %v5703 = vpop.f32.mrb[0].mxu0
      %v5704 = vadd.f32 %v5492, %v5703
      %v5705 = vpop.f32.mrb[0].mxu0
      %5706 = vmatprep.mubr.bf16.mxu0 0
      %5707 = vmatmul.mubr.bf16.gmra.mrb[0].mxu0 %v5584
      %v5708 = vpop.f32.mrb[0].mxu0
      %v5709 = vadd.f32 %v5497, %v5708
      %v5710 = vpop.f32.mrb[0].mxu0
      %v5711 = vpop.f32.mrb[0].mxu0
      %v5712 = vadd.f32 %v5500, %v5711
      %v5713 = vpop.f32.mrb[0].mxu0
      %5714 = vmatprep.mubr.bf16.mxu0 0
      %5715 = vmatmul.mubr.bf16.gmra.mrb[0].mxu0 %v5587
      %v5716 = vpop.f32.mrb[0].mxu0
      %v5717 = vadd.f32 %v5505, %v5716
      %v5718 = vpop.f32.mrb[0].mxu0
      %v5719 = vpop.f32.mrb[0].mxu0
      %v5720 = vadd.f32 %v5508, %v5719
      %v5721 = vpop.f32.mrb[0].mxu0
      %5722 = vmatprep.mubr.bf16.mxu0 0
      %5723 = vmatmul.mubr.bf16.gmra.mrb[0].mxu0 %v5590
      %v5724 = vpop.f32.mrb[0].mxu0
      %v5725 = vadd.f32 %v5513, %v5724
      %v5726 = vpop.f32.mrb[0].mxu0
      %v5727 = vpop.f32.mrb[0].mxu0
      %v5728 = vadd.f32 %v5516, %v5727
      %v5729 = vpop.f32.mrb[0].mxu0
      %5730 = vmatprep.mubr.bf16.mxu0 0
      %5731 = vmatmul.mubr.bf16.gmra.mrb[0].mxu0 %v5593
      %v5732 = vpop.f32.mrb[0].mxu0
      %v5733 = vadd.f32 %v5521, %v5732
      %v5734 = vpop.f32.mrb[0].mxu0
      %v5735 = vpop.f32.mrb[0].mxu0
      %v5736 = vadd.f32 %v5524, %v5735
      %v5737 = vpop.f32.mrb[0].mxu0
      %5738 = vmatprep.mubr.bf16.mxu0 0
      %5739 = vmatmul.mubr.bf16.gmra.mrb[0].mxu0 %v5596
      %v5740 = vpop.f32.mrb[0].mxu0
      %v5741 = vadd.f32 %v5529, %v5740
      %v5742 = vpop.f32.mrb[0].mxu0
      %v5743 = vpop.f32.mrb[0].mxu0
      %v5744 = vadd.f32 %v5532, %v5743
      %v5745 = vpop.f32.mrb[0].mxu0
      %5746 = vmatprep.mubr.bf16.mxu0 0
      %5747 = vmatmul.mubr.bf16.gmra.mrb[0].mxu0 %v5599
      %v5748 = vpop.f32.mrb[0].mxu0
      %v5749 = vadd.f32 %v5537, %v5748
      %v5750 = vpop.f32.mrb[0].mxu0
      %v5751 = vpop.f32.mrb[0].mxu0
      %v5752 = vadd.f32 %v5540, %v5751
      %v5753 = vpop.f32.mrb[0].mxu0
      %5754 = vmatprep.mubr.bf16.mxu0 0
      %5755 = vmatmul.mubr.bf16.gmra.mrb[0].mxu0 %v5602
      %v5756 = vpop.f32.mrb[0].mxu0
      %v5757 = vadd.f32 %v5545, %v5756
      %v5758 = vpop.f32.mrb[0].mxu0
      %v5759 = vpop.f32.mrb[0].mxu0
      %v5760 = vadd.f32 %v5548, %v5759
      %v5761 = vpop.f32.mrb[0].mxu0
      %5762 = vmatprep.mubr.bf16.mxu0 0
      %5763 = vmatmul.mubr.bf16.gmra.mrb[0].mxu0 %v5605
      %v5764 = vpop.f32.mrb[0].mxu0
      %v5765 = vadd.f32 %v5553, %v5764
      %v5766 = vpop.f32.mrb[0].mxu0
      %v5767 = vpop.f32.mrb[0].mxu0
      %v5768 = vadd.f32 %v5556, %v5767
      %v5769 = vpop.f32.mrb[0].mxu0
      %5770 = vdwg.mxu0
      %v5771 = vld [vmem:[#allocation3 + $0x2] sm:$0xff]
      %v5772 = vld [vmem:[#allocation3 + $0xa] sm:$0xff]
      %v5773 = vld [vmem:[#allocation3 + $0x1a] sm:$0xff]
      %v5774 = vld [vmem:[#allocation3 + $0x22] sm:$0xff]
      %v5775 = vld [vmem:[#allocation3 + $0x32] sm:$0xff]
      %v5776 = vld [vmem:[#allocation3 + $0x3a] sm:$0xff]
      %v5777 = vld [vmem:[#allocation3 + $0x4a] sm:$0xff]
      %v5778 = vld [vmem:[#allocation3 + $0x52] sm:$0xff]
      %v5779 = vld [vmem:[#allocation3 + $0x62] sm:$0xff]
      %v5780 = vld [vmem:[#allocation3 + $0x6a] sm:$0xff]
      %v5781 = vld [vmem:[#allocation3 + $0x7a] sm:$0xff]
      %v5782 = vld [vmem:[#allocation3 + $0x82] sm:$0xff]
      %v5783 = vld [vmem:[#allocation3 + $0x92] sm:$0xff]
      %v5784 = vld [vmem:[#allocation3 + $0x9a] sm:$0xff]
      %v5785 = vld [vmem:[#allocation3 + $0xaa] sm:$0xff]
      %v5786 = vld [vmem:[#allocation3 + $0xb2] sm:$0xff]
      %v5787 = vld [vmem:[#allocation3 + $0xc2] sm:$0xff]
      %v5788 = vld [vmem:[#allocation3 + $0xca] sm:$0xff]
      %v5789 = vld [vmem:[#allocation3 + $0xda] sm:$0xff]
      %v5790 = vld [vmem:[#allocation3 + $0xe2] sm:$0xff]
      %v5791 = vld [vmem:[#allocation3 + $0xf2] sm:$0xff]
      %v5792 = vld [vmem:[#allocation3 + $0xfa] sm:$0xff]
      %v5793 = vld [vmem:[#allocation3 + $0x10a] sm:$0xff]
      %v5794 = vld [vmem:[#allocation3 + $0x112] sm:$0xff]
      %v5795 = vld [vmem:[#allocation3 + $0x122] sm:$0xff]
      %v5796 = vld [vmem:[#allocation3 + $0x12a] sm:$0xff]
      %v5797 = vld [vmem:[#allocation3 + $0x13a] sm:$0xff]
      %v5798 = vld [vmem:[#allocation3 + $0x142] sm:$0xff]
      %v5799 = vld [vmem:[#allocation3 + $0x152] sm:$0xff]
      %v5800 = vld [vmem:[#allocation3 + $0x15a] sm:$0xff]
      %v5801 = vld [vmem:[#allocation3 + $0x16a] sm:$0xff]
      %v5802 = vld [vmem:[#allocation3 + $0x172] sm:$0xff]
      %v5803 = vpack.c.bf16 %v5772, %v5771
      %v5804 = vpack.c.bf16 %v5774, %v5773
      %v5805 = vpack.c.bf16 %v5776, %v5775
      %v5806 = vpack.c.bf16 %v5778, %v5777
      %v5807 = vpack.c.bf16 %v5780, %v5779
      %v5808 = vpack.c.bf16 %v5782, %v5781
      %v5809 = vpack.c.bf16 %v5784, %v5783
      %v5810 = vpack.c.bf16 %v5786, %v5785
      %v5811 = vpack.c.bf16 %v5788, %v5787
      %v5812 = vpack.c.bf16 %v5790, %v5789
      %v5813 = vpack.c.bf16 %v5792, %v5791
      %v5814 = vpack.c.bf16 %v5794, %v5793
      %v5815 = vpack.c.bf16 %v5796, %v5795
      %v5816 = vpack.c.bf16 %v5798, %v5797
      %v5817 = vpack.c.bf16 %v5800, %v5799
      %v5818 = vpack.c.bf16 %v5802, %v5801
      %s5819 = scalar_lea.vmem %s6, 4
      %v5820 = vld [vmem:[%s5819] sm:$0x3]
      %v5822 = vsel %vm2271, %v5803, 0
      %v5825 = vsel %vm2271, %v5804, 0
      %v5828 = vsel %vm2271, %v5805, 0
      %v5831 = vsel %vm2271, %v5806, 0
      %v5834 = vsel %vm2271, %v5807, 0
      %v5837 = vsel %vm2271, %v5808, 0
      %v5840 = vsel %vm2271, %v5809, 0
      %v5843 = vsel %vm2271, %v5810, 0
      %v5846 = vsel %vm2271, %v5811, 0
      %v5849 = vsel %vm2271, %v5812, 0
      %v5852 = vsel %vm2271, %v5813, 0
      %v5855 = vsel %vm2271, %v5814, 0
      %v5858 = vsel %vm2271, %v5815, 0
      %v5861 = vsel %vm2271, %v5816, 0
      %v5864 = vsel %vm2271, %v5817, 0
      %v5867 = vsel %vm2271, %v5818, 0
      %v5870 = vsel %vm5394, %v5820, 0
      %5872 = vmatprep.subr.bf16.mxu0 0
      %5873 = vmatpush1.bf16.msra.mxu0 %v5870
      %5874 = vmatprep.subr.bf16.mxu0 0
      %5875 = vmatpush1.bf16.msra.mxu0 0
      %5876 = vmatprep.subr.bf16.mxu0 0
      %5877 = vmatpush1.bf16.msra.mxu0 0
      %5878 = vmatprep.subr.bf16.mxu0 0
      %5879 = vmatpush1.bf16.msra.mxu0 0
      %5880 = vmatprep.subr.bf16.mxu0 0
      %5881 = vmatpush1.bf16.msra.mxu0 0
      %5882 = vmatprep.subr.bf16.mxu0 0
      %5883 = vmatpush1.bf16.msra.mxu0 0
      %5884 = vmatprep.subr.bf16.mxu0 0
      %5885 = vmatpush1.bf16.msra.mxu0 0
      %5886 = vmatprep.subr.bf16.mxu0 0
      %5887 = vmatpush1.bf16.msra.mxu0 0
      %5888 = vmatprep.subr.bf16.mxu0 0
      %5889 = vmatpush1.bf16.msra.mxu0 0
      %5890 = vmatprep.subr.bf16.mxu0 0
      %5891 = vmatpush1.bf16.msra.mxu0 0
      %5892 = vmatprep.subr.bf16.mxu0 0
      %5893 = vmatpush1.bf16.msra.mxu0 0
      %5894 = vmatprep.subr.bf16.mxu0 0
      %5895 = vmatpush1.bf16.msra.mxu0 0
      %5896 = vmatprep.subr.bf16.mxu0 0
      %5897 = vmatpush1.bf16.msra.mxu0 0
      %5898 = vmatprep.subr.bf16.mxu0 0
      %5899 = vmatpush1.bf16.msra.mxu0 0
      %5900 = vmatprep.subr.bf16.mxu0 0
      %5901 = vmatpush1.bf16.msra.mxu0 0
      %5902 = vmatprep.subr.bf16.mxu0 0
      %5903 = vmatpush1.bf16.msra.mxu0 0
      %5904 = vmatprep.mubr.bf16.mxu0 0
      %5905 = vmatmul.mubr.bf16.gmra.mrb[0].mxu0 %v5822
      %v5906 = vpop.f32.mrb[0].mxu0
      %v5907 = vadd.f32 0.0, %v5906
      %v5908 = vpop.f32.mrb[0].mxu0
      %v5909 = vpop.f32.mrb[0].mxu0
      %v5910 = vadd.f32 0.0, %v5909
      %v5911 = vpop.f32.mrb[0].mxu0
      %5912 = vmatprep.mubr.bf16.mxu0 0
      %5913 = vmatmul.mubr.bf16.gmra.mrb[0].mxu0 %v5825
      %v5914 = vpop.f32.mrb[0].mxu0
      %v5915 = vadd.f32 0.0, %v5914
      %v5916 = vpop.f32.mrb[0].mxu0
      %v5917 = vpop.f32.mrb[0].mxu0
      %v5918 = vadd.f32 0.0, %v5917
      %v5919 = vpop.f32.mrb[0].mxu0
      %5920 = vmatprep.mubr.bf16.mxu0 0
      %5921 = vmatmul.mubr.bf16.gmra.mrb[0].mxu0 %v5828
      %v5922 = vpop.f32.mrb[0].mxu0
      %v5923 = vadd.f32 0.0, %v5922
      %v5924 = vpop.f32.mrb[0].mxu0
      %v5925 = vpop.f32.mrb[0].mxu0
      %v5926 = vadd.f32 0.0, %v5925
      %v5927 = vpop.f32.mrb[0].mxu0
      %5928 = vmatprep.mubr.bf16.mxu0 0
      %5929 = vmatmul.mubr.bf16.gmra.mrb[0].mxu0 %v5831
      %v5930 = vpop.f32.mrb[0].mxu0
      %v5931 = vadd.f32 0.0, %v5930
      %v5932 = vpop.f32.mrb[0].mxu0
      %v5933 = vpop.f32.mrb[0].mxu0
      %v5934 = vadd.f32 0.0, %v5933
      %v5935 = vpop.f32.mrb[0].mxu0
      %5936 = vmatprep.mubr.bf16.mxu0 0
      %5937 = vmatmul.mubr.bf16.gmra.mrb[0].mxu0 %v5834
      %v5938 = vpop.f32.mrb[0].mxu0
      %v5939 = vadd.f32 0.0, %v5938
      %v5940 = vpop.f32.mrb[0].mxu0
      %v5941 = vpop.f32.mrb[0].mxu0
      %v5942 = vadd.f32 0.0, %v5941
      %v5943 = vpop.f32.mrb[0].mxu0
      %5944 = vmatprep.mubr.bf16.mxu0 0
      %5945 = vmatmul.mubr.bf16.gmra.mrb[0].mxu0 %v5837
      %v5946 = vpop.f32.mrb[0].mxu0
      %v5947 = vadd.f32 0.0, %v5946
      %v5948 = vpop.f32.mrb[0].mxu0
      %v5949 = vpop.f32.mrb[0].mxu0
      %v5950 = vadd.f32 0.0, %v5949
      %v5951 = vpop.f32.mrb[0].mxu0
      %5952 = vmatprep.mubr.bf16.mxu0 0
      %5953 = vmatmul.mubr.bf16.gmra.mrb[0].mxu0 %v5840
      %v5954 = vpop.f32.mrb[0].mxu0
      %v5955 = vadd.f32 0.0, %v5954
      %v5956 = vpop.f32.mrb[0].mxu0
      %v5957 = vpop.f32.mrb[0].mxu0
      %v5958 = vadd.f32 0.0, %v5957
      %v5959 = vpop.f32.mrb[0].mxu0
      %5960 = vmatprep.mubr.bf16.mxu0 0
      %5961 = vmatmul.mubr.bf16.gmra.mrb[0].mxu0 %v5843
      %v5962 = vpop.f32.mrb[0].mxu0
      %v5963 = vadd.f32 0.0, %v5962
      %v5964 = vpop.f32.mrb[0].mxu0
      %v5965 = vpop.f32.mrb[0].mxu0
      %v5966 = vadd.f32 0.0, %v5965
      %v5967 = vpop.f32.mrb[0].mxu0
      %5968 = vmatprep.mubr.bf16.mxu0 0
      %5969 = vmatmul.mubr.bf16.gmra.mrb[0].mxu0 %v5846
      %v5970 = vpop.f32.mrb[0].mxu0
      %v5971 = vadd.f32 0.0, %v5970
      %v5972 = vpop.f32.mrb[0].mxu0
      %v5973 = vpop.f32.mrb[0].mxu0
      %v5974 = vadd.f32 0.0, %v5973
      %v5975 = vpop.f32.mrb[0].mxu0
      %5976 = vmatprep.mubr.bf16.mxu0 0
      %5977 = vmatmul.mubr.bf16.gmra.mrb[0].mxu0 %v5849
      %v5978 = vpop.f32.mrb[0].mxu0
      %v5979 = vadd.f32 0.0, %v5978
      %v5980 = vpop.f32.mrb[0].mxu0
      %v5981 = vpop.f32.mrb[0].mxu0
      %v5982 = vadd.f32 0.0, %v5981
      %v5983 = vpop.f32.mrb[0].mxu0
      %5984 = vmatprep.mubr.bf16.mxu0 0
      %5985 = vmatmul.mubr.bf16.gmra.mrb[0].mxu0 %v5852
      %v5986 = vpop.f32.mrb[0].mxu0
      %v5987 = vadd.f32 0.0, %v5986
      %v5988 = vpop.f32.mrb[0].mxu0
      %v5989 = vpop.f32.mrb[0].mxu0
      %v5990 = vadd.f32 0.0, %v5989
      %v5991 = vpop.f32.mrb[0].mxu0
      %5992 = vmatprep.mubr.bf16.mxu0 0
      %5993 = vmatmul.mubr.bf16.gmra.mrb[0].mxu0 %v5855
      %v5994 = vpop.f32.mrb[0].mxu0
      %v5995 = vadd.f32 0.0, %v5994
      %v5996 = vpop.f32.mrb[0].mxu0
      %v5997 = vpop.f32.mrb[0].mxu0
      %v5998 = vadd.f32 0.0, %v5997
      %v5999 = vpop.f32.mrb[0].mxu0
      %6000 = vmatprep.mubr.bf16.mxu0 0
      %6001 = vmatmul.mubr.bf16.gmra.mrb[0].mxu0 %v5858
      %v6002 = vpop.f32.mrb[0].mxu0
      %v6003 = vadd.f32 0.0, %v6002
      %v6004 = vpop.f32.mrb[0].mxu0
      %v6005 = vpop.f32.mrb[0].mxu0
      %v6006 = vadd.f32 0.0, %v6005
      %v6007 = vpop.f32.mrb[0].mxu0
      %6008 = vmatprep.mubr.bf16.mxu0 0
      %6009 = vmatmul.mubr.bf16.gmra.mrb[0].mxu0 %v5861
      %v6010 = vpop.f32.mrb[0].mxu0
      %v6011 = vadd.f32 0.0, %v6010
      %v6012 = vpop.f32.mrb[0].mxu0
      %v6013 = vpop.f32.mrb[0].mxu0
      %v6014 = vadd.f32 0.0, %v6013
      %v6015 = vpop.f32.mrb[0].mxu0
      %6016 = vmatprep.mubr.bf16.mxu0 0
      %6017 = vmatmul.mubr.bf16.gmra.mrb[0].mxu0 %v5864
      %v6018 = vpop.f32.mrb[0].mxu0
      %v6019 = vadd.f32 0.0, %v6018
      %v6020 = vpop.f32.mrb[0].mxu0
      %v6021 = vpop.f32.mrb[0].mxu0
      %v6022 = vadd.f32 0.0, %v6021
      %v6023 = vpop.f32.mrb[0].mxu0
      %6024 = vmatprep.mubr.bf16.mxu0 0
      %6025 = vmatmul.mubr.bf16.gmra.mrb[0].mxu0 %v5867
      %v6026 = vpop.f32.mrb[0].mxu0
      %v6027 = vadd.f32 0.0, %v6026
      %v6028 = vpop.f32.mrb[0].mxu0
      %v6029 = vpop.f32.mrb[0].mxu0
      %v6030 = vadd.f32 0.0, %v6029
      %v6031 = vpop.f32.mrb[0].mxu0
      %6032 = vdwg.mxu0
      %v6033 = vadd.f32 %v5645, %v5907
      %v6034 = vadd.f32 %v5648, %v5910
      %v6035 = vadd.f32 %v5653, %v5915
      %v6036 = vadd.f32 %v5656, %v5918
      %v6037 = vadd.f32 %v5661, %v5923
      %v6038 = vadd.f32 %v5664, %v5926
      %v6039 = vadd.f32 %v5669, %v5931
      %v6040 = vadd.f32 %v5672, %v5934
      %v6041 = vadd.f32 %v5677, %v5939
      %v6042 = vadd.f32 %v5680, %v5942
      %v6043 = vadd.f32 %v5685, %v5947
      %v6044 = vadd.f32 %v5688, %v5950
      %v6045 = vadd.f32 %v5693, %v5955
      %v6046 = vadd.f32 %v5696, %v5958
      %v6047 = vadd.f32 %v5701, %v5963
      %v6048 = vadd.f32 %v5704, %v5966
      %v6049 = vadd.f32 %v5709, %v5971
      %v6050 = vadd.f32 %v5712, %v5974
      %v6051 = vadd.f32 %v5717, %v5979
      %v6052 = vadd.f32 %v5720, %v5982
      %v6053 = vadd.f32 %v5725, %v5987
      %v6054 = vadd.f32 %v5728, %v5990
      %v6055 = vadd.f32 %v5733, %v5995
      %v6056 = vadd.f32 %v5736, %v5998
      %v6057 = vadd.f32 %v5741, %v6003
      %v6058 = vadd.f32 %v5744, %v6006
      %v6059 = vadd.f32 %v5749, %v6011
      %v6060 = vadd.f32 %v5752, %v6014
      %v6061 = vadd.f32 %v5757, %v6019
      %v6062 = vadd.f32 %v5760, %v6022
      %v6063 = vadd.f32 %v5765, %v6027
      %v6064 = vadd.f32 %v5768, %v6030
      %v6065 = vld [vmem:[%s5214] sm:$0xff]
      %v6066 = vld [vmem:[%s5214 + $0x8] sm:$0xff]
      %v6067 = vld [vmem:[%s5214 + $0x18] sm:$0xff]
      %v6068 = vld [vmem:[%s5214 + $0x20] sm:$0xff]
      %v6069 = vld [vmem:[%s5214 + $0x30] sm:$0xff]
      %v6070 = vld [vmem:[%s5214 + $0x38] sm:$0xff]
      %v6071 = vld [vmem:[%s5214 + $0x48] sm:$0xff]
      %v6072 = vld [vmem:[%s5214 + $0x50] sm:$0xff]
      %v6073 = vld [vmem:[%s5214 + $0x60] sm:$0xff]
      %v6074 = vld [vmem:[%s5214 + $0x68] sm:$0xff]
      %v6075 = vld [vmem:[%s5214 + $0x78] sm:$0xff]
      %v6076 = vld [vmem:[%s5214 + $0x80] sm:$0xff]
      %v6077 = vld [vmem:[%s5214 + $0x90] sm:$0xff]
      %v6078 = vld [vmem:[%s5214 + $0x98] sm:$0xff]
      %v6079 = vld [vmem:[%s5214 + $0xa8] sm:$0xff]
      %v6080 = vld [vmem:[%s5214 + $0xb0] sm:$0xff]
      %v6081 = vld [vmem:[%s5214 + $0xc0] sm:$0xff]
      %v6082 = vld [vmem:[%s5214 + $0xc8] sm:$0xff]
      %v6083 = vld [vmem:[%s5214 + $0xd8] sm:$0xff]
      %v6084 = vld [vmem:[%s5214 + $0xe0] sm:$0xff]
      %v6085 = vld [vmem:[%s5214 + $0xf0] sm:$0xff]
      %v6086 = vld [vmem:[%s5214 + $0xf8] sm:$0xff]
      %v6087 = vld [vmem:[%s5214 + $0x108] sm:$0xff]
      %v6088 = vld [vmem:[%s5214 + $0x110] sm:$0xff]
      %v6089 = vld [vmem:[%s5214 + $0x120] sm:$0xff]
      %v6090 = vld [vmem:[%s5214 + $0x128] sm:$0xff]
      %v6091 = vld [vmem:[%s5214 + $0x138] sm:$0xff]
      %v6092 = vld [vmem:[%s5214 + $0x140] sm:$0xff]
      %v6093 = vld [vmem:[%s5214 + $0x150] sm:$0xff]
      %v6094 = vld [vmem:[%s5214 + $0x158] sm:$0xff]
      %v6095 = vld [vmem:[%s5214 + $0x168] sm:$0xff]
      %v6096 = vld [vmem:[%s5214 + $0x170] sm:$0xff]
      %v6097 = vpack.c.bf16 %v6066, %v6065
      %v6098 = vpack.c.bf16 %v6068, %v6067
      %v6099 = vpack.c.bf16 %v6070, %v6069
      %v6100 = vpack.c.bf16 %v6072, %v6071
      %v6101 = vpack.c.bf16 %v6074, %v6073
      %v6102 = vpack.c.bf16 %v6076, %v6075
      %v6103 = vpack.c.bf16 %v6078, %v6077
      %v6104 = vpack.c.bf16 %v6080, %v6079
      %v6105 = vpack.c.bf16 %v6082, %v6081
      %v6106 = vpack.c.bf16 %v6084, %v6083
      %v6107 = vpack.c.bf16 %v6086, %v6085
      %v6108 = vpack.c.bf16 %v6088, %v6087
      %v6109 = vpack.c.bf16 %v6090, %v6089
      %v6110 = vpack.c.bf16 %v6092, %v6091
      %v6111 = vpack.c.bf16 %v6094, %v6093
      %v6112 = vpack.c.bf16 %v6096, %v6095
      %s6113 = scalar_lea.vmem %s6, 6
      %v6114 = vld [vmem:[%s6113] sm:$0x3]
      %v6116 = vsel %vm2271, %v6097, 0
      %v6119 = vsel %vm2271, %v6098, 0
      %v6122 = vsel %vm2271, %v6099, 0
      %v6125 = vsel %vm2271, %v6100, 0
      %v6128 = vsel %vm2271, %v6101, 0
      %v6131 = vsel %vm2271, %v6102, 0
      %v6134 = vsel %vm2271, %v6103, 0
      %v6137 = vsel %vm2271, %v6104, 0
      %v6140 = vsel %vm2271, %v6105, 0
      %v6143 = vsel %vm2271, %v6106, 0
      %v6146 = vsel %vm2271, %v6107, 0
      %v6149 = vsel %vm2271, %v6108, 0
      %v6152 = vsel %vm2271, %v6109, 0
      %v6155 = vsel %vm2271, %v6110, 0
      %v6158 = vsel %vm2271, %v6111, 0
      %v6161 = vsel %vm2271, %v6112, 0
      %v6164 = vsel %vm5394, %v6114, 0
      %6166 = vmatprep.subr.bf16.mxu0 0
      %6167 = vmatpush1.bf16.msra.mxu0 %v6164
      %6168 = vmatprep.subr.bf16.mxu0 0
      %6169 = vmatpush1.bf16.msra.mxu0 0
      %6170 = vmatprep.subr.bf16.mxu0 0
      %6171 = vmatpush1.bf16.msra.mxu0 0
      %6172 = vmatprep.subr.bf16.mxu0 0
      %6173 = vmatpush1.bf16.msra.mxu0 0
      %6174 = vmatprep.subr.bf16.mxu0 0
      %6175 = vmatpush1.bf16.msra.mxu0 0
      %6176 = vmatprep.subr.bf16.mxu0 0
      %6177 = vmatpush1.bf16.msra.mxu0 0
      %6178 = vmatprep.subr.bf16.mxu0 0
      %6179 = vmatpush1.bf16.msra.mxu0 0
      %6180 = vmatprep.subr.bf16.mxu0 0
      %6181 = vmatpush1.bf16.msra.mxu0 0
      %6182 = vmatprep.subr.bf16.mxu0 0
      %6183 = vmatpush1.bf16.msra.mxu0 0
      %6184 = vmatprep.subr.bf16.mxu0 0
      %6185 = vmatpush1.bf16.msra.mxu0 0
      %6186 = vmatprep.subr.bf16.mxu0 0
      %6187 = vmatpush1.bf16.msra.mxu0 0
      %6188 = vmatprep.subr.bf16.mxu0 0
      %6189 = vmatpush1.bf16.msra.mxu0 0
      %6190 = vmatprep.subr.bf16.mxu0 0
      %6191 = vmatpush1.bf16.msra.mxu0 0
      %6192 = vmatprep.subr.bf16.mxu0 0
      %6193 = vmatpush1.bf16.msra.mxu0 0
      %6194 = vmatprep.subr.bf16.mxu0 0
      %6195 = vmatpush1.bf16.msra.mxu0 0
      %6196 = vmatprep.subr.bf16.mxu0 0
      %6197 = vmatpush1.bf16.msra.mxu0 0
      %6198 = vmatprep.mubr.bf16.mxu0 0
      %6199 = vmatmul.mubr.bf16.gmra.mrb[0].mxu0 %v6116
      %v6200 = vpop.f32.mrb[0].mxu0
      %v6201 = vadd.f32 0.0, %v6200
      %v6202 = vpop.f32.mrb[0].mxu0
      %v6203 = vpop.f32.mrb[0].mxu0
      %v6204 = vadd.f32 0.0, %v6203
      %v6205 = vpop.f32.mrb[0].mxu0
      %6206 = vmatprep.mubr.bf16.mxu0 0
      %6207 = vmatmul.mubr.bf16.gmra.mrb[0].mxu0 %v6119
      %v6208 = vpop.f32.mrb[0].mxu0
      %v6209 = vadd.f32 0.0, %v6208
      %v6210 = vpop.f32.mrb[0].mxu0
      %v6211 = vpop.f32.mrb[0].mxu0
      %v6212 = vadd.f32 0.0, %v6211
      %v6213 = vpop.f32.mrb[0].mxu0
      %6214 = vmatprep.mubr.bf16.mxu0 0
      %6215 = vmatmul.mubr.bf16.gmra.mrb[0].mxu0 %v6122
      %v6216 = vpop.f32.mrb[0].mxu0
      %v6217 = vadd.f32 0.0, %v6216
      %v6218 = vpop.f32.mrb[0].mxu0
      %v6219 = vpop.f32.mrb[0].mxu0
      %v6220 = vadd.f32 0.0, %v6219
      %v6221 = vpop.f32.mrb[0].mxu0
      %6222 = vmatprep.mubr.bf16.mxu0 0
      %6223 = vmatmul.mubr.bf16.gmra.mrb[0].mxu0 %v6125
      %v6224 = vpop.f32.mrb[0].mxu0
      %v6225 = vadd.f32 0.0, %v6224
      %v6226 = vpop.f32.mrb[0].mxu0
      %v6227 = vpop.f32.mrb[0].mxu0
      %v6228 = vadd.f32 0.0, %v6227
      %v6229 = vpop.f32.mrb[0].mxu0
      %6230 = vmatprep.mubr.bf16.mxu0 0
      %6231 = vmatmul.mubr.bf16.gmra.mrb[0].mxu0 %v6128
      %v6232 = vpop.f32.mrb[0].mxu0
      %v6233 = vadd.f32 0.0, %v6232
      %v6234 = vpop.f32.mrb[0].mxu0
      %v6235 = vpop.f32.mrb[0].mxu0
      %v6236 = vadd.f32 0.0, %v6235
      %v6237 = vpop.f32.mrb[0].mxu0
      %6238 = vmatprep.mubr.bf16.mxu0 0
      %6239 = vmatmul.mubr.bf16.gmra.mrb[0].mxu0 %v6131
      %v6240 = vpop.f32.mrb[0].mxu0
      %v6241 = vadd.f32 0.0, %v6240
      %v6242 = vpop.f32.mrb[0].mxu0
      %v6243 = vpop.f32.mrb[0].mxu0
      %v6244 = vadd.f32 0.0, %v6243
      %v6245 = vpop.f32.mrb[0].mxu0
      %6246 = vmatprep.mubr.bf16.mxu0 0
      %6247 = vmatmul.mubr.bf16.gmra.mrb[0].mxu0 %v6134
      %v6248 = vpop.f32.mrb[0].mxu0
      %v6249 = vadd.f32 0.0, %v6248
      %v6250 = vpop.f32.mrb[0].mxu0
      %v6251 = vpop.f32.mrb[0].mxu0
      %v6252 = vadd.f32 0.0, %v6251
      %v6253 = vpop.f32.mrb[0].mxu0
      %6254 = vmatprep.mubr.bf16.mxu0 0
      %6255 = vmatmul.mubr.bf16.gmra.mrb[0].mxu0 %v6137
      %v6256 = vpop.f32.mrb[0].mxu0
      %v6257 = vadd.f32 0.0, %v6256
      %v6258 = vpop.f32.mrb[0].mxu0
      %v6259 = vpop.f32.mrb[0].mxu0
      %v6260 = vadd.f32 0.0, %v6259
      %v6261 = vpop.f32.mrb[0].mxu0
      %6262 = vmatprep.mubr.bf16.mxu0 0
      %6263 = vmatmul.mubr.bf16.gmra.mrb[0].mxu0 %v6140
      %v6264 = vpop.f32.mrb[0].mxu0
      %v6265 = vadd.f32 0.0, %v6264
      %v6266 = vpop.f32.mrb[0].mxu0
      %v6267 = vpop.f32.mrb[0].mxu0
      %v6268 = vadd.f32 0.0, %v6267
      %v6269 = vpop.f32.mrb[0].mxu0
      %6270 = vmatprep.mubr.bf16.mxu0 0
      %6271 = vmatmul.mubr.bf16.gmra.mrb[0].mxu0 %v6143
      %v6272 = vpop.f32.mrb[0].mxu0
      %v6273 = vadd.f32 0.0, %v6272
      %v6274 = vpop.f32.mrb[0].mxu0
      %v6275 = vpop.f32.mrb[0].mxu0
      %v6276 = vadd.f32 0.0, %v6275
      %v6277 = vpop.f32.mrb[0].mxu0
      %6278 = vmatprep.mubr.bf16.mxu0 0
      %6279 = vmatmul.mubr.bf16.gmra.mrb[0].mxu0 %v6146
      %v6280 = vpop.f32.mrb[0].mxu0
      %v6281 = vadd.f32 0.0, %v6280
      %v6282 = vpop.f32.mrb[0].mxu0
      %v6283 = vpop.f32.mrb[0].mxu0
      %v6284 = vadd.f32 0.0, %v6283
      %v6285 = vpop.f32.mrb[0].mxu0
      %6286 = vmatprep.mubr.bf16.mxu0 0
      %6287 = vmatmul.mubr.bf16.gmra.mrb[0].mxu0 %v6149
      %v6288 = vpop.f32.mrb[0].mxu0
      %v6289 = vadd.f32 0.0, %v6288
      %v6290 = vpop.f32.mrb[0].mxu0
      %v6291 = vpop.f32.mrb[0].mxu0
      %v6292 = vadd.f32 0.0, %v6291
      %v6293 = vpop.f32.mrb[0].mxu0
      %6294 = vmatprep.mubr.bf16.mxu0 0
      %6295 = vmatmul.mubr.bf16.gmra.mrb[0].mxu0 %v6152
      %v6296 = vpop.f32.mrb[0].mxu0
      %v6297 = vadd.f32 0.0, %v6296
      %v6298 = vpop.f32.mrb[0].mxu0
      %v6299 = vpop.f32.mrb[0].mxu0
      %v6300 = vadd.f32 0.0, %v6299
      %v6301 = vpop.f32.mrb[0].mxu0
      %6302 = vmatprep.mubr.bf16.mxu0 0
      %6303 = vmatmul.mubr.bf16.gmra.mrb[0].mxu0 %v6155
      %v6304 = vpop.f32.mrb[0].mxu0
      %v6305 = vadd.f32 0.0, %v6304
      %v6306 = vpop.f32.mrb[0].mxu0
      %v6307 = vpop.f32.mrb[0].mxu0
      %v6308 = vadd.f32 0.0, %v6307
      %v6309 = vpop.f32.mrb[0].mxu0
      %6310 = vmatprep.mubr.bf16.mxu0 0
      %6311 = vmatmul.mubr.bf16.gmra.mrb[0].mxu0 %v6158
      %v6312 = vpop.f32.mrb[0].mxu0
      %v6313 = vadd.f32 0.0, %v6312
      %v6314 = vpop.f32.mrb[0].mxu0
      %v6315 = vpop.f32.mrb[0].mxu0
      %v6316 = vadd.f32 0.0, %v6315
      %v6317 = vpop.f32.mrb[0].mxu0
      %6318 = vmatprep.mubr.bf16.mxu0 0
      %6319 = vmatmul.mubr.bf16.gmra.mrb[0].mxu0 %v6161
      %v6320 = vpop.f32.mrb[0].mxu0
      %v6321 = vadd.f32 0.0, %v6320
      %v6322 = vpop.f32.mrb[0].mxu0
      %v6323 = vpop.f32.mrb[0].mxu0
      %v6324 = vadd.f32 0.0, %v6323
      %v6325 = vpop.f32.mrb[0].mxu0
      %6326 = vdwg.mxu0
      %v6327 = vadd.f32 %v6033, %v6201
      %v6328 = vadd.f32 %v6034, %v6204
      %v6329 = vadd.f32 %v6035, %v6209
      %v6330 = vadd.f32 %v6036, %v6212
      %v6331 = vadd.f32 %v6037, %v6217
      %v6332 = vadd.f32 %v6038, %v6220
      %v6333 = vadd.f32 %v6039, %v6225
      %v6334 = vadd.f32 %v6040, %v6228
      %v6335 = vadd.f32 %v6041, %v6233
      %v6336 = vadd.f32 %v6042, %v6236
      %v6337 = vadd.f32 %v6043, %v6241
      %v6338 = vadd.f32 %v6044, %v6244
      %v6339 = vadd.f32 %v6045, %v6249
      %v6340 = vadd.f32 %v6046, %v6252
      %v6341 = vadd.f32 %v6047, %v6257
      %v6342 = vadd.f32 %v6048, %v6260
      %v6343 = vadd.f32 %v6049, %v6265
      %v6344 = vadd.f32 %v6050, %v6268
      %v6345 = vadd.f32 %v6051, %v6273
      %v6346 = vadd.f32 %v6052, %v6276
      %v6347 = vadd.f32 %v6053, %v6281
      %v6348 = vadd.f32 %v6054, %v6284
      %v6349 = vadd.f32 %v6055, %v6289
      %v6350 = vadd.f32 %v6056, %v6292
      %v6351 = vadd.f32 %v6057, %v6297
      %v6352 = vadd.f32 %v6058, %v6300
      %v6353 = vadd.f32 %v6059, %v6305
      %v6354 = vadd.f32 %v6060, %v6308
      %v6355 = vadd.f32 %v6061, %v6313
      %v6356 = vadd.f32 %v6062, %v6316
      %v6357 = vadd.f32 %v6063, %v6321
      %v6358 = vadd.f32 %v6064, %v6324
      %v6359 = vld [vmem:[%s5214 + $0x1] sm:$0xff]
      %v6360 = vld [vmem:[%s5214 + $0x9] sm:$0xff]
      %v6361 = vld [vmem:[%s5214 + $0x19] sm:$0xff]
      %v6362 = vld [vmem:[%s5214 + $0x21] sm:$0xff]
      %v6363 = vld [vmem:[%s5214 + $0x31] sm:$0xff]
      %v6364 = vld [vmem:[%s5214 + $0x39] sm:$0xff]
      %v6365 = vld [vmem:[%s5214 + $0x49] sm:$0xff]
      %v6366 = vld [vmem:[%s5214 + $0x51] sm:$0xff]
      %v6367 = vld [vmem:[%s5214 + $0x61] sm:$0xff]
      %v6368 = vld [vmem:[%s5214 + $0x69] sm:$0xff]
      %v6369 = vld [vmem:[%s5214 + $0x79] sm:$0xff]
      %v6370 = vld [vmem:[%s5214 + $0x81] sm:$0xff]
      %v6371 = vld [vmem:[%s5214 + $0x91] sm:$0xff]
      %v6372 = vld [vmem:[%s5214 + $0x99] sm:$0xff]
      %v6373 = vld [vmem:[%s5214 + $0xa9] sm:$0xff]
      %v6374 = vld [vmem:[%s5214 + $0xb1] sm:$0xff]
      %v6375 = vld [vmem:[%s5214 + $0xc1] sm:$0xff]
      %v6376 = vld [vmem:[%s5214 + $0xc9] sm:$0xff]
      %v6377 = vld [vmem:[%s5214 + $0xd9] sm:$0xff]
      %v6378 = vld [vmem:[%s5214 + $0xe1] sm:$0xff]
      %v6379 = vld [vmem:[%s5214 + $0xf1] sm:$0xff]
      %v6380 = vld [vmem:[%s5214 + $0xf9] sm:$0xff]
      %v6381 = vld [vmem:[%s5214 + $0x109] sm:$0xff]
      %v6382 = vld [vmem:[%s5214 + $0x111] sm:$0xff]
      %v6383 = vld [vmem:[%s5214 + $0x121] sm:$0xff]
      %v6384 = vld [vmem:[%s5214 + $0x129] sm:$0xff]
      %v6385 = vld [vmem:[%s5214 + $0x139] sm:$0xff]
      %v6386 = vld [vmem:[%s5214 + $0x141] sm:$0xff]
      %v6387 = vld [vmem:[%s5214 + $0x151] sm:$0xff]
      %v6388 = vld [vmem:[%s5214 + $0x159] sm:$0xff]
      %v6389 = vld [vmem:[%s5214 + $0x169] sm:$0xff]
      %v6390 = vld [vmem:[%s5214 + $0x171] sm:$0xff]
      %v6391 = vpack.c.bf16 %v6360, %v6359
      %v6392 = vpack.c.bf16 %v6362, %v6361
      %v6393 = vpack.c.bf16 %v6364, %v6363
      %v6394 = vpack.c.bf16 %v6366, %v6365
      %v6395 = vpack.c.bf16 %v6368, %v6367
      %v6396 = vpack.c.bf16 %v6370, %v6369
      %v6397 = vpack.c.bf16 %v6372, %v6371
      %v6398 = vpack.c.bf16 %v6374, %v6373
      %v6399 = vpack.c.bf16 %v6376, %v6375
      %v6400 = vpack.c.bf16 %v6378, %v6377
      %v6401 = vpack.c.bf16 %v6380, %v6379
      %v6402 = vpack.c.bf16 %v6382, %v6381
      %v6403 = vpack.c.bf16 %v6384, %v6383
      %v6404 = vpack.c.bf16 %v6386, %v6385
      %v6405 = vpack.c.bf16 %v6388, %v6387
      %v6406 = vpack.c.bf16 %v6390, %v6389
      %s6407 = scalar_lea.vmem %s6, 8
      %v6408 = vld [vmem:[%s6407] sm:$0x3]
      %v6410 = vsel %vm2271, %v6391, 0
      %v6413 = vsel %vm2271, %v6392, 0
      %v6416 = vsel %vm2271, %v6393, 0
      %v6419 = vsel %vm2271, %v6394, 0
      %v6422 = vsel %vm2271, %v6395, 0
      %v6425 = vsel %vm2271, %v6396, 0
      %v6428 = vsel %vm2271, %v6397, 0
      %v6431 = vsel %vm2271, %v6398, 0
      %v6434 = vsel %vm2271, %v6399, 0
      %v6437 = vsel %vm2271, %v6400, 0
      %v6440 = vsel %vm2271, %v6401, 0
      %v6443 = vsel %vm2271, %v6402, 0
      %v6446 = vsel %vm2271, %v6403, 0
      %v6449 = vsel %vm2271, %v6404, 0
      %v6452 = vsel %vm2271, %v6405, 0
      %v6455 = vsel %vm2271, %v6406, 0
      %v6458 = vsel %vm5394, %v6408, 0
      %6460 = vmatprep.subr.bf16.mxu0 0
      %6461 = vmatpush1.bf16.msra.mxu0 %v6458
      %6462 = vmatprep.subr.bf16.mxu0 0
      %6463 = vmatpush1.bf16.msra.mxu0 0
      %6464 = vmatprep.subr.bf16.mxu0 0
      %6465 = vmatpush1.bf16.msra.mxu0 0
      %6466 = vmatprep.subr.bf16.mxu0 0
      %6467 = vmatpush1.bf16.msra.mxu0 0
      %6468 = vmatprep.subr.bf16.mxu0 0
      %6469 = vmatpush1.bf16.msra.mxu0 0
      %6470 = vmatprep.subr.bf16.mxu0 0
      %6471 = vmatpush1.bf16.msra.mxu0 0
      %6472 = vmatprep.subr.bf16.mxu0 0
      %6473 = vmatpush1.bf16.msra.mxu0 0
      %6474 = vmatprep.subr.bf16.mxu0 0
      %6475 = vmatpush1.bf16.msra.mxu0 0
      %6476 = vmatprep.subr.bf16.mxu0 0
      %6477 = vmatpush1.bf16.msra.mxu0 0
      %6478 = vmatprep.subr.bf16.mxu0 0
      %6479 = vmatpush1.bf16.msra.mxu0 0
      %6480 = vmatprep.subr.bf16.mxu0 0
      %6481 = vmatpush1.bf16.msra.mxu0 0
      %6482 = vmatprep.subr.bf16.mxu0 0
      %6483 = vmatpush1.bf16.msra.mxu0 0
      %6484 = vmatprep.subr.bf16.mxu0 0
      %6485 = vmatpush1.bf16.msra.mxu0 0
      %6486 = vmatprep.subr.bf16.mxu0 0
      %6487 = vmatpush1.bf16.msra.mxu0 0
      %6488 = vmatprep.subr.bf16.mxu0 0
      %6489 = vmatpush1.bf16.msra.mxu0 0
      %6490 = vmatprep.subr.bf16.mxu0 0
      %6491 = vmatpush1.bf16.msra.mxu0 0
      %6492 = vmatprep.mubr.bf16.mxu0 0
      %6493 = vmatmul.mubr.bf16.gmra.mrb[0].mxu0 %v6410
      %v6494 = vpop.f32.mrb[0].mxu0
      %v6495 = vadd.f32 0.0, %v6494
      %v6496 = vpop.f32.mrb[0].mxu0
      %v6497 = vpop.f32.mrb[0].mxu0
      %v6498 = vadd.f32 0.0, %v6497
      %v6499 = vpop.f32.mrb[0].mxu0
      %6500 = vmatprep.mubr.bf16.mxu0 0
      %6501 = vmatmul.mubr.bf16.gmra.mrb[0].mxu0 %v6413
      %v6502 = vpop.f32.mrb[0].mxu0
      %v6503 = vadd.f32 0.0, %v6502
      %v6504 = vpop.f32.mrb[0].mxu0
      %v6505 = vpop.f32.mrb[0].mxu0
      %v6506 = vadd.f32 0.0, %v6505
      %v6507 = vpop.f32.mrb[0].mxu0
      %6508 = vmatprep.mubr.bf16.mxu0 0
      %6509 = vmatmul.mubr.bf16.gmra.mrb[0].mxu0 %v6416
      %v6510 = vpop.f32.mrb[0].mxu0
      %v6511 = vadd.f32 0.0, %v6510
      %v6512 = vpop.f32.mrb[0].mxu0
      %v6513 = vpop.f32.mrb[0].mxu0
      %v6514 = vadd.f32 0.0, %v6513
      %v6515 = vpop.f32.mrb[0].mxu0
      %6516 = vmatprep.mubr.bf16.mxu0 0
      %6517 = vmatmul.mubr.bf16.gmra.mrb[0].mxu0 %v6419
      %v6518 = vpop.f32.mrb[0].mxu0
      %v6519 = vadd.f32 0.0, %v6518
      %v6520 = vpop.f32.mrb[0].mxu0
      %v6521 = vpop.f32.mrb[0].mxu0
      %v6522 = vadd.f32 0.0, %v6521
      %v6523 = vpop.f32.mrb[0].mxu0
      %6524 = vmatprep.mubr.bf16.mxu0 0
      %6525 = vmatmul.mubr.bf16.gmra.mrb[0].mxu0 %v6422
      %v6526 = vpop.f32.mrb[0].mxu0
      %v6527 = vadd.f32 0.0, %v6526
      %v6528 = vpop.f32.mrb[0].mxu0
      %v6529 = vpop.f32.mrb[0].mxu0
      %v6530 = vadd.f32 0.0, %v6529
      %v6531 = vpop.f32.mrb[0].mxu0
      %6532 = vmatprep.mubr.bf16.mxu0 0
      %6533 = vmatmul.mubr.bf16.gmra.mrb[0].mxu0 %v6425
      %v6534 = vpop.f32.mrb[0].mxu0
      %v6535 = vadd.f32 0.0, %v6534
      %v6536 = vpop.f32.mrb[0].mxu0
      %v6537 = vpop.f32.mrb[0].mxu0
      %v6538 = vadd.f32 0.0, %v6537
      %v6539 = vpop.f32.mrb[0].mxu0
      %6540 = vmatprep.mubr.bf16.mxu0 0
      %6541 = vmatmul.mubr.bf16.gmra.mrb[0].mxu0 %v6428
      %v6542 = vpop.f32.mrb[0].mxu0
      %v6543 = vadd.f32 0.0, %v6542
      %v6544 = vpop.f32.mrb[0].mxu0
      %v6545 = vpop.f32.mrb[0].mxu0
      %v6546 = vadd.f32 0.0, %v6545
      %v6547 = vpop.f32.mrb[0].mxu0
      %6548 = vmatprep.mubr.bf16.mxu0 0
      %6549 = vmatmul.mubr.bf16.gmra.mrb[0].mxu0 %v6431
      %v6550 = vpop.f32.mrb[0].mxu0
      %v6551 = vadd.f32 0.0, %v6550
      %v6552 = vpop.f32.mrb[0].mxu0
      %v6553 = vpop.f32.mrb[0].mxu0
      %v6554 = vadd.f32 0.0, %v6553
      %v6555 = vpop.f32.mrb[0].mxu0
      %6556 = vmatprep.mubr.bf16.mxu0 0
      %6557 = vmatmul.mubr.bf16.gmra.mrb[0].mxu0 %v6434
      %v6558 = vpop.f32.mrb[0].mxu0
      %v6559 = vadd.f32 0.0, %v6558
      %v6560 = vpop.f32.mrb[0].mxu0
      %v6561 = vpop.f32.mrb[0].mxu0
      %v6562 = vadd.f32 0.0, %v6561
      %v6563 = vpop.f32.mrb[0].mxu0
      %6564 = vmatprep.mubr.bf16.mxu0 0
      %6565 = vmatmul.mubr.bf16.gmra.mrb[0].mxu0 %v6437
      %v6566 = vpop.f32.mrb[0].mxu0
      %v6567 = vadd.f32 0.0, %v6566
      %v6568 = vpop.f32.mrb[0].mxu0
      %v6569 = vpop.f32.mrb[0].mxu0
      %v6570 = vadd.f32 0.0, %v6569
      %v6571 = vpop.f32.mrb[0].mxu0
      %6572 = vmatprep.mubr.bf16.mxu0 0
      %6573 = vmatmul.mubr.bf16.gmra.mrb[0].mxu0 %v6440
      %v6574 = vpop.f32.mrb[0].mxu0
      %v6575 = vadd.f32 0.0, %v6574
      %v6576 = vpop.f32.mrb[0].mxu0
      %v6577 = vpop.f32.mrb[0].mxu0
      %v6578 = vadd.f32 0.0, %v6577
      %v6579 = vpop.f32.mrb[0].mxu0
      %6580 = vmatprep.mubr.bf16.mxu0 0
      %6581 = vmatmul.mubr.bf16.gmra.mrb[0].mxu0 %v6443
      %v6582 = vpop.f32.mrb[0].mxu0
      %v6583 = vadd.f32 0.0, %v6582
      %v6584 = vpop.f32.mrb[0].mxu0
      %v6585 = vpop.f32.mrb[0].mxu0
      %v6586 = vadd.f32 0.0, %v6585
      %v6587 = vpop.f32.mrb[0].mxu0
      %6588 = vmatprep.mubr.bf16.mxu0 0
      %6589 = vmatmul.mubr.bf16.gmra.mrb[0].mxu0 %v6446
      %v6590 = vpop.f32.mrb[0].mxu0
      %v6591 = vadd.f32 0.0, %v6590
      %v6592 = vpop.f32.mrb[0].mxu0
      %v6593 = vpop.f32.mrb[0].mxu0
      %v6594 = vadd.f32 0.0, %v6593
      %v6595 = vpop.f32.mrb[0].mxu0
      %6596 = vmatprep.mubr.bf16.mxu0 0
      %6597 = vmatmul.mubr.bf16.gmra.mrb[0].mxu0 %v6449
      %v6598 = vpop.f32.mrb[0].mxu0
      %v6599 = vadd.f32 0.0, %v6598
      %v6600 = vpop.f32.mrb[0].mxu0
      %v6601 = vpop.f32.mrb[0].mxu0
      %v6602 = vadd.f32 0.0, %v6601
      %v6603 = vpop.f32.mrb[0].mxu0
      %6604 = vmatprep.mubr.bf16.mxu0 0
      %6605 = vmatmul.mubr.bf16.gmra.mrb[0].mxu0 %v6452
      %v6606 = vpop.f32.mrb[0].mxu0
      %v6607 = vadd.f32 0.0, %v6606
      %v6608 = vpop.f32.mrb[0].mxu0
      %v6609 = vpop.f32.mrb[0].mxu0
      %v6610 = vadd.f32 0.0, %v6609
      %v6611 = vpop.f32.mrb[0].mxu0
      %6612 = vmatprep.mubr.bf16.mxu0 0
      %6613 = vmatmul.mubr.bf16.gmra.mrb[0].mxu0 %v6455
      %v6614 = vpop.f32.mrb[0].mxu0
      %v6615 = vadd.f32 0.0, %v6614
      %v6616 = vpop.f32.mrb[0].mxu0
      %v6617 = vpop.f32.mrb[0].mxu0
      %v6618 = vadd.f32 0.0, %v6617
      %v6619 = vpop.f32.mrb[0].mxu0
      %6620 = vdwg.mxu0
      %v6621 = vadd.f32 %v6327, %v6495
      %v6622 = vadd.f32 %v6328, %v6498
      %v6623 = vadd.f32 %v6329, %v6503
      %v6624 = vadd.f32 %v6330, %v6506
      %v6625 = vadd.f32 %v6331, %v6511
      %v6626 = vadd.f32 %v6332, %v6514
      %v6627 = vadd.f32 %v6333, %v6519
      %v6628 = vadd.f32 %v6334, %v6522
      %v6629 = vadd.f32 %v6335, %v6527
      %v6630 = vadd.f32 %v6336, %v6530
      %v6631 = vadd.f32 %v6337, %v6535
      %v6632 = vadd.f32 %v6338, %v6538
      %v6633 = vadd.f32 %v6339, %v6543
      %v6634 = vadd.f32 %v6340, %v6546
      %v6635 = vadd.f32 %v6341, %v6551
      %v6636 = vadd.f32 %v6342, %v6554
      %v6637 = vadd.f32 %v6343, %v6559
      %v6638 = vadd.f32 %v6344, %v6562
      %v6639 = vadd.f32 %v6345, %v6567
      %v6640 = vadd.f32 %v6346, %v6570
      %v6641 = vadd.f32 %v6347, %v6575
      %v6642 = vadd.f32 %v6348, %v6578
      %v6643 = vadd.f32 %v6349, %v6583
      %v6644 = vadd.f32 %v6350, %v6586
      %v6645 = vadd.f32 %v6351, %v6591
      %v6646 = vadd.f32 %v6352, %v6594
      %v6647 = vadd.f32 %v6353, %v6599
      %v6648 = vadd.f32 %v6354, %v6602
      %v6649 = vadd.f32 %v6355, %v6607
      %v6650 = vadd.f32 %v6356, %v6610
      %v6651 = vadd.f32 %v6357, %v6615
      %v6652 = vadd.f32 %v6358, %v6618
      %v6653 = vld [vmem:[%s5214 + $0x2] sm:$0xff]
      %v6654 = vld [vmem:[%s5214 + $0xa] sm:$0xff]
      %v6655 = vld [vmem:[%s5214 + $0x1a] sm:$0xff]
      %v6656 = vld [vmem:[%s5214 + $0x22] sm:$0xff]
      %v6657 = vld [vmem:[%s5214 + $0x32] sm:$0xff]
      %v6658 = vld [vmem:[%s5214 + $0x3a] sm:$0xff]
      %v6659 = vld [vmem:[%s5214 + $0x4a] sm:$0xff]
      %v6660 = vld [vmem:[%s5214 + $0x52] sm:$0xff]
      %v6661 = vld [vmem:[%s5214 + $0x62] sm:$0xff]
      %v6662 = vld [vmem:[%s5214 + $0x6a] sm:$0xff]
      %v6663 = vld [vmem:[%s5214 + $0x7a] sm:$0xff]
      %v6664 = vld [vmem:[%s5214 + $0x82] sm:$0xff]
      %v6665 = vld [vmem:[%s5214 + $0x92] sm:$0xff]
      %v6666 = vld [vmem:[%s5214 + $0x9a] sm:$0xff]
      %v6667 = vld [vmem:[%s5214 + $0xaa] sm:$0xff]
      %v6668 = vld [vmem:[%s5214 + $0xb2] sm:$0xff]
      %v6669 = vld [vmem:[%s5214 + $0xc2] sm:$0xff]
      %v6670 = vld [vmem:[%s5214 + $0xca] sm:$0xff]
      %v6671 = vld [vmem:[%s5214 + $0xda] sm:$0xff]
      %v6672 = vld [vmem:[%s5214 + $0xe2] sm:$0xff]
      %v6673 = vld [vmem:[%s5214 + $0xf2] sm:$0xff]
      %v6674 = vld [vmem:[%s5214 + $0xfa] sm:$0xff]
      %v6675 = vld [vmem:[%s5214 + $0x10a] sm:$0xff]
      %v6676 = vld [vmem:[%s5214 + $0x112] sm:$0xff]
      %v6677 = vld [vmem:[%s5214 + $0x122] sm:$0xff]
      %v6678 = vld [vmem:[%s5214 + $0x12a] sm:$0xff]
      %v6679 = vld [vmem:[%s5214 + $0x13a] sm:$0xff]
      %v6680 = vld [vmem:[%s5214 + $0x142] sm:$0xff]
      %v6681 = vld [vmem:[%s5214 + $0x152] sm:$0xff]
      %v6682 = vld [vmem:[%s5214 + $0x15a] sm:$0xff]
      %v6683 = vld [vmem:[%s5214 + $0x16a] sm:$0xff]
      %v6684 = vld [vmem:[%s5214 + $0x172] sm:$0xff]
      %v6685 = vpack.c.bf16 %v6654, %v6653
      %v6686 = vpack.c.bf16 %v6656, %v6655
      %v6687 = vpack.c.bf16 %v6658, %v6657
      %v6688 = vpack.c.bf16 %v6660, %v6659
      %v6689 = vpack.c.bf16 %v6662, %v6661
      %v6690 = vpack.c.bf16 %v6664, %v6663
      %v6691 = vpack.c.bf16 %v6666, %v6665
      %v6692 = vpack.c.bf16 %v6668, %v6667
      %v6693 = vpack.c.bf16 %v6670, %v6669
      %v6694 = vpack.c.bf16 %v6672, %v6671
      %v6695 = vpack.c.bf16 %v6674, %v6673
      %v6696 = vpack.c.bf16 %v6676, %v6675
      %v6697 = vpack.c.bf16 %v6678, %v6677
      %v6698 = vpack.c.bf16 %v6680, %v6679
      %v6699 = vpack.c.bf16 %v6682, %v6681
      %v6700 = vpack.c.bf16 %v6684, %v6683
      %s6701 = scalar_lea.vmem %s6, 10
      %v6702 = vld [vmem:[%s6701] sm:$0x3]
      %v6704 = vsel %vm2271, %v6685, 0
      %v6707 = vsel %vm2271, %v6686, 0
      %v6710 = vsel %vm2271, %v6687, 0
      %v6713 = vsel %vm2271, %v6688, 0
      %v6716 = vsel %vm2271, %v6689, 0
      %v6719 = vsel %vm2271, %v6690, 0
      %v6722 = vsel %vm2271, %v6691, 0
      %v6725 = vsel %vm2271, %v6692, 0
      %v6728 = vsel %vm2271, %v6693, 0
      %v6731 = vsel %vm2271, %v6694, 0
      %v6734 = vsel %vm2271, %v6695, 0
      %v6737 = vsel %vm2271, %v6696, 0
      %v6740 = vsel %vm2271, %v6697, 0
      %v6743 = vsel %vm2271, %v6698, 0
      %v6746 = vsel %vm2271, %v6699, 0
      %v6749 = vsel %vm2271, %v6700, 0
      %v6752 = vsel %vm5394, %v6702, 0
      %6754 = vmatprep.subr.bf16.mxu0 0
      %6755 = vmatpush1.bf16.msra.mxu0 %v6752
      %6756 = vmatprep.subr.bf16.mxu0 0
      %6757 = vmatpush1.bf16.msra.mxu0 0
      %6758 = vmatprep.subr.bf16.mxu0 0
      %6759 = vmatpush1.bf16.msra.mxu0 0
      %6760 = vmatprep.subr.bf16.mxu0 0
      %6761 = vmatpush1.bf16.msra.mxu0 0
      %6762 = vmatprep.subr.bf16.mxu0 0
      %6763 = vmatpush1.bf16.msra.mxu0 0
      %6764 = vmatprep.subr.bf16.mxu0 0
      %6765 = vmatpush1.bf16.msra.mxu0 0
      %6766 = vmatprep.subr.bf16.mxu0 0
      %6767 = vmatpush1.bf16.msra.mxu0 0
      %6768 = vmatprep.subr.bf16.mxu0 0
      %6769 = vmatpush1.bf16.msra.mxu0 0
      %6770 = vmatprep.subr.bf16.mxu0 0
      %6771 = vmatpush1.bf16.msra.mxu0 0
      %6772 = vmatprep.subr.bf16.mxu0 0
      %6773 = vmatpush1.bf16.msra.mxu0 0
      %6774 = vmatprep.subr.bf16.mxu0 0
      %6775 = vmatpush1.bf16.msra.mxu0 0
      %6776 = vmatprep.subr.bf16.mxu0 0
      %6777 = vmatpush1.bf16.msra.mxu0 0
      %6778 = vmatprep.subr.bf16.mxu0 0
      %6779 = vmatpush1.bf16.msra.mxu0 0
      %6780 = vmatprep.subr.bf16.mxu0 0
      %6781 = vmatpush1.bf16.msra.mxu0 0
      %6782 = vmatprep.subr.bf16.mxu0 0
      %6783 = vmatpush1.bf16.msra.mxu0 0
      %6784 = vmatprep.subr.bf16.mxu0 0
      %6785 = vmatpush1.bf16.msra.mxu0 0
      %6786 = vmatprep.mubr.bf16.mxu0 0
      %6787 = vmatmul.mubr.bf16.gmra.mrb[0].mxu0 %v6704
      %v6788 = vpop.f32.mrb[0].mxu0
      %v6789 = vadd.f32 0.0, %v6788
      %v6790 = vpop.f32.mrb[0].mxu0
      %v6791 = vpop.f32.mrb[0].mxu0
      %v6792 = vadd.f32 0.0, %v6791
      %v6793 = vpop.f32.mrb[0].mxu0
      %6794 = vmatprep.mubr.bf16.mxu0 0
      %6795 = vmatmul.mubr.bf16.gmra.mrb[0].mxu0 %v6707
      %v6796 = vpop.f32.mrb[0].mxu0
      %v6797 = vadd.f32 0.0, %v6796
      %v6798 = vpop.f32.mrb[0].mxu0
      %v6799 = vpop.f32.mrb[0].mxu0
      %v6800 = vadd.f32 0.0, %v6799
      %v6801 = vpop.f32.mrb[0].mxu0
      %6802 = vmatprep.mubr.bf16.mxu0 0
      %6803 = vmatmul.mubr.bf16.gmra.mrb[0].mxu0 %v6710
      %v6804 = vpop.f32.mrb[0].mxu0
      %v6805 = vadd.f32 0.0, %v6804
      %v6806 = vpop.f32.mrb[0].mxu0
      %v6807 = vpop.f32.mrb[0].mxu0
      %v6808 = vadd.f32 0.0, %v6807
      %v6809 = vpop.f32.mrb[0].mxu0
      %6810 = vmatprep.mubr.bf16.mxu0 0
      %6811 = vmatmul.mubr.bf16.gmra.mrb[0].mxu0 %v6713
      %v6812 = vpop.f32.mrb[0].mxu0
      %v6813 = vadd.f32 0.0, %v6812
      %v6814 = vpop.f32.mrb[0].mxu0
      %v6815 = vpop.f32.mrb[0].mxu0
      %v6816 = vadd.f32 0.0, %v6815
      %v6817 = vpop.f32.mrb[0].mxu0
      %6818 = vmatprep.mubr.bf16.mxu0 0
      %6819 = vmatmul.mubr.bf16.gmra.mrb[0].mxu0 %v6716
      %v6820 = vpop.f32.mrb[0].mxu0
      %v6821 = vadd.f32 0.0, %v6820
      %v6822 = vpop.f32.mrb[0].mxu0
      %v6823 = vpop.f32.mrb[0].mxu0
      %v6824 = vadd.f32 0.0, %v6823
      %v6825 = vpop.f32.mrb[0].mxu0
      %6826 = vmatprep.mubr.bf16.mxu0 0
      %6827 = vmatmul.mubr.bf16.gmra.mrb[0].mxu0 %v6719
      %v6828 = vpop.f32.mrb[0].mxu0
      %v6829 = vadd.f32 0.0, %v6828
      %v6830 = vpop.f32.mrb[0].mxu0
      %v6831 = vpop.f32.mrb[0].mxu0
      %v6832 = vadd.f32 0.0, %v6831
      %v6833 = vpop.f32.mrb[0].mxu0
      %6834 = vmatprep.mubr.bf16.mxu0 0
      %6835 = vmatmul.mubr.bf16.gmra.mrb[0].mxu0 %v6722
      %v6836 = vpop.f32.mrb[0].mxu0
      %v6837 = vadd.f32 0.0, %v6836
      %v6838 = vpop.f32.mrb[0].mxu0
      %v6839 = vpop.f32.mrb[0].mxu0
      %v6840 = vadd.f32 0.0, %v6839
      %v6841 = vpop.f32.mrb[0].mxu0
      %6842 = vmatprep.mubr.bf16.mxu0 0
      %6843 = vmatmul.mubr.bf16.gmra.mrb[0].mxu0 %v6725
      %v6844 = vpop.f32.mrb[0].mxu0
      %v6845 = vadd.f32 0.0, %v6844
      %v6846 = vpop.f32.mrb[0].mxu0
      %v6847 = vpop.f32.mrb[0].mxu0
      %v6848 = vadd.f32 0.0, %v6847
      %v6849 = vpop.f32.mrb[0].mxu0
      %6850 = vmatprep.mubr.bf16.mxu0 0
      %6851 = vmatmul.mubr.bf16.gmra.mrb[0].mxu0 %v6728
      %v6852 = vpop.f32.mrb[0].mxu0
      %v6853 = vadd.f32 0.0, %v6852
      %v6854 = vpop.f32.mrb[0].mxu0
      %v6855 = vpop.f32.mrb[0].mxu0
      %v6856 = vadd.f32 0.0, %v6855
      %v6857 = vpop.f32.mrb[0].mxu0
      %6858 = vmatprep.mubr.bf16.mxu0 0
      %6859 = vmatmul.mubr.bf16.gmra.mrb[0].mxu0 %v6731
      %v6860 = vpop.f32.mrb[0].mxu0
      %v6861 = vadd.f32 0.0, %v6860
      %v6862 = vpop.f32.mrb[0].mxu0
      %v6863 = vpop.f32.mrb[0].mxu0
      %v6864 = vadd.f32 0.0, %v6863
      %v6865 = vpop.f32.mrb[0].mxu0
      %6866 = vmatprep.mubr.bf16.mxu0 0
      %6867 = vmatmul.mubr.bf16.gmra.mrb[0].mxu0 %v6734
      %v6868 = vpop.f32.mrb[0].mxu0
      %v6869 = vadd.f32 0.0, %v6868
      %v6870 = vpop.f32.mrb[0].mxu0
      %v6871 = vpop.f32.mrb[0].mxu0
      %v6872 = vadd.f32 0.0, %v6871
      %v6873 = vpop.f32.mrb[0].mxu0
      %6874 = vmatprep.mubr.bf16.mxu0 0
      %6875 = vmatmul.mubr.bf16.gmra.mrb[0].mxu0 %v6737
      %v6876 = vpop.f32.mrb[0].mxu0
      %v6877 = vadd.f32 0.0, %v6876
      %v6878 = vpop.f32.mrb[0].mxu0
      %v6879 = vpop.f32.mrb[0].mxu0
      %v6880 = vadd.f32 0.0, %v6879
      %v6881 = vpop.f32.mrb[0].mxu0
      %6882 = vmatprep.mubr.bf16.mxu0 0
      %6883 = vmatmul.mubr.bf16.gmra.mrb[0].mxu0 %v6740
      %v6884 = vpop.f32.mrb[0].mxu0
      %v6885 = vadd.f32 0.0, %v6884
      %v6886 = vpop.f32.mrb[0].mxu0
      %v6887 = vpop.f32.mrb[0].mxu0
      %v6888 = vadd.f32 0.0, %v6887
      %v6889 = vpop.f32.mrb[0].mxu0
      %6890 = vmatprep.mubr.bf16.mxu0 0
      %6891 = vmatmul.mubr.bf16.gmra.mrb[0].mxu0 %v6743
      %v6892 = vpop.f32.mrb[0].mxu0
      %v6893 = vadd.f32 0.0, %v6892
      %v6894 = vpop.f32.mrb[0].mxu0
      %v6895 = vpop.f32.mrb[0].mxu0
      %v6896 = vadd.f32 0.0, %v6895
      %v6897 = vpop.f32.mrb[0].mxu0
      %6898 = vmatprep.mubr.bf16.mxu0 0
      %6899 = vmatmul.mubr.bf16.gmra.mrb[0].mxu0 %v6746
      %v6900 = vpop.f32.mrb[0].mxu0
      %v6901 = vadd.f32 0.0, %v6900
      %v6902 = vpop.f32.mrb[0].mxu0
      %v6903 = vpop.f32.mrb[0].mxu0
      %v6904 = vadd.f32 0.0, %v6903
      %v6905 = vpop.f32.mrb[0].mxu0
      %6906 = vmatprep.mubr.bf16.mxu0 0
      %6907 = vmatmul.mubr.bf16.gmra.mrb[0].mxu0 %v6749
      %v6908 = vpop.f32.mrb[0].mxu0
      %v6909 = vadd.f32 0.0, %v6908
      %v6910 = vpop.f32.mrb[0].mxu0
      %v6911 = vpop.f32.mrb[0].mxu0
      %v6912 = vadd.f32 0.0, %v6911
      %v6913 = vpop.f32.mrb[0].mxu0
      %6914 = vdwg.mxu0
      %v6915 = vadd.f32 %v6621, %v6789
      %v6916 = vadd.f32 %v6622, %v6792
      %v6917 = vadd.f32 %v6623, %v6797
      %v6918 = vadd.f32 %v6624, %v6800
      %v6919 = vadd.f32 %v6625, %v6805
      %v6920 = vadd.f32 %v6626, %v6808
      %v6921 = vadd.f32 %v6627, %v6813
      %v6922 = vadd.f32 %v6628, %v6816
      %v6923 = vadd.f32 %v6629, %v6821
      %v6924 = vadd.f32 %v6630, %v6824
      %v6925 = vadd.f32 %v6631, %v6829
      %v6926 = vadd.f32 %v6632, %v6832
      %v6927 = vadd.f32 %v6633, %v6837
      %v6928 = vadd.f32 %v6634, %v6840
      %v6929 = vadd.f32 %v6635, %v6845
      %v6930 = vadd.f32 %v6636, %v6848
      %v6931 = vadd.f32 %v6637, %v6853
      %v6932 = vadd.f32 %v6638, %v6856
      %v6933 = vadd.f32 %v6639, %v6861
      %v6934 = vadd.f32 %v6640, %v6864
      %v6935 = vadd.f32 %v6641, %v6869
      %v6936 = vadd.f32 %v6642, %v6872
      %v6937 = vadd.f32 %v6643, %v6877
      %v6938 = vadd.f32 %v6644, %v6880
      %v6939 = vadd.f32 %v6645, %v6885
      %v6940 = vadd.f32 %v6646, %v6888
      %v6941 = vadd.f32 %v6647, %v6893
      %v6942 = vadd.f32 %v6648, %v6896
      %v6943 = vadd.f32 %v6649, %v6901
      %v6944 = vadd.f32 %v6650, %v6904
      %v6945 = vadd.f32 %v6651, %v6909
      %v6946 = vadd.f32 %v6652, %v6912
      %s6947 = scalar_lea.vmem [#allocation3], 48
      %v6948 = vld [vmem:[%s6947] sm:$0xff]
      %v6949 = vld [vmem:[%s6947 + $0x8] sm:$0xff]
      %v6950 = vld [vmem:[%s6947 + $0x18] sm:$0xff]
      %v6951 = vld [vmem:[%s6947 + $0x20] sm:$0xff]
      %v6952 = vld [vmem:[%s6947 + $0x30] sm:$0xff]
      %v6953 = vld [vmem:[%s6947 + $0x38] sm:$0xff]
      %v6954 = vld [vmem:[%s6947 + $0x48] sm:$0xff]
      %v6955 = vld [vmem:[%s6947 + $0x50] sm:$0xff]
      %v6956 = vld [vmem:[%s6947 + $0x60] sm:$0xff]
      %v6957 = vld [vmem:[%s6947 + $0x68] sm:$0xff]
      %v6958 = vld [vmem:[%s6947 + $0x78] sm:$0xff]
      %v6959 = vld [vmem:[%s6947 + $0x80] sm:$0xff]
      %v6960 = vld [vmem:[%s6947 + $0x90] sm:$0xff]
      %v6961 = vld [vmem:[%s6947 + $0x98] sm:$0xff]
      %v6962 = vld [vmem:[%s6947 + $0xa8] sm:$0xff]
      %v6963 = vld [vmem:[%s6947 + $0xb0] sm:$0xff]
      %v6964 = vld [vmem:[%s6947 + $0xc0] sm:$0xff]
      %v6965 = vld [vmem:[%s6947 + $0xc8] sm:$0xff]
      %v6966 = vld [vmem:[%s6947 + $0xd8] sm:$0xff]
      %v6967 = vld [vmem:[%s6947 + $0xe0] sm:$0xff]
      %v6968 = vld [vmem:[%s6947 + $0xf0] sm:$0xff]
      %v6969 = vld [vmem:[%s6947 + $0xf8] sm:$0xff]
      %v6970 = vld [vmem:[%s6947 + $0x108] sm:$0xff]
      %v6971 = vld [vmem:[%s6947 + $0x110] sm:$0xff]
      %v6972 = vld [vmem:[%s6947 + $0x120] sm:$0xff]
      %v6973 = vld [vmem:[%s6947 + $0x128] sm:$0xff]
      %v6974 = vld [vmem:[%s6947 + $0x138] sm:$0xff]
      %v6975 = vld [vmem:[%s6947 + $0x140] sm:$0xff]
      %v6976 = vld [vmem:[%s6947 + $0x150] sm:$0xff]
      %v6977 = vld [vmem:[%s6947 + $0x158] sm:$0xff]
      %v6978 = vld [vmem:[%s6947 + $0x168] sm:$0xff]
      %v6979 = vld [vmem:[%s6947 + $0x170] sm:$0xff]
      %v6980 = vpack.c.bf16 %v6949, %v6948
      %v6981 = vpack.c.bf16 %v6951, %v6950
      %v6982 = vpack.c.bf16 %v6953, %v6952
      %v6983 = vpack.c.bf16 %v6955, %v6954
      %v6984 = vpack.c.bf16 %v6957, %v6956
      %v6985 = vpack.c.bf16 %v6959, %v6958
      %v6986 = vpack.c.bf16 %v6961, %v6960
      %v6987 = vpack.c.bf16 %v6963, %v6962
      %v6988 = vpack.c.bf16 %v6965, %v6964
      %v6989 = vpack.c.bf16 %v6967, %v6966
      %v6990 = vpack.c.bf16 %v6969, %v6968
      %v6991 = vpack.c.bf16 %v6971, %v6970
      %v6992 = vpack.c.bf16 %v6973, %v6972
      %v6993 = vpack.c.bf16 %v6975, %v6974
      %v6994 = vpack.c.bf16 %v6977, %v6976
      %v6995 = vpack.c.bf16 %v6979, %v6978
      %s6996 = scalar_lea.vmem %s6, 12
      %v6997 = vld [vmem:[%s6996] sm:$0x3]
      %v6999 = vsel %vm2271, %v6980, 0
      %v7002 = vsel %vm2271, %v6981, 0
      %v7005 = vsel %vm2271, %v6982, 0
      %v7008 = vsel %vm2271, %v6983, 0
      %v7011 = vsel %vm2271, %v6984, 0
      %v7014 = vsel %vm2271, %v6985, 0
      %v7017 = vsel %vm2271, %v6986, 0
      %v7020 = vsel %vm2271, %v6987, 0
      %v7023 = vsel %vm2271, %v6988, 0
      %v7026 = vsel %vm2271, %v6989, 0
      %v7029 = vsel %vm2271, %v6990, 0
      %v7032 = vsel %vm2271, %v6991, 0
      %v7035 = vsel %vm2271, %v6992, 0
      %v7038 = vsel %vm2271, %v6993, 0
      %v7041 = vsel %vm2271, %v6994, 0
      %v7044 = vsel %vm2271, %v6995, 0
      %v7047 = vsel %vm5394, %v6997, 0
      %7049 = vmatprep.subr.bf16.mxu0 0
      %7050 = vmatpush1.bf16.msra.mxu0 %v7047
      %7051 = vmatprep.subr.bf16.mxu0 0
      %7052 = vmatpush1.bf16.msra.mxu0 0
      %7053 = vmatprep.subr.bf16.mxu0 0
      %7054 = vmatpush1.bf16.msra.mxu0 0
      %7055 = vmatprep.subr.bf16.mxu0 0
      %7056 = vmatpush1.bf16.msra.mxu0 0
      %7057 = vmatprep.subr.bf16.mxu0 0
      %7058 = vmatpush1.bf16.msra.mxu0 0
      %7059 = vmatprep.subr.bf16.mxu0 0
      %7060 = vmatpush1.bf16.msra.mxu0 0
      %7061 = vmatprep.subr.bf16.mxu0 0
      %7062 = vmatpush1.bf16.msra.mxu0 0
      %7063 = vmatprep.subr.bf16.mxu0 0
      %7064 = vmatpush1.bf16.msra.mxu0 0
      %7065 = vmatprep.subr.bf16.mxu0 0
      %7066 = vmatpush1.bf16.msra.mxu0 0
      %7067 = vmatprep.subr.bf16.mxu0 0
      %7068 = vmatpush1.bf16.msra.mxu0 0
      %7069 = vmatprep.subr.bf16.mxu0 0
      %7070 = vmatpush1.bf16.msra.mxu0 0
      %7071 = vmatprep.subr.bf16.mxu0 0
      %7072 = vmatpush1.bf16.msra.mxu0 0
      %7073 = vmatprep.subr.bf16.mxu0 0
      %7074 = vmatpush1.bf16.msra.mxu0 0
      %7075 = vmatprep.subr.bf16.mxu0 0
      %7076 = vmatpush1.bf16.msra.mxu0 0
      %7077 = vmatprep.subr.bf16.mxu0 0
      %7078 = vmatpush1.bf16.msra.mxu0 0
      %7079 = vmatprep.subr.bf16.mxu0 0
      %7080 = vmatpush1.bf16.msra.mxu0 0
      %7081 = vmatprep.mubr.bf16.mxu0 0
      %7082 = vmatmul.mubr.bf16.gmra.mrb[0].mxu0 %v6999
      %v7083 = vpop.f32.mrb[0].mxu0
      %v7084 = vadd.f32 0.0, %v7083
      %v7085 = vpop.f32.mrb[0].mxu0
      %v7086 = vpop.f32.mrb[0].mxu0
      %v7087 = vadd.f32 0.0, %v7086
      %v7088 = vpop.f32.mrb[0].mxu0
      %7089 = vmatprep.mubr.bf16.mxu0 0
      %7090 = vmatmul.mubr.bf16.gmra.mrb[0].mxu0 %v7002
      %v7091 = vpop.f32.mrb[0].mxu0
      %v7092 = vadd.f32 0.0, %v7091
      %v7093 = vpop.f32.mrb[0].mxu0
      %v7094 = vpop.f32.mrb[0].mxu0
      %v7095 = vadd.f32 0.0, %v7094
      %v7096 = vpop.f32.mrb[0].mxu0
      %7097 = vmatprep.mubr.bf16.mxu0 0
      %7098 = vmatmul.mubr.bf16.gmra.mrb[0].mxu0 %v7005
      %v7099 = vpop.f32.mrb[0].mxu0
      %v7100 = vadd.f32 0.0, %v7099
      %v7101 = vpop.f32.mrb[0].mxu0
      %v7102 = vpop.f32.mrb[0].mxu0
      %v7103 = vadd.f32 0.0, %v7102
      %v7104 = vpop.f32.mrb[0].mxu0
      %7105 = vmatprep.mubr.bf16.mxu0 0
      %7106 = vmatmul.mubr.bf16.gmra.mrb[0].mxu0 %v7008
      %v7107 = vpop.f32.mrb[0].mxu0
      %v7108 = vadd.f32 0.0, %v7107
      %v7109 = vpop.f32.mrb[0].mxu0
      %v7110 = vpop.f32.mrb[0].mxu0
      %v7111 = vadd.f32 0.0, %v7110
      %v7112 = vpop.f32.mrb[0].mxu0
      %7113 = vmatprep.mubr.bf16.mxu0 0
      %7114 = vmatmul.mubr.bf16.gmra.mrb[0].mxu0 %v7011
      %v7115 = vpop.f32.mrb[0].mxu0
      %v7116 = vadd.f32 0.0, %v7115
      %v7117 = vpop.f32.mrb[0].mxu0
      %v7118 = vpop.f32.mrb[0].mxu0
      %v7119 = vadd.f32 0.0, %v7118
      %v7120 = vpop.f32.mrb[0].mxu0
      %7121 = vmatprep.mubr.bf16.mxu0 0
      %7122 = vmatmul.mubr.bf16.gmra.mrb[0].mxu0 %v7014
      %v7123 = vpop.f32.mrb[0].mxu0
      %v7124 = vadd.f32 0.0, %v7123
      %v7125 = vpop.f32.mrb[0].mxu0
      %v7126 = vpop.f32.mrb[0].mxu0
      %v7127 = vadd.f32 0.0, %v7126
      %v7128 = vpop.f32.mrb[0].mxu0
      %7129 = vmatprep.mubr.bf16.mxu0 0
      %7130 = vmatmul.mubr.bf16.gmra.mrb[0].mxu0 %v7017
      %v7131 = vpop.f32.mrb[0].mxu0
      %v7132 = vadd.f32 0.0, %v7131
      %v7133 = vpop.f32.mrb[0].mxu0
      %v7134 = vpop.f32.mrb[0].mxu0
      %v7135 = vadd.f32 0.0, %v7134
      %v7136 = vpop.f32.mrb[0].mxu0
      %7137 = vmatprep.mubr.bf16.mxu0 0
      %7138 = vmatmul.mubr.bf16.gmra.mrb[0].mxu0 %v7020
      %v7139 = vpop.f32.mrb[0].mxu0
      %v7140 = vadd.f32 0.0, %v7139
      %v7141 = vpop.f32.mrb[0].mxu0
      %v7142 = vpop.f32.mrb[0].mxu0
      %v7143 = vadd.f32 0.0, %v7142
      %v7144 = vpop.f32.mrb[0].mxu0
      %7145 = vmatprep.mubr.bf16.mxu0 0
      %7146 = vmatmul.mubr.bf16.gmra.mrb[0].mxu0 %v7023
      %v7147 = vpop.f32.mrb[0].mxu0
      %v7148 = vadd.f32 0.0, %v7147
      %v7149 = vpop.f32.mrb[0].mxu0
      %v7150 = vpop.f32.mrb[0].mxu0
      %v7151 = vadd.f32 0.0, %v7150
      %v7152 = vpop.f32.mrb[0].mxu0
      %7153 = vmatprep.mubr.bf16.mxu0 0
      %7154 = vmatmul.mubr.bf16.gmra.mrb[0].mxu0 %v7026
      %v7155 = vpop.f32.mrb[0].mxu0
      %v7156 = vadd.f32 0.0, %v7155
      %v7157 = vpop.f32.mrb[0].mxu0
      %v7158 = vpop.f32.mrb[0].mxu0
      %v7159 = vadd.f32 0.0, %v7158
      %v7160 = vpop.f32.mrb[0].mxu0
      %7161 = vmatprep.mubr.bf16.mxu0 0
      %7162 = vmatmul.mubr.bf16.gmra.mrb[0].mxu0 %v7029
      %v7163 = vpop.f32.mrb[0].mxu0
      %v7164 = vadd.f32 0.0, %v7163
      %v7165 = vpop.f32.mrb[0].mxu0
      %v7166 = vpop.f32.mrb[0].mxu0
      %v7167 = vadd.f32 0.0, %v7166
      %v7168 = vpop.f32.mrb[0].mxu0
      %7169 = vmatprep.mubr.bf16.mxu0 0
      %7170 = vmatmul.mubr.bf16.gmra.mrb[0].mxu0 %v7032
      %v7171 = vpop.f32.mrb[0].mxu0
      %v7172 = vadd.f32 0.0, %v7171
      %v7173 = vpop.f32.mrb[0].mxu0
      %v7174 = vpop.f32.mrb[0].mxu0
      %v7175 = vadd.f32 0.0, %v7174
      %v7176 = vpop.f32.mrb[0].mxu0
      %7177 = vmatprep.mubr.bf16.mxu0 0
      %7178 = vmatmul.mubr.bf16.gmra.mrb[0].mxu0 %v7035
      %v7179 = vpop.f32.mrb[0].mxu0
      %v7180 = vadd.f32 0.0, %v7179
      %v7181 = vpop.f32.mrb[0].mxu0
      %v7182 = vpop.f32.mrb[0].mxu0
      %v7183 = vadd.f32 0.0, %v7182
      %v7184 = vpop.f32.mrb[0].mxu0
      %7185 = vmatprep.mubr.bf16.mxu0 0
      %7186 = vmatmul.mubr.bf16.gmra.mrb[0].mxu0 %v7038
      %v7187 = vpop.f32.mrb[0].mxu0
      %v7188 = vadd.f32 0.0, %v7187
      %v7189 = vpop.f32.mrb[0].mxu0
      %v7190 = vpop.f32.mrb[0].mxu0
      %v7191 = vadd.f32 0.0, %v7190
      %v7192 = vpop.f32.mrb[0].mxu0
      %7193 = vmatprep.mubr.bf16.mxu0 0
      %7194 = vmatmul.mubr.bf16.gmra.mrb[0].mxu0 %v7041
      %v7195 = vpop.f32.mrb[0].mxu0
      %v7196 = vadd.f32 0.0, %v7195
      %v7197 = vpop.f32.mrb[0].mxu0
      %v7198 = vpop.f32.mrb[0].mxu0
      %v7199 = vadd.f32 0.0, %v7198
      %v7200 = vpop.f32.mrb[0].mxu0
      %7201 = vmatprep.mubr.bf16.mxu0 0
      %7202 = vmatmul.mubr.bf16.gmra.mrb[0].mxu0 %v7044
      %v7203 = vpop.f32.mrb[0].mxu0
      %v7204 = vadd.f32 0.0, %v7203
      %v7205 = vpop.f32.mrb[0].mxu0
      %v7206 = vpop.f32.mrb[0].mxu0
      %v7207 = vadd.f32 0.0, %v7206
      %v7208 = vpop.f32.mrb[0].mxu0
      %7209 = vdwg.mxu0
      %v7210 = vadd.f32 %v6915, %v7084
      %v7211 = vadd.f32 %v6916, %v7087
      %v7212 = vadd.f32 %v6917, %v7092
      %v7213 = vadd.f32 %v6918, %v7095
      %v7214 = vadd.f32 %v6919, %v7100
      %v7215 = vadd.f32 %v6920, %v7103
      %v7216 = vadd.f32 %v6921, %v7108
      %v7217 = vadd.f32 %v6922, %v7111
      %v7218 = vadd.f32 %v6923, %v7116
      %v7219 = vadd.f32 %v6924, %v7119
      %v7220 = vadd.f32 %v6925, %v7124
      %v7221 = vadd.f32 %v6926, %v7127
      %v7222 = vadd.f32 %v6927, %v7132
      %v7223 = vadd.f32 %v6928, %v7135
      %v7224 = vadd.f32 %v6929, %v7140
      %v7225 = vadd.f32 %v6930, %v7143
      %v7226 = vadd.f32 %v6931, %v7148
      %v7227 = vadd.f32 %v6932, %v7151
      %v7228 = vadd.f32 %v6933, %v7156
      %v7229 = vadd.f32 %v6934, %v7159
      %v7230 = vadd.f32 %v6935, %v7164
      %v7231 = vadd.f32 %v6936, %v7167
      %v7232 = vadd.f32 %v6937, %v7172
      %v7233 = vadd.f32 %v6938, %v7175
      %v7234 = vadd.f32 %v6939, %v7180
      %v7235 = vadd.f32 %v6940, %v7183
      %v7236 = vadd.f32 %v6941, %v7188
      %v7237 = vadd.f32 %v6942, %v7191
      %v7238 = vadd.f32 %v6943, %v7196
      %v7239 = vadd.f32 %v6944, %v7199
      %v7240 = vadd.f32 %v6945, %v7204
      %v7241 = vadd.f32 %v6946, %v7207
      %v7242 = vld [vmem:[%s6947 + $0x1] sm:$0xff]
      %v7243 = vld [vmem:[%s6947 + $0x9] sm:$0xff]
      %v7244 = vld [vmem:[%s6947 + $0x19] sm:$0xff]
      %v7245 = vld [vmem:[%s6947 + $0x21] sm:$0xff]
      %v7246 = vld [vmem:[%s6947 + $0x31] sm:$0xff]
      %v7247 = vld [vmem:[%s6947 + $0x39] sm:$0xff]
      %v7248 = vld [vmem:[%s6947 + $0x49] sm:$0xff]
      %v7249 = vld [vmem:[%s6947 + $0x51] sm:$0xff]
      %v7250 = vld [vmem:[%s6947 + $0x61] sm:$0xff]
      %v7251 = vld [vmem:[%s6947 + $0x69] sm:$0xff]
      %v7252 = vld [vmem:[%s6947 + $0x79] sm:$0xff]
      %v7253 = vld [vmem:[%s6947 + $0x81] sm:$0xff]
      %v7254 = vld [vmem:[%s6947 + $0x91] sm:$0xff]
      %v7255 = vld [vmem:[%s6947 + $0x99] sm:$0xff]
      %v7256 = vld [vmem:[%s6947 + $0xa9] sm:$0xff]
      %v7257 = vld [vmem:[%s6947 + $0xb1] sm:$0xff]
      %v7258 = vld [vmem:[%s6947 + $0xc1] sm:$0xff]
      %v7259 = vld [vmem:[%s6947 + $0xc9] sm:$0xff]
      %v7260 = vld [vmem:[%s6947 + $0xd9] sm:$0xff]
      %v7261 = vld [vmem:[%s6947 + $0xe1] sm:$0xff]
      %v7262 = vld [vmem:[%s6947 + $0xf1] sm:$0xff]
      %v7263 = vld [vmem:[%s6947 + $0xf9] sm:$0xff]
      %v7264 = vld [vmem:[%s6947 + $0x109] sm:$0xff]
      %v7265 = vld [vmem:[%s6947 + $0x111] sm:$0xff]
      %v7266 = vld [vmem:[%s6947 + $0x121] sm:$0xff]
      %v7267 = vld [vmem:[%s6947 + $0x129] sm:$0xff]
      %v7268 = vld [vmem:[%s6947 + $0x139] sm:$0xff]
      %v7269 = vld [vmem:[%s6947 + $0x141] sm:$0xff]
      %v7270 = vld [vmem:[%s6947 + $0x151] sm:$0xff]
      %v7271 = vld [vmem:[%s6947 + $0x159] sm:$0xff]
      %v7272 = vld [vmem:[%s6947 + $0x169] sm:$0xff]
      %v7273 = vld [vmem:[%s6947 + $0x171] sm:$0xff]
      %v7274 = vpack.c.bf16 %v7243, %v7242
      %v7275 = vpack.c.bf16 %v7245, %v7244
      %v7276 = vpack.c.bf16 %v7247, %v7246
      %v7277 = vpack.c.bf16 %v7249, %v7248
      %v7278 = vpack.c.bf16 %v7251, %v7250
      %v7279 = vpack.c.bf16 %v7253, %v7252
      %v7280 = vpack.c.bf16 %v7255, %v7254
      %v7281 = vpack.c.bf16 %v7257, %v7256
      %v7282 = vpack.c.bf16 %v7259, %v7258
      %v7283 = vpack.c.bf16 %v7261, %v7260
      %v7284 = vpack.c.bf16 %v7263, %v7262
      %v7285 = vpack.c.bf16 %v7265, %v7264
      %v7286 = vpack.c.bf16 %v7267, %v7266
      %v7287 = vpack.c.bf16 %v7269, %v7268
      %v7288 = vpack.c.bf16 %v7271, %v7270
      %v7289 = vpack.c.bf16 %v7273, %v7272
      %s7290 = scalar_lea.vmem %s6, 14
      %v7291 = vld [vmem:[%s7290] sm:$0x3]
      %v7293 = vsel %vm2271, %v7274, 0
      %v7296 = vsel %vm2271, %v7275, 0
      %v7299 = vsel %vm2271, %v7276, 0
      %v7302 = vsel %vm2271, %v7277, 0
      %v7305 = vsel %vm2271, %v7278, 0
      %v7308 = vsel %vm2271, %v7279, 0
      %v7311 = vsel %vm2271, %v7280, 0
      %v7314 = vsel %vm2271, %v7281, 0
      %v7317 = vsel %vm2271, %v7282, 0
      %v7320 = vsel %vm2271, %v7283, 0
      %v7323 = vsel %vm2271, %v7284, 0
      %v7326 = vsel %vm2271, %v7285, 0
      %v7329 = vsel %vm2271, %v7286, 0
      %v7332 = vsel %vm2271, %v7287, 0
      %v7335 = vsel %vm2271, %v7288, 0
      %v7338 = vsel %vm2271, %v7289, 0
      %v7341 = vsel %vm5394, %v7291, 0
      %7343 = vmatprep.subr.bf16.mxu0 0
      %7344 = vmatpush1.bf16.msra.mxu0 %v7341
      %7345 = vmatprep.subr.bf16.mxu0 0
      %7346 = vmatpush1.bf16.msra.mxu0 0
      %7347 = vmatprep.subr.bf16.mxu0 0
      %7348 = vmatpush1.bf16.msra.mxu0 0
      %7349 = vmatprep.subr.bf16.mxu0 0
      %7350 = vmatpush1.bf16.msra.mxu0 0
      %7351 = vmatprep.subr.bf16.mxu0 0
      %7352 = vmatpush1.bf16.msra.mxu0 0
      %7353 = vmatprep.subr.bf16.mxu0 0
      %7354 = vmatpush1.bf16.msra.mxu0 0
      %7355 = vmatprep.subr.bf16.mxu0 0
      %7356 = vmatpush1.bf16.msra.mxu0 0
      %7357 = vmatprep.subr.bf16.mxu0 0
      %7358 = vmatpush1.bf16.msra.mxu0 0
      %7359 = vmatprep.subr.bf16.mxu0 0
      %7360 = vmatpush1.bf16.msra.mxu0 0
      %7361 = vmatprep.subr.bf16.mxu0 0
      %7362 = vmatpush1.bf16.msra.mxu0 0
      %7363 = vmatprep.subr.bf16.mxu0 0
      %7364 = vmatpush1.bf16.msra.mxu0 0
      %7365 = vmatprep.subr.bf16.mxu0 0
      %7366 = vmatpush1.bf16.msra.mxu0 0
      %7367 = vmatprep.subr.bf16.mxu0 0
      %7368 = vmatpush1.bf16.msra.mxu0 0
      %7369 = vmatprep.subr.bf16.mxu0 0
      %7370 = vmatpush1.bf16.msra.mxu0 0
      %7371 = vmatprep.subr.bf16.mxu0 0
      %7372 = vmatpush1.bf16.msra.mxu0 0
      %7373 = vmatprep.subr.bf16.mxu0 0
      %7374 = vmatpush1.bf16.msra.mxu0 0
      %7375 = vmatprep.mubr.bf16.mxu0 0
      %7376 = vmatmul.mubr.bf16.gmra.mrb[0].mxu0 %v7293
      %v7377 = vpop.f32.mrb[0].mxu0
      %v7378 = vadd.f32 0.0, %v7377
      %v7379 = vpop.f32.mrb[0].mxu0
      %v7380 = vpop.f32.mrb[0].mxu0
      %v7381 = vadd.f32 0.0, %v7380
      %v7382 = vpop.f32.mrb[0].mxu0
      %7383 = vmatprep.mubr.bf16.mxu0 0
      %7384 = vmatmul.mubr.bf16.gmra.mrb[0].mxu0 %v7296
      %v7385 = vpop.f32.mrb[0].mxu0
      %v7386 = vadd.f32 0.0, %v7385
      %v7387 = vpop.f32.mrb[0].mxu0
      %v7388 = vpop.f32.mrb[0].mxu0
      %v7389 = vadd.f32 0.0, %v7388
      %v7390 = vpop.f32.mrb[0].mxu0
      %7391 = vmatprep.mubr.bf16.mxu0 0
      %7392 = vmatmul.mubr.bf16.gmra.mrb[0].mxu0 %v7299
      %v7393 = vpop.f32.mrb[0].mxu0
      %v7394 = vadd.f32 0.0, %v7393
      %v7395 = vpop.f32.mrb[0].mxu0
      %v7396 = vpop.f32.mrb[0].mxu0
      %v7397 = vadd.f32 0.0, %v7396
      %v7398 = vpop.f32.mrb[0].mxu0
      %7399 = vmatprep.mubr.bf16.mxu0 0
      %7400 = vmatmul.mubr.bf16.gmra.mrb[0].mxu0 %v7302
      %v7401 = vpop.f32.mrb[0].mxu0
      %v7402 = vadd.f32 0.0, %v7401
      %v7403 = vpop.f32.mrb[0].mxu0
      %v7404 = vpop.f32.mrb[0].mxu0
      %v7405 = vadd.f32 0.0, %v7404
      %v7406 = vpop.f32.mrb[0].mxu0
      %7407 = vmatprep.mubr.bf16.mxu0 0
      %7408 = vmatmul.mubr.bf16.gmra.mrb[0].mxu0 %v7305
      %v7409 = vpop.f32.mrb[0].mxu0
      %v7410 = vadd.f32 0.0, %v7409
      %v7411 = vpop.f32.mrb[0].mxu0
      %v7412 = vpop.f32.mrb[0].mxu0
      %v7413 = vadd.f32 0.0, %v7412
      %v7414 = vpop.f32.mrb[0].mxu0
      %7415 = vmatprep.mubr.bf16.mxu0 0
      %7416 = vmatmul.mubr.bf16.gmra.mrb[0].mxu0 %v7308
      %v7417 = vpop.f32.mrb[0].mxu0
      %v7418 = vadd.f32 0.0, %v7417
      %v7419 = vpop.f32.mrb[0].mxu0
      %v7420 = vpop.f32.mrb[0].mxu0
      %v7421 = vadd.f32 0.0, %v7420
      %v7422 = vpop.f32.mrb[0].mxu0
      %7423 = vmatprep.mubr.bf16.mxu0 0
      %7424 = vmatmul.mubr.bf16.gmra.mrb[0].mxu0 %v7311
      %v7425 = vpop.f32.mrb[0].mxu0
      %v7426 = vadd.f32 0.0, %v7425
      %v7427 = vpop.f32.mrb[0].mxu0
      %v7428 = vpop.f32.mrb[0].mxu0
      %v7429 = vadd.f32 0.0, %v7428
      %v7430 = vpop.f32.mrb[0].mxu0
      %7431 = vmatprep.mubr.bf16.mxu0 0
      %7432 = vmatmul.mubr.bf16.gmra.mrb[0].mxu0 %v7314
      %v7433 = vpop.f32.mrb[0].mxu0
      %v7434 = vadd.f32 0.0, %v7433
      %v7435 = vpop.f32.mrb[0].mxu0
      %v7436 = vpop.f32.mrb[0].mxu0
      %v7437 = vadd.f32 0.0, %v7436
      %v7438 = vpop.f32.mrb[0].mxu0
      %7439 = vmatprep.mubr.bf16.mxu0 0
      %7440 = vmatmul.mubr.bf16.gmra.mrb[0].mxu0 %v7317
      %v7441 = vpop.f32.mrb[0].mxu0
      %v7442 = vadd.f32 0.0, %v7441
      %v7443 = vpop.f32.mrb[0].mxu0
      %v7444 = vpop.f32.mrb[0].mxu0
      %v7445 = vadd.f32 0.0, %v7444
      %v7446 = vpop.f32.mrb[0].mxu0
      %7447 = vmatprep.mubr.bf16.mxu0 0
      %7448 = vmatmul.mubr.bf16.gmra.mrb[0].mxu0 %v7320
      %v7449 = vpop.f32.mrb[0].mxu0
      %v7450 = vadd.f32 0.0, %v7449
      %v7451 = vpop.f32.mrb[0].mxu0
      %v7452 = vpop.f32.mrb[0].mxu0
      %v7453 = vadd.f32 0.0, %v7452
      %v7454 = vpop.f32.mrb[0].mxu0
      %7455 = vmatprep.mubr.bf16.mxu0 0
      %7456 = vmatmul.mubr.bf16.gmra.mrb[0].mxu0 %v7323
      %v7457 = vpop.f32.mrb[0].mxu0
      %v7458 = vadd.f32 0.0, %v7457
      %v7459 = vpop.f32.mrb[0].mxu0
      %v7460 = vpop.f32.mrb[0].mxu0
      %v7461 = vadd.f32 0.0, %v7460
      %v7462 = vpop.f32.mrb[0].mxu0
      %7463 = vmatprep.mubr.bf16.mxu0 0
      %7464 = vmatmul.mubr.bf16.gmra.mrb[0].mxu0 %v7326
      %v7465 = vpop.f32.mrb[0].mxu0
      %v7466 = vadd.f32 0.0, %v7465
      %v7467 = vpop.f32.mrb[0].mxu0
      %v7468 = vpop.f32.mrb[0].mxu0
      %v7469 = vadd.f32 0.0, %v7468
      %v7470 = vpop.f32.mrb[0].mxu0
      %7471 = vmatprep.mubr.bf16.mxu0 0
      %7472 = vmatmul.mubr.bf16.gmra.mrb[0].mxu0 %v7329
      %v7473 = vpop.f32.mrb[0].mxu0
      %v7474 = vadd.f32 0.0, %v7473
      %v7475 = vpop.f32.mrb[0].mxu0
      %v7476 = vpop.f32.mrb[0].mxu0
      %v7477 = vadd.f32 0.0, %v7476
      %v7478 = vpop.f32.mrb[0].mxu0
      %7479 = vmatprep.mubr.bf16.mxu0 0
      %7480 = vmatmul.mubr.bf16.gmra.mrb[0].mxu0 %v7332
      %v7481 = vpop.f32.mrb[0].mxu0
      %v7482 = vadd.f32 0.0, %v7481
      %v7483 = vpop.f32.mrb[0].mxu0
      %v7484 = vpop.f32.mrb[0].mxu0
      %v7485 = vadd.f32 0.0, %v7484
      %v7486 = vpop.f32.mrb[0].mxu0
      %7487 = vmatprep.mubr.bf16.mxu0 0
      %7488 = vmatmul.mubr.bf16.gmra.mrb[0].mxu0 %v7335
      %v7489 = vpop.f32.mrb[0].mxu0
      %v7490 = vadd.f32 0.0, %v7489
      %v7491 = vpop.f32.mrb[0].mxu0
      %v7492 = vpop.f32.mrb[0].mxu0
      %v7493 = vadd.f32 0.0, %v7492
      %v7494 = vpop.f32.mrb[0].mxu0
      %7495 = vmatprep.mubr.bf16.mxu0 0
      %7496 = vmatmul.mubr.bf16.gmra.mrb[0].mxu0 %v7338
      %v7497 = vpop.f32.mrb[0].mxu0
      %v7498 = vadd.f32 0.0, %v7497
      %v7499 = vpop.f32.mrb[0].mxu0
      %v7500 = vpop.f32.mrb[0].mxu0
      %v7501 = vadd.f32 0.0, %v7500
      %v7502 = vpop.f32.mrb[0].mxu0
      %7503 = vdwg.mxu0
      %v7504 = vadd.f32 %v7210, %v7378
      %v7505 = vadd.f32 %v7211, %v7381
      %v7506 = vadd.f32 %v7212, %v7386
      %v7507 = vadd.f32 %v7213, %v7389
      %v7508 = vadd.f32 %v7214, %v7394
      %v7509 = vadd.f32 %v7215, %v7397
      %v7510 = vadd.f32 %v7216, %v7402
      %v7511 = vadd.f32 %v7217, %v7405
      %v7512 = vadd.f32 %v7218, %v7410
      %v7513 = vadd.f32 %v7219, %v7413
      %v7514 = vadd.f32 %v7220, %v7418
      %v7515 = vadd.f32 %v7221, %v7421
      %v7516 = vadd.f32 %v7222, %v7426
      %v7517 = vadd.f32 %v7223, %v7429
      %v7518 = vadd.f32 %v7224, %v7434
      %v7519 = vadd.f32 %v7225, %v7437
      %v7520 = vadd.f32 %v7226, %v7442
      %v7521 = vadd.f32 %v7227, %v7445
      %v7522 = vadd.f32 %v7228, %v7450
      %v7523 = vadd.f32 %v7229, %v7453
      %v7524 = vadd.f32 %v7230, %v7458
      %v7525 = vadd.f32 %v7231, %v7461
      %v7526 = vadd.f32 %v7232, %v7466
      %v7527 = vadd.f32 %v7233, %v7469
      %v7528 = vadd.f32 %v7234, %v7474
      %v7529 = vadd.f32 %v7235, %v7477
      %v7530 = vadd.f32 %v7236, %v7482
      %v7531 = vadd.f32 %v7237, %v7485
      %v7532 = vadd.f32 %v7238, %v7490
      %v7533 = vadd.f32 %v7239, %v7493
      %v7534 = vadd.f32 %v7240, %v7498
      %v7535 = vadd.f32 %v7241, %v7501
      %v7536 = vld [vmem:[%s6947 + $0x2] sm:$0xff]
      %v7537 = vld [vmem:[%s6947 + $0xa] sm:$0xff]
      %v7538 = vld [vmem:[%s6947 + $0x1a] sm:$0xff]
      %v7539 = vld [vmem:[%s6947 + $0x22] sm:$0xff]
      %v7540 = vld [vmem:[%s6947 + $0x32] sm:$0xff]
      %v7541 = vld [vmem:[%s6947 + $0x3a] sm:$0xff]
      %v7542 = vld [vmem:[%s6947 + $0x4a] sm:$0xff]
      %v7543 = vld [vmem:[%s6947 + $0x52] sm:$0xff]
      %v7544 = vld [vmem:[%s6947 + $0x62] sm:$0xff]
      %v7545 = vld [vmem:[%s6947 + $0x6a] sm:$0xff]
      %v7546 = vld [vmem:[%s6947 + $0x7a] sm:$0xff]
      %v7547 = vld [vmem:[%s6947 + $0x82] sm:$0xff]
      %v7548 = vld [vmem:[%s6947 + $0x92] sm:$0xff]
      %v7549 = vld [vmem:[%s6947 + $0x9a] sm:$0xff]
      %v7550 = vld [vmem:[%s6947 + $0xaa] sm:$0xff]
      %v7551 = vld [vmem:[%s6947 + $0xb2] sm:$0xff]
      %v7552 = vld [vmem:[%s6947 + $0xc2] sm:$0xff]
      %v7553 = vld [vmem:[%s6947 + $0xca] sm:$0xff]
      %v7554 = vld [vmem:[%s6947 + $0xda] sm:$0xff]
      %v7555 = vld [vmem:[%s6947 + $0xe2] sm:$0xff]
      %v7556 = vld [vmem:[%s6947 + $0xf2] sm:$0xff]
      %v7557 = vld [vmem:[%s6947 + $0xfa] sm:$0xff]
      %v7558 = vld [vmem:[%s6947 + $0x10a] sm:$0xff]
      %v7559 = vld [vmem:[%s6947 + $0x112] sm:$0xff]
      %v7560 = vld [vmem:[%s6947 + $0x122] sm:$0xff]
      %v7561 = vld [vmem:[%s6947 + $0x12a] sm:$0xff]
      %v7562 = vld [vmem:[%s6947 + $0x13a] sm:$0xff]
      %v7563 = vld [vmem:[%s6947 + $0x142] sm:$0xff]
      %v7564 = vld [vmem:[%s6947 + $0x152] sm:$0xff]
      %v7565 = vld [vmem:[%s6947 + $0x15a] sm:$0xff]
      %v7566 = vld [vmem:[%s6947 + $0x16a] sm:$0xff]
      %v7567 = vld [vmem:[%s6947 + $0x172] sm:$0xff]
      %v7568 = vpack.c.bf16 %v7537, %v7536
      %v7569 = vpack.c.bf16 %v7539, %v7538
      %v7570 = vpack.c.bf16 %v7541, %v7540
      %v7571 = vpack.c.bf16 %v7543, %v7542
      %v7572 = vpack.c.bf16 %v7545, %v7544
      %v7573 = vpack.c.bf16 %v7547, %v7546
      %v7574 = vpack.c.bf16 %v7549, %v7548
      %v7575 = vpack.c.bf16 %v7551, %v7550
      %v7576 = vpack.c.bf16 %v7553, %v7552
      %v7577 = vpack.c.bf16 %v7555, %v7554
      %v7578 = vpack.c.bf16 %v7557, %v7556
      %v7579 = vpack.c.bf16 %v7559, %v7558
      %v7580 = vpack.c.bf16 %v7561, %v7560
      %v7581 = vpack.c.bf16 %v7563, %v7562
      %v7582 = vpack.c.bf16 %v7565, %v7564
      %v7583 = vpack.c.bf16 %v7567, %v7566
      %s7584 = scalar_lea.vmem %s6, 16
      %v7585 = vld [vmem:[%s7584] sm:$0x3]
      %v7587 = vsel %vm2271, %v7568, 0
      %v7590 = vsel %vm2271, %v7569, 0
      %v7593 = vsel %vm2271, %v7570, 0
      %v7596 = vsel %vm2271, %v7571, 0
      %v7599 = vsel %vm2271, %v7572, 0
      %v7602 = vsel %vm2271, %v7573, 0
      %v7605 = vsel %vm2271, %v7574, 0
      %v7608 = vsel %vm2271, %v7575, 0
      %v7611 = vsel %vm2271, %v7576, 0
      %v7614 = vsel %vm2271, %v7577, 0
      %v7617 = vsel %vm2271, %v7578, 0
      %v7620 = vsel %vm2271, %v7579, 0
      %v7623 = vsel %vm2271, %v7580, 0
      %v7626 = vsel %vm2271, %v7581, 0
      %v7629 = vsel %vm2271, %v7582, 0
      %v7632 = vsel %vm2271, %v7583, 0
      %v7635 = vsel %vm5394, %v7585, 0
      %7637 = vmatprep.subr.bf16.mxu0 0
      %7638 = vmatpush1.bf16.msra.mxu0 %v7635
      %7639 = vmatprep.subr.bf16.mxu0 0
      %7640 = vmatpush1.bf16.msra.mxu0 0
      %7641 = vmatprep.subr.bf16.mxu0 0
      %7642 = vmatpush1.bf16.msra.mxu0 0
      %7643 = vmatprep.subr.bf16.mxu0 0
      %7644 = vmatpush1.bf16.msra.mxu0 0
      %7645 = vmatprep.subr.bf16.mxu0 0
      %7646 = vmatpush1.bf16.msra.mxu0 0
      %7647 = vmatprep.subr.bf16.mxu0 0
      %7648 = vmatpush1.bf16.msra.mxu0 0
      %7649 = vmatprep.subr.bf16.mxu0 0
      %7650 = vmatpush1.bf16.msra.mxu0 0
      %7651 = vmatprep.subr.bf16.mxu0 0
      %7652 = vmatpush1.bf16.msra.mxu0 0
      %7653 = vmatprep.subr.bf16.mxu0 0
      %7654 = vmatpush1.bf16.msra.mxu0 0
      %7655 = vmatprep.subr.bf16.mxu0 0
      %7656 = vmatpush1.bf16.msra.mxu0 0
      %7657 = vmatprep.subr.bf16.mxu0 0
      %7658 = vmatpush1.bf16.msra.mxu0 0
      %7659 = vmatprep.subr.bf16.mxu0 0
      %7660 = vmatpush1.bf16.msra.mxu0 0
      %7661 = vmatprep.subr.bf16.mxu0 0
      %7662 = vmatpush1.bf16.msra.mxu0 0
      %7663 = vmatprep.subr.bf16.mxu0 0
      %7664 = vmatpush1.bf16.msra.mxu0 0
      %7665 = vmatprep.subr.bf16.mxu0 0
      %7666 = vmatpush1.bf16.msra.mxu0 0
      %7667 = vmatprep.subr.bf16.mxu0 0
      %7668 = vmatpush1.bf16.msra.mxu0 0
      %7669 = vmatprep.mubr.bf16.mxu0 0
      %7670 = vmatmul.mubr.bf16.gmra.mrb[0].mxu0 %v7587
      %v7671 = vpop.f32.mrb[0].mxu0
      %v7672 = vadd.f32 0.0, %v7671
      %v7673 = vpop.f32.mrb[0].mxu0
      %v7674 = vpop.f32.mrb[0].mxu0
      %v7675 = vadd.f32 0.0, %v7674
      %v7676 = vpop.f32.mrb[0].mxu0
      %7677 = vmatprep.mubr.bf16.mxu0 0
      %7678 = vmatmul.mubr.bf16.gmra.mrb[0].mxu0 %v7590
      %v7679 = vpop.f32.mrb[0].mxu0
      %v7680 = vadd.f32 0.0, %v7679
      %v7681 = vpop.f32.mrb[0].mxu0
      %v7682 = vpop.f32.mrb[0].mxu0
      %v7683 = vadd.f32 0.0, %v7682
      %v7684 = vpop.f32.mrb[0].mxu0
      %7685 = vmatprep.mubr.bf16.mxu0 0
      %7686 = vmatmul.mubr.bf16.gmra.mrb[0].mxu0 %v7593
      %v7687 = vpop.f32.mrb[0].mxu0
      %v7688 = vadd.f32 0.0, %v7687
      %v7689 = vpop.f32.mrb[0].mxu0
      %v7690 = vpop.f32.mrb[0].mxu0
      %v7691 = vadd.f32 0.0, %v7690
      %v7692 = vpop.f32.mrb[0].mxu0
      %7693 = vmatprep.mubr.bf16.mxu0 0
      %7694 = vmatmul.mubr.bf16.gmra.mrb[0].mxu0 %v7596
      %v7695 = vpop.f32.mrb[0].mxu0
      %v7696 = vadd.f32 0.0, %v7695
      %v7697 = vpop.f32.mrb[0].mxu0
      %v7698 = vpop.f32.mrb[0].mxu0
      %v7699 = vadd.f32 0.0, %v7698
      %v7700 = vpop.f32.mrb[0].mxu0
      %7701 = vmatprep.mubr.bf16.mxu0 0
      %7702 = vmatmul.mubr.bf16.gmra.mrb[0].mxu0 %v7599
      %v7703 = vpop.f32.mrb[0].mxu0
      %v7704 = vadd.f32 0.0, %v7703
      %v7705 = vpop.f32.mrb[0].mxu0
      %v7706 = vpop.f32.mrb[0].mxu0
      %v7707 = vadd.f32 0.0, %v7706
      %v7708 = vpop.f32.mrb[0].mxu0
      %7709 = vmatprep.mubr.bf16.mxu0 0
      %7710 = vmatmul.mubr.bf16.gmra.mrb[0].mxu0 %v7602
      %v7711 = vpop.f32.mrb[0].mxu0
      %v7712 = vadd.f32 0.0, %v7711
      %v7713 = vpop.f32.mrb[0].mxu0
      %v7714 = vpop.f32.mrb[0].mxu0
      %v7715 = vadd.f32 0.0, %v7714
      %v7716 = vpop.f32.mrb[0].mxu0
      %7717 = vmatprep.mubr.bf16.mxu0 0
      %7718 = vmatmul.mubr.bf16.gmra.mrb[0].mxu0 %v7605
      %v7719 = vpop.f32.mrb[0].mxu0
      %v7720 = vadd.f32 0.0, %v7719
      %v7721 = vpop.f32.mrb[0].mxu0
      %v7722 = vpop.f32.mrb[0].mxu0
      %v7723 = vadd.f32 0.0, %v7722
      %v7724 = vpop.f32.mrb[0].mxu0
      %7725 = vmatprep.mubr.bf16.mxu0 0
      %7726 = vmatmul.mubr.bf16.gmra.mrb[0].mxu0 %v7608
      %v7727 = vpop.f32.mrb[0].mxu0
      %v7728 = vadd.f32 0.0, %v7727
      %v7729 = vpop.f32.mrb[0].mxu0
      %v7730 = vpop.f32.mrb[0].mxu0
      %v7731 = vadd.f32 0.0, %v7730
      %v7732 = vpop.f32.mrb[0].mxu0
      %7733 = vmatprep.mubr.bf16.mxu0 0
      %7734 = vmatmul.mubr.bf16.gmra.mrb[0].mxu0 %v7611
      %v7735 = vpop.f32.mrb[0].mxu0
      %v7736 = vadd.f32 0.0, %v7735
      %v7737 = vpop.f32.mrb[0].mxu0
      %v7738 = vpop.f32.mrb[0].mxu0
      %v7739 = vadd.f32 0.0, %v7738
      %v7740 = vpop.f32.mrb[0].mxu0
      %7741 = vmatprep.mubr.bf16.mxu0 0
      %7742 = vmatmul.mubr.bf16.gmra.mrb[0].mxu0 %v7614
      %v7743 = vpop.f32.mrb[0].mxu0
      %v7744 = vadd.f32 0.0, %v7743
      %v7745 = vpop.f32.mrb[0].mxu0
      %v7746 = vpop.f32.mrb[0].mxu0
      %v7747 = vadd.f32 0.0, %v7746
      %v7748 = vpop.f32.mrb[0].mxu0
      %7749 = vmatprep.mubr.bf16.mxu0 0
      %7750 = vmatmul.mubr.bf16.gmra.mrb[0].mxu0 %v7617
      %v7751 = vpop.f32.mrb[0].mxu0
      %v7752 = vadd.f32 0.0, %v7751
      %v7753 = vpop.f32.mrb[0].mxu0
      %v7754 = vpop.f32.mrb[0].mxu0
      %v7755 = vadd.f32 0.0, %v7754
      %v7756 = vpop.f32.mrb[0].mxu0
      %7757 = vmatprep.mubr.bf16.mxu0 0
      %7758 = vmatmul.mubr.bf16.gmra.mrb[0].mxu0 %v7620
      %v7759 = vpop.f32.mrb[0].mxu0
      %v7760 = vadd.f32 0.0, %v7759
      %v7761 = vpop.f32.mrb[0].mxu0
      %v7762 = vpop.f32.mrb[0].mxu0
      %v7763 = vadd.f32 0.0, %v7762
      %v7764 = vpop.f32.mrb[0].mxu0
      %7765 = vmatprep.mubr.bf16.mxu0 0
      %7766 = vmatmul.mubr.bf16.gmra.mrb[0].mxu0 %v7623
      %v7767 = vpop.f32.mrb[0].mxu0
      %v7768 = vadd.f32 0.0, %v7767
      %v7769 = vpop.f32.mrb[0].mxu0
      %v7770 = vpop.f32.mrb[0].mxu0
      %v7771 = vadd.f32 0.0, %v7770
      %v7772 = vpop.f32.mrb[0].mxu0
      %7773 = vmatprep.mubr.bf16.mxu0 0
      %7774 = vmatmul.mubr.bf16.gmra.mrb[0].mxu0 %v7626
      %v7775 = vpop.f32.mrb[0].mxu0
      %v7776 = vadd.f32 0.0, %v7775
      %v7777 = vpop.f32.mrb[0].mxu0
      %v7778 = vpop.f32.mrb[0].mxu0
      %v7779 = vadd.f32 0.0, %v7778
      %v7780 = vpop.f32.mrb[0].mxu0
      %7781 = vmatprep.mubr.bf16.mxu0 0
      %7782 = vmatmul.mubr.bf16.gmra.mrb[0].mxu0 %v7629
      %v7783 = vpop.f32.mrb[0].mxu0
      %v7784 = vadd.f32 0.0, %v7783
      %v7785 = vpop.f32.mrb[0].mxu0
      %v7786 = vpop.f32.mrb[0].mxu0
      %v7787 = vadd.f32 0.0, %v7786
      %v7788 = vpop.f32.mrb[0].mxu0
      %7789 = vmatprep.mubr.bf16.mxu0 0
      %7790 = vmatmul.mubr.bf16.gmra.mrb[0].mxu0 %v7632
      %v7791 = vpop.f32.mrb[0].mxu0
      %v7792 = vadd.f32 0.0, %v7791
      %v7793 = vpop.f32.mrb[0].mxu0
      %v7794 = vpop.f32.mrb[0].mxu0
      %v7795 = vadd.f32 0.0, %v7794
      %v7796 = vpop.f32.mrb[0].mxu0
      %7797 = vdwg.mxu0
      %v7798 = vadd.f32 %v7504, %v7672
      %v7799 = vadd.f32 %v7505, %v7675
      %v7800 = vadd.f32 %v7506, %v7680
      %v7801 = vadd.f32 %v7507, %v7683
      %v7802 = vadd.f32 %v7508, %v7688
      %v7803 = vadd.f32 %v7509, %v7691
      %v7804 = vadd.f32 %v7510, %v7696
      %v7805 = vadd.f32 %v7511, %v7699
      %v7806 = vadd.f32 %v7512, %v7704
      %v7807 = vadd.f32 %v7513, %v7707
      %v7808 = vadd.f32 %v7514, %v7712
      %v7809 = vadd.f32 %v7515, %v7715
      %v7810 = vadd.f32 %v7516, %v7720
      %v7811 = vadd.f32 %v7517, %v7723
      %v7812 = vadd.f32 %v7518, %v7728
      %v7813 = vadd.f32 %v7519, %v7731
      %v7814 = vadd.f32 %v7520, %v7736
      %v7815 = vadd.f32 %v7521, %v7739
      %v7816 = vadd.f32 %v7522, %v7744
      %v7817 = vadd.f32 %v7523, %v7747
      %v7818 = vadd.f32 %v7524, %v7752
      %v7819 = vadd.f32 %v7525, %v7755
      %v7820 = vadd.f32 %v7526, %v7760
      %v7821 = vadd.f32 %v7527, %v7763
      %v7822 = vadd.f32 %v7528, %v7768
      %v7823 = vadd.f32 %v7529, %v7771
      %v7824 = vadd.f32 %v7530, %v7776
      %v7825 = vadd.f32 %v7531, %v7779
      %v7826 = vadd.f32 %v7532, %v7784
      %v7827 = vadd.f32 %v7533, %v7787
      %v7828 = vadd.f32 %v7534, %v7792
      %v7829 = vadd.f32 %v7535, %v7795
      %v7830 = vld [vmem:[%s7] sm:$0x1]
      %v7832 = vlaneseq
      %v7833 = vshrl.u32 %v7832, 7
      %v7834 = vsub.s32 0, %v7833
      %v7835 = vrot.slane %v7830, %v7834
      %v7837 = vadd.f32 %v7798, %v7835
      %v7838 = vadd.f32 %v7799, %v7835
      %v7839 = vadd.f32 %v7800, %v7835
      %v7840 = vadd.f32 %v7801, %v7835
      %v7841 = vadd.f32 %v7802, %v7835
      %v7842 = vadd.f32 %v7803, %v7835
      %v7843 = vadd.f32 %v7804, %v7835
      %v7844 = vadd.f32 %v7805, %v7835
      %v7845 = vadd.f32 %v7806, %v7835
      %v7846 = vadd.f32 %v7807, %v7835
      %v7847 = vadd.f32 %v7808, %v7835
      %v7848 = vadd.f32 %v7809, %v7835
      %v7849 = vadd.f32 %v7810, %v7835
      %v7850 = vadd.f32 %v7811, %v7835
      %v7851 = vadd.f32 %v7812, %v7835
      %v7852 = vadd.f32 %v7813, %v7835
      %v7853 = vadd.f32 %v7814, %v7835
      %v7854 = vadd.f32 %v7815, %v7835
      %v7855 = vadd.f32 %v7816, %v7835
      %v7856 = vadd.f32 %v7817, %v7835
      %v7857 = vadd.f32 %v7818, %v7835
      %v7858 = vadd.f32 %v7819, %v7835
      %v7859 = vadd.f32 %v7820, %v7835
      %v7860 = vadd.f32 %v7821, %v7835
      %v7861 = vadd.f32 %v7822, %v7835
      %v7862 = vadd.f32 %v7823, %v7835
      %v7863 = vadd.f32 %v7824, %v7835
      %v7864 = vadd.f32 %v7825, %v7835
      %v7865 = vadd.f32 %v7826, %v7835
      %v7866 = vadd.f32 %v7827, %v7835
      %v7867 = vadd.f32 %v7828, %v7835
      %v7868 = vadd.f32 %v7829, %v7835
      %vm7869 = vcmp.gt.f32.partialorder %v7837, 0.0
      %vm7870 = vcmp.gt.f32.partialorder %v7838, 0.0
      %vm7871 = vcmp.gt.f32.partialorder %v7839, 0.0
      %vm7872 = vcmp.gt.f32.partialorder %v7840, 0.0
      %vm7873 = vcmp.gt.f32.partialorder %v7841, 0.0
      %vm7874 = vcmp.gt.f32.partialorder %v7842, 0.0
      %vm7875 = vcmp.gt.f32.partialorder %v7843, 0.0
      %vm7876 = vcmp.gt.f32.partialorder %v7844, 0.0
      %vm7877 = vcmp.gt.f32.partialorder %v7845, 0.0
      %vm7878 = vcmp.gt.f32.partialorder %v7846, 0.0
      %vm7879 = vcmp.gt.f32.partialorder %v7847, 0.0
      %vm7880 = vcmp.gt.f32.partialorder %v7848, 0.0
      %vm7881 = vcmp.gt.f32.partialorder %v7849, 0.0
      %vm7882 = vcmp.gt.f32.partialorder %v7850, 0.0
      %vm7883 = vcmp.gt.f32.partialorder %v7851, 0.0
      %vm7884 = vcmp.gt.f32.partialorder %v7852, 0.0
      %vm7885 = vcmp.gt.f32.partialorder %v7853, 0.0
      %vm7886 = vcmp.gt.f32.partialorder %v7854, 0.0
      %vm7887 = vcmp.gt.f32.partialorder %v7855, 0.0
      %vm7888 = vcmp.gt.f32.partialorder %v7856, 0.0
      %vm7889 = vcmp.gt.f32.partialorder %v7857, 0.0
      %vm7890 = vcmp.gt.f32.partialorder %v7858, 0.0
      %vm7891 = vcmp.gt.f32.partialorder %v7859, 0.0
      %vm7892 = vcmp.gt.f32.partialorder %v7860, 0.0
      %vm7893 = vcmp.gt.f32.partialorder %v7861, 0.0
      %vm7894 = vcmp.gt.f32.partialorder %v7862, 0.0
      %vm7895 = vcmp.gt.f32.partialorder %v7863, 0.0
      %vm7896 = vcmp.gt.f32.partialorder %v7864, 0.0
      %vm7897 = vcmp.gt.f32.partialorder %v7865, 0.0
      %vm7898 = vcmp.gt.f32.partialorder %v7866, 0.0
      %vm7899 = vcmp.gt.f32.partialorder %v7867, 0.0
      %vm7900 = vcmp.gt.f32.partialorder %v7868, 0.0
      %v7901 = vmul.f32 %v7837, 0.2
      %v7902 = vmul.f32 %v7838, 0.2
      %v7903 = vmul.f32 %v7839, 0.2
      %v7904 = vmul.f32 %v7840, 0.2
      %v7905 = vmul.f32 %v7841, 0.2
      %v7906 = vmul.f32 %v7842, 0.2
      %v7907 = vmul.f32 %v7843, 0.2
      %v7908 = vmul.f32 %v7844, 0.2
      %v7909 = vmul.f32 %v7845, 0.2
      %v7910 = vmul.f32 %v7846, 0.2
      %v7911 = vmul.f32 %v7847, 0.2
      %v7912 = vmul.f32 %v7848, 0.2
      %v7913 = vmul.f32 %v7849, 0.2
      %v7914 = vmul.f32 %v7850, 0.2
      %v7915 = vmul.f32 %v7851, 0.2
      %v7916 = vmul.f32 %v7852, 0.2
      %v7917 = vmul.f32 %v7853, 0.2
      %v7918 = vmul.f32 %v7854, 0.2
      %v7919 = vmul.f32 %v7855, 0.2
      %v7920 = vmul.f32 %v7856, 0.2
      %v7921 = vmul.f32 %v7857, 0.2
      %v7922 = vmul.f32 %v7858, 0.2
      %v7923 = vmul.f32 %v7859, 0.2
      %v7924 = vmul.f32 %v7860, 0.2
      %v7925 = vmul.f32 %v7861, 0.2
      %v7926 = vmul.f32 %v7862, 0.2
      %v7927 = vmul.f32 %v7863, 0.2
      %v7928 = vmul.f32 %v7864, 0.2
      %v7929 = vmul.f32 %v7865, 0.2
      %v7930 = vmul.f32 %v7866, 0.2
      %v7931 = vmul.f32 %v7867, 0.2
      %v7932 = vmul.f32 %v7868, 0.2
      %v7933 = vsel %vm7869, %v7837, %v7901
      %v7934 = vsel %vm7870, %v7838, %v7902
      %v7935 = vsel %vm7871, %v7839, %v7903
      %v7936 = vsel %vm7872, %v7840, %v7904
      %v7937 = vsel %vm7873, %v7841, %v7905
      %v7938 = vsel %vm7874, %v7842, %v7906
      %v7939 = vsel %vm7875, %v7843, %v7907
      %v7940 = vsel %vm7876, %v7844, %v7908
      %v7941 = vsel %vm7877, %v7845, %v7909
      %v7942 = vsel %vm7878, %v7846, %v7910
      %v7943 = vsel %vm7879, %v7847, %v7911
      %v7944 = vsel %vm7880, %v7848, %v7912
      %v7945 = vsel %vm7881, %v7849, %v7913
      %v7946 = vsel %vm7882, %v7850, %v7914
      %v7947 = vsel %vm7883, %v7851, %v7915
      %v7948 = vsel %vm7884, %v7852, %v7916
      %v7949 = vsel %vm7885, %v7853, %v7917
      %v7950 = vsel %vm7886, %v7854, %v7918
      %v7951 = vsel %vm7887, %v7855, %v7919
      %v7952 = vsel %vm7888, %v7856, %v7920
      %v7953 = vsel %vm7889, %v7857, %v7921
      %v7954 = vsel %vm7890, %v7858, %v7922
      %v7955 = vsel %vm7891, %v7859, %v7923
      %v7956 = vsel %vm7892, %v7860, %v7924
      %v7957 = vsel %vm7893, %v7861, %v7925
      %v7958 = vsel %vm7894, %v7862, %v7926
      %v7959 = vsel %vm7895, %v7863, %v7927
      %v7960 = vsel %vm7896, %v7864, %v7928
      %v7961 = vsel %vm7897, %v7865, %v7929
      %v7962 = vsel %vm7898, %v7866, %v7930
      %v7963 = vsel %vm7899, %v7867, %v7931
      %v7964 = vsel %vm7900, %v7868, %v7932
      %7965 = vst.msk [vmem:[%s325] sm:$0xff] %vm2271, %v7933
      %7966 = vst.msk [vmem:[%s325 + $0x8] sm:$0xff] %vm2271, %v7934
      %7967 = vst.msk [vmem:[%s325 + $0x10] sm:$0xff] %vm2271, %v7935
      %7968 = vst.msk [vmem:[%s325 + $0x18] sm:$0xff] %vm2271, %v7936
      %7969 = vst.msk [vmem:[%s325 + $0x20] sm:$0xff] %vm2271, %v7937
      %7970 = vst.msk [vmem:[%s325 + $0x28] sm:$0xff] %vm2271, %v7938
      %7971 = vst.msk [vmem:[%s325 + $0x30] sm:$0xff] %vm2271, %v7939
      %7972 = vst.msk [vmem:[%s325 + $0x38] sm:$0xff] %vm2271, %v7940
      %7973 = vst.msk [vmem:[%s325 + $0x40] sm:$0xff] %vm2271, %v7941
      %7974 = vst.msk [vmem:[%s325 + $0x48] sm:$0xff] %vm2271, %v7942
      %7975 = vst.msk [vmem:[%s325 + $0x50] sm:$0xff] %vm2271, %v7943
      %7976 = vst.msk [vmem:[%s325 + $0x58] sm:$0xff] %vm2271, %v7944
      %7977 = vst.msk [vmem:[%s325 + $0x60] sm:$0xff] %vm2271, %v7945
      %7978 = vst.msk [vmem:[%s325 + $0x68] sm:$0xff] %vm2271, %v7946
      %7979 = vst.msk [vmem:[%s325 + $0x70] sm:$0xff] %vm2271, %v7947
      %7980 = vst.msk [vmem:[%s325 + $0x78] sm:$0xff] %vm2271, %v7948
      %7981 = vst.msk [vmem:[%s325 + $0x80] sm:$0xff] %vm2271, %v7949
      %7982 = vst.msk [vmem:[%s325 + $0x88] sm:$0xff] %vm2271, %v7950
      %7983 = vst.msk [vmem:[%s325 + $0x90] sm:$0xff] %vm2271, %v7951
      %7984 = vst.msk [vmem:[%s325 + $0x98] sm:$0xff] %vm2271, %v7952
      %7985 = vst.msk [vmem:[%s325 + $0xa0] sm:$0xff] %vm2271, %v7953
      %7986 = vst.msk [vmem:[%s325 + $0xa8] sm:$0xff] %vm2271, %v7954
      %7987 = vst.msk [vmem:[%s325 + $0xb0] sm:$0xff] %vm2271, %v7955
      %7988 = vst.msk [vmem:[%s325 + $0xb8] sm:$0xff] %vm2271, %v7956
      %7989 = vst.msk [vmem:[%s325 + $0xc0] sm:$0xff] %vm2271, %v7957
      %7990 = vst.msk [vmem:[%s325 + $0xc8] sm:$0xff] %vm2271, %v7958
      %7991 = vst.msk [vmem:[%s325 + $0xd0] sm:$0xff] %vm2271, %v7959
      %7992 = vst.msk [vmem:[%s325 + $0xd8] sm:$0xff] %vm2271, %v7960
      %7993 = vst.msk [vmem:[%s325 + $0xe0] sm:$0xff] %vm2271, %v7961
      %7994 = vst.msk [vmem:[%s325 + $0xe8] sm:$0xff] %vm2271, %v7962
      %7995 = vst.msk [vmem:[%s325 + $0xf0] sm:$0xff] %vm2271, %v7963
      %7996 = vst.msk [vmem:[%s325 + $0xf8] sm:$0xff] %vm2271, %v7964
      %p7997 = scmp.lt.s32.totalorder %s19, 1
      %s7998 = scalar_select %p7997, %s19, 1
      %s7999 = smul.addr %s7998, 32
      %s8000 = smul.addr %s7999, 8
      %s8001 = scalar_lea.vmem %s8, %s8000
      // Predicated region
      $region57: #{tpu_custom_call.1} parent=51 // pred_check
        %p8002 = pneg %p215
      $region58: #{tpu_custom_call.1} parent=51 // pred_check_branch
        %8004 = sbr.rel (%p8002) target = $region60
      $region59: #{tpu_custom_call.1} parent=51 // pred_region
        _
      $region60: #{tpu_custom_call.1} parent=51 // pred_fallthru
        _
    $region52: #{tpu_custom_call.1} parent=5 // pred_fallthru
      _
    %p8005 = scmp.le.s32.totalorder 2, %s14
    // Predicated region
    $region61: #{tpu_custom_call.1} parent=5 // pred_check
      %p8006 = pneg %p8005
    $region62: #{tpu_custom_call.1} parent=5 // pred_check_branch
      %8008 = sbr.rel (%p8006) target = $region64
    $region63: #{tpu_custom_call.1} parent=5 // pred_region
      %s8009 = ssub.s32 %s14, 2
      // Predicated region
      $region65: #{tpu_custom_call.1} parent=63 // pred_check
        %p8010 = pneg %p221
      $region66: #{tpu_custom_call.1} parent=63 // pred_check_branch
        %8012 = sbr.rel (%p8010) target = $region68
      $region67: #{tpu_custom_call.1} parent=63 // pred_region
        %p8013 = scmp.lt.s32.totalorder %s20, 1
        %s8014 = scalar_select %p8013, %s20, 1
        %s8015 = smul.addr %s8014, 32
        %s8016 = smul.addr %s8015, 8
        %s8017 = scalar_lea.vmem %s8, %s8016
      $region68: #{tpu_custom_call.1} parent=63 // pred_fallthru
        _
    $region64: #{tpu_custom_call.1} parent=5 // pred_fallthru
      _
  $region6: #{tpu_custom_call.1} parent=0 // loop_footer
    %s18 = sadd.s32 1, %s14
  $region7: #{tpu_custom_call.1} parent=0 // loop_footer_branch
    %13 = sbr.rel target = $region3
  $region8: #{tpu_custom_call.1} parent=0 // loop_exit
    _

</llo_original>
